<compile_context>
chip_gen: v5e
topology: v5e:2x2
jax: 0.10.0
libtpu: 0.0.40
codegen_flags: <defaults>
</compile_context>

<pallas_src>
import functools
import math

import jax
import jax.numpy as jnp
from jax.experimental import pallas as pl
from jax.experimental.pallas import tpu as pltpu

LRELU = 0.1
_OFFS = [(dy, dx) for dy in (-1, 0, 1) for dx in (-1, 0, 1)]   # tap t = (dy+1)*3 + (dx+1)


def _lrelu(x):
    return jnp.where(x >= 0, x, LRELU * x)


# ------------------------------ Pallas kernel -------------------------------

def _rdab_kernel(kv_ref, x_ref, mw1_ref, mw2_ref, gw_ref, gb_ref, cw_ref, cb_ref,
                 o_ref, *, C, H, W):
    """Fully fused RDAB block for one batch sample, (C, H*W) layout.

    kv_ref : (1, 64, 1)    f32   degradation representation (column vector)
    x_ref  : (1, C, H*W)   f32   input feature map (row-major flattened NCHW)
    mw1_ref: (2, 64, 64)   f32   kernel-MLP layer-1 weights, [branch, in, out]
    mw2_ref: (2, 9*C, 64)  f32   kernel-MLP layer-2 weights, row order t*C + c
    gw_ref : (2, C, 1)     f32   1x1 gate conv weight (C -> 1)
    gb_ref : (2, 1, 1)     f32   1x1 gate conv bias
    cw_ref : (2, 9, C, C)  bf16  3x3 conv weights, [branch, tap, C_out, C_in]
    cb_ref : (2, C, 1)     f32   3x3 conv bias
    o_ref  : (1, C, H*W)   f32   block output
    """
    HW = H * W

    # Row-boundary masks for the dx = +/-1 taps (lanes index the flattened H*W).
    col = jax.lax.broadcasted_iota(jnp.int32, (1, HW), 1) % W
    not_last = (col != (W - 1)).astype(jnp.float32)     # valid lanes for dx = +1
    not_first = (col != 0).astype(jnp.float32)          # valid lanes for dx = -1

    def shifted(f, dy, dx):
        """tap[c, i*W + j] = f[c, (i+dy)*W + (j+dx)], zero outside the image."""
        s = dy * W + dx
        if s == 0:
            out = f
        elif s > 0:
            out = jnp.concatenate([f[:, s:], jnp.zeros((C, s), f.dtype)], axis=1)
        else:
            out = jnp.concatenate([jnp.zeros((C, -s), f.dtype), f[:, :HW + s]], axis=1)
        if dx == 1:
            out = out * not_last
        elif dx == -1:
            out = out * not_first
        return out

    def rda_dw(f, br):
        """Depthwise 3x3 conv with per-sample MLP-predicted taps (VPU, f32)."""
        h = jnp.sum(mw1_ref[br] * kv_ref[0], axis=0, keepdims=True)        # (1, 64)
        h = _lrelu(h)
        acc = jnp.zeros((C, HW), jnp.float32)
        for t, (dy, dx) in enumerate(_OFFS):
            # per-tap per-channel weight k_t[c] = sum_m W2[t*C+c, m] * h[m] -> (C, 1)
            k_t = jnp.sum(mw2_ref[br, t * C:(t + 1) * C, :] * h, axis=1, keepdims=True)
            acc = acc + shifted(f, dy, dx) * k_t
        return acc

    def conv3x3(f, br):
        """Full 3x3 conv: 9 accumulating MXU matmuls  W_t(C,C) @ tap_t(C, HW)."""
        acc = jnp.zeros((C, HW), jnp.float32)
        for t, (dy, dx) in enumerate(_OFFS):
            tap = shifted(f, dy, dx).astype(jnp.bfloat16)
            acc = acc + jnp.dot(cw_ref[br, t], tap, preferred_element_type=jnp.float32)
        return acc + cb_ref[br]

    def gate(f, br):
        """sigmoid(1x1 conv C -> 1) -> (1, HW), broadcast over channels."""
        m = jnp.sum(f * gw_ref[br], axis=0, keepdims=True) + gb_ref[br]
        return jax.nn.sigmoid(m)

    x = x_ref[0]                                        # (C, HW)

    # --- da_conv1 + RDAB LeakyReLU -------------------------------------------
    d1 = _lrelu(rda_dw(x, 0))
    out = _lrelu(d1 * gate(x, 0) + x)

    # --- conv1 (3x3, C->C) + LeakyReLU ---------------------------------------
    y = _lrelu(conv3x3(out, 0))

    # --- da_conv2 + RDAB LeakyReLU -------------------------------------------
    d2 = _lrelu(rda_dw(y, 1))
    out2 = _lrelu(d2 * gate(y, 1) + y)

    # --- conv2 (3x3, C->C) + residual with x (re-read ref: short live range) --
    o_ref[0] = conv3x3(out2, 1) + x_ref[0]


# --------------------------------- wrapper ----------------------------------

@jax.jit
def rdab_forward(x_nchw, kv, params):
    """RDAB.forward([x, kv]). x: (B, C, H, W) f32, kv: (B, 64) f32 -> (B, C, H, W)."""
    B, C, H, W = x_nchw.shape
    HW = H * W

    x_flat = x_nchw.reshape(B, C, HW)                          # free NCHW reshape
    kv_col = kv[:, :, None]                                    # (B, 64, 1)

    # Kernel-prediction MLP weights: layer-1 as [in, out]; layer-2 rows reordered
    # from torch's (c*9 + t) to (t*C + c) so each tap's rows are contiguous.
    mw1 = jnp.transpose(params["mlp_w1"], (0, 2, 1))
    mw2 = jnp.transpose(params["mlp_w2"].reshape(2, C, 9, 64),
                        (0, 2, 1, 3)).reshape(2, 9 * C, 64)
    gw = params["gw"][:, :, None]                              # (2, C, 1)
    gb = params["gb"][:, None, None]                           # (2, 1, 1)
    # 3x3 conv weights OIHW -> [branch, tap, C_out, C_in], bf16 for the MXU.
    cw = jnp.transpose(params["cw"], (0, 3, 4, 1, 2)).reshape(2, 9, C, C)
    cw = cw.astype(jnp.bfloat16)
    cb = params["cb"][:, :, None]                              # (2, C, 1)

    flops = B * (2 * 9 * 2 * C * C * HW            # two 3x3 convs (MXU)
                 + 2 * 9 * 3 * C * HW              # two depthwise convs + masking
                 + 2 * 3 * C * HW                  # two 1x1 gates + gating
                 + 2 * 2 * 64 * (64 + 9 * C))      # two kernel-prediction MLPs
    bytes_accessed = (2 * B * C * HW * 4 + mw1.size * 4 + mw2.size * 4 + cw.size * 2
                      + (gw.size + gb.size + cb.size + kv_col.size) * 4)

    out_flat = pl.pallas_call(
        functools.partial(_rdab_kernel, C=C, H=H, W=W),
        out_shape=jax.ShapeDtypeStruct((B, C, HW), jnp.float32),
        grid=(B,),
        in_specs=[
            pl.BlockSpec((1, 64, 1), lambda b: (b, 0, 0)),        # kv column
            pl.BlockSpec((1, C, HW), lambda b: (b, 0, 0)),        # x (lane-dense)
            pl.BlockSpec((2, 64, 64), lambda b: (0, 0, 0)),       # MLP W1
            pl.BlockSpec((2, 9 * C, 64), lambda b: (0, 0, 0)),    # MLP W2
            pl.BlockSpec((2, C, 1), lambda b: (0, 0, 0)),         # gate weight
            pl.BlockSpec((2, 1, 1), lambda b: (0, 0, 0)),         # gate bias
            pl.BlockSpec((2, 9, C, C), lambda b: (0, 0, 0, 0)),   # conv weights bf16
            pl.BlockSpec((2, C, 1), lambda b: (0, 0, 0)),         # conv bias
        ],
        out_specs=pl.BlockSpec((1, C, HW), lambda b: (b, 0, 0)),
        compiler_params=pltpu.CompilerParams(
            dimension_semantics=("parallel",),
            vmem_limit_bytes=32 * 1024 * 1024),                   # < v7x 64 MiB physical
        cost_estimate=pl.CostEstimate(flops=flops, transcendentals=2 * B * HW,
                                      bytes_accessed=bytes_accessed),
    )(kv_col, x_flat, mw1, mw2, gw, gb, cw, cb)

    return out_flat.reshape(B, C, H, W)


# ------------------------- pure-JAX reference (f32) -------------------------

def _ref_conv3x3(x, w, b):
    out = jax.lax.conv_general_dilated(
        x, w, (1, 1), ((1, 1), (1, 1)),
        dimension_numbers=("NCHW", "OIHW", "NCHW"),
        precision=jax.lax.Precision.HIGHEST)
    return out + b.reshape(1, -1, 1, 1)


def _ref_rda_conv(x, kv, w1, w2, gw, gb):
    B, C, H, W = x.shape
    h = _lrelu(jnp.dot(kv, w1.T, precision=jax.lax.Precision.HIGHEST))
    kflat = jnp.dot(h, w2.T, precision=jax.lax.Precision.HIGHEST)      # (B, C*9)
    kern = kflat.reshape(B * C, 1, 3, 3)
    dw = jax.lax.conv_general_dilated(
        x.reshape(1, B * C, H, W), kern, (1, 1), ((1, 1), (1, 1)),
        dimension_numbers=("NCHW", "OIHW", "NCHW"),
        feature_group_count=B * C, precision=jax.lax.Precision.HIGHEST)
    dw = _lrelu(dw).reshape(B, C, H, W)
    m = jnp.sum(x * gw.reshape(1, C, 1, 1), axis=1, keepdims=True) + gb
    return dw * jax.nn.sigmoid(m) + x


def rdab_reference(x, kv, p):
    out = _lrelu(_ref_rda_conv(x, kv, p["mlp_w1"][0], p["mlp_w2"][0],
                               p["gw"][0], p["gb"][0]))
    out = _lrelu(_ref_conv3x3(out, p["cw"][0], p["cb"][0]))
    out = _lrelu(_ref_rda_conv(out, kv, p["mlp_w1"][1], p["mlp_w2"][1],
                               p["gw"][1], p["gb"][1]))
    return _ref_conv3x3(out, p["cw"][1], p["cb"][1]) + x


# ------------------------------- parameters ---------------------------------

def init_params(key, C=64):
    """Deterministic synthetic params, PyTorch-default-style uniform init."""
    kit = iter(jax.random.split(key, 8))

    def u(shape, fan_in):
        bound = 1.0 / math.sqrt(fan_in)
        return jax.random.uniform(next(kit), shape, jnp.float32, -bound, bound)

    return {
        # kernel-prediction MLPs (no bias), torch Linear layout (out, in),
        # stacked over [da_conv1, da_conv2]
        "mlp_w1": u((2, 64, 64), 64),
        "mlp_w2": u((2, 9 * C, 64), 64),
        # 1x1 gate convs Conv2d(C, 1, 1) weight / bias
        "gw": u((2, C), C),
        "gb": u((2,), C),
        # conv1 / conv2: Conv2d(C, C, 3, padding=1), OIHW
        "cw": u((2, C, C, 3, 3), 9 * C),
        "cb": u((2, C), 9 * C),
    }


# ---------------------------------- main -------------------------------------

if __name__ == "__main__":
    # n_feat must be 64: RDA_conv's kernel MLP is hard-wired Linear(64, 64*3*3).
    B, C, H, W = 2, 64, 16, 16
    kx, kk, kp = jax.random.split(jax.random.PRNGKey(0), 3)
    x = jax.random.normal(kx, (B, C, H, W), jnp.float32)
    kv = jax.random.normal(kk, (B, 64), jnp.float32)      # degradation representation
    params = init_params(kp, C)

    out = jax.block_until_ready(rdab_forward(x, kv, params))
    assert out.shape == (B, C, H, W), out.shape
    assert bool(jnp.all(jnp.isfinite(out)))

    ref = rdab_reference(x, kv, params)
    err = float(jnp.max(jnp.abs(out - ref)))
    assert err < 0.25, f"max abs err vs reference: {err}"
    print("KERNEL_OK")
</pallas_src>

<mosaic_0001>
module attributes {stable_mosaic.version = 11 : i64} {
  func.func @_rdab_kernel(%arg0: i32, %arg1: memref<1x64x1xf32, #tpu.memory_space<vmem>>, %arg2: memref<1x64x256xf32, #tpu.memory_space<vmem>>, %arg3: memref<2x64x64xf32, #tpu.memory_space<vmem>>, %arg4: memref<2x576x64xf32, #tpu.memory_space<vmem>>, %arg5: memref<2x64x1xf32, #tpu.memory_space<vmem>>, %arg6: memref<2x1x1xf32, #tpu.memory_space<vmem>>, %arg7: memref<2x9x64x64xbf16, #tpu.memory_space<vmem>>, %arg8: memref<2x64x1xf32, #tpu.memory_space<vmem>>, %arg9: memref<1x64x256xf32, #tpu.memory_space<vmem>>) attributes {dimension_semantics = [#tpu.dimension_semantics<parallel>], iteration_bounds = array<i64: 2>, scalar_prefetch = 0 : i64, scratch_operands = 0 : i64, tpu.core_type = #tpu.core_type<tc>, window_params = [{transform_indices = @transform_0, window_bounds = array<i64: 1, 64, 1>}, {transform_indices = @transform_1, window_bounds = array<i64: 1, 64, 256>}, {pipeline_mode = #tpu.pipeline_mode<synchronous>, transform_indices = @transform_2, window_bounds = array<i64: 2, 64, 64>}, {pipeline_mode = #tpu.pipeline_mode<synchronous>, transform_indices = @transform_3, window_bounds = array<i64: 2, 576, 64>}, {pipeline_mode = #tpu.pipeline_mode<synchronous>, transform_indices = @transform_4, window_bounds = array<i64: 2, 64, 1>}, {pipeline_mode = #tpu.pipeline_mode<synchronous>, transform_indices = @transform_5, window_bounds = array<i64: 2, 1, 1>}, {pipeline_mode = #tpu.pipeline_mode<synchronous>, transform_indices = @transform_6, window_bounds = array<i64: 2, 9, 64, 64>}, {pipeline_mode = #tpu.pipeline_mode<synchronous>, transform_indices = @transform_7, window_bounds = array<i64: 2, 64, 1>}, {transform_indices = @transform_8, window_bounds = array<i64: 1, 64, 256>}]} {
    %0 = tpu.iota {dimensions = array<i32: 1>} : vector<1x256xi32>
    %c16_i32 = arith.constant 16 : i32
    %c0_i32 = arith.constant 0 : i32
    %1 = arith.cmpi eq, %c16_i32, %c0_i32 : i32
    %c1_i32 = arith.constant 1 : i32
    %2 = arith.select %1, %c1_i32, %c16_i32 : i32
    %3 = vector.broadcast %2 : i32 to vector<1x256xi32>
    %4 = arith.remsi %0, %3 : vector<1x256xi32>
    %c0_i32_0 = arith.constant 0 : i32
    %5 = vector.broadcast %c0_i32_0 : i32 to vector<1x256xi32>
    %6 = arith.cmpi ne, %4, %5 : vector<1x256xi32>
    %c0_i32_1 = arith.constant 0 : i32
    %7 = vector.broadcast %c0_i32_1 : i32 to vector<1x256xi32>
    %8 = arith.cmpi slt, %4, %7 : vector<1x256xi32>
    %c0_i32_2 = arith.constant 0 : i32
    %9 = arith.cmpi slt, %2, %c0_i32_2 : i32
    %10 = vector.broadcast %9 : i1 to vector<1x256xi1>
    %11 = vector.broadcast %10 : vector<1x256xi1> to vector<1x256xi1>
    %12 = arith.xori %8, %11 : vector<1x256xi1>
    %13 = arith.andi %12, %6 : vector<1x256xi1>
    %14 = vector.broadcast %2 : i32 to vector<1x256xi32>
    %15 = arith.addi %4, %14 : vector<1x256xi32>
    %16 = arith.select %13, %15, %4 : vector<1x256xi1>, vector<1x256xi32>
    %c15_i32 = arith.constant 15 : i32
    %17 = vector.broadcast %c15_i32 : i32 to vector<1x256xi32>
    %18 = arith.cmpi ne, %16, %17 : vector<1x256xi32>
    %19 = arith.extui %18 : vector<1x256xi1> to vector<1x256xi32>
    %20 = arith.sitofp %19 : vector<1x256xi32> to vector<1x256xf32>
    %c0_i32_3 = arith.constant 0 : i32
    %21 = vector.broadcast %c0_i32_3 : i32 to vector<1x256xi32>
    %22 = arith.cmpi ne, %16, %21 : vector<1x256xi32>
    %23 = arith.extui %22 : vector<1x256xi1> to vector<1x256xi32>
    %24 = arith.sitofp %23 : vector<1x256xi32> to vector<1x256xf32>
    %c0 = arith.constant 0 : index
    %c0_4 = arith.constant 0 : index
    %c0_5 = arith.constant 0 : index
    %25 = vector.load %arg2[%c0, %c0_4, %c0_5] : memref<1x64x256xf32, #tpu.memory_space<vmem>>, vector<1x64x256xf32>
    %26 = vector.shape_cast %25 : vector<1x64x256xf32> to vector<64x256xf32>
    %c0_6 = arith.constant 0 : index
    %c0_7 = arith.constant 0 : index
    %c0_8 = arith.constant 0 : index
    %27 = vector.load %arg3[%c0_6, %c0_7, %c0_8] : memref<2x64x64xf32, #tpu.memory_space<vmem>>, vector<1x64x64xf32>
    %28 = vector.shape_cast %27 : vector<1x64x64xf32> to vector<64x64xf32>
    %c0_9 = arith.constant 0 : index
    %c0_10 = arith.constant 0 : index
    %c0_11 = arith.constant 0 : index
    %29 = vector.load %arg1[%c0_9, %c0_10, %c0_11] : memref<1x64x1xf32, #tpu.memory_space<vmem>>, vector<1x64x1xf32>
    %30 = vector.shape_cast %29 : vector<1x64x1xf32> to vector<64x1xf32>
    %31 = vector.broadcast %30 : vector<64x1xf32> to vector<64x64xf32>
    %32 = arith.mulf %28, %31 : vector<64x64xf32>
    %cst = arith.constant dense<0.000000e+00> : vector<64xf32>
    %33 = vector.multi_reduction <add>, %32, %cst [0] : vector<64x64xf32> to vector<64xf32>
    %34 = vector.shape_cast %33 : vector<64xf32> to vector<1x64xf32>
    %cst_12 = arith.constant 0.000000e+00 : f32
    %35 = vector.broadcast %cst_12 : f32 to vector<1x64xf32>
    %36 = arith.cmpf oge, %34, %35 : vector<1x64xf32>
    %cst_13 = arith.constant 1.000000e-01 : f32
    %37 = vector.broadcast %cst_13 : f32 to vector<1x64xf32>
    %38 = arith.mulf %37, %34 : vector<1x64xf32>
    %39 = arith.select %36, %34, %38 : vector<1x64xi1>, vector<1x64xf32>
    %cst_14 = arith.constant 0.000000e+00 : f32
    %40 = vector.broadcast %cst_14 : f32 to vector<64x256xf32>
    %c0_15 = arith.constant 0 : index
    %c0_16 = arith.constant 0 : index
    %c0_17 = arith.constant 0 : index
    %41 = vector.load %arg4[%c0_15, %c0_16, %c0_17] : memref<2x576x64xf32, #tpu.memory_space<vmem>>, vector<1x64x64xf32>
    %42 = vector.shape_cast %41 : vector<1x64x64xf32> to vector<64x64xf32>
    %43 = vector.broadcast %39 : vector<1x64xf32> to vector<64x64xf32>
    %44 = arith.mulf %42, %43 : vector<64x64xf32>
    %cst_18 = arith.constant dense<0.000000e+00> : vector<64xf32>
    %45 = vector.multi_reduction <add>, %44, %cst_18 [1] : vector<64x64xf32> to vector<64xf32>
    %46 = vector.shape_cast %45 : vector<64xf32> to vector<64x1xf32>
    %cst_19 = arith.constant 0.000000e+00 : f32
    %47 = vector.broadcast %cst_19 : f32 to vector<64x17xf32>
    %48 = vector.extract_strided_slice %26 {offsets = [0, 0], sizes = [64, 239], strides = [1, 1]} : vector<64x256xf32> to vector<64x239xf32>
    %49 = tpu.concatenate %47, %48 in 1 : vector<64x17xf32>, vector<64x239xf32> -> vector<64x256xf32>
    %50 = vector.broadcast %24 : vector<1x256xf32> to vector<64x256xf32>
    %51 = arith.mulf %49, %50 : vector<64x256xf32>
    %52 = vector.broadcast %46 : vector<64x1xf32> to vector<64x256xf32>
    %53 = arith.mulf %51, %52 : vector<64x256xf32>
    %54 = arith.addf %40, %53 : vector<64x256xf32>
    %c0_20 = arith.constant 0 : index
    %c64 = arith.constant 64 : index
    %c0_21 = arith.constant 0 : index
    %55 = vector.load %arg4[%c0_20, %c64, %c0_21] : memref<2x576x64xf32, #tpu.memory_space<vmem>>, vector<1x64x64xf32>
    %56 = vector.shape_cast %55 : vector<1x64x64xf32> to vector<64x64xf32>
    %57 = vector.broadcast %39 : vector<1x64xf32> to vector<64x64xf32>
    %58 = arith.mulf %56, %57 : vector<64x64xf32>
    %cst_22 = arith.constant dense<0.000000e+00> : vector<64xf32>
    %59 = vector.multi_reduction <add>, %58, %cst_22 [1] : vector<64x64xf32> to vector<64xf32>
    %60 = vector.shape_cast %59 : vector<64xf32> to vector<64x1xf32>
    %cst_23 = arith.constant 0.000000e+00 : f32
    %61 = vector.broadcast %cst_23 : f32 to vector<64x16xf32>
    %62 = vector.extract_strided_slice %26 {offsets = [0, 0], sizes = [64, 240], strides = [1, 1]} : vector<64x256xf32> to vector<64x240xf32>
    %63 = tpu.concatenate %61, %62 in 1 : vector<64x16xf32>, vector<64x240xf32> -> vector<64x256xf32>
    %64 = vector.broadcast %60 : vector<64x1xf32> to vector<64x256xf32>
    %65 = arith.mulf %63, %64 : vector<64x256xf32>
    %66 = arith.addf %54, %65 : vector<64x256xf32>
    %c0_24 = arith.constant 0 : index
    %c128 = arith.constant 128 : index
    %c0_25 = arith.constant 0 : index
    %67 = vector.load %arg4[%c0_24, %c128, %c0_25] : memref<2x576x64xf32, #tpu.memory_space<vmem>>, vector<1x64x64xf32>
    %68 = vector.shape_cast %67 : vector<1x64x64xf32> to vector<64x64xf32>
    %69 = vector.broadcast %39 : vector<1x64xf32> to vector<64x64xf32>
    %70 = arith.mulf %68, %69 : vector<64x64xf32>
    %cst_26 = arith.constant dense<0.000000e+00> : vector<64xf32>
    %71 = vector.multi_reduction <add>, %70, %cst_26 [1] : vector<64x64xf32> to vector<64xf32>
    %72 = vector.shape_cast %71 : vector<64xf32> to vector<64x1xf32>
    %cst_27 = arith.constant 0.000000e+00 : f32
    %73 = vector.broadcast %cst_27 : f32 to vector<64x15xf32>
    %74 = vector.extract_strided_slice %26 {offsets = [0, 0], sizes = [64, 241], strides = [1, 1]} : vector<64x256xf32> to vector<64x241xf32>
    %75 = tpu.concatenate %73, %74 in 1 : vector<64x15xf32>, vector<64x241xf32> -> vector<64x256xf32>
    %76 = vector.broadcast %20 : vector<1x256xf32> to vector<64x256xf32>
    %77 = arith.mulf %75, %76 : vector<64x256xf32>
    %78 = vector.broadcast %72 : vector<64x1xf32> to vector<64x256xf32>
    %79 = arith.mulf %77, %78 : vector<64x256xf32>
    %80 = arith.addf %66, %79 : vector<64x256xf32>
    %c0_28 = arith.constant 0 : index
    %c192 = arith.constant 192 : index
    %c0_29 = arith.constant 0 : index
    %81 = vector.load %arg4[%c0_28, %c192, %c0_29] : memref<2x576x64xf32, #tpu.memory_space<vmem>>, vector<1x64x64xf32>
    %82 = vector.shape_cast %81 : vector<1x64x64xf32> to vector<64x64xf32>
    %83 = vector.broadcast %39 : vector<1x64xf32> to vector<64x64xf32>
    %84 = arith.mulf %82, %83 : vector<64x64xf32>
    %cst_30 = arith.constant dense<0.000000e+00> : vector<64xf32>
    %85 = vector.multi_reduction <add>, %84, %cst_30 [1] : vector<64x64xf32> to vector<64xf32>
    %86 = vector.shape_cast %85 : vector<64xf32> to vector<64x1xf32>
    %cst_31 = arith.constant 0.000000e+00 : f32
    %87 = vector.broadcast %cst_31 : f32 to vector<64x1xf32>
    %88 = vector.extract_strided_slice %26 {offsets = [0, 0], sizes = [64, 255], strides = [1, 1]} : vector<64x256xf32> to vector<64x255xf32>
    %89 = tpu.concatenate %87, %88 in 1 : vector<64x1xf32>, vector<64x255xf32> -> vector<64x256xf32>
    %90 = vector.broadcast %24 : vector<1x256xf32> to vector<64x256xf32>
    %91 = arith.mulf %89, %90 : vector<64x256xf32>
    %92 = vector.broadcast %86 : vector<64x1xf32> to vector<64x256xf32>
    %93 = arith.mulf %91, %92 : vector<64x256xf32>
    %94 = arith.addf %80, %93 : vector<64x256xf32>
    %c0_32 = arith.constant 0 : index
    %c256 = arith.constant 256 : index
    %c0_33 = arith.constant 0 : index
    %95 = vector.load %arg4[%c0_32, %c256, %c0_33] : memref<2x576x64xf32, #tpu.memory_space<vmem>>, vector<1x64x64xf32>
    %96 = vector.shape_cast %95 : vector<1x64x64xf32> to vector<64x64xf32>
    %97 = vector.broadcast %39 : vector<1x64xf32> to vector<64x64xf32>
    %98 = arith.mulf %96, %97 : vector<64x64xf32>
    %cst_34 = arith.constant dense<0.000000e+00> : vector<64xf32>
    %99 = vector.multi_reduction <add>, %98, %cst_34 [1] : vector<64x64xf32> to vector<64xf32>
    %100 = vector.shape_cast %99 : vector<64xf32> to vector<64x1xf32>
    %101 = vector.broadcast %100 : vector<64x1xf32> to vector<64x256xf32>
    %102 = arith.mulf %26, %101 : vector<64x256xf32>
    %103 = arith.addf %94, %102 : vector<64x256xf32>
    %c0_35 = arith.constant 0 : index
    %c320 = arith.constant 320 : index
    %c0_36 = arith.constant 0 : index
    %104 = vector.load %arg4[%c0_35, %c320, %c0_36] : memref<2x576x64xf32, #tpu.memory_space<vmem>>, vector<1x64x64xf32>
    %105 = vector.shape_cast %104 : vector<1x64x64xf32> to vector<64x64xf32>
    %106 = vector.broadcast %39 : vector<1x64xf32> to vector<64x64xf32>
    %107 = arith.mulf %105, %106 : vector<64x64xf32>
    %cst_37 = arith.constant dense<0.000000e+00> : vector<64xf32>
    %108 = vector.multi_reduction <add>, %107, %cst_37 [1] : vector<64x64xf32> to vector<64xf32>
    %109 = vector.shape_cast %108 : vector<64xf32> to vector<64x1xf32>
    %110 = vector.extract_strided_slice %26 {offsets = [0, 1], sizes = [64, 255], strides = [1, 1]} : vector<64x256xf32> to vector<64x255xf32>
    %cst_38 = arith.constant 0.000000e+00 : f32
    %111 = vector.broadcast %cst_38 : f32 to vector<64x1xf32>
    %112 = tpu.concatenate %110, %111 in 1 : vector<64x255xf32>, vector<64x1xf32> -> vector<64x256xf32>
    %113 = vector.broadcast %20 : vector<1x256xf32> to vector<64x256xf32>
    %114 = arith.mulf %112, %113 : vector<64x256xf32>
    %115 = vector.broadcast %109 : vector<64x1xf32> to vector<64x256xf32>
    %116 = arith.mulf %114, %115 : vector<64x256xf32>
    %117 = arith.addf %103, %116 : vector<64x256xf32>
    %c0_39 = arith.constant 0 : index
    %c384 = arith.constant 384 : index
    %c0_40 = arith.constant 0 : index
    %118 = vector.load %arg4[%c0_39, %c384, %c0_40] : memref<2x576x64xf32, #tpu.memory_space<vmem>>, vector<1x64x64xf32>
    %119 = vector.shape_cast %118 : vector<1x64x64xf32> to vector<64x64xf32>
    %120 = vector.broadcast %39 : vector<1x64xf32> to vector<64x64xf32>
    %121 = arith.mulf %119, %120 : vector<64x64xf32>
    %cst_41 = arith.constant dense<0.000000e+00> : vector<64xf32>
    %122 = vector.multi_reduction <add>, %121, %cst_41 [1] : vector<64x64xf32> to vector<64xf32>
    %123 = vector.shape_cast %122 : vector<64xf32> to vector<64x1xf32>
    %124 = vector.extract_strided_slice %26 {offsets = [0, 15], sizes = [64, 241], strides = [1, 1]} : vector<64x256xf32> to vector<64x241xf32>
    %cst_42 = arith.constant 0.000000e+00 : f32
    %125 = vector.broadcast %cst_42 : f32 to vector<64x15xf32>
    %126 = tpu.concatenate %124, %125 in 1 : vector<64x241xf32>, vector<64x15xf32> -> vector<64x256xf32>
    %127 = vector.broadcast %24 : vector<1x256xf32> to vector<64x256xf32>
    %128 = arith.mulf %126, %127 : vector<64x256xf32>
    %129 = vector.broadcast %123 : vector<64x1xf32> to vector<64x256xf32>
    %130 = arith.mulf %128, %129 : vector<64x256xf32>
    %131 = arith.addf %117, %130 : vector<64x256xf32>
    %c0_43 = arith.constant 0 : index
    %c448 = arith.constant 448 : index
    %c0_44 = arith.constant 0 : index
    %132 = vector.load %arg4[%c0_43, %c448, %c0_44] : memref<2x576x64xf32, #tpu.memory_space<vmem>>, vector<1x64x64xf32>
    %133 = vector.shape_cast %132 : vector<1x64x64xf32> to vector<64x64xf32>
    %134 = vector.broadcast %39 : vector<1x64xf32> to vector<64x64xf32>
    %135 = arith.mulf %133, %134 : vector<64x64xf32>
    %cst_45 = arith.constant dense<0.000000e+00> : vector<64xf32>
    %136 = vector.multi_reduction <add>, %135, %cst_45 [1] : vector<64x64xf32> to vector<64xf32>
    %137 = vector.shape_cast %136 : vector<64xf32> to vector<64x1xf32>
    %138 = vector.extract_strided_slice %26 {offsets = [0, 16], sizes = [64, 240], strides = [1, 1]} : vector<64x256xf32> to vector<64x240xf32>
    %cst_46 = arith.constant 0.000000e+00 : f32
    %139 = vector.broadcast %cst_46 : f32 to vector<64x16xf32>
    %140 = tpu.concatenate %138, %139 in 1 : vector<64x240xf32>, vector<64x16xf32> -> vector<64x256xf32>
    %141 = vector.broadcast %137 : vector<64x1xf32> to vector<64x256xf32>
    %142 = arith.mulf %140, %141 : vector<64x256xf32>
    %143 = arith.addf %131, %142 : vector<64x256xf32>
    %c0_47 = arith.constant 0 : index
    %c512 = arith.constant 512 : index
    %c0_48 = arith.constant 0 : index
    %144 = vector.load %arg4[%c0_47, %c512, %c0_48] : memref<2x576x64xf32, #tpu.memory_space<vmem>>, vector<1x64x64xf32>
    %145 = vector.shape_cast %144 : vector<1x64x64xf32> to vector<64x64xf32>
    %146 = vector.broadcast %39 : vector<1x64xf32> to vector<64x64xf32>
    %147 = arith.mulf %145, %146 : vector<64x64xf32>
    %cst_49 = arith.constant dense<0.000000e+00> : vector<64xf32>
    %148 = vector.multi_reduction <add>, %147, %cst_49 [1] : vector<64x64xf32> to vector<64xf32>
    %149 = vector.shape_cast %148 : vector<64xf32> to vector<64x1xf32>
    %150 = vector.extract_strided_slice %26 {offsets = [0, 17], sizes = [64, 239], strides = [1, 1]} : vector<64x256xf32> to vector<64x239xf32>
    %cst_50 = arith.constant 0.000000e+00 : f32
    %151 = vector.broadcast %cst_50 : f32 to vector<64x17xf32>
    %152 = tpu.concatenate %150, %151 in 1 : vector<64x239xf32>, vector<64x17xf32> -> vector<64x256xf32>
    %153 = vector.broadcast %20 : vector<1x256xf32> to vector<64x256xf32>
    %154 = arith.mulf %152, %153 : vector<64x256xf32>
    %155 = vector.broadcast %149 : vector<64x1xf32> to vector<64x256xf32>
    %156 = arith.mulf %154, %155 : vector<64x256xf32>
    %157 = arith.addf %143, %156 : vector<64x256xf32>
    %cst_51 = arith.constant 0.000000e+00 : f32
    %158 = vector.broadcast %cst_51 : f32 to vector<64x256xf32>
    %159 = arith.cmpf oge, %157, %158 : vector<64x256xf32>
    %cst_52 = arith.constant 1.000000e-01 : f32
    %160 = vector.broadcast %cst_52 : f32 to vector<64x256xf32>
    %161 = arith.mulf %160, %157 : vector<64x256xf32>
    %162 = arith.select %159, %157, %161 : vector<64x256xi1>, vector<64x256xf32>
    %c0_53 = arith.constant 0 : index
    %c0_54 = arith.constant 0 : index
    %c0_55 = arith.constant 0 : index
    %163 = vector.load %arg5[%c0_53, %c0_54, %c0_55] : memref<2x64x1xf32, #tpu.memory_space<vmem>>, vector<1x64x1xf32>
    %164 = vector.shape_cast %163 : vector<1x64x1xf32> to vector<64x1xf32>
    %165 = vector.broadcast %164 : vector<64x1xf32> to vector<64x256xf32>
    %166 = arith.mulf %26, %165 : vector<64x256xf32>
    %cst_56 = arith.constant dense<0.000000e+00> : vector<256xf32>
    %167 = vector.multi_reduction <add>, %166, %cst_56 [0] : vector<64x256xf32> to vector<256xf32>
    %168 = vector.shape_cast %167 : vector<256xf32> to vector<1x256xf32>
    %c0_57 = arith.constant 0 : index
    %c0_58 = arith.constant 0 : index
    %c0_59 = arith.constant 0 : index
    %169 = vector.load %arg6[%c0_57, %c0_58, %c0_59] : memref<2x1x1xf32, #tpu.memory_space<vmem>>, vector<1x1x1xf32>
    %170 = vector.shape_cast %169 : vector<1x1x1xf32> to vector<1x1xf32>
    %171 = vector.broadcast %170 : vector<1x1xf32> to vector<1x256xf32>
    %172 = arith.addf %168, %171 : vector<1x256xf32>
    %173 = arith.negf %172 : vector<1x256xf32>
    %174 = math.exp %173 : vector<1x256xf32>
    %cst_60 = arith.constant 1.000000e+00 : f32
    %175 = vector.broadcast %cst_60 : f32 to vector<1x256xf32>
    %176 = arith.addf %175, %174 : vector<1x256xf32>
    %177 = arith.divf %175, %176 : vector<1x256xf32>
    %178 = vector.broadcast %177 : vector<1x256xf32> to vector<64x256xf32>
    %179 = arith.mulf %162, %178 : vector<64x256xf32>
    %180 = arith.addf %179, %26 : vector<64x256xf32>
    %cst_61 = arith.constant 0.000000e+00 : f32
    %181 = vector.broadcast %cst_61 : f32 to vector<64x256xf32>
    %182 = arith.cmpf oge, %180, %181 : vector<64x256xf32>
    %cst_62 = arith.constant 1.000000e-01 : f32
    %183 = vector.broadcast %cst_62 : f32 to vector<64x256xf32>
    %184 = arith.mulf %183, %180 : vector<64x256xf32>
    %185 = arith.select %182, %180, %184 : vector<64x256xi1>, vector<64x256xf32>
    %cst_63 = arith.constant 0.000000e+00 : f32
    %186 = vector.broadcast %cst_63 : f32 to vector<64x256xf32>
    %cst_64 = arith.constant 0.000000e+00 : f32
    %187 = vector.broadcast %cst_64 : f32 to vector<64x17xf32>
    %188 = vector.extract_strided_slice %185 {offsets = [0, 0], sizes = [64, 239], strides = [1, 1]} : vector<64x256xf32> to vector<64x239xf32>
    %189 = tpu.concatenate %187, %188 in 1 : vector<64x17xf32>, vector<64x239xf32> -> vector<64x256xf32>
    %190 = vector.broadcast %24 : vector<1x256xf32> to vector<64x256xf32>
    %191 = arith.mulf %189, %190 : vector<64x256xf32>
    %192 = arith.truncf %191 : vector<64x256xf32> to vector<64x256xbf16>
    %c0_65 = arith.constant 0 : index
    %c0_66 = arith.constant 0 : index
    %c0_67 = arith.constant 0 : index
    %c0_68 = arith.constant 0 : index
    %193 = vector.load %arg7[%c0_65, %c0_66, %c0_67, %c0_68] : memref<2x9x64x64xbf16, #tpu.memory_space<vmem>>, vector<1x1x64x64xbf16>
    %194 = vector.shape_cast %193 : vector<1x1x64x64xbf16> to vector<64x64xbf16>
    %cst_69 = arith.constant dense<0.000000e+00> : vector<64x256xf32>
    %195 = tpu.matmul %194, %192, %cst_69 {dimension_numbers = #tpu.dot_dimension_numbers<[1], [0], [0], [1], [0, 0, 1, 1], [], []>} : vector<64x64xbf16>, vector<64x256xbf16>, vector<64x256xf32> -> vector<64x256xf32>
    %196 = arith.addf %186, %195 : vector<64x256xf32>
    %cst_70 = arith.constant 0.000000e+00 : f32
    %197 = vector.broadcast %cst_70 : f32 to vector<64x16xf32>
    %198 = vector.extract_strided_slice %185 {offsets = [0, 0], sizes = [64, 240], strides = [1, 1]} : vector<64x256xf32> to vector<64x240xf32>
    %199 = tpu.concatenate %197, %198 in 1 : vector<64x16xf32>, vector<64x240xf32> -> vector<64x256xf32>
    %200 = arith.truncf %199 : vector<64x256xf32> to vector<64x256xbf16>
    %c0_71 = arith.constant 0 : index
    %c1 = arith.constant 1 : index
    %c0_72 = arith.constant 0 : index
    %c0_73 = arith.constant 0 : index
    %201 = vector.load %arg7[%c0_71, %c1, %c0_72, %c0_73] : memref<2x9x64x64xbf16, #tpu.memory_space<vmem>>, vector<1x1x64x64xbf16>
    %202 = vector.shape_cast %201 : vector<1x1x64x64xbf16> to vector<64x64xbf16>
    %cst_74 = arith.constant dense<0.000000e+00> : vector<64x256xf32>
    %203 = tpu.matmul %202, %200, %cst_74 {dimension_numbers = #tpu.dot_dimension_numbers<[1], [0], [0], [1], [0, 0, 1, 1], [], []>} : vector<64x64xbf16>, vector<64x256xbf16>, vector<64x256xf32> -> vector<64x256xf32>
    %204 = arith.addf %196, %203 : vector<64x256xf32>
    %cst_75 = arith.constant 0.000000e+00 : f32
    %205 = vector.broadcast %cst_75 : f32 to vector<64x15xf32>
    %206 = vector.extract_strided_slice %185 {offsets = [0, 0], sizes = [64, 241], strides = [1, 1]} : vector<64x256xf32> to vector<64x241xf32>
    %207 = tpu.concatenate %205, %206 in 1 : vector<64x15xf32>, vector<64x241xf32> -> vector<64x256xf32>
    %208 = vector.broadcast %20 : vector<1x256xf32> to vector<64x256xf32>
    %209 = arith.mulf %207, %208 : vector<64x256xf32>
    %210 = arith.truncf %209 : vector<64x256xf32> to vector<64x256xbf16>
    %c0_76 = arith.constant 0 : index
    %c2 = arith.constant 2 : index
    %c0_77 = arith.constant 0 : index
    %c0_78 = arith.constant 0 : index
    %211 = vector.load %arg7[%c0_76, %c2, %c0_77, %c0_78] : memref<2x9x64x64xbf16, #tpu.memory_space<vmem>>, vector<1x1x64x64xbf16>
    %212 = vector.shape_cast %211 : vector<1x1x64x64xbf16> to vector<64x64xbf16>
    %cst_79 = arith.constant dense<0.000000e+00> : vector<64x256xf32>
    %213 = tpu.matmul %212, %210, %cst_79 {dimension_numbers = #tpu.dot_dimension_numbers<[1], [0], [0], [1], [0, 0, 1, 1], [], []>} : vector<64x64xbf16>, vector<64x256xbf16>, vector<64x256xf32> -> vector<64x256xf32>
    %214 = arith.addf %204, %213 : vector<64x256xf32>
    %cst_80 = arith.constant 0.000000e+00 : f32
    %215 = vector.broadcast %cst_80 : f32 to vector<64x1xf32>
    %216 = vector.extract_strided_slice %185 {offsets = [0, 0], sizes = [64, 255], strides = [1, 1]} : vector<64x256xf32> to vector<64x255xf32>
    %217 = tpu.concatenate %215, %216 in 1 : vector<64x1xf32>, vector<64x255xf32> -> vector<64x256xf32>
    %218 = vector.broadcast %24 : vector<1x256xf32> to vector<64x256xf32>
    %219 = arith.mulf %217, %218 : vector<64x256xf32>
    %220 = arith.truncf %219 : vector<64x256xf32> to vector<64x256xbf16>
    %c0_81 = arith.constant 0 : index
    %c3 = arith.constant 3 : index
    %c0_82 = arith.constant 0 : index
    %c0_83 = arith.constant 0 : index
    %221 = vector.load %arg7[%c0_81, %c3, %c0_82, %c0_83] : memref<2x9x64x64xbf16, #tpu.memory_space<vmem>>, vector<1x1x64x64xbf16>
    %222 = vector.shape_cast %221 : vector<1x1x64x64xbf16> to vector<64x64xbf16>
    %cst_84 = arith.constant dense<0.000000e+00> : vector<64x256xf32>
    %223 = tpu.matmul %222, %220, %cst_84 {dimension_numbers = #tpu.dot_dimension_numbers<[1], [0], [0], [1], [0, 0, 1, 1], [], []>} : vector<64x64xbf16>, vector<64x256xbf16>, vector<64x256xf32> -> vector<64x256xf32>
    %224 = arith.addf %214, %223 : vector<64x256xf32>
    %225 = arith.truncf %185 : vector<64x256xf32> to vector<64x256xbf16>
    %c0_85 = arith.constant 0 : index
    %c4 = arith.constant 4 : index
    %c0_86 = arith.constant 0 : index
    %c0_87 = arith.constant 0 : index
    %226 = vector.load %arg7[%c0_85, %c4, %c0_86, %c0_87] : memref<2x9x64x64xbf16, #tpu.memory_space<vmem>>, vector<1x1x64x64xbf16>
    %227 = vector.shape_cast %226 : vector<1x1x64x64xbf16> to vector<64x64xbf16>
    %cst_88 = arith.constant dense<0.000000e+00> : vector<64x256xf32>
    %228 = tpu.matmul %227, %225, %cst_88 {dimension_numbers = #tpu.dot_dimension_numbers<[1], [0], [0], [1], [0, 0, 1, 1], [], []>} : vector<64x64xbf16>, vector<64x256xbf16>, vector<64x256xf32> -> vector<64x256xf32>
    %229 = arith.addf %224, %228 : vector<64x256xf32>
    %230 = vector.extract_strided_slice %185 {offsets = [0, 1], sizes = [64, 255], strides = [1, 1]} : vector<64x256xf32> to vector<64x255xf32>
    %cst_89 = arith.constant 0.000000e+00 : f32
    %231 = vector.broadcast %cst_89 : f32 to vector<64x1xf32>
    %232 = tpu.concatenate %230, %231 in 1 : vector<64x255xf32>, vector<64x1xf32> -> vector<64x256xf32>
    %233 = vector.broadcast %20 : vector<1x256xf32> to vector<64x256xf32>
    %234 = arith.mulf %232, %233 : vector<64x256xf32>
    %235 = arith.truncf %234 : vector<64x256xf32> to vector<64x256xbf16>
    %c0_90 = arith.constant 0 : index
    %c5 = arith.constant 5 : index
    %c0_91 = arith.constant 0 : index
    %c0_92 = arith.constant 0 : index
    %236 = vector.load %arg7[%c0_90, %c5, %c0_91, %c0_92] : memref<2x9x64x64xbf16, #tpu.memory_space<vmem>>, vector<1x1x64x64xbf16>
    %237 = vector.shape_cast %236 : vector<1x1x64x64xbf16> to vector<64x64xbf16>
    %cst_93 = arith.constant dense<0.000000e+00> : vector<64x256xf32>
    %238 = tpu.matmul %237, %235, %cst_93 {dimension_numbers = #tpu.dot_dimension_numbers<[1], [0], [0], [1], [0, 0, 1, 1], [], []>} : vector<64x64xbf16>, vector<64x256xbf16>, vector<64x256xf32> -> vector<64x256xf32>
    %239 = arith.addf %229, %238 : vector<64x256xf32>
    %240 = vector.extract_strided_slice %185 {offsets = [0, 15], sizes = [64, 241], strides = [1, 1]} : vector<64x256xf32> to vector<64x241xf32>
    %cst_94 = arith.constant 0.000000e+00 : f32
    %241 = vector.broadcast %cst_94 : f32 to vector<64x15xf32>
    %242 = tpu.concatenate %240, %241 in 1 : vector<64x241xf32>, vector<64x15xf32> -> vector<64x256xf32>
    %243 = vector.broadcast %24 : vector<1x256xf32> to vector<64x256xf32>
    %244 = arith.mulf %242, %243 : vector<64x256xf32>
    %245 = arith.truncf %244 : vector<64x256xf32> to vector<64x256xbf16>
    %c0_95 = arith.constant 0 : index
    %c6 = arith.constant 6 : index
    %c0_96 = arith.constant 0 : index
    %c0_97 = arith.constant 0 : index
    %246 = vector.load %arg7[%c0_95, %c6, %c0_96, %c0_97] : memref<2x9x64x64xbf16, #tpu.memory_space<vmem>>, vector<1x1x64x64xbf16>
    %247 = vector.shape_cast %246 : vector<1x1x64x64xbf16> to vector<64x64xbf16>
    %cst_98 = arith.constant dense<0.000000e+00> : vector<64x256xf32>
    %248 = tpu.matmul %247, %245, %cst_98 {dimension_numbers = #tpu.dot_dimension_numbers<[1], [0], [0], [1], [0, 0, 1, 1], [], []>} : vector<64x64xbf16>, vector<64x256xbf16>, vector<64x256xf32> -> vector<64x256xf32>
    %249 = arith.addf %239, %248 : vector<64x256xf32>
    %250 = vector.extract_strided_slice %185 {offsets = [0, 16], sizes = [64, 240], strides = [1, 1]} : vector<64x256xf32> to vector<64x240xf32>
    %cst_99 = arith.constant 0.000000e+00 : f32
    %251 = vector.broadcast %cst_99 : f32 to vector<64x16xf32>
    %252 = tpu.concatenate %250, %251 in 1 : vector<64x240xf32>, vector<64x16xf32> -> vector<64x256xf32>
    %253 = arith.truncf %252 : vector<64x256xf32> to vector<64x256xbf16>
    %c0_100 = arith.constant 0 : index
    %c7 = arith.constant 7 : index
    %c0_101 = arith.constant 0 : index
    %c0_102 = arith.constant 0 : index
    %254 = vector.load %arg7[%c0_100, %c7, %c0_101, %c0_102] : memref<2x9x64x64xbf16, #tpu.memory_space<vmem>>, vector<1x1x64x64xbf16>
    %255 = vector.shape_cast %254 : vector<1x1x64x64xbf16> to vector<64x64xbf16>
    %cst_103 = arith.constant dense<0.000000e+00> : vector<64x256xf32>
    %256 = tpu.matmul %255, %253, %cst_103 {dimension_numbers = #tpu.dot_dimension_numbers<[1], [0], [0], [1], [0, 0, 1, 1], [], []>} : vector<64x64xbf16>, vector<64x256xbf16>, vector<64x256xf32> -> vector<64x256xf32>
    %257 = arith.addf %249, %256 : vector<64x256xf32>
    %258 = vector.extract_strided_slice %185 {offsets = [0, 17], sizes = [64, 239], strides = [1, 1]} : vector<64x256xf32> to vector<64x239xf32>
    %cst_104 = arith.constant 0.000000e+00 : f32
    %259 = vector.broadcast %cst_104 : f32 to vector<64x17xf32>
    %260 = tpu.concatenate %258, %259 in 1 : vector<64x239xf32>, vector<64x17xf32> -> vector<64x256xf32>
    %261 = vector.broadcast %20 : vector<1x256xf32> to vector<64x256xf32>
    %262 = arith.mulf %260, %261 : vector<64x256xf32>
    %263 = arith.truncf %262 : vector<64x256xf32> to vector<64x256xbf16>
    %c0_105 = arith.constant 0 : index
    %c8 = arith.constant 8 : index
    %c0_106 = arith.constant 0 : index
    %c0_107 = arith.constant 0 : index
    %264 = vector.load %arg7[%c0_105, %c8, %c0_106, %c0_107] : memref<2x9x64x64xbf16, #tpu.memory_space<vmem>>, vector<1x1x64x64xbf16>
    %265 = vector.shape_cast %264 : vector<1x1x64x64xbf16> to vector<64x64xbf16>
    %cst_108 = arith.constant dense<0.000000e+00> : vector<64x256xf32>
    %266 = tpu.matmul %265, %263, %cst_108 {dimension_numbers = #tpu.dot_dimension_numbers<[1], [0], [0], [1], [0, 0, 1, 1], [], []>} : vector<64x64xbf16>, vector<64x256xbf16>, vector<64x256xf32> -> vector<64x256xf32>
    %267 = arith.addf %257, %266 : vector<64x256xf32>
    %c0_109 = arith.constant 0 : index
    %c0_110 = arith.constant 0 : index
    %c0_111 = arith.constant 0 : index
    %268 = vector.load %arg8[%c0_109, %c0_110, %c0_111] : memref<2x64x1xf32, #tpu.memory_space<vmem>>, vector<1x64x1xf32>
    %269 = vector.shape_cast %268 : vector<1x64x1xf32> to vector<64x1xf32>
    %270 = vector.broadcast %269 : vector<64x1xf32> to vector<64x256xf32>
    %271 = arith.addf %267, %270 : vector<64x256xf32>
    %cst_112 = arith.constant 0.000000e+00 : f32
    %272 = vector.broadcast %cst_112 : f32 to vector<64x256xf32>
    %273 = arith.cmpf oge, %271, %272 : vector<64x256xf32>
    %cst_113 = arith.constant 1.000000e-01 : f32
    %274 = vector.broadcast %cst_113 : f32 to vector<64x256xf32>
    %275 = arith.mulf %274, %271 : vector<64x256xf32>
    %276 = arith.select %273, %271, %275 : vector<64x256xi1>, vector<64x256xf32>
    %c1_114 = arith.constant 1 : index
    %c0_115 = arith.constant 0 : index
    %c0_116 = arith.constant 0 : index
    %277 = vector.load %arg3[%c1_114, %c0_115, %c0_116] : memref<2x64x64xf32, #tpu.memory_space<vmem>>, vector<1x64x64xf32>
    %278 = vector.shape_cast %277 : vector<1x64x64xf32> to vector<64x64xf32>
    %c0_117 = arith.constant 0 : index
    %c0_118 = arith.constant 0 : index
    %c0_119 = arith.constant 0 : index
    %279 = vector.load %arg1[%c0_117, %c0_118, %c0_119] : memref<1x64x1xf32, #tpu.memory_space<vmem>>, vector<1x64x1xf32>
    %280 = vector.shape_cast %279 : vector<1x64x1xf32> to vector<64x1xf32>
    %281 = vector.broadcast %280 : vector<64x1xf32> to vector<64x64xf32>
    %282 = arith.mulf %278, %281 : vector<64x64xf32>
    %cst_120 = arith.constant dense<0.000000e+00> : vector<64xf32>
    %283 = vector.multi_reduction <add>, %282, %cst_120 [0] : vector<64x64xf32> to vector<64xf32>
    %284 = vector.shape_cast %283 : vector<64xf32> to vector<1x64xf32>
    %cst_121 = arith.constant 0.000000e+00 : f32
    %285 = vector.broadcast %cst_121 : f32 to vector<1x64xf32>
    %286 = arith.cmpf oge, %284, %285 : vector<1x64xf32>
    %cst_122 = arith.constant 1.000000e-01 : f32
    %287 = vector.broadcast %cst_122 : f32 to vector<1x64xf32>
    %288 = arith.mulf %287, %284 : vector<1x64xf32>
    %289 = arith.select %286, %284, %288 : vector<1x64xi1>, vector<1x64xf32>
    %cst_123 = arith.constant 0.000000e+00 : f32
    %290 = vector.broadcast %cst_123 : f32 to vector<64x256xf32>
    %c1_124 = arith.constant 1 : index
    %c0_125 = arith.constant 0 : index
    %c0_126 = arith.constant 0 : index
    %291 = vector.load %arg4[%c1_124, %c0_125, %c0_126] : memref<2x576x64xf32, #tpu.memory_space<vmem>>, vector<1x64x64xf32>
    %292 = vector.shape_cast %291 : vector<1x64x64xf32> to vector<64x64xf32>
    %293 = vector.broadcast %289 : vector<1x64xf32> to vector<64x64xf32>
    %294 = arith.mulf %292, %293 : vector<64x64xf32>
    %cst_127 = arith.constant dense<0.000000e+00> : vector<64xf32>
    %295 = vector.multi_reduction <add>, %294, %cst_127 [1] : vector<64x64xf32> to vector<64xf32>
    %296 = vector.shape_cast %295 : vector<64xf32> to vector<64x1xf32>
    %cst_128 = arith.constant 0.000000e+00 : f32
    %297 = vector.broadcast %cst_128 : f32 to vector<64x17xf32>
    %298 = vector.extract_strided_slice %276 {offsets = [0, 0], sizes = [64, 239], strides = [1, 1]} : vector<64x256xf32> to vector<64x239xf32>
    %299 = tpu.concatenate %297, %298 in 1 : vector<64x17xf32>, vector<64x239xf32> -> vector<64x256xf32>
    %300 = vector.broadcast %24 : vector<1x256xf32> to vector<64x256xf32>
    %301 = arith.mulf %299, %300 : vector<64x256xf32>
    %302 = vector.broadcast %296 : vector<64x1xf32> to vector<64x256xf32>
    %303 = arith.mulf %301, %302 : vector<64x256xf32>
    %304 = arith.addf %290, %303 : vector<64x256xf32>
    %c1_129 = arith.constant 1 : index
    %c64_130 = arith.constant 64 : index
    %c0_131 = arith.constant 0 : index
    %305 = vector.load %arg4[%c1_129, %c64_130, %c0_131] : memref<2x576x64xf32, #tpu.memory_space<vmem>>, vector<1x64x64xf32>
    %306 = vector.shape_cast %305 : vector<1x64x64xf32> to vector<64x64xf32>
    %307 = vector.broadcast %289 : vector<1x64xf32> to vector<64x64xf32>
    %308 = arith.mulf %306, %307 : vector<64x64xf32>
    %cst_132 = arith.constant dense<0.000000e+00> : vector<64xf32>
    %309 = vector.multi_reduction <add>, %308, %cst_132 [1] : vector<64x64xf32> to vector<64xf32>
    %310 = vector.shape_cast %309 : vector<64xf32> to vector<64x1xf32>
    %cst_133 = arith.constant 0.000000e+00 : f32
    %311 = vector.broadcast %cst_133 : f32 to vector<64x16xf32>
    %312 = vector.extract_strided_slice %276 {offsets = [0, 0], sizes = [64, 240], strides = [1, 1]} : vector<64x256xf32> to vector<64x240xf32>
    %313 = tpu.concatenate %311, %312 in 1 : vector<64x16xf32>, vector<64x240xf32> -> vector<64x256xf32>
    %314 = vector.broadcast %310 : vector<64x1xf32> to vector<64x256xf32>
    %315 = arith.mulf %313, %314 : vector<64x256xf32>
    %316 = arith.addf %304, %315 : vector<64x256xf32>
    %c1_134 = arith.constant 1 : index
    %c128_135 = arith.constant 128 : index
    %c0_136 = arith.constant 0 : index
    %317 = vector.load %arg4[%c1_134, %c128_135, %c0_136] : memref<2x576x64xf32, #tpu.memory_space<vmem>>, vector<1x64x64xf32>
    %318 = vector.shape_cast %317 : vector<1x64x64xf32> to vector<64x64xf32>
    %319 = vector.broadcast %289 : vector<1x64xf32> to vector<64x64xf32>
    %320 = arith.mulf %318, %319 : vector<64x64xf32>
    %cst_137 = arith.constant dense<0.000000e+00> : vector<64xf32>
    %321 = vector.multi_reduction <add>, %320, %cst_137 [1] : vector<64x64xf32> to vector<64xf32>
    %322 = vector.shape_cast %321 : vector<64xf32> to vector<64x1xf32>
    %cst_138 = arith.constant 0.000000e+00 : f32
    %323 = vector.broadcast %cst_138 : f32 to vector<64x15xf32>
    %324 = vector.extract_strided_slice %276 {offsets = [0, 0], sizes = [64, 241], strides = [1, 1]} : vector<64x256xf32> to vector<64x241xf32>
    %325 = tpu.concatenate %323, %324 in 1 : vector<64x15xf32>, vector<64x241xf32> -> vector<64x256xf32>
    %326 = vector.broadcast %20 : vector<1x256xf32> to vector<64x256xf32>
    %327 = arith.mulf %325, %326 : vector<64x256xf32>
    %328 = vector.broadcast %322 : vector<64x1xf32> to vector<64x256xf32>
    %329 = arith.mulf %327, %328 : vector<64x256xf32>
    %330 = arith.addf %316, %329 : vector<64x256xf32>
    %c1_139 = arith.constant 1 : index
    %c192_140 = arith.constant 192 : index
    %c0_141 = arith.constant 0 : index
    %331 = vector.load %arg4[%c1_139, %c192_140, %c0_141] : memref<2x576x64xf32, #tpu.memory_space<vmem>>, vector<1x64x64xf32>
    %332 = vector.shape_cast %331 : vector<1x64x64xf32> to vector<64x64xf32>
    %333 = vector.broadcast %289 : vector<1x64xf32> to vector<64x64xf32>
    %334 = arith.mulf %332, %333 : vector<64x64xf32>
    %cst_142 = arith.constant dense<0.000000e+00> : vector<64xf32>
    %335 = vector.multi_reduction <add>, %334, %cst_142 [1] : vector<64x64xf32> to vector<64xf32>
    %336 = vector.shape_cast %335 : vector<64xf32> to vector<64x1xf32>
    %cst_143 = arith.constant 0.000000e+00 : f32
    %337 = vector.broadcast %cst_143 : f32 to vector<64x1xf32>
    %338 = vector.extract_strided_slice %276 {offsets = [0, 0], sizes = [64, 255], strides = [1, 1]} : vector<64x256xf32> to vector<64x255xf32>
    %339 = tpu.concatenate %337, %338 in 1 : vector<64x1xf32>, vector<64x255xf32> -> vector<64x256xf32>
    %340 = vector.broadcast %24 : vector<1x256xf32> to vector<64x256xf32>
    %341 = arith.mulf %339, %340 : vector<64x256xf32>
    %342 = vector.broadcast %336 : vector<64x1xf32> to vector<64x256xf32>
    %343 = arith.mulf %341, %342 : vector<64x256xf32>
    %344 = arith.addf %330, %343 : vector<64x256xf32>
    %c1_144 = arith.constant 1 : index
    %c256_145 = arith.constant 256 : index
    %c0_146 = arith.constant 0 : index
    %345 = vector.load %arg4[%c1_144, %c256_145, %c0_146] : memref<2x576x64xf32, #tpu.memory_space<vmem>>, vector<1x64x64xf32>
    %346 = vector.shape_cast %345 : vector<1x64x64xf32> to vector<64x64xf32>
    %347 = vector.broadcast %289 : vector<1x64xf32> to vector<64x64xf32>
    %348 = arith.mulf %346, %347 : vector<64x64xf32>
    %cst_147 = arith.constant dense<0.000000e+00> : vector<64xf32>
    %349 = vector.multi_reduction <add>, %348, %cst_147 [1] : vector<64x64xf32> to vector<64xf32>
    %350 = vector.shape_cast %349 : vector<64xf32> to vector<64x1xf32>
    %351 = vector.broadcast %350 : vector<64x1xf32> to vector<64x256xf32>
    %352 = arith.mulf %276, %351 : vector<64x256xf32>
    %353 = arith.addf %344, %352 : vector<64x256xf32>
    %c1_148 = arith.constant 1 : index
    %c320_149 = arith.constant 320 : index
    %c0_150 = arith.constant 0 : index
    %354 = vector.load %arg4[%c1_148, %c320_149, %c0_150] : memref<2x576x64xf32, #tpu.memory_space<vmem>>, vector<1x64x64xf32>
    %355 = vector.shape_cast %354 : vector<1x64x64xf32> to vector<64x64xf32>
    %356 = vector.broadcast %289 : vector<1x64xf32> to vector<64x64xf32>
    %357 = arith.mulf %355, %356 : vector<64x64xf32>
    %cst_151 = arith.constant dense<0.000000e+00> : vector<64xf32>
    %358 = vector.multi_reduction <add>, %357, %cst_151 [1] : vector<64x64xf32> to vector<64xf32>
    %359 = vector.shape_cast %358 : vector<64xf32> to vector<64x1xf32>
    %360 = vector.extract_strided_slice %276 {offsets = [0, 1], sizes = [64, 255], strides = [1, 1]} : vector<64x256xf32> to vector<64x255xf32>
    %cst_152 = arith.constant 0.000000e+00 : f32
    %361 = vector.broadcast %cst_152 : f32 to vector<64x1xf32>
    %362 = tpu.concatenate %360, %361 in 1 : vector<64x255xf32>, vector<64x1xf32> -> vector<64x256xf32>
    %363 = vector.broadcast %20 : vector<1x256xf32> to vector<64x256xf32>
    %364 = arith.mulf %362, %363 : vector<64x256xf32>
    %365 = vector.broadcast %359 : vector<64x1xf32> to vector<64x256xf32>
    %366 = arith.mulf %364, %365 : vector<64x256xf32>
    %367 = arith.addf %353, %366 : vector<64x256xf32>
    %c1_153 = arith.constant 1 : index
    %c384_154 = arith.constant 384 : index
    %c0_155 = arith.constant 0 : index
    %368 = vector.load %arg4[%c1_153, %c384_154, %c0_155] : memref<2x576x64xf32, #tpu.memory_space<vmem>>, vector<1x64x64xf32>
    %369 = vector.shape_cast %368 : vector<1x64x64xf32> to vector<64x64xf32>
    %370 = vector.broadcast %289 : vector<1x64xf32> to vector<64x64xf32>
    %371 = arith.mulf %369, %370 : vector<64x64xf32>
    %cst_156 = arith.constant dense<0.000000e+00> : vector<64xf32>
    %372 = vector.multi_reduction <add>, %371, %cst_156 [1] : vector<64x64xf32> to vector<64xf32>
    %373 = vector.shape_cast %372 : vector<64xf32> to vector<64x1xf32>
    %374 = vector.extract_strided_slice %276 {offsets = [0, 15], sizes = [64, 241], strides = [1, 1]} : vector<64x256xf32> to vector<64x241xf32>
    %cst_157 = arith.constant 0.000000e+00 : f32
    %375 = vector.broadcast %cst_157 : f32 to vector<64x15xf32>
    %376 = tpu.concatenate %374, %375 in 1 : vector<64x241xf32>, vector<64x15xf32> -> vector<64x256xf32>
    %377 = vector.broadcast %24 : vector<1x256xf32> to vector<64x256xf32>
    %378 = arith.mulf %376, %377 : vector<64x256xf32>
    %379 = vector.broadcast %373 : vector<64x1xf32> to vector<64x256xf32>
    %380 = arith.mulf %378, %379 : vector<64x256xf32>
    %381 = arith.addf %367, %380 : vector<64x256xf32>
    %c1_158 = arith.constant 1 : index
    %c448_159 = arith.constant 448 : index
    %c0_160 = arith.constant 0 : index
    %382 = vector.load %arg4[%c1_158, %c448_159, %c0_160] : memref<2x576x64xf32, #tpu.memory_space<vmem>>, vector<1x64x64xf32>
    %383 = vector.shape_cast %382 : vector<1x64x64xf32> to vector<64x64xf32>
    %384 = vector.broadcast %289 : vector<1x64xf32> to vector<64x64xf32>
    %385 = arith.mulf %383, %384 : vector<64x64xf32>
    %cst_161 = arith.constant dense<0.000000e+00> : vector<64xf32>
    %386 = vector.multi_reduction <add>, %385, %cst_161 [1] : vector<64x64xf32> to vector<64xf32>
    %387 = vector.shape_cast %386 : vector<64xf32> to vector<64x1xf32>
    %388 = vector.extract_strided_slice %276 {offsets = [0, 16], sizes = [64, 240], strides = [1, 1]} : vector<64x256xf32> to vector<64x240xf32>
    %cst_162 = arith.constant 0.000000e+00 : f32
    %389 = vector.broadcast %cst_162 : f32 to vector<64x16xf32>
    %390 = tpu.concatenate %388, %389 in 1 : vector<64x240xf32>, vector<64x16xf32> -> vector<64x256xf32>
    %391 = vector.broadcast %387 : vector<64x1xf32> to vector<64x256xf32>
    %392 = arith.mulf %390, %391 : vector<64x256xf32>
    %393 = arith.addf %381, %392 : vector<64x256xf32>
    %c1_163 = arith.constant 1 : index
    %c512_164 = arith.constant 512 : index
    %c0_165 = arith.constant 0 : index
    %394 = vector.load %arg4[%c1_163, %c512_164, %c0_165] : memref<2x576x64xf32, #tpu.memory_space<vmem>>, vector<1x64x64xf32>
    %395 = vector.shape_cast %394 : vector<1x64x64xf32> to vector<64x64xf32>
    %396 = vector.broadcast %289 : vector<1x64xf32> to vector<64x64xf32>
    %397 = arith.mulf %395, %396 : vector<64x64xf32>
    %cst_166 = arith.constant dense<0.000000e+00> : vector<64xf32>
    %398 = vector.multi_reduction <add>, %397, %cst_166 [1] : vector<64x64xf32> to vector<64xf32>
    %399 = vector.shape_cast %398 : vector<64xf32> to vector<64x1xf32>
    %400 = vector.extract_strided_slice %276 {offsets = [0, 17], sizes = [64, 239], strides = [1, 1]} : vector<64x256xf32> to vector<64x239xf32>
    %cst_167 = arith.constant 0.000000e+00 : f32
    %401 = vector.broadcast %cst_167 : f32 to vector<64x17xf32>
    %402 = tpu.concatenate %400, %401 in 1 : vector<64x239xf32>, vector<64x17xf32> -> vector<64x256xf32>
    %403 = vector.broadcast %20 : vector<1x256xf32> to vector<64x256xf32>
    %404 = arith.mulf %402, %403 : vector<64x256xf32>
    %405 = vector.broadcast %399 : vector<64x1xf32> to vector<64x256xf32>
    %406 = arith.mulf %404, %405 : vector<64x256xf32>
    %407 = arith.addf %393, %406 : vector<64x256xf32>
    %cst_168 = arith.constant 0.000000e+00 : f32
    %408 = vector.broadcast %cst_168 : f32 to vector<64x256xf32>
    %409 = arith.cmpf oge, %407, %408 : vector<64x256xf32>
    %cst_169 = arith.constant 1.000000e-01 : f32
    %410 = vector.broadcast %cst_169 : f32 to vector<64x256xf32>
    %411 = arith.mulf %410, %407 : vector<64x256xf32>
    %412 = arith.select %409, %407, %411 : vector<64x256xi1>, vector<64x256xf32>
    %c1_170 = arith.constant 1 : index
    %c0_171 = arith.constant 0 : index
    %c0_172 = arith.constant 0 : index
    %413 = vector.load %arg5[%c1_170, %c0_171, %c0_172] : memref<2x64x1xf32, #tpu.memory_space<vmem>>, vector<1x64x1xf32>
    %414 = vector.shape_cast %413 : vector<1x64x1xf32> to vector<64x1xf32>
    %415 = vector.broadcast %414 : vector<64x1xf32> to vector<64x256xf32>
    %416 = arith.mulf %276, %415 : vector<64x256xf32>
    %cst_173 = arith.constant dense<0.000000e+00> : vector<256xf32>
    %417 = vector.multi_reduction <add>, %416, %cst_173 [0] : vector<64x256xf32> to vector<256xf32>
    %418 = vector.shape_cast %417 : vector<256xf32> to vector<1x256xf32>
    %c1_174 = arith.constant 1 : index
    %c0_175 = arith.constant 0 : index
    %c0_176 = arith.constant 0 : index
    %419 = vector.load %arg6[%c1_174, %c0_175, %c0_176] : memref<2x1x1xf32, #tpu.memory_space<vmem>>, vector<1x1x1xf32>
    %420 = vector.shape_cast %419 : vector<1x1x1xf32> to vector<1x1xf32>
    %421 = vector.broadcast %420 : vector<1x1xf32> to vector<1x256xf32>
    %422 = arith.addf %418, %421 : vector<1x256xf32>
    %423 = arith.negf %422 : vector<1x256xf32>
    %424 = math.exp %423 : vector<1x256xf32>
    %cst_177 = arith.constant 1.000000e+00 : f32
    %425 = vector.broadcast %cst_177 : f32 to vector<1x256xf32>
    %426 = arith.addf %425, %424 : vector<1x256xf32>
    %427 = arith.divf %425, %426 : vector<1x256xf32>
    %428 = vector.broadcast %427 : vector<1x256xf32> to vector<64x256xf32>
    %429 = arith.mulf %412, %428 : vector<64x256xf32>
    %430 = arith.addf %429, %276 : vector<64x256xf32>
    %cst_178 = arith.constant 0.000000e+00 : f32
    %431 = vector.broadcast %cst_178 : f32 to vector<64x256xf32>
    %432 = arith.cmpf oge, %430, %431 : vector<64x256xf32>
    %cst_179 = arith.constant 1.000000e-01 : f32
    %433 = vector.broadcast %cst_179 : f32 to vector<64x256xf32>
    %434 = arith.mulf %433, %430 : vector<64x256xf32>
    %435 = arith.select %432, %430, %434 : vector<64x256xi1>, vector<64x256xf32>
    %cst_180 = arith.constant 0.000000e+00 : f32
    %436 = vector.broadcast %cst_180 : f32 to vector<64x256xf32>
    %cst_181 = arith.constant 0.000000e+00 : f32
    %437 = vector.broadcast %cst_181 : f32 to vector<64x17xf32>
    %438 = vector.extract_strided_slice %435 {offsets = [0, 0], sizes = [64, 239], strides = [1, 1]} : vector<64x256xf32> to vector<64x239xf32>
    %439 = tpu.concatenate %437, %438 in 1 : vector<64x17xf32>, vector<64x239xf32> -> vector<64x256xf32>
    %440 = vector.broadcast %24 : vector<1x256xf32> to vector<64x256xf32>
    %441 = arith.mulf %439, %440 : vector<64x256xf32>
    %442 = arith.truncf %441 : vector<64x256xf32> to vector<64x256xbf16>
    %c1_182 = arith.constant 1 : index
    %c0_183 = arith.constant 0 : index
    %c0_184 = arith.constant 0 : index
    %c0_185 = arith.constant 0 : index
    %443 = vector.load %arg7[%c1_182, %c0_183, %c0_184, %c0_185] : memref<2x9x64x64xbf16, #tpu.memory_space<vmem>>, vector<1x1x64x64xbf16>
    %444 = vector.shape_cast %443 : vector<1x1x64x64xbf16> to vector<64x64xbf16>
    %cst_186 = arith.constant dense<0.000000e+00> : vector<64x256xf32>
    %445 = tpu.matmul %444, %442, %cst_186 {dimension_numbers = #tpu.dot_dimension_numbers<[1], [0], [0], [1], [0, 0, 1, 1], [], []>} : vector<64x64xbf16>, vector<64x256xbf16>, vector<64x256xf32> -> vector<64x256xf32>
    %446 = arith.addf %436, %445 : vector<64x256xf32>
    %cst_187 = arith.constant 0.000000e+00 : f32
    %447 = vector.broadcast %cst_187 : f32 to vector<64x16xf32>
    %448 = vector.extract_strided_slice %435 {offsets = [0, 0], sizes = [64, 240], strides = [1, 1]} : vector<64x256xf32> to vector<64x240xf32>
    %449 = tpu.concatenate %447, %448 in 1 : vector<64x16xf32>, vector<64x240xf32> -> vector<64x256xf32>
    %450 = arith.truncf %449 : vector<64x256xf32> to vector<64x256xbf16>
    %c1_188 = arith.constant 1 : index
    %c1_189 = arith.constant 1 : index
    %c0_190 = arith.constant 0 : index
    %c0_191 = arith.constant 0 : index
    %451 = vector.load %arg7[%c1_188, %c1_189, %c0_190, %c0_191] : memref<2x9x64x64xbf16, #tpu.memory_space<vmem>>, vector<1x1x64x64xbf16>
    %452 = vector.shape_cast %451 : vector<1x1x64x64xbf16> to vector<64x64xbf16>
    %cst_192 = arith.constant dense<0.000000e+00> : vector<64x256xf32>
    %453 = tpu.matmul %452, %450, %cst_192 {dimension_numbers = #tpu.dot_dimension_numbers<[1], [0], [0], [1], [0, 0, 1, 1], [], []>} : vector<64x64xbf16>, vector<64x256xbf16>, vector<64x256xf32> -> vector<64x256xf32>
    %454 = arith.addf %446, %453 : vector<64x256xf32>
    %cst_193 = arith.constant 0.000000e+00 : f32
    %455 = vector.broadcast %cst_193 : f32 to vector<64x15xf32>
    %456 = vector.extract_strided_slice %435 {offsets = [0, 0], sizes = [64, 241], strides = [1, 1]} : vector<64x256xf32> to vector<64x241xf32>
    %457 = tpu.concatenate %455, %456 in 1 : vector<64x15xf32>, vector<64x241xf32> -> vector<64x256xf32>
    %458 = vector.broadcast %20 : vector<1x256xf32> to vector<64x256xf32>
    %459 = arith.mulf %457, %458 : vector<64x256xf32>
    %460 = arith.truncf %459 : vector<64x256xf32> to vector<64x256xbf16>
    %c1_194 = arith.constant 1 : index
    %c2_195 = arith.constant 2 : index
    %c0_196 = arith.constant 0 : index
    %c0_197 = arith.constant 0 : index
    %461 = vector.load %arg7[%c1_194, %c2_195, %c0_196, %c0_197] : memref<2x9x64x64xbf16, #tpu.memory_space<vmem>>, vector<1x1x64x64xbf16>
    %462 = vector.shape_cast %461 : vector<1x1x64x64xbf16> to vector<64x64xbf16>
    %cst_198 = arith.constant dense<0.000000e+00> : vector<64x256xf32>
    %463 = tpu.matmul %462, %460, %cst_198 {dimension_numbers = #tpu.dot_dimension_numbers<[1], [0], [0], [1], [0, 0, 1, 1], [], []>} : vector<64x64xbf16>, vector<64x256xbf16>, vector<64x256xf32> -> vector<64x256xf32>
    %464 = arith.addf %454, %463 : vector<64x256xf32>
    %cst_199 = arith.constant 0.000000e+00 : f32
    %465 = vector.broadcast %cst_199 : f32 to vector<64x1xf32>
    %466 = vector.extract_strided_slice %435 {offsets = [0, 0], sizes = [64, 255], strides = [1, 1]} : vector<64x256xf32> to vector<64x255xf32>
    %467 = tpu.concatenate %465, %466 in 1 : vector<64x1xf32>, vector<64x255xf32> -> vector<64x256xf32>
    %468 = vector.broadcast %24 : vector<1x256xf32> to vector<64x256xf32>
    %469 = arith.mulf %467, %468 : vector<64x256xf32>
    %470 = arith.truncf %469 : vector<64x256xf32> to vector<64x256xbf16>
    %c1_200 = arith.constant 1 : index
    %c3_201 = arith.constant 3 : index
    %c0_202 = arith.constant 0 : index
    %c0_203 = arith.constant 0 : index
    %471 = vector.load %arg7[%c1_200, %c3_201, %c0_202, %c0_203] : memref<2x9x64x64xbf16, #tpu.memory_space<vmem>>, vector<1x1x64x64xbf16>
    %472 = vector.shape_cast %471 : vector<1x1x64x64xbf16> to vector<64x64xbf16>
    %cst_204 = arith.constant dense<0.000000e+00> : vector<64x256xf32>
    %473 = tpu.matmul %472, %470, %cst_204 {dimension_numbers = #tpu.dot_dimension_numbers<[1], [0], [0], [1], [0, 0, 1, 1], [], []>} : vector<64x64xbf16>, vector<64x256xbf16>, vector<64x256xf32> -> vector<64x256xf32>
    %474 = arith.addf %464, %473 : vector<64x256xf32>
    %475 = arith.truncf %435 : vector<64x256xf32> to vector<64x256xbf16>
    %c1_205 = arith.constant 1 : index
    %c4_206 = arith.constant 4 : index
    %c0_207 = arith.constant 0 : index
    %c0_208 = arith.constant 0 : index
    %476 = vector.load %arg7[%c1_205, %c4_206, %c0_207, %c0_208] : memref<2x9x64x64xbf16, #tpu.memory_space<vmem>>, vector<1x1x64x64xbf16>
    %477 = vector.shape_cast %476 : vector<1x1x64x64xbf16> to vector<64x64xbf16>
    %cst_209 = arith.constant dense<0.000000e+00> : vector<64x256xf32>
    %478 = tpu.matmul %477, %475, %cst_209 {dimension_numbers = #tpu.dot_dimension_numbers<[1], [0], [0], [1], [0, 0, 1, 1], [], []>} : vector<64x64xbf16>, vector<64x256xbf16>, vector<64x256xf32> -> vector<64x256xf32>
    %479 = arith.addf %474, %478 : vector<64x256xf32>
    %480 = vector.extract_strided_slice %435 {offsets = [0, 1], sizes = [64, 255], strides = [1, 1]} : vector<64x256xf32> to vector<64x255xf32>
    %cst_210 = arith.constant 0.000000e+00 : f32
    %481 = vector.broadcast %cst_210 : f32 to vector<64x1xf32>
    %482 = tpu.concatenate %480, %481 in 1 : vector<64x255xf32>, vector<64x1xf32> -> vector<64x256xf32>
    %483 = vector.broadcast %20 : vector<1x256xf32> to vector<64x256xf32>
    %484 = arith.mulf %482, %483 : vector<64x256xf32>
    %485 = arith.truncf %484 : vector<64x256xf32> to vector<64x256xbf16>
    %c1_211 = arith.constant 1 : index
    %c5_212 = arith.constant 5 : index
    %c0_213 = arith.constant 0 : index
    %c0_214 = arith.constant 0 : index
    %486 = vector.load %arg7[%c1_211, %c5_212, %c0_213, %c0_214] : memref<2x9x64x64xbf16, #tpu.memory_space<vmem>>, vector<1x1x64x64xbf16>
    %487 = vector.shape_cast %486 : vector<1x1x64x64xbf16> to vector<64x64xbf16>
    %cst_215 = arith.constant dense<0.000000e+00> : vector<64x256xf32>
    %488 = tpu.matmul %487, %485, %cst_215 {dimension_numbers = #tpu.dot_dimension_numbers<[1], [0], [0], [1], [0, 0, 1, 1], [], []>} : vector<64x64xbf16>, vector<64x256xbf16>, vector<64x256xf32> -> vector<64x256xf32>
    %489 = arith.addf %479, %488 : vector<64x256xf32>
    %490 = vector.extract_strided_slice %435 {offsets = [0, 15], sizes = [64, 241], strides = [1, 1]} : vector<64x256xf32> to vector<64x241xf32>
    %cst_216 = arith.constant 0.000000e+00 : f32
    %491 = vector.broadcast %cst_216 : f32 to vector<64x15xf32>
    %492 = tpu.concatenate %490, %491 in 1 : vector<64x241xf32>, vector<64x15xf32> -> vector<64x256xf32>
    %493 = vector.broadcast %24 : vector<1x256xf32> to vector<64x256xf32>
    %494 = arith.mulf %492, %493 : vector<64x256xf32>
    %495 = arith.truncf %494 : vector<64x256xf32> to vector<64x256xbf16>
    %c1_217 = arith.constant 1 : index
    %c6_218 = arith.constant 6 : index
    %c0_219 = arith.constant 0 : index
    %c0_220 = arith.constant 0 : index
    %496 = vector.load %arg7[%c1_217, %c6_218, %c0_219, %c0_220] : memref<2x9x64x64xbf16, #tpu.memory_space<vmem>>, vector<1x1x64x64xbf16>
    %497 = vector.shape_cast %496 : vector<1x1x64x64xbf16> to vector<64x64xbf16>
    %cst_221 = arith.constant dense<0.000000e+00> : vector<64x256xf32>
    %498 = tpu.matmul %497, %495, %cst_221 {dimension_numbers = #tpu.dot_dimension_numbers<[1], [0], [0], [1], [0, 0, 1, 1], [], []>} : vector<64x64xbf16>, vector<64x256xbf16>, vector<64x256xf32> -> vector<64x256xf32>
    %499 = arith.addf %489, %498 : vector<64x256xf32>
    %500 = vector.extract_strided_slice %435 {offsets = [0, 16], sizes = [64, 240], strides = [1, 1]} : vector<64x256xf32> to vector<64x240xf32>
    %cst_222 = arith.constant 0.000000e+00 : f32
    %501 = vector.broadcast %cst_222 : f32 to vector<64x16xf32>
    %502 = tpu.concatenate %500, %501 in 1 : vector<64x240xf32>, vector<64x16xf32> -> vector<64x256xf32>
    %503 = arith.truncf %502 : vector<64x256xf32> to vector<64x256xbf16>
    %c1_223 = arith.constant 1 : index
    %c7_224 = arith.constant 7 : index
    %c0_225 = arith.constant 0 : index
    %c0_226 = arith.constant 0 : index
    %504 = vector.load %arg7[%c1_223, %c7_224, %c0_225, %c0_226] : memref<2x9x64x64xbf16, #tpu.memory_space<vmem>>, vector<1x1x64x64xbf16>
    %505 = vector.shape_cast %504 : vector<1x1x64x64xbf16> to vector<64x64xbf16>
    %cst_227 = arith.constant dense<0.000000e+00> : vector<64x256xf32>
    %506 = tpu.matmul %505, %503, %cst_227 {dimension_numbers = #tpu.dot_dimension_numbers<[1], [0], [0], [1], [0, 0, 1, 1], [], []>} : vector<64x64xbf16>, vector<64x256xbf16>, vector<64x256xf32> -> vector<64x256xf32>
    %507 = arith.addf %499, %506 : vector<64x256xf32>
    %508 = vector.extract_strided_slice %435 {offsets = [0, 17], sizes = [64, 239], strides = [1, 1]} : vector<64x256xf32> to vector<64x239xf32>
    %cst_228 = arith.constant 0.000000e+00 : f32
    %509 = vector.broadcast %cst_228 : f32 to vector<64x17xf32>
    %510 = tpu.concatenate %508, %509 in 1 : vector<64x239xf32>, vector<64x17xf32> -> vector<64x256xf32>
    %511 = vector.broadcast %20 : vector<1x256xf32> to vector<64x256xf32>
    %512 = arith.mulf %510, %511 : vector<64x256xf32>
    %513 = arith.truncf %512 : vector<64x256xf32> to vector<64x256xbf16>
    %c1_229 = arith.constant 1 : index
    %c8_230 = arith.constant 8 : index
    %c0_231 = arith.constant 0 : index
    %c0_232 = arith.constant 0 : index
    %514 = vector.load %arg7[%c1_229, %c8_230, %c0_231, %c0_232] : memref<2x9x64x64xbf16, #tpu.memory_space<vmem>>, vector<1x1x64x64xbf16>
    %515 = vector.shape_cast %514 : vector<1x1x64x64xbf16> to vector<64x64xbf16>
    %cst_233 = arith.constant dense<0.000000e+00> : vector<64x256xf32>
    %516 = tpu.matmul %515, %513, %cst_233 {dimension_numbers = #tpu.dot_dimension_numbers<[1], [0], [0], [1], [0, 0, 1, 1], [], []>} : vector<64x64xbf16>, vector<64x256xbf16>, vector<64x256xf32> -> vector<64x256xf32>
    %517 = arith.addf %507, %516 : vector<64x256xf32>
    %c1_234 = arith.constant 1 : index
    %c0_235 = arith.constant 0 : index
    %c0_236 = arith.constant 0 : index
    %518 = vector.load %arg8[%c1_234, %c0_235, %c0_236] : memref<2x64x1xf32, #tpu.memory_space<vmem>>, vector<1x64x1xf32>
    %519 = vector.shape_cast %518 : vector<1x64x1xf32> to vector<64x1xf32>
    %520 = vector.broadcast %519 : vector<64x1xf32> to vector<64x256xf32>
    %521 = arith.addf %517, %520 : vector<64x256xf32>
    %c0_237 = arith.constant 0 : index
    %c0_238 = arith.constant 0 : index
    %c0_239 = arith.constant 0 : index
    %522 = vector.load %arg2[%c0_237, %c0_238, %c0_239] : memref<1x64x256xf32, #tpu.memory_space<vmem>>, vector<1x64x256xf32>
    %523 = vector.shape_cast %522 : vector<1x64x256xf32> to vector<64x256xf32>
    %524 = arith.addf %521, %523 : vector<64x256xf32>
    %c0_240 = arith.constant 0 : index
    %c0_241 = arith.constant 0 : index
    %c0_242 = arith.constant 0 : index
    %525 = vector.load %arg9[%c0_240, %c0_241, %c0_242] : memref<1x64x256xf32, #tpu.memory_space<vmem>>, vector<1x64x256xf32>
    %526 = vector.shape_cast %525 : vector<1x64x256xf32> to vector<64x256xf32>
    %527 = vector.shape_cast %524 : vector<64x256xf32> to vector<1x64x256xf32>
    tpu.vector_store %arg9[%c0_240, %c0_241, %c0_242], %527 {strides = array<i32>} : memref<1x64x256xf32, #tpu.memory_space<vmem>>, vector<1x64x256xf32>,
    return
  }
  func.func @transform_0(%arg0: i32) -> (i32, i32, i32) {
    %c0_i32 = arith.constant 0 : i32
    %c0_i32_0 = arith.constant 0 : i32
    %c0_i32_1 = arith.constant 0 : i32
    return %arg0, %c0_i32, %c0_i32_0 : i32, i32, i32
  }
  func.func @transform_1(%arg0: i32) -> (i32, i32, i32) {
    %c0_i32 = arith.constant 0 : i32
    %c0_i32_0 = arith.constant 0 : i32
    %c0_i32_1 = arith.constant 0 : i32
    return %arg0, %c0_i32, %c0_i32_0 : i32, i32, i32
  }
  func.func @transform_2(%arg0: i32) -> (i32, i32, i32) {
    %c0_i32 = arith.constant 0 : i32
    %c0_i32_0 = arith.constant 0 : i32
    %c0_i32_1 = arith.constant 0 : i32
    %c0_i32_2 = arith.constant 0 : i32
    return %c0_i32, %c0_i32_0, %c0_i32_1 : i32, i32, i32
  }
  func.func @transform_3(%arg0: i32) -> (i32, i32, i32) {
    %c0_i32 = arith.constant 0 : i32
    %c0_i32_0 = arith.constant 0 : i32
    %c0_i32_1 = arith.constant 0 : i32
    %c0_i32_2 = arith.constant 0 : i32
    return %c0_i32, %c0_i32_0, %c0_i32_1 : i32, i32, i32
  }
  func.func @transform_4(%arg0: i32) -> (i32, i32, i32) {
    %c0_i32 = arith.constant 0 : i32
    %c0_i32_0 = arith.constant 0 : i32
    %c0_i32_1 = arith.constant 0 : i32
    %c0_i32_2 = arith.constant 0 : i32
    return %c0_i32, %c0_i32_0, %c0_i32_1 : i32, i32, i32
  }
  func.func @transform_5(%arg0: i32) -> (i32, i32, i32) {
    %c0_i32 = arith.constant 0 : i32
    %c0_i32_0 = arith.constant 0 : i32
    %c0_i32_1 = arith.constant 0 : i32
    %c0_i32_2 = arith.constant 0 : i32
    return %c0_i32, %c0_i32_0, %c0_i32_1 : i32, i32, i32
  }
  func.func @transform_6(%arg0: i32) -> (i32, i32, i32, i32) {
    %c0_i32 = arith.constant 0 : i32
    %c0_i32_0 = arith.constant 0 : i32
    %c0_i32_1 = arith.constant 0 : i32
    %c0_i32_2 = arith.constant 0 : i32
    %c0_i32_3 = arith.constant 0 : i32
    return %c0_i32, %c0_i32_0, %c0_i32_1, %c0_i32_2 : i32, i32, i32, i32
  }
  func.func @transform_7(%arg0: i32) -> (i32, i32, i32) {
    %c0_i32 = arith.constant 0 : i32
    %c0_i32_0 = arith.constant 0 : i32
    %c0_i32_1 = arith.constant 0 : i32
    %c0_i32_2 = arith.constant 0 : i32
    return %c0_i32, %c0_i32_0, %c0_i32_1 : i32, i32, i32
  }
  func.func @transform_8(%arg0: i32) -> (i32, i32, i32) {
    %c0_i32 = arith.constant 0 : i32
    %c0_i32_0 = arith.constant 0 : i32
    %c0_i32_1 = arith.constant 0 : i32
    return %arg0, %c0_i32, %c0_i32_0 : i32, i32, i32
  }
}

</mosaic_0001>

<llo_original>
// kernel: rdab_forward.1
$region0: #{rdab_forward.1}
  #allocation0 [shape = 'u32[]', space=smem, size = 0x4, offset = 0x4, fixed_abs, tag = 'smem constant byte address 0x4 - core index']
  #allocation1 [shape = 'u32[72,128]{1,0:T(1,128)}', space=vmem, size = 0x9000, scoped, tag = 'internal scratch']
  %s0 = inlined_call_operand.vmem [shape: f32[2,64,1], index: 0, kind: input, shape index: {}]
  %s1 = inlined_call_operand.vmem [shape: f32[2,64,256], index: 1, kind: input, shape index: {}]
  %s2 = inlined_call_operand.vmem [shape: f32[2,64,64], index: 2, kind: input, shape index: {}]
  %s3 = inlined_call_operand.vmem [shape: f32[2,576,64], index: 3, kind: input, shape index: {}]
  %s4 = inlined_call_operand.vmem [shape: f32[2,64,1], index: 4, kind: input, shape index: {}]
  %s5 = inlined_call_operand.vmem [shape: f32[2,1,1], index: 5, kind: input, shape index: {}]
  %s6 = inlined_call_operand.vmem [shape: bf16[2,9,64,64], index: 6, kind: input, shape index: {}]
  %s7 = inlined_call_operand.vmem [shape: f32[2,64,1], index: 7, kind: input, shape index: {}]
  %s8 = inlined_call_operand.vmem [shape: f32[2,64,256], index: 8, kind: output, shape index: {}]
  %s9 = sld [smem:[#allocation0]]
  $region65: #{rdab_forward.1} parent=0
    _
  %s11 = ssub.s32 1, %s9
  %s12 = scalar_select 0, %s11, %s9
  loop: start=0, step=1, limit=4
  $region2: #{rdab_forward.1} parent=0 // loop_pre_header
    _
  $region3: #{rdab_forward.1} parent=0 // loop_header
    %s14 = sphi 0, %s18
    %p15 = scmp.ge.s32.totalorder %s14, 4
    %s24 = sphi 0, %s26
    %s27 = sphi 0, %s24
    %s28 = sphi 0, %s27
    %s44 = sphi 0, %s28
    %s50 = sphi 0, %s52
    %s53 = sphi 0, %s50
    %s54 = sphi 0, %s53
    %s70 = sphi 0, %s54
    %s74 = sphi 0, %s74
    %s76 = sphi 0, %s74
    %s77 = sphi 0, %s76
    %s91 = sphi 0, %s77
    %s95 = sphi 0, %s95
    %s97 = sphi 0, %s95
    %s98 = sphi 0, %s97
    %s112 = sphi 0, %s98
    %s116 = sphi 0, %s116
    %s118 = sphi 0, %s116
    %s119 = sphi 0, %s118
    %s133 = sphi 0, %s119
    %s137 = sphi 0, %s137
    %s139 = sphi 0, %s137
    %s140 = sphi 0, %s139
    %s154 = sphi 0, %s140
    %s158 = sphi 0, %s158
    %s160 = sphi 0, %s158
    %s161 = sphi 0, %s160
    %s175 = sphi 0, %s161
    %s179 = sphi 0, %s179
    %s181 = sphi 0, %s179
    %s182 = sphi 0, %s181
    %s196 = sphi 0, %s182
    %s202 = sphi 0, %s204
    %s205 = sphi 0, %s202
    %s206 = sphi 0, %s205
    %s222 = sphi 0, %s206
  $region4: #{rdab_forward.1} parent=0 // loop_header_branch
    %17 = sbr.rel (%p15) target = $region8
  $region5: #{rdab_forward.1} parent=0 // loop_body
    %s19 = ssub.s32 %s14, 1
    %s20 = ssub.s32 %s14, 2
    %s21 = sadd.s32 %s14, 1
    %s22 = ssub.s32 %s14, %s21
    %p23 = scmp.eq.s32.totalorder %s22, 0
    %s25 = sadd.s32 %s24, 1
    %s26 = scalar_select %p23, %s24, %s25
    %p29 = pneg %p23
    %p30 = scmp.eq.s32.totalorder %s14, 1
    %p31 = por %p29, %p30
    %p32 = scmp.ne.s32.totalorder %s24, %s27
    %p33 = scmp.eq.s32.totalorder %s14, 0
    %p34 = por %p32, %p33
    %p35 = scmp.ne.s32.totalorder %s24, %s27
    %p36 = scmp.eq.s32.totalorder %s19, 1
    %p37 = por %p35, %p36
    %p38 = scmp.ne.s32.totalorder %s27, %s28
    %p39 = scmp.eq.s32.totalorder %s19, 0
    %p40 = por %p38, %p39
    %p41 = scmp.ne.s32.totalorder %s27, %s28
    %p42 = scmp.eq.s32.totalorder %s20, 1
    %p43 = por %p41, %p42
    %p45 = scmp.ne.s32.totalorder %s28, %s44
    %p46 = scmp.eq.s32.totalorder %s20, 0
    %p47 = por %p45, %p46
    %s48 = ssub.s32 %s14, %s21
    %p49 = scmp.eq.s32.totalorder %s48, 0
    %s51 = sadd.s32 %s50, 1
    %s52 = scalar_select %p49, %s50, %s51
    %p55 = pneg %p49
    %p56 = scmp.eq.s32.totalorder %s14, 1
    %p57 = por %p55, %p56
    %p58 = scmp.ne.s32.totalorder %s50, %s53
    %p59 = scmp.eq.s32.totalorder %s14, 0
    %p60 = por %p58, %p59
    %p61 = scmp.ne.s32.totalorder %s50, %s53
    %p62 = scmp.eq.s32.totalorder %s19, 1
    %p63 = por %p61, %p62
    %p64 = scmp.ne.s32.totalorder %s53, %s54
    %p65 = scmp.eq.s32.totalorder %s19, 0
    %p66 = por %p64, %p65
    %p67 = scmp.ne.s32.totalorder %s53, %s54
    %p68 = scmp.eq.s32.totalorder %s20, 1
    %p69 = por %p67, %p68
    %p71 = scmp.ne.s32.totalorder %s54, %s70
    %p72 = scmp.eq.s32.totalorder %s20, 0
    %p73 = por %p71, %p72
    %s75 = sadd.s32 %s74, 1
    %p78 = scmp.eq.s32.totalorder %s14, 1
    %p79 = scmp.ne.s32.totalorder %s74, %s76
    %p80 = scmp.eq.s32.totalorder %s14, 0
    %p81 = por %p79, %p80
    %p82 = scmp.ne.s32.totalorder %s74, %s76
    %p83 = scmp.eq.s32.totalorder %s19, 1
    %p84 = por %p82, %p83
    %p85 = scmp.ne.s32.totalorder %s76, %s77
    %p86 = scmp.eq.s32.totalorder %s19, 0
    %p87 = por %p85, %p86
    %p88 = scmp.ne.s32.totalorder %s76, %s77
    %p89 = scmp.eq.s32.totalorder %s20, 1
    %p90 = por %p88, %p89
    %p92 = scmp.ne.s32.totalorder %s77, %s91
    %p93 = scmp.eq.s32.totalorder %s20, 0
    %p94 = por %p92, %p93
    %s96 = sadd.s32 %s95, 1
    %p99 = scmp.eq.s32.totalorder %s14, 1
    %p100 = scmp.ne.s32.totalorder %s95, %s97
    %p101 = scmp.eq.s32.totalorder %s14, 0
    %p102 = por %p100, %p101
    %p103 = scmp.ne.s32.totalorder %s95, %s97
    %p104 = scmp.eq.s32.totalorder %s19, 1
    %p105 = por %p103, %p104
    %p106 = scmp.ne.s32.totalorder %s97, %s98
    %p107 = scmp.eq.s32.totalorder %s19, 0
    %p108 = por %p106, %p107
    %p109 = scmp.ne.s32.totalorder %s97, %s98
    %p110 = scmp.eq.s32.totalorder %s20, 1
    %p111 = por %p109, %p110
    %p113 = scmp.ne.s32.totalorder %s98, %s112
    %p114 = scmp.eq.s32.totalorder %s20, 0
    %p115 = por %p113, %p114
    %s117 = sadd.s32 %s116, 1
    %p120 = scmp.eq.s32.totalorder %s14, 1
    %p121 = scmp.ne.s32.totalorder %s116, %s118
    %p122 = scmp.eq.s32.totalorder %s14, 0
    %p123 = por %p121, %p122
    %p124 = scmp.ne.s32.totalorder %s116, %s118
    %p125 = scmp.eq.s32.totalorder %s19, 1
    %p126 = por %p124, %p125
    %p127 = scmp.ne.s32.totalorder %s118, %s119
    %p128 = scmp.eq.s32.totalorder %s19, 0
    %p129 = por %p127, %p128
    %p130 = scmp.ne.s32.totalorder %s118, %s119
    %p131 = scmp.eq.s32.totalorder %s20, 1
    %p132 = por %p130, %p131
    %p134 = scmp.ne.s32.totalorder %s119, %s133
    %p135 = scmp.eq.s32.totalorder %s20, 0
    %p136 = por %p134, %p135
    %s138 = sadd.s32 %s137, 1
    %p141 = scmp.eq.s32.totalorder %s14, 1
    %p142 = scmp.ne.s32.totalorder %s137, %s139
    %p143 = scmp.eq.s32.totalorder %s14, 0
    %p144 = por %p142, %p143
    %p145 = scmp.ne.s32.totalorder %s137, %s139
    %p146 = scmp.eq.s32.totalorder %s19, 1
    %p147 = por %p145, %p146
    %p148 = scmp.ne.s32.totalorder %s139, %s140
    %p149 = scmp.eq.s32.totalorder %s19, 0
    %p150 = por %p148, %p149
    %p151 = scmp.ne.s32.totalorder %s139, %s140
    %p152 = scmp.eq.s32.totalorder %s20, 1
    %p153 = por %p151, %p152
    %p155 = scmp.ne.s32.totalorder %s140, %s154
    %p156 = scmp.eq.s32.totalorder %s20, 0
    %p157 = por %p155, %p156
    %s159 = sadd.s32 %s158, 1
    %p162 = scmp.eq.s32.totalorder %s14, 1
    %p163 = scmp.ne.s32.totalorder %s158, %s160
    %p164 = scmp.eq.s32.totalorder %s14, 0
    %p165 = por %p163, %p164
    %p166 = scmp.ne.s32.totalorder %s158, %s160
    %p167 = scmp.eq.s32.totalorder %s19, 1
    %p168 = por %p166, %p167
    %p169 = scmp.ne.s32.totalorder %s160, %s161
    %p170 = scmp.eq.s32.totalorder %s19, 0
    %p171 = por %p169, %p170
    %p172 = scmp.ne.s32.totalorder %s160, %s161
    %p173 = scmp.eq.s32.totalorder %s20, 1
    %p174 = por %p172, %p173
    %p176 = scmp.ne.s32.totalorder %s161, %s175
    %p177 = scmp.eq.s32.totalorder %s20, 0
    %p178 = por %p176, %p177
    %s180 = sadd.s32 %s179, 1
    %p183 = scmp.eq.s32.totalorder %s14, 1
    %p184 = scmp.ne.s32.totalorder %s179, %s181
    %p185 = scmp.eq.s32.totalorder %s14, 0
    %p186 = por %p184, %p185
    %p187 = scmp.ne.s32.totalorder %s179, %s181
    %p188 = scmp.eq.s32.totalorder %s19, 1
    %p189 = por %p187, %p188
    %p190 = scmp.ne.s32.totalorder %s181, %s182
    %p191 = scmp.eq.s32.totalorder %s19, 0
    %p192 = por %p190, %p191
    %p193 = scmp.ne.s32.totalorder %s181, %s182
    %p194 = scmp.eq.s32.totalorder %s20, 1
    %p195 = por %p193, %p194
    %p197 = scmp.ne.s32.totalorder %s182, %s196
    %p198 = scmp.eq.s32.totalorder %s20, 0
    %p199 = por %p197, %p198
    %s200 = ssub.s32 %s14, %s21
    %p201 = scmp.eq.s32.totalorder %s200, 0
    %s203 = sadd.s32 %s202, 1
    %s204 = scalar_select %p201, %s202, %s203
    %p207 = pneg %p201
    %p208 = scmp.eq.s32.totalorder %s14, 1
    %p209 = por %p207, %p208
    %p210 = scmp.ne.s32.totalorder %s202, %s205
    %p211 = scmp.eq.s32.totalorder %s14, 0
    %p212 = por %p210, %p211
    %p213 = scmp.ne.s32.totalorder %s202, %s205
    %p214 = scmp.eq.s32.totalorder %s19, 1
    %p215 = por %p213, %p214
    %p216 = scmp.ne.s32.totalorder %s205, %s206
    %p217 = scmp.eq.s32.totalorder %s19, 0
    %p218 = por %p216, %p217
    %p219 = scmp.ne.s32.totalorder %s205, %s206
    %p220 = scmp.eq.s32.totalorder %s20, 1
    %p221 = por %p219, %p220
    %p223 = scmp.ne.s32.totalorder %s206, %s222
    %p224 = scmp.eq.s32.totalorder %s20, 0
    %p225 = por %p223, %p224
    %p226 = scmp.le.s32.totalorder 1, %s14
    %p227 = scmp.lt.s32.totalorder %s14, 3
    %p228 = pnand %p226, %p227
    %p229 = pneg %p228
    // Predicated region
    $region9: #{rdab_forward.1} parent=5 // pred_check
      _
    $region10: #{rdab_forward.1} parent=5 // pred_check_branch
      %231 = sbr.rel (%p228) target = $region12
    $region11: #{rdab_forward.1} parent=5 // pred_region
      %s232 = ssub.s32 %s14, 1
      // Predicated region
      $region13: #{rdab_forward.1} parent=11 // pred_check
        %p233 = pneg %p87
      $region14: #{rdab_forward.1} parent=11 // pred_check_branch
        %235 = sbr.rel (%p233) target = $region16
      $region15: #{rdab_forward.1} parent=11 // pred_region
        _
      $region16: #{rdab_forward.1} parent=11 // pred_fallthru
        _
      // Predicated region
      $region17: #{rdab_forward.1} parent=11 // pred_check
        %p236 = pneg %p108
      $region18: #{rdab_forward.1} parent=11 // pred_check_branch
        %238 = sbr.rel (%p236) target = $region20
      $region19: #{rdab_forward.1} parent=11 // pred_region
        _
      $region20: #{rdab_forward.1} parent=11 // pred_fallthru
        _
      // Predicated region
      $region21: #{rdab_forward.1} parent=11 // pred_check
        %p239 = pneg %p129
      $region22: #{rdab_forward.1} parent=11 // pred_check_branch
        %241 = sbr.rel (%p239) target = $region24
      $region23: #{rdab_forward.1} parent=11 // pred_region
        _
      $region24: #{rdab_forward.1} parent=11 // pred_fallthru
        _
      // Predicated region
      $region25: #{rdab_forward.1} parent=11 // pred_check
        %p242 = pneg %p150
      $region26: #{rdab_forward.1} parent=11 // pred_check_branch
        %244 = sbr.rel (%p242) target = $region28
      $region27: #{rdab_forward.1} parent=11 // pred_region
        _
      $region28: #{rdab_forward.1} parent=11 // pred_fallthru
        _
      // Predicated region
      $region29: #{rdab_forward.1} parent=11 // pred_check
        %p245 = pneg %p171
      $region30: #{rdab_forward.1} parent=11 // pred_check_branch
        %247 = sbr.rel (%p245) target = $region32
      $region31: #{rdab_forward.1} parent=11 // pred_region
        _
      $region32: #{rdab_forward.1} parent=11 // pred_fallthru
        _
      // Predicated region
      $region33: #{rdab_forward.1} parent=11 // pred_check
        %p248 = pneg %p192
      $region34: #{rdab_forward.1} parent=11 // pred_check_branch
        %250 = sbr.rel (%p248) target = $region36
      $region35: #{rdab_forward.1} parent=11 // pred_region
        _
      $region36: #{rdab_forward.1} parent=11 // pred_fallthru
        _
    $region12: #{rdab_forward.1} parent=5 // pred_fallthru
      _
    %p251 = scmp.lt.s32.totalorder %s14, 2
    // Predicated region
    $region37: #{rdab_forward.1} parent=5 // pred_check
      %p252 = pneg %p251
    $region38: #{rdab_forward.1} parent=5 // pred_check_branch
      %254 = sbr.rel (%p252) target = $region40
    $region39: #{rdab_forward.1} parent=5 // pred_region
      // Predicated region
      $region41: #{rdab_forward.1} parent=39 // pred_check
        %p255 = pneg %p34
      $region42: #{rdab_forward.1} parent=39 // pred_check_branch
        %257 = sbr.rel (%p255) target = $region44
      $region43: #{rdab_forward.1} parent=39 // pred_region
        %p258 = scmp.lt.s32.totalorder %s14, 1
        %s259 = scalar_select %p258, %s14, 1
        %s260 = smul.addr %s259, 8
        %s261 = smul.addr %s260, 8
        %s262 = scalar_lea.vmem %s0, %s261
      $region44: #{rdab_forward.1} parent=39 // pred_fallthru
        _
      // Predicated region
      $region45: #{rdab_forward.1} parent=39 // pred_check
        %p263 = pneg %p60
      $region46: #{rdab_forward.1} parent=39 // pred_check_branch
        %265 = sbr.rel (%p263) target = $region48
      $region47: #{rdab_forward.1} parent=39 // pred_region
        %p266 = scmp.lt.s32.totalorder %s14, 1
        %s267 = scalar_select %p266, %s14, 1
        %s268 = smul.addr %s267, 16
        %s269 = smul.addr %s268, 8
        %s270 = scalar_lea.vmem %s1, %s269
      $region48: #{rdab_forward.1} parent=39 // pred_fallthru
        _
    $region40: #{rdab_forward.1} parent=5 // pred_fallthru
      _
    %p271 = scmp.le.s32.totalorder 1, %s14
    %p272 = scmp.lt.s32.totalorder %s14, 3
    %p273 = pnand %p271, %p272
    %p274 = pneg %p273
    // Predicated region
    $region49: #{rdab_forward.1} parent=5 // pred_check
      _
    $region50: #{rdab_forward.1} parent=5 // pred_check_branch
      %276 = sbr.rel (%p273) target = $region52
    $region51: #{rdab_forward.1} parent=5 // pred_region
      %s277 = ssub.s32 %s14, 1
      %p278 = scmp.lt.s32.totalorder %s19, 1
      %s279 = scalar_select %p278, %s19, 1
      %s280 = smul.addr %s279, 8
      %s281 = smul.addr %s280, 8
      %s282 = scalar_lea.vmem %s0, %s281
      %p283 = pneg %p40
      %p284 = pneg %p37
      %p285 = scmp.lt.s32.totalorder %s19, 1
      %s286 = scalar_select %p285, %s19, 1
      %s287 = smul.addr %s286, 16
      %s288 = smul.addr %s287, 8
      %s289 = scalar_lea.vmem %s1, %s288
      %p290 = pneg %p66
      %p291 = pneg %p63
      %p292 = pneg %p87
      %p293 = pneg %p84
      %p294 = pneg %p108
      %p295 = pneg %p105
      %p296 = pneg %p129
      %p297 = pneg %p126
      %p298 = pneg %p150
      %p299 = pneg %p147
      %p300 = pneg %p171
      %p301 = pneg %p168
      %p302 = pneg %p192
      %p303 = pneg %p189
      %p304 = pneg %p218
      %p305 = pneg %p215
      %p306 = scmp.lt.s32.totalorder %s19, 1
      %s307 = scalar_select %p306, %s19, 1
      %s308 = smul.addr %s307, 16
      %s309 = smul.addr %s308, 8
      %s310 = scalar_lea.vmem %s8, %s309
      %p311 = scmp.lt.s32.totalorder %s19, 1
      %s312 = scalar_select %p311, %s19, 1
      %s313 = smul.addr %s312, 8
      %s314 = smul.addr %s313, 8
      %s315 = scalar_lea.vmem %s0, %s314
      %p316 = scmp.lt.s32.totalorder %s19, 1
      %s317 = scalar_select %p316, %s19, 1
      %s318 = smul.addr %s317, 16
      %s319 = smul.addr %s318, 8
      %s320 = scalar_lea.vmem %s1, %s319
      %p321 = scmp.lt.s32.totalorder %s19, 1
      %s322 = scalar_select %p321, %s19, 1
      %s323 = smul.addr %s322, 16
      %s324 = smul.addr %s323, 8
      %s325 = scalar_lea.vmem %s8, %s324
      %v327 = vlaneseq
      %v328 = vand.u32 %v327, 127
      %v329 = vadd.s32 %v328, 128
      %vm330 = vcmp.lt.s32.totalorder %v328, 0
      %v331 = vsub.s32 0, %v328
      %v332 = vsel %vm330, %v331, %v328
      %v333 = vshrl.u32 %v332, 4
      %v334 = vand.u32 %v332, 15
      %v335 = vsub.s32 0, %v334
      %v336 = vsel %vm330, %v335, %v334
      %vm337 = vcmp.lt.s32.totalorder %v329, 0
      %v338 = vsub.s32 0, %v329
      %v339 = vsel %vm337, %v338, %v329
      %v340 = vshrl.u32 %v339, 4
      %v341 = vand.u32 %v339, 15
      %v342 = vsub.s32 0, %v341
      %v343 = vsel %vm337, %v342, %v341
      %vm344 = vcmp.ne.s32.totalorder %v336, 0
      %vm345 = vcmp.ne.s32.totalorder %v343, 0
      %vm346 = vcmp.lt.s32.totalorder %v336, 0
      %vm347 = vcmp.lt.s32.totalorder %v343, 0
      %vm348 = vmand %vm346, %vm344
      %vm349 = vmand %vm347, %vm345
      %v350 = vadd.s32 %v336, 16
      %v351 = vadd.s32 %v343, 16
      %v352 = vsel %vm348, %v350, %v336
      %v353 = vsel %vm349, %v351, %v343
      %vm354 = vcmp.ne.s32.totalorder %v352, 15
      %vm355 = vcmp.ne.s32.totalorder %v353, 15
      %v356 = vsel %vm354, 1, 0
      %v357 = vsel %vm355, 1, 0
      %v358 = vcvt.s32.f32 %v356
      %v359 = vcvt.s32.f32 %v357
      %vm360 = vcmp.ne.s32.totalorder %v352, 0
      %vm361 = vcmp.ne.s32.totalorder %v353, 0
      %v362 = vsel %vm360, 1, 0
      %v363 = vsel %vm361, 1, 0
      %v364 = vcvt.s32.f32 %v362
      %v365 = vcvt.s32.f32 %v363
      %v366 = vld [vmem:[%s320] sm:$0xff]
      %v367 = vld [vmem:[%s320 + $0x8] sm:$0xff]
      %v368 = vld [vmem:[%s320 + $0x10] sm:$0xff]
      %v369 = vld [vmem:[%s320 + $0x18] sm:$0xff]
      %v370 = vld [vmem:[%s320 + $0x20] sm:$0xff]
      %v371 = vld [vmem:[%s320 + $0x28] sm:$0xff]
      %v372 = vld [vmem:[%s320 + $0x30] sm:$0xff]
      %v373 = vld [vmem:[%s320 + $0x38] sm:$0xff]
      %v374 = vld [vmem:[%s320 + $0x40] sm:$0xff]
      %v375 = vld [vmem:[%s320 + $0x48] sm:$0xff]
      %v376 = vld [vmem:[%s320 + $0x50] sm:$0xff]
      %v377 = vld [vmem:[%s320 + $0x58] sm:$0xff]
      %v378 = vld [vmem:[%s320 + $0x60] sm:$0xff]
      %v379 = vld [vmem:[%s320 + $0x68] sm:$0xff]
      %v380 = vld [vmem:[%s320 + $0x70] sm:$0xff]
      %v381 = vld [vmem:[%s320 + $0x78] sm:$0xff]
      %v382 = vld [vmem:[%s2] sm:$0xff]
      %v383 = vld [vmem:[%s2 + $0x8] sm:$0xff]
      %v384 = vld [vmem:[%s2 + $0x10] sm:$0xff]
      %v385 = vld [vmem:[%s2 + $0x18] sm:$0xff]
      %v386 = vld [vmem:[%s2 + $0x20] sm:$0xff]
      %v387 = vld [vmem:[%s2 + $0x28] sm:$0xff]
      %v388 = vld [vmem:[%s2 + $0x30] sm:$0xff]
      %v389 = vld [vmem:[%s2 + $0x38] sm:$0xff]
      %v390 = vld [vmem:[%s315] sm:$0xff]
      %v391 = vld [vmem:[%s315 + $0x8] sm:$0xff]
      %v392 = vld [vmem:[%s315 + $0x10] sm:$0xff]
      %v393 = vld [vmem:[%s315 + $0x18] sm:$0xff]
      %v394 = vld [vmem:[%s315 + $0x20] sm:$0xff]
      %v395 = vld [vmem:[%s315 + $0x28] sm:$0xff]
      %v396 = vld [vmem:[%s315 + $0x30] sm:$0xff]
      %v397 = vld [vmem:[%s315 + $0x38] sm:$0xff]
      %399 = vset.pattern.permute.xlu0 0
      %400 = vperm.xlu0 %399, %v390
      %v401 = vpop.permute.xlu0 %400
      %404 = vset.pattern.permute.xlu0 0
      %405 = vperm.xlu0 %404, %v391
      %v406 = vpop.permute.xlu0 %405
      %409 = vset.pattern.permute.xlu0 0
      %410 = vperm.xlu0 %409, %v392
      %v411 = vpop.permute.xlu0 %410
      %414 = vset.pattern.permute.xlu0 0
      %415 = vperm.xlu0 %414, %v393
      %v416 = vpop.permute.xlu0 %415
      %419 = vset.pattern.permute.xlu0 0
      %420 = vperm.xlu0 %419, %v394
      %v421 = vpop.permute.xlu0 %420
      %424 = vset.pattern.permute.xlu0 0
      %425 = vperm.xlu0 %424, %v395
      %v426 = vpop.permute.xlu0 %425
      %429 = vset.pattern.permute.xlu0 0
      %430 = vperm.xlu0 %429, %v396
      %v431 = vpop.permute.xlu0 %430
      %434 = vset.pattern.permute.xlu0 0
      %435 = vperm.xlu0 %434, %v397
      %v436 = vpop.permute.xlu0 %435
      %v438 = vmul.f32 %v382, %v401
      %v439 = vmul.f32 %v383, %v406
      %v440 = vmul.f32 %v384, %v411
      %v441 = vmul.f32 %v385, %v416
      %v442 = vmul.f32 %v386, %v421
      %v443 = vmul.f32 %v387, %v426
      %v444 = vmul.f32 %v388, %v431
      %v445 = vmul.f32 %v389, %v436
      %vm446 = vcmask 523264
      %v447 = vsel %vm446, %v438, 0.0
      %v448 = vsel %vm446, %v439, 0.0
      %v449 = vadd.f32 %v447, %v448
      %v450 = vsel %vm446, %v440, 0.0
      %v451 = vadd.f32 %v449, %v450
      %v452 = vsel %vm446, %v441, 0.0
      %v453 = vadd.f32 %v451, %v452
      %v454 = vsel %vm446, %v442, 0.0
      %v455 = vadd.f32 %v453, %v454
      %v456 = vsel %vm446, %v443, 0.0
      %v457 = vadd.f32 %v455, %v456
      %v458 = vsel %vm446, %v444, 0.0
      %v459 = vadd.f32 %v457, %v458
      %v460 = vsel %vm446, %v445, 0.0
      %v461 = vadd.f32 %v459, %v460
      %v462 = vrot.slane %v461, 4
      %v463 = vadd.f32 %v461, %v462
      %v464 = vrot.slane %v463, 2
      %v465 = vadd.f32 %v463, %v464
      %v466 = vrot.slane %v465, 1
      %v467 = vadd.f32 %v465, %v466
      %vm468 = vcmp.ge.f32.partialorder %v467, 0.0
      %v469 = vmul.f32 %v467, 0.1
      %v470 = vsel %vm468, %v467, %v469
      %v471 = vld [vmem:[%s3] sm:$0xff]
      %v472 = vld [vmem:[%s3 + $0x8] sm:$0xff]
      %v473 = vld [vmem:[%s3 + $0x10] sm:$0xff]
      %v474 = vld [vmem:[%s3 + $0x18] sm:$0xff]
      %v475 = vld [vmem:[%s3 + $0x20] sm:$0xff]
      %v476 = vld [vmem:[%s3 + $0x28] sm:$0xff]
      %v477 = vld [vmem:[%s3 + $0x30] sm:$0xff]
      %v478 = vld [vmem:[%s3 + $0x38] sm:$0xff]
      %v479 = vmul.f32 %v471, %v470
      %v480 = vmul.f32 %v472, %v470
      %v481 = vmul.f32 %v473, %v470
      %v482 = vmul.f32 %v474, %v470
      %v483 = vmul.f32 %v475, %v470
      %v484 = vmul.f32 %v476, %v470
      %v485 = vmul.f32 %v477, %v470
      %v486 = vmul.f32 %v478, %v470
      %v487 = vsel %vm446, %v479, 0.0
      %488 = vadd.xlane.f32.xlu0 %v487
      %v489 = vpop.xlane.xlu0 %488
      %v490 = vsel %vm446, %v480, 0.0
      %491 = vadd.xlane.f32.xlu0 %v490
      %v492 = vpop.xlane.xlu0 %491
      %v493 = vsel %vm446, %v481, 0.0
      %494 = vadd.xlane.f32.xlu0 %v493
      %v495 = vpop.xlane.xlu0 %494
      %v496 = vsel %vm446, %v482, 0.0
      %497 = vadd.xlane.f32.xlu0 %v496
      %v498 = vpop.xlane.xlu0 %497
      %v499 = vsel %vm446, %v483, 0.0
      %500 = vadd.xlane.f32.xlu0 %v499
      %v501 = vpop.xlane.xlu0 %500
      %v502 = vsel %vm446, %v484, 0.0
      %503 = vadd.xlane.f32.xlu0 %v502
      %v504 = vpop.xlane.xlu0 %503
      %v505 = vsel %vm446, %v485, 0.0
      %506 = vadd.xlane.f32.xlu0 %v505
      %v507 = vpop.xlane.xlu0 %506
      %v508 = vsel %vm446, %v486, 0.0
      %509 = vadd.xlane.f32.xlu0 %v508
      %v510 = vpop.xlane.xlu0 %509
      %527 = vrot.lane.b32.xlu0 %v366, 17
      %v528 = vpop.permute.xlu0 %527
      %529 = vrot.lane.b32.xlu0 %v367, 17
      %v530 = vpop.permute.xlu0 %529
      %531 = vrot.lane.b32.xlu0 %v368, 17
      %v532 = vpop.permute.xlu0 %531
      %533 = vrot.lane.b32.xlu0 %v369, 17
      %v534 = vpop.permute.xlu0 %533
      %535 = vrot.lane.b32.xlu0 %v370, 17
      %v536 = vpop.permute.xlu0 %535
      %537 = vrot.lane.b32.xlu0 %v371, 17
      %v538 = vpop.permute.xlu0 %537
      %539 = vrot.lane.b32.xlu0 %v372, 17
      %v540 = vpop.permute.xlu0 %539
      %541 = vrot.lane.b32.xlu0 %v373, 17
      %v542 = vpop.permute.xlu0 %541
      %543 = vrot.lane.b32.xlu0 %v374, 17
      %v544 = vpop.permute.xlu0 %543
      %545 = vrot.lane.b32.xlu0 %v375, 17
      %v546 = vpop.permute.xlu0 %545
      %547 = vrot.lane.b32.xlu0 %v376, 17
      %v548 = vpop.permute.xlu0 %547
      %549 = vrot.lane.b32.xlu0 %v377, 17
      %v550 = vpop.permute.xlu0 %549
      %551 = vrot.lane.b32.xlu0 %v378, 17
      %v552 = vpop.permute.xlu0 %551
      %553 = vrot.lane.b32.xlu0 %v379, 17
      %v554 = vpop.permute.xlu0 %553
      %555 = vrot.lane.b32.xlu0 %v380, 17
      %v556 = vpop.permute.xlu0 %555
      %557 = vrot.lane.b32.xlu0 %v381, 17
      %v558 = vpop.permute.xlu0 %557
      %vm559 = vcmask 138240
      %v560 = vsel %vm559, %v528, %v530
      %v561 = vsel %vm559, %v532, %v534
      %v562 = vsel %vm559, %v536, %v538
      %v563 = vsel %vm559, %v540, %v542
      %v564 = vsel %vm559, %v544, %v546
      %v565 = vsel %vm559, %v548, %v550
      %v566 = vsel %vm559, %v552, %v554
      %v567 = vsel %vm559, %v556, %v558
      %v584 = vsel %vm559, 0.0, %v528
      %v585 = vsel %vm559, 0.0, %v532
      %v586 = vsel %vm559, 0.0, %v536
      %v587 = vsel %vm559, 0.0, %v540
      %v588 = vsel %vm559, 0.0, %v544
      %v589 = vsel %vm559, 0.0, %v548
      %v590 = vsel %vm559, 0.0, %v552
      %v591 = vsel %vm559, 0.0, %v556
      %v592 = vmul.f32 %v584, %v364
      %v593 = vmul.f32 %v560, %v365
      %v594 = vmul.f32 %v585, %v364
      %v595 = vmul.f32 %v561, %v365
      %v596 = vmul.f32 %v586, %v364
      %v597 = vmul.f32 %v562, %v365
      %v598 = vmul.f32 %v587, %v364
      %v599 = vmul.f32 %v563, %v365
      %v600 = vmul.f32 %v588, %v364
      %v601 = vmul.f32 %v564, %v365
      %v602 = vmul.f32 %v589, %v364
      %v603 = vmul.f32 %v565, %v365
      %v604 = vmul.f32 %v590, %v364
      %v605 = vmul.f32 %v566, %v365
      %v606 = vmul.f32 %v591, %v364
      %v607 = vmul.f32 %v567, %v365
      %v608 = vmul.f32 %v592, %v489
      %v609 = vmul.f32 %v593, %v489
      %v610 = vmul.f32 %v594, %v492
      %v611 = vmul.f32 %v595, %v492
      %v612 = vmul.f32 %v596, %v495
      %v613 = vmul.f32 %v597, %v495
      %v614 = vmul.f32 %v598, %v498
      %v615 = vmul.f32 %v599, %v498
      %v616 = vmul.f32 %v600, %v501
      %v617 = vmul.f32 %v601, %v501
      %v618 = vmul.f32 %v602, %v504
      %v619 = vmul.f32 %v603, %v504
      %v620 = vmul.f32 %v604, %v507
      %v621 = vmul.f32 %v605, %v507
      %v622 = vmul.f32 %v606, %v510
      %v623 = vmul.f32 %v607, %v510
      %v624 = vadd.f32 %v608, 0.0
      %v625 = vadd.f32 %v609, 0.0
      %v626 = vadd.f32 %v610, 0.0
      %v627 = vadd.f32 %v611, 0.0
      %v628 = vadd.f32 %v612, 0.0
      %v629 = vadd.f32 %v613, 0.0
      %v630 = vadd.f32 %v614, 0.0
      %v631 = vadd.f32 %v615, 0.0
      %v632 = vadd.f32 %v616, 0.0
      %v633 = vadd.f32 %v617, 0.0
      %v634 = vadd.f32 %v618, 0.0
      %v635 = vadd.f32 %v619, 0.0
      %v636 = vadd.f32 %v620, 0.0
      %v637 = vadd.f32 %v621, 0.0
      %v638 = vadd.f32 %v622, 0.0
      %v639 = vadd.f32 %v623, 0.0
      %v640 = vld [vmem:[%s3 + $0x40] sm:$0xff]
      %v641 = vld [vmem:[%s3 + $0x48] sm:$0xff]
      %v642 = vld [vmem:[%s3 + $0x50] sm:$0xff]
      %v643 = vld [vmem:[%s3 + $0x58] sm:$0xff]
      %v644 = vld [vmem:[%s3 + $0x60] sm:$0xff]
      %v645 = vld [vmem:[%s3 + $0x68] sm:$0xff]
      %v646 = vld [vmem:[%s3 + $0x70] sm:$0xff]
      %v647 = vld [vmem:[%s3 + $0x78] sm:$0xff]
      %v648 = vmul.f32 %v640, %v470
      %v649 = vmul.f32 %v641, %v470
      %v650 = vmul.f32 %v642, %v470
      %v651 = vmul.f32 %v643, %v470
      %v652 = vmul.f32 %v644, %v470
      %v653 = vmul.f32 %v645, %v470
      %v654 = vmul.f32 %v646, %v470
      %v655 = vmul.f32 %v647, %v470
      %v656 = vsel %vm446, %v648, 0.0
      %657 = vadd.xlane.f32.xlu0 %v656
      %v658 = vpop.xlane.xlu0 %657
      %v659 = vsel %vm446, %v649, 0.0
      %660 = vadd.xlane.f32.xlu0 %v659
      %v661 = vpop.xlane.xlu0 %660
      %v662 = vsel %vm446, %v650, 0.0
      %663 = vadd.xlane.f32.xlu0 %v662
      %v664 = vpop.xlane.xlu0 %663
      %v665 = vsel %vm446, %v651, 0.0
      %666 = vadd.xlane.f32.xlu0 %v665
      %v667 = vpop.xlane.xlu0 %666
      %v668 = vsel %vm446, %v652, 0.0
      %669 = vadd.xlane.f32.xlu0 %v668
      %v670 = vpop.xlane.xlu0 %669
      %v671 = vsel %vm446, %v653, 0.0
      %672 = vadd.xlane.f32.xlu0 %v671
      %v673 = vpop.xlane.xlu0 %672
      %v674 = vsel %vm446, %v654, 0.0
      %675 = vadd.xlane.f32.xlu0 %v674
      %v676 = vpop.xlane.xlu0 %675
      %v677 = vsel %vm446, %v655, 0.0
      %678 = vadd.xlane.f32.xlu0 %v677
      %v679 = vpop.xlane.xlu0 %678
      %680 = vrot.lane.b32.xlu0 %v366, 16
      %v681 = vpop.permute.xlu0 %680
      %682 = vrot.lane.b32.xlu0 %v367, 16
      %v683 = vpop.permute.xlu0 %682
      %684 = vrot.lane.b32.xlu0 %v368, 16
      %v685 = vpop.permute.xlu0 %684
      %686 = vrot.lane.b32.xlu0 %v369, 16
      %v687 = vpop.permute.xlu0 %686
      %688 = vrot.lane.b32.xlu0 %v370, 16
      %v689 = vpop.permute.xlu0 %688
      %690 = vrot.lane.b32.xlu0 %v371, 16
      %v691 = vpop.permute.xlu0 %690
      %692 = vrot.lane.b32.xlu0 %v372, 16
      %v693 = vpop.permute.xlu0 %692
      %694 = vrot.lane.b32.xlu0 %v373, 16
      %v695 = vpop.permute.xlu0 %694
      %696 = vrot.lane.b32.xlu0 %v374, 16
      %v697 = vpop.permute.xlu0 %696
      %698 = vrot.lane.b32.xlu0 %v375, 16
      %v699 = vpop.permute.xlu0 %698
      %700 = vrot.lane.b32.xlu0 %v376, 16
      %v701 = vpop.permute.xlu0 %700
      %702 = vrot.lane.b32.xlu0 %v377, 16
      %v703 = vpop.permute.xlu0 %702
      %704 = vrot.lane.b32.xlu0 %v378, 16
      %v705 = vpop.permute.xlu0 %704
      %706 = vrot.lane.b32.xlu0 %v379, 16
      %v707 = vpop.permute.xlu0 %706
      %708 = vrot.lane.b32.xlu0 %v380, 16
      %v709 = vpop.permute.xlu0 %708
      %710 = vrot.lane.b32.xlu0 %v381, 16
      %v711 = vpop.permute.xlu0 %710
      %vm712 = vcmask 130048
      %v713 = vsel %vm712, %v681, %v683
      %v714 = vsel %vm712, %v685, %v687
      %v715 = vsel %vm712, %v689, %v691
      %v716 = vsel %vm712, %v693, %v695
      %v717 = vsel %vm712, %v697, %v699
      %v718 = vsel %vm712, %v701, %v703
      %v719 = vsel %vm712, %v705, %v707
      %v720 = vsel %vm712, %v709, %v711
      %v737 = vsel %vm712, 0.0, %v681
      %v738 = vsel %vm712, 0.0, %v685
      %v739 = vsel %vm712, 0.0, %v689
      %v740 = vsel %vm712, 0.0, %v693
      %v741 = vsel %vm712, 0.0, %v697
      %v742 = vsel %vm712, 0.0, %v701
      %v743 = vsel %vm712, 0.0, %v705
      %v744 = vsel %vm712, 0.0, %v709
      %v745 = vmul.f32 %v737, %v658
      %v746 = vmul.f32 %v713, %v658
      %v747 = vmul.f32 %v738, %v661
      %v748 = vmul.f32 %v714, %v661
      %v749 = vmul.f32 %v739, %v664
      %v750 = vmul.f32 %v715, %v664
      %v751 = vmul.f32 %v740, %v667
      %v752 = vmul.f32 %v716, %v667
      %v753 = vmul.f32 %v741, %v670
      %v754 = vmul.f32 %v717, %v670
      %v755 = vmul.f32 %v742, %v673
      %v756 = vmul.f32 %v718, %v673
      %v757 = vmul.f32 %v743, %v676
      %v758 = vmul.f32 %v719, %v676
      %v759 = vmul.f32 %v744, %v679
      %v760 = vmul.f32 %v720, %v679
      %v761 = vadd.f32 %v624, %v745
      %v762 = vadd.f32 %v625, %v746
      %v763 = vadd.f32 %v626, %v747
      %v764 = vadd.f32 %v627, %v748
      %v765 = vadd.f32 %v628, %v749
      %v766 = vadd.f32 %v629, %v750
      %v767 = vadd.f32 %v630, %v751
      %v768 = vadd.f32 %v631, %v752
      %v769 = vadd.f32 %v632, %v753
      %v770 = vadd.f32 %v633, %v754
      %v771 = vadd.f32 %v634, %v755
      %v772 = vadd.f32 %v635, %v756
      %v773 = vadd.f32 %v636, %v757
      %v774 = vadd.f32 %v637, %v758
      %v775 = vadd.f32 %v638, %v759
      %v776 = vadd.f32 %v639, %v760
      %v777 = vld [vmem:[%s3 + $0x80] sm:$0xff]
      %v778 = vld [vmem:[%s3 + $0x88] sm:$0xff]
      %v779 = vld [vmem:[%s3 + $0x90] sm:$0xff]
      %v780 = vld [vmem:[%s3 + $0x98] sm:$0xff]
      %v781 = vld [vmem:[%s3 + $0xa0] sm:$0xff]
      %v782 = vld [vmem:[%s3 + $0xa8] sm:$0xff]
      %v783 = vld [vmem:[%s3 + $0xb0] sm:$0xff]
      %v784 = vld [vmem:[%s3 + $0xb8] sm:$0xff]
      %v785 = vmul.f32 %v777, %v470
      %v786 = vmul.f32 %v778, %v470
      %v787 = vmul.f32 %v779, %v470
      %v788 = vmul.f32 %v780, %v470
      %v789 = vmul.f32 %v781, %v470
      %v790 = vmul.f32 %v782, %v470
      %v791 = vmul.f32 %v783, %v470
      %v792 = vmul.f32 %v784, %v470
      %v793 = vsel %vm446, %v785, 0.0
      %794 = vadd.xlane.f32.xlu0 %v793
      %v795 = vpop.xlane.xlu0 %794
      %v796 = vsel %vm446, %v786, 0.0
      %797 = vadd.xlane.f32.xlu0 %v796
      %v798 = vpop.xlane.xlu0 %797
      %v799 = vsel %vm446, %v787, 0.0
      %800 = vadd.xlane.f32.xlu0 %v799
      %v801 = vpop.xlane.xlu0 %800
      %v802 = vsel %vm446, %v788, 0.0
      %803 = vadd.xlane.f32.xlu0 %v802
      %v804 = vpop.xlane.xlu0 %803
      %v805 = vsel %vm446, %v789, 0.0
      %806 = vadd.xlane.f32.xlu0 %v805
      %v807 = vpop.xlane.xlu0 %806
      %v808 = vsel %vm446, %v790, 0.0
      %809 = vadd.xlane.f32.xlu0 %v808
      %v810 = vpop.xlane.xlu0 %809
      %v811 = vsel %vm446, %v791, 0.0
      %812 = vadd.xlane.f32.xlu0 %v811
      %v813 = vpop.xlane.xlu0 %812
      %v814 = vsel %vm446, %v792, 0.0
      %815 = vadd.xlane.f32.xlu0 %v814
      %v816 = vpop.xlane.xlu0 %815
      %817 = vrot.lane.b32.xlu0 %v366, 15
      %v818 = vpop.permute.xlu0 %817
      %819 = vrot.lane.b32.xlu0 %v367, 15
      %v820 = vpop.permute.xlu0 %819
      %821 = vrot.lane.b32.xlu0 %v368, 15
      %v822 = vpop.permute.xlu0 %821
      %823 = vrot.lane.b32.xlu0 %v369, 15
      %v824 = vpop.permute.xlu0 %823
      %825 = vrot.lane.b32.xlu0 %v370, 15
      %v826 = vpop.permute.xlu0 %825
      %827 = vrot.lane.b32.xlu0 %v371, 15
      %v828 = vpop.permute.xlu0 %827
      %829 = vrot.lane.b32.xlu0 %v372, 15
      %v830 = vpop.permute.xlu0 %829
      %831 = vrot.lane.b32.xlu0 %v373, 15
      %v832 = vpop.permute.xlu0 %831
      %833 = vrot.lane.b32.xlu0 %v374, 15
      %v834 = vpop.permute.xlu0 %833
      %835 = vrot.lane.b32.xlu0 %v375, 15
      %v836 = vpop.permute.xlu0 %835
      %837 = vrot.lane.b32.xlu0 %v376, 15
      %v838 = vpop.permute.xlu0 %837
      %839 = vrot.lane.b32.xlu0 %v377, 15
      %v840 = vpop.permute.xlu0 %839
      %841 = vrot.lane.b32.xlu0 %v378, 15
      %v842 = vpop.permute.xlu0 %841
      %843 = vrot.lane.b32.xlu0 %v379, 15
      %v844 = vpop.permute.xlu0 %843
      %845 = vrot.lane.b32.xlu0 %v380, 15
      %v846 = vpop.permute.xlu0 %845
      %847 = vrot.lane.b32.xlu0 %v381, 15
      %v848 = vpop.permute.xlu0 %847
      %vm849 = vcmask 121856
      %v850 = vsel %vm849, %v818, %v820
      %v851 = vsel %vm849, %v822, %v824
      %v852 = vsel %vm849, %v826, %v828
      %v853 = vsel %vm849, %v830, %v832
      %v854 = vsel %vm849, %v834, %v836
      %v855 = vsel %vm849, %v838, %v840
      %v856 = vsel %vm849, %v842, %v844
      %v857 = vsel %vm849, %v846, %v848
      %v874 = vsel %vm849, 0.0, %v818
      %v875 = vsel %vm849, 0.0, %v822
      %v876 = vsel %vm849, 0.0, %v826
      %v877 = vsel %vm849, 0.0, %v830
      %v878 = vsel %vm849, 0.0, %v834
      %v879 = vsel %vm849, 0.0, %v838
      %v880 = vsel %vm849, 0.0, %v842
      %v881 = vsel %vm849, 0.0, %v846
      %v882 = vmul.f32 %v874, %v358
      %v883 = vmul.f32 %v850, %v359
      %v884 = vmul.f32 %v875, %v358
      %v885 = vmul.f32 %v851, %v359
      %v886 = vmul.f32 %v876, %v358
      %v887 = vmul.f32 %v852, %v359
      %v888 = vmul.f32 %v877, %v358
      %v889 = vmul.f32 %v853, %v359
      %v890 = vmul.f32 %v878, %v358
      %v891 = vmul.f32 %v854, %v359
      %v892 = vmul.f32 %v879, %v358
      %v893 = vmul.f32 %v855, %v359
      %v894 = vmul.f32 %v880, %v358
      %v895 = vmul.f32 %v856, %v359
      %v896 = vmul.f32 %v881, %v358
      %v897 = vmul.f32 %v857, %v359
      %v898 = vmul.f32 %v882, %v795
      %v899 = vmul.f32 %v883, %v795
      %v900 = vmul.f32 %v884, %v798
      %v901 = vmul.f32 %v885, %v798
      %v902 = vmul.f32 %v886, %v801
      %v903 = vmul.f32 %v887, %v801
      %v904 = vmul.f32 %v888, %v804
      %v905 = vmul.f32 %v889, %v804
      %v906 = vmul.f32 %v890, %v807
      %v907 = vmul.f32 %v891, %v807
      %v908 = vmul.f32 %v892, %v810
      %v909 = vmul.f32 %v893, %v810
      %v910 = vmul.f32 %v894, %v813
      %v911 = vmul.f32 %v895, %v813
      %v912 = vmul.f32 %v896, %v816
      %v913 = vmul.f32 %v897, %v816
      %v914 = vadd.f32 %v761, %v898
      %v915 = vadd.f32 %v762, %v899
      %v916 = vadd.f32 %v763, %v900
      %v917 = vadd.f32 %v764, %v901
      %v918 = vadd.f32 %v765, %v902
      %v919 = vadd.f32 %v766, %v903
      %v920 = vadd.f32 %v767, %v904
      %v921 = vadd.f32 %v768, %v905
      %v922 = vadd.f32 %v769, %v906
      %v923 = vadd.f32 %v770, %v907
      %v924 = vadd.f32 %v771, %v908
      %v925 = vadd.f32 %v772, %v909
      %v926 = vadd.f32 %v773, %v910
      %v927 = vadd.f32 %v774, %v911
      %v928 = vadd.f32 %v775, %v912
      %v929 = vadd.f32 %v776, %v913
      %v930 = vld [vmem:[%s3 + $0xc0] sm:$0xff]
      %v931 = vld [vmem:[%s3 + $0xc8] sm:$0xff]
      %v932 = vld [vmem:[%s3 + $0xd0] sm:$0xff]
      %v933 = vld [vmem:[%s3 + $0xd8] sm:$0xff]
      %v934 = vld [vmem:[%s3 + $0xe0] sm:$0xff]
      %v935 = vld [vmem:[%s3 + $0xe8] sm:$0xff]
      %v936 = vld [vmem:[%s3 + $0xf0] sm:$0xff]
      %v937 = vld [vmem:[%s3 + $0xf8] sm:$0xff]
      %v938 = vmul.f32 %v930, %v470
      %v939 = vmul.f32 %v931, %v470
      %v940 = vmul.f32 %v932, %v470
      %v941 = vmul.f32 %v933, %v470
      %v942 = vmul.f32 %v934, %v470
      %v943 = vmul.f32 %v935, %v470
      %v944 = vmul.f32 %v936, %v470
      %v945 = vmul.f32 %v937, %v470
      %v946 = vsel %vm446, %v938, 0.0
      %947 = vadd.xlane.f32.xlu0 %v946
      %v948 = vpop.xlane.xlu0 %947
      %v949 = vsel %vm446, %v939, 0.0
      %950 = vadd.xlane.f32.xlu0 %v949
      %v951 = vpop.xlane.xlu0 %950
      %v952 = vsel %vm446, %v940, 0.0
      %953 = vadd.xlane.f32.xlu0 %v952
      %v954 = vpop.xlane.xlu0 %953
      %v955 = vsel %vm446, %v941, 0.0
      %956 = vadd.xlane.f32.xlu0 %v955
      %v957 = vpop.xlane.xlu0 %956
      %v958 = vsel %vm446, %v942, 0.0
      %959 = vadd.xlane.f32.xlu0 %v958
      %v960 = vpop.xlane.xlu0 %959
      %v961 = vsel %vm446, %v943, 0.0
      %962 = vadd.xlane.f32.xlu0 %v961
      %v963 = vpop.xlane.xlu0 %962
      %v964 = vsel %vm446, %v944, 0.0
      %965 = vadd.xlane.f32.xlu0 %v964
      %v966 = vpop.xlane.xlu0 %965
      %v967 = vsel %vm446, %v945, 0.0
      %968 = vadd.xlane.f32.xlu0 %v967
      %v969 = vpop.xlane.xlu0 %968
      %970 = vrot.lane.b32.xlu0 %v366, 1
      %v971 = vpop.permute.xlu0 %970
      %972 = vrot.lane.b32.xlu0 %v367, 1
      %v973 = vpop.permute.xlu0 %972
      %974 = vrot.lane.b32.xlu0 %v368, 1
      %v975 = vpop.permute.xlu0 %974
      %976 = vrot.lane.b32.xlu0 %v369, 1
      %v977 = vpop.permute.xlu0 %976
      %978 = vrot.lane.b32.xlu0 %v370, 1
      %v979 = vpop.permute.xlu0 %978
      %980 = vrot.lane.b32.xlu0 %v371, 1
      %v981 = vpop.permute.xlu0 %980
      %982 = vrot.lane.b32.xlu0 %v372, 1
      %v983 = vpop.permute.xlu0 %982
      %984 = vrot.lane.b32.xlu0 %v373, 1
      %v985 = vpop.permute.xlu0 %984
      %986 = vrot.lane.b32.xlu0 %v374, 1
      %v987 = vpop.permute.xlu0 %986
      %988 = vrot.lane.b32.xlu0 %v375, 1
      %v989 = vpop.permute.xlu0 %988
      %990 = vrot.lane.b32.xlu0 %v376, 1
      %v991 = vpop.permute.xlu0 %990
      %992 = vrot.lane.b32.xlu0 %v377, 1
      %v993 = vpop.permute.xlu0 %992
      %994 = vrot.lane.b32.xlu0 %v378, 1
      %v995 = vpop.permute.xlu0 %994
      %996 = vrot.lane.b32.xlu0 %v379, 1
      %v997 = vpop.permute.xlu0 %996
      %998 = vrot.lane.b32.xlu0 %v380, 1
      %v999 = vpop.permute.xlu0 %998
      %1000 = vrot.lane.b32.xlu0 %v381, 1
      %v1001 = vpop.permute.xlu0 %1000
      %vm1002 = vcmask 7168
      %v1003 = vsel %vm1002, %v971, %v973
      %v1004 = vsel %vm1002, %v975, %v977
      %v1005 = vsel %vm1002, %v979, %v981
      %v1006 = vsel %vm1002, %v983, %v985
      %v1007 = vsel %vm1002, %v987, %v989
      %v1008 = vsel %vm1002, %v991, %v993
      %v1009 = vsel %vm1002, %v995, %v997
      %v1010 = vsel %vm1002, %v999, %v1001
      %v1027 = vsel %vm1002, 0.0, %v971
      %v1028 = vsel %vm1002, 0.0, %v975
      %v1029 = vsel %vm1002, 0.0, %v979
      %v1030 = vsel %vm1002, 0.0, %v983
      %v1031 = vsel %vm1002, 0.0, %v987
      %v1032 = vsel %vm1002, 0.0, %v991
      %v1033 = vsel %vm1002, 0.0, %v995
      %v1034 = vsel %vm1002, 0.0, %v999
      %v1035 = vmul.f32 %v1027, %v364
      %v1036 = vmul.f32 %v1003, %v365
      %v1037 = vmul.f32 %v1028, %v364
      %v1038 = vmul.f32 %v1004, %v365
      %v1039 = vmul.f32 %v1029, %v364
      %v1040 = vmul.f32 %v1005, %v365
      %v1041 = vmul.f32 %v1030, %v364
      %v1042 = vmul.f32 %v1006, %v365
      %v1043 = vmul.f32 %v1031, %v364
      %v1044 = vmul.f32 %v1007, %v365
      %v1045 = vmul.f32 %v1032, %v364
      %v1046 = vmul.f32 %v1008, %v365
      %v1047 = vmul.f32 %v1033, %v364
      %v1048 = vmul.f32 %v1009, %v365
      %v1049 = vmul.f32 %v1034, %v364
      %v1050 = vmul.f32 %v1010, %v365
      %v1051 = vmul.f32 %v1035, %v948
      %v1052 = vmul.f32 %v1036, %v948
      %v1053 = vmul.f32 %v1037, %v951
      %v1054 = vmul.f32 %v1038, %v951
      %v1055 = vmul.f32 %v1039, %v954
      %v1056 = vmul.f32 %v1040, %v954
      %v1057 = vmul.f32 %v1041, %v957
      %v1058 = vmul.f32 %v1042, %v957
      %v1059 = vmul.f32 %v1043, %v960
      %v1060 = vmul.f32 %v1044, %v960
      %v1061 = vmul.f32 %v1045, %v963
      %v1062 = vmul.f32 %v1046, %v963
      %v1063 = vmul.f32 %v1047, %v966
      %v1064 = vmul.f32 %v1048, %v966
      %v1065 = vmul.f32 %v1049, %v969
      %v1066 = vmul.f32 %v1050, %v969
      %v1067 = vadd.f32 %v914, %v1051
      %v1068 = vadd.f32 %v915, %v1052
      %v1069 = vadd.f32 %v916, %v1053
      %v1070 = vadd.f32 %v917, %v1054
      %v1071 = vadd.f32 %v918, %v1055
      %v1072 = vadd.f32 %v919, %v1056
      %v1073 = vadd.f32 %v920, %v1057
      %v1074 = vadd.f32 %v921, %v1058
      %v1075 = vadd.f32 %v922, %v1059
      %v1076 = vadd.f32 %v923, %v1060
      %v1077 = vadd.f32 %v924, %v1061
      %v1078 = vadd.f32 %v925, %v1062
      %v1079 = vadd.f32 %v926, %v1063
      %v1080 = vadd.f32 %v927, %v1064
      %v1081 = vadd.f32 %v928, %v1065
      %v1082 = vadd.f32 %v929, %v1066
      %v1083 = vld [vmem:[%s3 + $0x100] sm:$0xff]
      %v1084 = vld [vmem:[%s3 + $0x108] sm:$0xff]
      %v1085 = vld [vmem:[%s3 + $0x110] sm:$0xff]
      %v1086 = vld [vmem:[%s3 + $0x118] sm:$0xff]
      %v1087 = vld [vmem:[%s3 + $0x120] sm:$0xff]
      %v1088 = vld [vmem:[%s3 + $0x128] sm:$0xff]
      %v1089 = vld [vmem:[%s3 + $0x130] sm:$0xff]
      %v1090 = vld [vmem:[%s3 + $0x138] sm:$0xff]
      %v1091 = vmul.f32 %v1083, %v470
      %v1092 = vmul.f32 %v1084, %v470
      %v1093 = vmul.f32 %v1085, %v470
      %v1094 = vmul.f32 %v1086, %v470
      %v1095 = vmul.f32 %v1087, %v470
      %v1096 = vmul.f32 %v1088, %v470
      %v1097 = vmul.f32 %v1089, %v470
      %v1098 = vmul.f32 %v1090, %v470
      %v1099 = vsel %vm446, %v1091, 0.0
      %1100 = vadd.xlane.f32.xlu0 %v1099
      %v1101 = vpop.xlane.xlu0 %1100
      %v1102 = vsel %vm446, %v1092, 0.0
      %1103 = vadd.xlane.f32.xlu0 %v1102
      %v1104 = vpop.xlane.xlu0 %1103
      %v1105 = vsel %vm446, %v1093, 0.0
      %1106 = vadd.xlane.f32.xlu0 %v1105
      %v1107 = vpop.xlane.xlu0 %1106
      %v1108 = vsel %vm446, %v1094, 0.0
      %1109 = vadd.xlane.f32.xlu0 %v1108
      %v1110 = vpop.xlane.xlu0 %1109
      %v1111 = vsel %vm446, %v1095, 0.0
      %1112 = vadd.xlane.f32.xlu0 %v1111
      %v1113 = vpop.xlane.xlu0 %1112
      %v1114 = vsel %vm446, %v1096, 0.0
      %1115 = vadd.xlane.f32.xlu0 %v1114
      %v1116 = vpop.xlane.xlu0 %1115
      %v1117 = vsel %vm446, %v1097, 0.0
      %1118 = vadd.xlane.f32.xlu0 %v1117
      %v1119 = vpop.xlane.xlu0 %1118
      %v1120 = vsel %vm446, %v1098, 0.0
      %1121 = vadd.xlane.f32.xlu0 %v1120
      %v1122 = vpop.xlane.xlu0 %1121
      %v1123 = vmul.f32 %v366, %v1101
      %v1124 = vmul.f32 %v367, %v1101
      %v1125 = vmul.f32 %v368, %v1104
      %v1126 = vmul.f32 %v369, %v1104
      %v1127 = vmul.f32 %v370, %v1107
      %v1128 = vmul.f32 %v371, %v1107
      %v1129 = vmul.f32 %v372, %v1110
      %v1130 = vmul.f32 %v373, %v1110
      %v1131 = vmul.f32 %v374, %v1113
      %v1132 = vmul.f32 %v375, %v1113
      %v1133 = vmul.f32 %v376, %v1116
      %v1134 = vmul.f32 %v377, %v1116
      %v1135 = vmul.f32 %v378, %v1119
      %v1136 = vmul.f32 %v379, %v1119
      %v1137 = vmul.f32 %v380, %v1122
      %v1138 = vmul.f32 %v381, %v1122
      %v1139 = vadd.f32 %v1067, %v1123
      %v1140 = vadd.f32 %v1068, %v1124
      %v1141 = vadd.f32 %v1069, %v1125
      %v1142 = vadd.f32 %v1070, %v1126
      %v1143 = vadd.f32 %v1071, %v1127
      %v1144 = vadd.f32 %v1072, %v1128
      %v1145 = vadd.f32 %v1073, %v1129
      %v1146 = vadd.f32 %v1074, %v1130
      %v1147 = vadd.f32 %v1075, %v1131
      %v1148 = vadd.f32 %v1076, %v1132
      %v1149 = vadd.f32 %v1077, %v1133
      %v1150 = vadd.f32 %v1078, %v1134
      %v1151 = vadd.f32 %v1079, %v1135
      %v1152 = vadd.f32 %v1080, %v1136
      %v1153 = vadd.f32 %v1081, %v1137
      %v1154 = vadd.f32 %v1082, %v1138
      %v1155 = vld [vmem:[%s3 + $0x140] sm:$0xff]
      %v1156 = vld [vmem:[%s3 + $0x148] sm:$0xff]
      %v1157 = vld [vmem:[%s3 + $0x150] sm:$0xff]
      %v1158 = vld [vmem:[%s3 + $0x158] sm:$0xff]
      %v1159 = vld [vmem:[%s3 + $0x160] sm:$0xff]
      %v1160 = vld [vmem:[%s3 + $0x168] sm:$0xff]
      %v1161 = vld [vmem:[%s3 + $0x170] sm:$0xff]
      %v1162 = vld [vmem:[%s3 + $0x178] sm:$0xff]
      %v1163 = vmul.f32 %v1155, %v470
      %v1164 = vmul.f32 %v1156, %v470
      %v1165 = vmul.f32 %v1157, %v470
      %v1166 = vmul.f32 %v1158, %v470
      %v1167 = vmul.f32 %v1159, %v470
      %v1168 = vmul.f32 %v1160, %v470
      %v1169 = vmul.f32 %v1161, %v470
      %v1170 = vmul.f32 %v1162, %v470
      %v1171 = vsel %vm446, %v1163, 0.0
      %1172 = vadd.xlane.f32.xlu0 %v1171
      %v1173 = vpop.xlane.xlu0 %1172
      %v1174 = vsel %vm446, %v1164, 0.0
      %1175 = vadd.xlane.f32.xlu0 %v1174
      %v1176 = vpop.xlane.xlu0 %1175
      %v1177 = vsel %vm446, %v1165, 0.0
      %1178 = vadd.xlane.f32.xlu0 %v1177
      %v1179 = vpop.xlane.xlu0 %1178
      %v1180 = vsel %vm446, %v1166, 0.0
      %1181 = vadd.xlane.f32.xlu0 %v1180
      %v1182 = vpop.xlane.xlu0 %1181
      %v1183 = vsel %vm446, %v1167, 0.0
      %1184 = vadd.xlane.f32.xlu0 %v1183
      %v1185 = vpop.xlane.xlu0 %1184
      %v1186 = vsel %vm446, %v1168, 0.0
      %1187 = vadd.xlane.f32.xlu0 %v1186
      %v1188 = vpop.xlane.xlu0 %1187
      %v1189 = vsel %vm446, %v1169, 0.0
      %1190 = vadd.xlane.f32.xlu0 %v1189
      %v1191 = vpop.xlane.xlu0 %1190
      %v1192 = vsel %vm446, %v1170, 0.0
      %1193 = vadd.xlane.f32.xlu0 %v1192
      %v1194 = vpop.xlane.xlu0 %1193
      %1195 = vrot.lane.b32.xlu0 %v366, 127
      %v1196 = vpop.permute.xlu0 %1195
      %1197 = vrot.lane.b32.xlu0 %v367, 127
      %v1198 = vpop.permute.xlu0 %1197
      %1199 = vrot.lane.b32.xlu0 %v368, 127
      %v1200 = vpop.permute.xlu0 %1199
      %1201 = vrot.lane.b32.xlu0 %v369, 127
      %v1202 = vpop.permute.xlu0 %1201
      %1203 = vrot.lane.b32.xlu0 %v370, 127
      %v1204 = vpop.permute.xlu0 %1203
      %1205 = vrot.lane.b32.xlu0 %v371, 127
      %v1206 = vpop.permute.xlu0 %1205
      %1207 = vrot.lane.b32.xlu0 %v372, 127
      %v1208 = vpop.permute.xlu0 %1207
      %1209 = vrot.lane.b32.xlu0 %v373, 127
      %v1210 = vpop.permute.xlu0 %1209
      %1211 = vrot.lane.b32.xlu0 %v374, 127
      %v1212 = vpop.permute.xlu0 %1211
      %1213 = vrot.lane.b32.xlu0 %v375, 127
      %v1214 = vpop.permute.xlu0 %1213
      %1215 = vrot.lane.b32.xlu0 %v376, 127
      %v1216 = vpop.permute.xlu0 %1215
      %1217 = vrot.lane.b32.xlu0 %v377, 127
      %v1218 = vpop.permute.xlu0 %1217
      %1219 = vrot.lane.b32.xlu0 %v378, 127
      %v1220 = vpop.permute.xlu0 %1219
      %1221 = vrot.lane.b32.xlu0 %v379, 127
      %v1222 = vpop.permute.xlu0 %1221
      %1223 = vrot.lane.b32.xlu0 %v380, 127
      %v1224 = vpop.permute.xlu0 %1223
      %1225 = vrot.lane.b32.xlu0 %v381, 127
      %v1226 = vpop.permute.xlu0 %1225
      %vm1227 = vcmask 1039360
      %v1228 = vsel %vm1227, %v1196, %v1198
      %v1229 = vsel %vm1227, %v1200, %v1202
      %v1230 = vsel %vm1227, %v1204, %v1206
      %v1231 = vsel %vm1227, %v1208, %v1210
      %v1232 = vsel %vm1227, %v1212, %v1214
      %v1233 = vsel %vm1227, %v1216, %v1218
      %v1234 = vsel %vm1227, %v1220, %v1222
      %v1235 = vsel %vm1227, %v1224, %v1226
      %v1252 = vsel %vm1227, %v1198, 0.0
      %v1253 = vsel %vm1227, %v1202, 0.0
      %v1254 = vsel %vm1227, %v1206, 0.0
      %v1255 = vsel %vm1227, %v1210, 0.0
      %v1256 = vsel %vm1227, %v1214, 0.0
      %v1257 = vsel %vm1227, %v1218, 0.0
      %v1258 = vsel %vm1227, %v1222, 0.0
      %v1259 = vsel %vm1227, %v1226, 0.0
      %v1260 = vmul.f32 %v1228, %v358
      %v1261 = vmul.f32 %v1252, %v359
      %v1262 = vmul.f32 %v1229, %v358
      %v1263 = vmul.f32 %v1253, %v359
      %v1264 = vmul.f32 %v1230, %v358
      %v1265 = vmul.f32 %v1254, %v359
      %v1266 = vmul.f32 %v1231, %v358
      %v1267 = vmul.f32 %v1255, %v359
      %v1268 = vmul.f32 %v1232, %v358
      %v1269 = vmul.f32 %v1256, %v359
      %v1270 = vmul.f32 %v1233, %v358
      %v1271 = vmul.f32 %v1257, %v359
      %v1272 = vmul.f32 %v1234, %v358
      %v1273 = vmul.f32 %v1258, %v359
      %v1274 = vmul.f32 %v1235, %v358
      %v1275 = vmul.f32 %v1259, %v359
      %v1276 = vmul.f32 %v1260, %v1173
      %v1277 = vmul.f32 %v1261, %v1173
      %v1278 = vmul.f32 %v1262, %v1176
      %v1279 = vmul.f32 %v1263, %v1176
      %v1280 = vmul.f32 %v1264, %v1179
      %v1281 = vmul.f32 %v1265, %v1179
      %v1282 = vmul.f32 %v1266, %v1182
      %v1283 = vmul.f32 %v1267, %v1182
      %v1284 = vmul.f32 %v1268, %v1185
      %v1285 = vmul.f32 %v1269, %v1185
      %v1286 = vmul.f32 %v1270, %v1188
      %v1287 = vmul.f32 %v1271, %v1188
      %v1288 = vmul.f32 %v1272, %v1191
      %v1289 = vmul.f32 %v1273, %v1191
      %v1290 = vmul.f32 %v1274, %v1194
      %v1291 = vmul.f32 %v1275, %v1194
      %v1292 = vadd.f32 %v1139, %v1276
      %v1293 = vadd.f32 %v1140, %v1277
      %v1294 = vadd.f32 %v1141, %v1278
      %v1295 = vadd.f32 %v1142, %v1279
      %v1296 = vadd.f32 %v1143, %v1280
      %v1297 = vadd.f32 %v1144, %v1281
      %v1298 = vadd.f32 %v1145, %v1282
      %v1299 = vadd.f32 %v1146, %v1283
      %v1300 = vadd.f32 %v1147, %v1284
      %v1301 = vadd.f32 %v1148, %v1285
      %v1302 = vadd.f32 %v1149, %v1286
      %v1303 = vadd.f32 %v1150, %v1287
      %v1304 = vadd.f32 %v1151, %v1288
      %v1305 = vadd.f32 %v1152, %v1289
      %v1306 = vadd.f32 %v1153, %v1290
      %v1307 = vadd.f32 %v1154, %v1291
      %v1308 = vld [vmem:[%s3 + $0x180] sm:$0xff]
      %v1309 = vld [vmem:[%s3 + $0x188] sm:$0xff]
      %v1310 = vld [vmem:[%s3 + $0x190] sm:$0xff]
      %v1311 = vld [vmem:[%s3 + $0x198] sm:$0xff]
      %v1312 = vld [vmem:[%s3 + $0x1a0] sm:$0xff]
      %v1313 = vld [vmem:[%s3 + $0x1a8] sm:$0xff]
      %v1314 = vld [vmem:[%s3 + $0x1b0] sm:$0xff]
      %v1315 = vld [vmem:[%s3 + $0x1b8] sm:$0xff]
      %v1316 = vmul.f32 %v1308, %v470
      %v1317 = vmul.f32 %v1309, %v470
      %v1318 = vmul.f32 %v1310, %v470
      %v1319 = vmul.f32 %v1311, %v470
      %v1320 = vmul.f32 %v1312, %v470
      %v1321 = vmul.f32 %v1313, %v470
      %v1322 = vmul.f32 %v1314, %v470
      %v1323 = vmul.f32 %v1315, %v470
      %v1324 = vsel %vm446, %v1316, 0.0
      %1325 = vadd.xlane.f32.xlu0 %v1324
      %v1326 = vpop.xlane.xlu0 %1325
      %v1327 = vsel %vm446, %v1317, 0.0
      %1328 = vadd.xlane.f32.xlu0 %v1327
      %v1329 = vpop.xlane.xlu0 %1328
      %v1330 = vsel %vm446, %v1318, 0.0
      %1331 = vadd.xlane.f32.xlu0 %v1330
      %v1332 = vpop.xlane.xlu0 %1331
      %v1333 = vsel %vm446, %v1319, 0.0
      %1334 = vadd.xlane.f32.xlu0 %v1333
      %v1335 = vpop.xlane.xlu0 %1334
      %v1336 = vsel %vm446, %v1320, 0.0
      %1337 = vadd.xlane.f32.xlu0 %v1336
      %v1338 = vpop.xlane.xlu0 %1337
      %v1339 = vsel %vm446, %v1321, 0.0
      %1340 = vadd.xlane.f32.xlu0 %v1339
      %v1341 = vpop.xlane.xlu0 %1340
      %v1342 = vsel %vm446, %v1322, 0.0
      %1343 = vadd.xlane.f32.xlu0 %v1342
      %v1344 = vpop.xlane.xlu0 %1343
      %v1345 = vsel %vm446, %v1323, 0.0
      %1346 = vadd.xlane.f32.xlu0 %v1345
      %v1347 = vpop.xlane.xlu0 %1346
      %1348 = vrot.lane.b32.xlu0 %v366, 113
      %v1349 = vpop.permute.xlu0 %1348
      %1350 = vrot.lane.b32.xlu0 %v367, 113
      %v1351 = vpop.permute.xlu0 %1350
      %1352 = vrot.lane.b32.xlu0 %v368, 113
      %v1353 = vpop.permute.xlu0 %1352
      %1354 = vrot.lane.b32.xlu0 %v369, 113
      %v1355 = vpop.permute.xlu0 %1354
      %1356 = vrot.lane.b32.xlu0 %v370, 113
      %v1357 = vpop.permute.xlu0 %1356
      %1358 = vrot.lane.b32.xlu0 %v371, 113
      %v1359 = vpop.permute.xlu0 %1358
      %1360 = vrot.lane.b32.xlu0 %v372, 113
      %v1361 = vpop.permute.xlu0 %1360
      %1362 = vrot.lane.b32.xlu0 %v373, 113
      %v1363 = vpop.permute.xlu0 %1362
      %1364 = vrot.lane.b32.xlu0 %v374, 113
      %v1365 = vpop.permute.xlu0 %1364
      %1366 = vrot.lane.b32.xlu0 %v375, 113
      %v1367 = vpop.permute.xlu0 %1366
      %1368 = vrot.lane.b32.xlu0 %v376, 113
      %v1369 = vpop.permute.xlu0 %1368
      %1370 = vrot.lane.b32.xlu0 %v377, 113
      %v1371 = vpop.permute.xlu0 %1370
      %1372 = vrot.lane.b32.xlu0 %v378, 113
      %v1373 = vpop.permute.xlu0 %1372
      %1374 = vrot.lane.b32.xlu0 %v379, 113
      %v1375 = vpop.permute.xlu0 %1374
      %1376 = vrot.lane.b32.xlu0 %v380, 113
      %v1377 = vpop.permute.xlu0 %1376
      %1378 = vrot.lane.b32.xlu0 %v381, 113
      %v1379 = vpop.permute.xlu0 %1378
      %vm1380 = vcmask 924672
      %v1381 = vsel %vm1380, %v1349, %v1351
      %v1382 = vsel %vm1380, %v1353, %v1355
      %v1383 = vsel %vm1380, %v1357, %v1359
      %v1384 = vsel %vm1380, %v1361, %v1363
      %v1385 = vsel %vm1380, %v1365, %v1367
      %v1386 = vsel %vm1380, %v1369, %v1371
      %v1387 = vsel %vm1380, %v1373, %v1375
      %v1388 = vsel %vm1380, %v1377, %v1379
      %v1405 = vsel %vm1380, %v1351, 0.0
      %v1406 = vsel %vm1380, %v1355, 0.0
      %v1407 = vsel %vm1380, %v1359, 0.0
      %v1408 = vsel %vm1380, %v1363, 0.0
      %v1409 = vsel %vm1380, %v1367, 0.0
      %v1410 = vsel %vm1380, %v1371, 0.0
      %v1411 = vsel %vm1380, %v1375, 0.0
      %v1412 = vsel %vm1380, %v1379, 0.0
      %v1413 = vmul.f32 %v1381, %v364
      %v1414 = vmul.f32 %v1405, %v365
      %v1415 = vmul.f32 %v1382, %v364
      %v1416 = vmul.f32 %v1406, %v365
      %v1417 = vmul.f32 %v1383, %v364
      %v1418 = vmul.f32 %v1407, %v365
      %v1419 = vmul.f32 %v1384, %v364
      %v1420 = vmul.f32 %v1408, %v365
      %v1421 = vmul.f32 %v1385, %v364
      %v1422 = vmul.f32 %v1409, %v365
      %v1423 = vmul.f32 %v1386, %v364
      %v1424 = vmul.f32 %v1410, %v365
      %v1425 = vmul.f32 %v1387, %v364
      %v1426 = vmul.f32 %v1411, %v365
      %v1427 = vmul.f32 %v1388, %v364
      %v1428 = vmul.f32 %v1412, %v365
      %v1429 = vmul.f32 %v1413, %v1326
      %v1430 = vmul.f32 %v1414, %v1326
      %v1431 = vmul.f32 %v1415, %v1329
      %v1432 = vmul.f32 %v1416, %v1329
      %v1433 = vmul.f32 %v1417, %v1332
      %v1434 = vmul.f32 %v1418, %v1332
      %v1435 = vmul.f32 %v1419, %v1335
      %v1436 = vmul.f32 %v1420, %v1335
      %v1437 = vmul.f32 %v1421, %v1338
      %v1438 = vmul.f32 %v1422, %v1338
      %v1439 = vmul.f32 %v1423, %v1341
      %v1440 = vmul.f32 %v1424, %v1341
      %v1441 = vmul.f32 %v1425, %v1344
      %v1442 = vmul.f32 %v1426, %v1344
      %v1443 = vmul.f32 %v1427, %v1347
      %v1444 = vmul.f32 %v1428, %v1347
      %v1445 = vadd.f32 %v1292, %v1429
      %v1446 = vadd.f32 %v1293, %v1430
      %v1447 = vadd.f32 %v1294, %v1431
      %v1448 = vadd.f32 %v1295, %v1432
      %v1449 = vadd.f32 %v1296, %v1433
      %v1450 = vadd.f32 %v1297, %v1434
      %v1451 = vadd.f32 %v1298, %v1435
      %v1452 = vadd.f32 %v1299, %v1436
      %v1453 = vadd.f32 %v1300, %v1437
      %v1454 = vadd.f32 %v1301, %v1438
      %v1455 = vadd.f32 %v1302, %v1439
      %v1456 = vadd.f32 %v1303, %v1440
      %v1457 = vadd.f32 %v1304, %v1441
      %v1458 = vadd.f32 %v1305, %v1442
      %v1459 = vadd.f32 %v1306, %v1443
      %v1460 = vadd.f32 %v1307, %v1444
      %v1461 = vld [vmem:[%s3 + $0x1c0] sm:$0xff]
      %v1462 = vld [vmem:[%s3 + $0x1c8] sm:$0xff]
      %v1463 = vld [vmem:[%s3 + $0x1d0] sm:$0xff]
      %v1464 = vld [vmem:[%s3 + $0x1d8] sm:$0xff]
      %v1465 = vld [vmem:[%s3 + $0x1e0] sm:$0xff]
      %v1466 = vld [vmem:[%s3 + $0x1e8] sm:$0xff]
      %v1467 = vld [vmem:[%s3 + $0x1f0] sm:$0xff]
      %v1468 = vld [vmem:[%s3 + $0x1f8] sm:$0xff]
      %v1469 = vmul.f32 %v1461, %v470
      %v1470 = vmul.f32 %v1462, %v470
      %v1471 = vmul.f32 %v1463, %v470
      %v1472 = vmul.f32 %v1464, %v470
      %v1473 = vmul.f32 %v1465, %v470
      %v1474 = vmul.f32 %v1466, %v470
      %v1475 = vmul.f32 %v1467, %v470
      %v1476 = vmul.f32 %v1468, %v470
      %v1477 = vsel %vm446, %v1469, 0.0
      %1478 = vadd.xlane.f32.xlu0 %v1477
      %v1479 = vpop.xlane.xlu0 %1478
      %v1480 = vsel %vm446, %v1470, 0.0
      %1481 = vadd.xlane.f32.xlu0 %v1480
      %v1482 = vpop.xlane.xlu0 %1481
      %v1483 = vsel %vm446, %v1471, 0.0
      %1484 = vadd.xlane.f32.xlu0 %v1483
      %v1485 = vpop.xlane.xlu0 %1484
      %v1486 = vsel %vm446, %v1472, 0.0
      %1487 = vadd.xlane.f32.xlu0 %v1486
      %v1488 = vpop.xlane.xlu0 %1487
      %v1489 = vsel %vm446, %v1473, 0.0
      %1490 = vadd.xlane.f32.xlu0 %v1489
      %v1491 = vpop.xlane.xlu0 %1490
      %v1492 = vsel %vm446, %v1474, 0.0
      %1493 = vadd.xlane.f32.xlu0 %v1492
      %v1494 = vpop.xlane.xlu0 %1493
      %v1495 = vsel %vm446, %v1475, 0.0
      %1496 = vadd.xlane.f32.xlu0 %v1495
      %v1497 = vpop.xlane.xlu0 %1496
      %v1498 = vsel %vm446, %v1476, 0.0
      %1499 = vadd.xlane.f32.xlu0 %v1498
      %v1500 = vpop.xlane.xlu0 %1499
      %1501 = vrot.lane.b32.xlu0 %v366, 112
      %v1502 = vpop.permute.xlu0 %1501
      %1503 = vrot.lane.b32.xlu0 %v367, 112
      %v1504 = vpop.permute.xlu0 %1503
      %1505 = vrot.lane.b32.xlu0 %v368, 112
      %v1506 = vpop.permute.xlu0 %1505
      %1507 = vrot.lane.b32.xlu0 %v369, 112
      %v1508 = vpop.permute.xlu0 %1507
      %1509 = vrot.lane.b32.xlu0 %v370, 112
      %v1510 = vpop.permute.xlu0 %1509
      %1511 = vrot.lane.b32.xlu0 %v371, 112
      %v1512 = vpop.permute.xlu0 %1511
      %1513 = vrot.lane.b32.xlu0 %v372, 112
      %v1514 = vpop.permute.xlu0 %1513
      %1515 = vrot.lane.b32.xlu0 %v373, 112
      %v1516 = vpop.permute.xlu0 %1515
      %1517 = vrot.lane.b32.xlu0 %v374, 112
      %v1518 = vpop.permute.xlu0 %1517
      %1519 = vrot.lane.b32.xlu0 %v375, 112
      %v1520 = vpop.permute.xlu0 %1519
      %1521 = vrot.lane.b32.xlu0 %v376, 112
      %v1522 = vpop.permute.xlu0 %1521
      %1523 = vrot.lane.b32.xlu0 %v377, 112
      %v1524 = vpop.permute.xlu0 %1523
      %1525 = vrot.lane.b32.xlu0 %v378, 112
      %v1526 = vpop.permute.xlu0 %1525
      %1527 = vrot.lane.b32.xlu0 %v379, 112
      %v1528 = vpop.permute.xlu0 %1527
      %1529 = vrot.lane.b32.xlu0 %v380, 112
      %v1530 = vpop.permute.xlu0 %1529
      %1531 = vrot.lane.b32.xlu0 %v381, 112
      %v1532 = vpop.permute.xlu0 %1531
      %vm1533 = vcmask 916480
      %v1534 = vsel %vm1533, %v1502, %v1504
      %v1535 = vsel %vm1533, %v1506, %v1508
      %v1536 = vsel %vm1533, %v1510, %v1512
      %v1537 = vsel %vm1533, %v1514, %v1516
      %v1538 = vsel %vm1533, %v1518, %v1520
      %v1539 = vsel %vm1533, %v1522, %v1524
      %v1540 = vsel %vm1533, %v1526, %v1528
      %v1541 = vsel %vm1533, %v1530, %v1532
      %v1558 = vsel %vm1533, %v1504, 0.0
      %v1559 = vsel %vm1533, %v1508, 0.0
      %v1560 = vsel %vm1533, %v1512, 0.0
      %v1561 = vsel %vm1533, %v1516, 0.0
      %v1562 = vsel %vm1533, %v1520, 0.0
      %v1563 = vsel %vm1533, %v1524, 0.0
      %v1564 = vsel %vm1533, %v1528, 0.0
      %v1565 = vsel %vm1533, %v1532, 0.0
      %v1566 = vmul.f32 %v1534, %v1479
      %v1567 = vmul.f32 %v1558, %v1479
      %v1568 = vmul.f32 %v1535, %v1482
      %v1569 = vmul.f32 %v1559, %v1482
      %v1570 = vmul.f32 %v1536, %v1485
      %v1571 = vmul.f32 %v1560, %v1485
      %v1572 = vmul.f32 %v1537, %v1488
      %v1573 = vmul.f32 %v1561, %v1488
      %v1574 = vmul.f32 %v1538, %v1491
      %v1575 = vmul.f32 %v1562, %v1491
      %v1576 = vmul.f32 %v1539, %v1494
      %v1577 = vmul.f32 %v1563, %v1494
      %v1578 = vmul.f32 %v1540, %v1497
      %v1579 = vmul.f32 %v1564, %v1497
      %v1580 = vmul.f32 %v1541, %v1500
      %v1581 = vmul.f32 %v1565, %v1500
      %v1582 = vadd.f32 %v1445, %v1566
      %v1583 = vadd.f32 %v1446, %v1567
      %v1584 = vadd.f32 %v1447, %v1568
      %v1585 = vadd.f32 %v1448, %v1569
      %v1586 = vadd.f32 %v1449, %v1570
      %v1587 = vadd.f32 %v1450, %v1571
      %v1588 = vadd.f32 %v1451, %v1572
      %v1589 = vadd.f32 %v1452, %v1573
      %v1590 = vadd.f32 %v1453, %v1574
      %v1591 = vadd.f32 %v1454, %v1575
      %v1592 = vadd.f32 %v1455, %v1576
      %v1593 = vadd.f32 %v1456, %v1577
      %v1594 = vadd.f32 %v1457, %v1578
      %v1595 = vadd.f32 %v1458, %v1579
      %v1596 = vadd.f32 %v1459, %v1580
      %v1597 = vadd.f32 %v1460, %v1581
      %v1598 = vld [vmem:[%s3 + $0x200] sm:$0xff]
      %v1599 = vld [vmem:[%s3 + $0x208] sm:$0xff]
      %v1600 = vld [vmem:[%s3 + $0x210] sm:$0xff]
      %v1601 = vld [vmem:[%s3 + $0x218] sm:$0xff]
      %v1602 = vld [vmem:[%s3 + $0x220] sm:$0xff]
      %v1603 = vld [vmem:[%s3 + $0x228] sm:$0xff]
      %v1604 = vld [vmem:[%s3 + $0x230] sm:$0xff]
      %v1605 = vld [vmem:[%s3 + $0x238] sm:$0xff]
      %v1606 = vmul.f32 %v1598, %v470
      %v1607 = vmul.f32 %v1599, %v470
      %v1608 = vmul.f32 %v1600, %v470
      %v1609 = vmul.f32 %v1601, %v470
      %v1610 = vmul.f32 %v1602, %v470
      %v1611 = vmul.f32 %v1603, %v470
      %v1612 = vmul.f32 %v1604, %v470
      %v1613 = vmul.f32 %v1605, %v470
      %v1614 = vsel %vm446, %v1606, 0.0
      %1615 = vadd.xlane.f32.xlu0 %v1614
      %v1616 = vpop.xlane.xlu0 %1615
      %v1617 = vsel %vm446, %v1607, 0.0
      %1618 = vadd.xlane.f32.xlu0 %v1617
      %v1619 = vpop.xlane.xlu0 %1618
      %v1620 = vsel %vm446, %v1608, 0.0
      %1621 = vadd.xlane.f32.xlu0 %v1620
      %v1622 = vpop.xlane.xlu0 %1621
      %v1623 = vsel %vm446, %v1609, 0.0
      %1624 = vadd.xlane.f32.xlu0 %v1623
      %v1625 = vpop.xlane.xlu0 %1624
      %v1626 = vsel %vm446, %v1610, 0.0
      %1627 = vadd.xlane.f32.xlu0 %v1626
      %v1628 = vpop.xlane.xlu0 %1627
      %v1629 = vsel %vm446, %v1611, 0.0
      %1630 = vadd.xlane.f32.xlu0 %v1629
      %v1631 = vpop.xlane.xlu0 %1630
      %v1632 = vsel %vm446, %v1612, 0.0
      %1633 = vadd.xlane.f32.xlu0 %v1632
      %v1634 = vpop.xlane.xlu0 %1633
      %v1635 = vsel %vm446, %v1613, 0.0
      %1636 = vadd.xlane.f32.xlu0 %v1635
      %v1637 = vpop.xlane.xlu0 %1636
      %1638 = vrot.lane.b32.xlu0 %v366, 111
      %v1639 = vpop.permute.xlu0 %1638
      %1640 = vrot.lane.b32.xlu0 %v367, 111
      %v1641 = vpop.permute.xlu0 %1640
      %1642 = vrot.lane.b32.xlu0 %v368, 111
      %v1643 = vpop.permute.xlu0 %1642
      %1644 = vrot.lane.b32.xlu0 %v369, 111
      %v1645 = vpop.permute.xlu0 %1644
      %1646 = vrot.lane.b32.xlu0 %v370, 111
      %v1647 = vpop.permute.xlu0 %1646
      %1648 = vrot.lane.b32.xlu0 %v371, 111
      %v1649 = vpop.permute.xlu0 %1648
      %1650 = vrot.lane.b32.xlu0 %v372, 111
      %v1651 = vpop.permute.xlu0 %1650
      %1652 = vrot.lane.b32.xlu0 %v373, 111
      %v1653 = vpop.permute.xlu0 %1652
      %1654 = vrot.lane.b32.xlu0 %v374, 111
      %v1655 = vpop.permute.xlu0 %1654
      %1656 = vrot.lane.b32.xlu0 %v375, 111
      %v1657 = vpop.permute.xlu0 %1656
      %1658 = vrot.lane.b32.xlu0 %v376, 111
      %v1659 = vpop.permute.xlu0 %1658
      %1660 = vrot.lane.b32.xlu0 %v377, 111
      %v1661 = vpop.permute.xlu0 %1660
      %1662 = vrot.lane.b32.xlu0 %v378, 111
      %v1663 = vpop.permute.xlu0 %1662
      %1664 = vrot.lane.b32.xlu0 %v379, 111
      %v1665 = vpop.permute.xlu0 %1664
      %1666 = vrot.lane.b32.xlu0 %v380, 111
      %v1667 = vpop.permute.xlu0 %1666
      %1668 = vrot.lane.b32.xlu0 %v381, 111
      %v1669 = vpop.permute.xlu0 %1668
      %vm1670 = vcmask 908288
      %v1671 = vsel %vm1670, %v1639, %v1641
      %v1672 = vsel %vm1670, %v1643, %v1645
      %v1673 = vsel %vm1670, %v1647, %v1649
      %v1674 = vsel %vm1670, %v1651, %v1653
      %v1675 = vsel %vm1670, %v1655, %v1657
      %v1676 = vsel %vm1670, %v1659, %v1661
      %v1677 = vsel %vm1670, %v1663, %v1665
      %v1678 = vsel %vm1670, %v1667, %v1669
      %v1695 = vsel %vm1670, %v1641, 0.0
      %v1696 = vsel %vm1670, %v1645, 0.0
      %v1697 = vsel %vm1670, %v1649, 0.0
      %v1698 = vsel %vm1670, %v1653, 0.0
      %v1699 = vsel %vm1670, %v1657, 0.0
      %v1700 = vsel %vm1670, %v1661, 0.0
      %v1701 = vsel %vm1670, %v1665, 0.0
      %v1702 = vsel %vm1670, %v1669, 0.0
      %v1703 = vmul.f32 %v1671, %v358
      %v1704 = vmul.f32 %v1695, %v359
      %v1705 = vmul.f32 %v1672, %v358
      %v1706 = vmul.f32 %v1696, %v359
      %v1707 = vmul.f32 %v1673, %v358
      %v1708 = vmul.f32 %v1697, %v359
      %v1709 = vmul.f32 %v1674, %v358
      %v1710 = vmul.f32 %v1698, %v359
      %v1711 = vmul.f32 %v1675, %v358
      %v1712 = vmul.f32 %v1699, %v359
      %v1713 = vmul.f32 %v1676, %v358
      %v1714 = vmul.f32 %v1700, %v359
      %v1715 = vmul.f32 %v1677, %v358
      %v1716 = vmul.f32 %v1701, %v359
      %v1717 = vmul.f32 %v1678, %v358
      %v1718 = vmul.f32 %v1702, %v359
      %v1719 = vmul.f32 %v1703, %v1616
      %v1720 = vmul.f32 %v1704, %v1616
      %v1721 = vmul.f32 %v1705, %v1619
      %v1722 = vmul.f32 %v1706, %v1619
      %v1723 = vmul.f32 %v1707, %v1622
      %v1724 = vmul.f32 %v1708, %v1622
      %v1725 = vmul.f32 %v1709, %v1625
      %v1726 = vmul.f32 %v1710, %v1625
      %v1727 = vmul.f32 %v1711, %v1628
      %v1728 = vmul.f32 %v1712, %v1628
      %v1729 = vmul.f32 %v1713, %v1631
      %v1730 = vmul.f32 %v1714, %v1631
      %v1731 = vmul.f32 %v1715, %v1634
      %v1732 = vmul.f32 %v1716, %v1634
      %v1733 = vmul.f32 %v1717, %v1637
      %v1734 = vmul.f32 %v1718, %v1637
      %v1735 = vadd.f32 %v1582, %v1719
      %v1736 = vadd.f32 %v1583, %v1720
      %v1737 = vadd.f32 %v1584, %v1721
      %v1738 = vadd.f32 %v1585, %v1722
      %v1739 = vadd.f32 %v1586, %v1723
      %v1740 = vadd.f32 %v1587, %v1724
      %v1741 = vadd.f32 %v1588, %v1725
      %v1742 = vadd.f32 %v1589, %v1726
      %v1743 = vadd.f32 %v1590, %v1727
      %v1744 = vadd.f32 %v1591, %v1728
      %v1745 = vadd.f32 %v1592, %v1729
      %v1746 = vadd.f32 %v1593, %v1730
      %v1747 = vadd.f32 %v1594, %v1731
      %v1748 = vadd.f32 %v1595, %v1732
      %v1749 = vadd.f32 %v1596, %v1733
      %v1750 = vadd.f32 %v1597, %v1734
      %vm1751 = vcmp.ge.f32.partialorder %v1735, 0.0
      %vm1752 = vcmp.ge.f32.partialorder %v1736, 0.0
      %vm1753 = vcmp.ge.f32.partialorder %v1737, 0.0
      %vm1754 = vcmp.ge.f32.partialorder %v1738, 0.0
      %vm1755 = vcmp.ge.f32.partialorder %v1739, 0.0
      %vm1756 = vcmp.ge.f32.partialorder %v1740, 0.0
      %vm1757 = vcmp.ge.f32.partialorder %v1741, 0.0
      %vm1758 = vcmp.ge.f32.partialorder %v1742, 0.0
      %vm1759 = vcmp.ge.f32.partialorder %v1743, 0.0
      %vm1760 = vcmp.ge.f32.partialorder %v1744, 0.0
      %vm1761 = vcmp.ge.f32.partialorder %v1745, 0.0
      %vm1762 = vcmp.ge.f32.partialorder %v1746, 0.0
      %vm1763 = vcmp.ge.f32.partialorder %v1747, 0.0
      %vm1764 = vcmp.ge.f32.partialorder %v1748, 0.0
      %vm1765 = vcmp.ge.f32.partialorder %v1749, 0.0
      %vm1766 = vcmp.ge.f32.partialorder %v1750, 0.0
      %v1767 = vmul.f32 %v1735, 0.1
      %v1768 = vmul.f32 %v1736, 0.1
      %v1769 = vmul.f32 %v1737, 0.1
      %v1770 = vmul.f32 %v1738, 0.1
      %v1771 = vmul.f32 %v1739, 0.1
      %v1772 = vmul.f32 %v1740, 0.1
      %v1773 = vmul.f32 %v1741, 0.1
      %v1774 = vmul.f32 %v1742, 0.1
      %v1775 = vmul.f32 %v1743, 0.1
      %v1776 = vmul.f32 %v1744, 0.1
      %v1777 = vmul.f32 %v1745, 0.1
      %v1778 = vmul.f32 %v1746, 0.1
      %v1779 = vmul.f32 %v1747, 0.1
      %v1780 = vmul.f32 %v1748, 0.1
      %v1781 = vmul.f32 %v1749, 0.1
      %v1782 = vmul.f32 %v1750, 0.1
      %v1783 = vsel %vm1751, %v1735, %v1767
      %v1784 = vsel %vm1752, %v1736, %v1768
      %v1785 = vsel %vm1753, %v1737, %v1769
      %v1786 = vsel %vm1754, %v1738, %v1770
      %v1787 = vsel %vm1755, %v1739, %v1771
      %v1788 = vsel %vm1756, %v1740, %v1772
      %v1789 = vsel %vm1757, %v1741, %v1773
      %v1790 = vsel %vm1758, %v1742, %v1774
      %v1791 = vsel %vm1759, %v1743, %v1775
      %v1792 = vsel %vm1760, %v1744, %v1776
      %v1793 = vsel %vm1761, %v1745, %v1777
      %v1794 = vsel %vm1762, %v1746, %v1778
      %v1795 = vsel %vm1763, %v1747, %v1779
      %v1796 = vsel %vm1764, %v1748, %v1780
      %v1797 = vsel %vm1765, %v1749, %v1781
      %v1798 = vsel %vm1766, %v1750, %v1782
      %v1799 = vld [vmem:[%s4] sm:$0xff]
      %v1800 = vld [vmem:[%s4 + $0x8] sm:$0xff]
      %v1801 = vld [vmem:[%s4 + $0x10] sm:$0xff]
      %v1802 = vld [vmem:[%s4 + $0x18] sm:$0xff]
      %v1803 = vld [vmem:[%s4 + $0x20] sm:$0xff]
      %v1804 = vld [vmem:[%s4 + $0x28] sm:$0xff]
      %v1805 = vld [vmem:[%s4 + $0x30] sm:$0xff]
      %v1806 = vld [vmem:[%s4 + $0x38] sm:$0xff]
      %1808 = vset.pattern.permute.xlu0 0
      %1809 = vperm.xlu0 %1808, %v1799
      %v1810 = vpop.permute.xlu0 %1809
      %1813 = vset.pattern.permute.xlu0 0
      %1814 = vperm.xlu0 %1813, %v1800
      %v1815 = vpop.permute.xlu0 %1814
      %1818 = vset.pattern.permute.xlu0 0
      %1819 = vperm.xlu0 %1818, %v1801
      %v1820 = vpop.permute.xlu0 %1819
      %1823 = vset.pattern.permute.xlu0 0
      %1824 = vperm.xlu0 %1823, %v1802
      %v1825 = vpop.permute.xlu0 %1824
      %1828 = vset.pattern.permute.xlu0 0
      %1829 = vperm.xlu0 %1828, %v1803
      %v1830 = vpop.permute.xlu0 %1829
      %1833 = vset.pattern.permute.xlu0 0
      %1834 = vperm.xlu0 %1833, %v1804
      %v1835 = vpop.permute.xlu0 %1834
      %1838 = vset.pattern.permute.xlu0 0
      %1839 = vperm.xlu0 %1838, %v1805
      %v1840 = vpop.permute.xlu0 %1839
      %1843 = vset.pattern.permute.xlu0 0
      %1844 = vperm.xlu0 %1843, %v1806
      %v1845 = vpop.permute.xlu0 %1844
      %v1847 = vmul.f32 %v366, %v1810
      %v1848 = vmul.f32 %v367, %v1810
      %v1849 = vmul.f32 %v368, %v1815
      %v1850 = vmul.f32 %v369, %v1815
      %v1851 = vmul.f32 %v370, %v1820
      %v1852 = vmul.f32 %v371, %v1820
      %v1853 = vmul.f32 %v372, %v1825
      %v1854 = vmul.f32 %v373, %v1825
      %v1855 = vmul.f32 %v374, %v1830
      %v1856 = vmul.f32 %v375, %v1830
      %v1857 = vmul.f32 %v376, %v1835
      %v1858 = vmul.f32 %v377, %v1835
      %v1859 = vmul.f32 %v378, %v1840
      %v1860 = vmul.f32 %v379, %v1840
      %v1861 = vmul.f32 %v380, %v1845
      %v1862 = vmul.f32 %v381, %v1845
      %v1863 = vadd.f32 %v1847, %v1849
      %v1864 = vadd.f32 %v1863, %v1851
      %v1865 = vadd.f32 %v1864, %v1853
      %v1866 = vadd.f32 %v1865, %v1855
      %v1867 = vadd.f32 %v1866, %v1857
      %v1868 = vadd.f32 %v1867, %v1859
      %v1869 = vadd.f32 %v1868, %v1861
      %v1870 = vrot.slane %v1869, 4
      %v1871 = vadd.f32 %v1869, %v1870
      %v1872 = vrot.slane %v1871, 2
      %v1873 = vadd.f32 %v1871, %v1872
      %v1874 = vrot.slane %v1873, 1
      %v1875 = vadd.f32 %v1873, %v1874
      %v1876 = vadd.f32 %v1848, %v1850
      %v1877 = vadd.f32 %v1876, %v1852
      %v1878 = vadd.f32 %v1877, %v1854
      %v1879 = vadd.f32 %v1878, %v1856
      %v1880 = vadd.f32 %v1879, %v1858
      %v1881 = vadd.f32 %v1880, %v1860
      %v1882 = vadd.f32 %v1881, %v1862
      %v1883 = vrot.slane %v1882, 4
      %v1884 = vadd.f32 %v1882, %v1883
      %v1885 = vrot.slane %v1884, 2
      %v1886 = vadd.f32 %v1884, %v1885
      %v1887 = vrot.slane %v1886, 1
      %v1888 = vadd.f32 %v1886, %v1887
      %v1889 = vld [vmem:[%s5] sm:$0x1]
      %1891 = vset.pattern.permute.xlu0 0
      %1892 = vperm.xlu0 %1891, %v1889
      %v1893 = vpop.permute.xlu0 %1892
      %v1895 = vperm.slane %v1893, 0
      %v1896 = vadd.f32 %v1875, %v1895
      %v1897 = vadd.f32 %v1888, %v1895
      %v1898 = vxor.u32 %v1896, 2147483648
      %v1899 = vxor.u32 %v1897, 2147483648
      %v1900 = vmul.f32 %v1898, 1.442695
      %v1901 = vpow.pop %v1900
      %v1902 = vmul.f32 %v1899, 1.442695
      %v1903 = vpow.pop %v1902
      %v1904 = vadd.f32 %v1901, 1.0
      %v1905 = vadd.f32 %v1903, 1.0
      %v1906 = vrcp.pop %v1904
      %v1907 = vmul.f32 %v1904, %v1906
      %v1908 = vsub.f32 1.0, %v1907
      %v1909 = vmul.f32 %v1906, %v1908
      %v1910 = vadd.f32 %v1906, %v1909
      %vm1911 = vweird.f32 %v1904
      %vm1912 = vweird.f32 %v1906
      %vm1913 = vmor %vm1911, %vm1912
      %v1914 = vsel %vm1913, %v1906, %v1910
      %v1915 = vand.u32 2147483647, %v1904
      %vm1916 = vcmp.eq.f32.partialorder %v1915, 8.507059e+37
      %v1917 = vand.u32 %v1904, 2147483648
      %v1918 = vor.u32 1.1754944e-38, %v1917
      %v1919 = vsel %vm1916, %v1918, %v1914
      %v1920 = vmul.f32 1.0, %v1919
      %v1921 = vrcp.pop %v1905
      %v1922 = vmul.f32 %v1905, %v1921
      %v1923 = vsub.f32 1.0, %v1922
      %v1924 = vmul.f32 %v1921, %v1923
      %v1925 = vadd.f32 %v1921, %v1924
      %vm1926 = vweird.f32 %v1905
      %vm1927 = vweird.f32 %v1921
      %vm1928 = vmor %vm1926, %vm1927
      %v1929 = vsel %vm1928, %v1921, %v1925
      %v1930 = vand.u32 2147483647, %v1905
      %vm1931 = vcmp.eq.f32.partialorder %v1930, 8.507059e+37
      %v1932 = vand.u32 %v1905, 2147483648
      %v1933 = vor.u32 1.1754944e-38, %v1932
      %v1934 = vsel %vm1931, %v1933, %v1929
      %v1935 = vmul.f32 1.0, %v1934
      %v1936 = vmul.f32 %v1783, %v1920
      %v1937 = vmul.f32 %v1784, %v1935
      %v1938 = vmul.f32 %v1785, %v1920
      %v1939 = vmul.f32 %v1786, %v1935
      %v1940 = vmul.f32 %v1787, %v1920
      %v1941 = vmul.f32 %v1788, %v1935
      %v1942 = vmul.f32 %v1789, %v1920
      %v1943 = vmul.f32 %v1790, %v1935
      %v1944 = vmul.f32 %v1791, %v1920
      %v1945 = vmul.f32 %v1792, %v1935
      %v1946 = vmul.f32 %v1793, %v1920
      %v1947 = vmul.f32 %v1794, %v1935
      %v1948 = vmul.f32 %v1795, %v1920
      %v1949 = vmul.f32 %v1796, %v1935
      %v1950 = vmul.f32 %v1797, %v1920
      %v1951 = vmul.f32 %v1798, %v1935
      %v1952 = vadd.f32 %v1936, %v366
      %v1953 = vadd.f32 %v1937, %v367
      %v1954 = vadd.f32 %v1938, %v368
      %v1955 = vadd.f32 %v1939, %v369
      %v1956 = vadd.f32 %v1940, %v370
      %v1957 = vadd.f32 %v1941, %v371
      %v1958 = vadd.f32 %v1942, %v372
      %v1959 = vadd.f32 %v1943, %v373
      %v1960 = vadd.f32 %v1944, %v374
      %v1961 = vadd.f32 %v1945, %v375
      %v1962 = vadd.f32 %v1946, %v376
      %v1963 = vadd.f32 %v1947, %v377
      %v1964 = vadd.f32 %v1948, %v378
      %v1965 = vadd.f32 %v1949, %v379
      %v1966 = vadd.f32 %v1950, %v380
      %v1967 = vadd.f32 %v1951, %v381
      %vm1968 = vcmp.ge.f32.partialorder %v1952, 0.0
      %vm1969 = vcmp.ge.f32.partialorder %v1953, 0.0
      %vm1970 = vcmp.ge.f32.partialorder %v1954, 0.0
      %vm1971 = vcmp.ge.f32.partialorder %v1955, 0.0
      %vm1972 = vcmp.ge.f32.partialorder %v1956, 0.0
      %vm1973 = vcmp.ge.f32.partialorder %v1957, 0.0
      %vm1974 = vcmp.ge.f32.partialorder %v1958, 0.0
      %vm1975 = vcmp.ge.f32.partialorder %v1959, 0.0
      %vm1976 = vcmp.ge.f32.partialorder %v1960, 0.0
      %vm1977 = vcmp.ge.f32.partialorder %v1961, 0.0
      %vm1978 = vcmp.ge.f32.partialorder %v1962, 0.0
      %vm1979 = vcmp.ge.f32.partialorder %v1963, 0.0
      %vm1980 = vcmp.ge.f32.partialorder %v1964, 0.0
      %vm1981 = vcmp.ge.f32.partialorder %v1965, 0.0
      %vm1982 = vcmp.ge.f32.partialorder %v1966, 0.0
      %vm1983 = vcmp.ge.f32.partialorder %v1967, 0.0
      %v1984 = vmul.f32 %v1952, 0.1
      %v1985 = vmul.f32 %v1953, 0.1
      %v1986 = vmul.f32 %v1954, 0.1
      %v1987 = vmul.f32 %v1955, 0.1
      %v1988 = vmul.f32 %v1956, 0.1
      %v1989 = vmul.f32 %v1957, 0.1
      %v1990 = vmul.f32 %v1958, 0.1
      %v1991 = vmul.f32 %v1959, 0.1
      %v1992 = vmul.f32 %v1960, 0.1
      %v1993 = vmul.f32 %v1961, 0.1
      %v1994 = vmul.f32 %v1962, 0.1
      %v1995 = vmul.f32 %v1963, 0.1
      %v1996 = vmul.f32 %v1964, 0.1
      %v1997 = vmul.f32 %v1965, 0.1
      %v1998 = vmul.f32 %v1966, 0.1
      %v1999 = vmul.f32 %v1967, 0.1
      %v2000 = vsel %vm1968, %v1952, %v1984
      %v2001 = vsel %vm1969, %v1953, %v1985
      %v2002 = vsel %vm1970, %v1954, %v1986
      %v2003 = vsel %vm1971, %v1955, %v1987
      %v2004 = vsel %vm1972, %v1956, %v1988
      %v2005 = vsel %vm1973, %v1957, %v1989
      %v2006 = vsel %vm1974, %v1958, %v1990
      %v2007 = vsel %vm1975, %v1959, %v1991
      %v2008 = vsel %vm1976, %v1960, %v1992
      %v2009 = vsel %vm1977, %v1961, %v1993
      %v2010 = vsel %vm1978, %v1962, %v1994
      %v2011 = vsel %vm1979, %v1963, %v1995
      %v2012 = vsel %vm1980, %v1964, %v1996
      %v2013 = vsel %vm1981, %v1965, %v1997
      %v2014 = vsel %vm1982, %v1966, %v1998
      %v2015 = vsel %vm1983, %v1967, %v1999
      %2032 = vrot.lane.b32.xlu0 %v2000, 17
      %v2033 = vpop.permute.xlu0 %2032
      %2034 = vrot.lane.b32.xlu0 %v2001, 17
      %v2035 = vpop.permute.xlu0 %2034
      %2036 = vrot.lane.b32.xlu0 %v2002, 17
      %v2037 = vpop.permute.xlu0 %2036
      %2038 = vrot.lane.b32.xlu0 %v2003, 17
      %v2039 = vpop.permute.xlu0 %2038
      %2040 = vrot.lane.b32.xlu0 %v2004, 17
      %v2041 = vpop.permute.xlu0 %2040
      %2042 = vrot.lane.b32.xlu0 %v2005, 17
      %v2043 = vpop.permute.xlu0 %2042
      %2044 = vrot.lane.b32.xlu0 %v2006, 17
      %v2045 = vpop.permute.xlu0 %2044
      %2046 = vrot.lane.b32.xlu0 %v2007, 17
      %v2047 = vpop.permute.xlu0 %2046
      %2048 = vrot.lane.b32.xlu0 %v2008, 17
      %v2049 = vpop.permute.xlu0 %2048
      %2050 = vrot.lane.b32.xlu0 %v2009, 17
      %v2051 = vpop.permute.xlu0 %2050
      %2052 = vrot.lane.b32.xlu0 %v2010, 17
      %v2053 = vpop.permute.xlu0 %2052
      %2054 = vrot.lane.b32.xlu0 %v2011, 17
      %v2055 = vpop.permute.xlu0 %2054
      %2056 = vrot.lane.b32.xlu0 %v2012, 17
      %v2057 = vpop.permute.xlu0 %2056
      %2058 = vrot.lane.b32.xlu0 %v2013, 17
      %v2059 = vpop.permute.xlu0 %2058
      %2060 = vrot.lane.b32.xlu0 %v2014, 17
      %v2061 = vpop.permute.xlu0 %2060
      %2062 = vrot.lane.b32.xlu0 %v2015, 17
      %v2063 = vpop.permute.xlu0 %2062
      %v2064 = vsel %vm559, %v2033, %v2035
      %v2065 = vsel %vm559, %v2037, %v2039
      %v2066 = vsel %vm559, %v2041, %v2043
      %v2067 = vsel %vm559, %v2045, %v2047
      %v2068 = vsel %vm559, %v2049, %v2051
      %v2069 = vsel %vm559, %v2053, %v2055
      %v2070 = vsel %vm559, %v2057, %v2059
      %v2071 = vsel %vm559, %v2061, %v2063
      %v2088 = vsel %vm559, 0.0, %v2033
      %v2089 = vsel %vm559, 0.0, %v2037
      %v2090 = vsel %vm559, 0.0, %v2041
      %v2091 = vsel %vm559, 0.0, %v2045
      %v2092 = vsel %vm559, 0.0, %v2049
      %v2093 = vsel %vm559, 0.0, %v2053
      %v2094 = vsel %vm559, 0.0, %v2057
      %v2095 = vsel %vm559, 0.0, %v2061
      %v2096 = vmul.f32 %v2088, %v364
      %v2097 = vmul.f32 %v2064, %v365
      %v2098 = vmul.f32 %v2089, %v364
      %v2099 = vmul.f32 %v2065, %v365
      %v2100 = vmul.f32 %v2090, %v364
      %v2101 = vmul.f32 %v2066, %v365
      %v2102 = vmul.f32 %v2091, %v364
      %v2103 = vmul.f32 %v2067, %v365
      %v2104 = vmul.f32 %v2092, %v364
      %v2105 = vmul.f32 %v2068, %v365
      %v2106 = vmul.f32 %v2093, %v364
      %v2107 = vmul.f32 %v2069, %v365
      %v2108 = vmul.f32 %v2094, %v364
      %v2109 = vmul.f32 %v2070, %v365
      %v2110 = vmul.f32 %v2095, %v364
      %v2111 = vmul.f32 %v2071, %v365
      %v2112 = vpack.c.bf16 %v2098, %v2096
      %v2113 = vpack.c.bf16 %v2099, %v2097
      %v2114 = vpack.c.bf16 %v2102, %v2100
      %v2115 = vpack.c.bf16 %v2103, %v2101
      %v2116 = vpack.c.bf16 %v2106, %v2104
      %v2117 = vpack.c.bf16 %v2107, %v2105
      %v2118 = vpack.c.bf16 %v2110, %v2108
      %v2119 = vpack.c.bf16 %v2111, %v2109
      %v2120 = vld [vmem:[%s6] sm:$0xf]
      %v2121 = vld [vmem:[%s6 + $0x4] sm:$0xf]
      %v2122 = vld [vmem:[%s6 + $0x8] sm:$0xf]
      %v2123 = vld [vmem:[%s6 + $0xc] sm:$0xf]
      %v2124 = vld [vmem:[%s6 + $0x10] sm:$0xf]
      %v2125 = vld [vmem:[%s6 + $0x14] sm:$0xf]
      %v2126 = vld [vmem:[%s6 + $0x18] sm:$0xf]
      %v2127 = vld [vmem:[%s6 + $0x1c] sm:$0xf]
      %2128 = vrot.lane.b32.xlu0 %v2000, 16
      %v2129 = vpop.permute.xlu0 %2128
      %2130 = vrot.lane.b32.xlu0 %v2001, 16
      %v2131 = vpop.permute.xlu0 %2130
      %2132 = vrot.lane.b32.xlu0 %v2002, 16
      %v2133 = vpop.permute.xlu0 %2132
      %2134 = vrot.lane.b32.xlu0 %v2003, 16
      %v2135 = vpop.permute.xlu0 %2134
      %2136 = vrot.lane.b32.xlu0 %v2004, 16
      %v2137 = vpop.permute.xlu0 %2136
      %2138 = vrot.lane.b32.xlu0 %v2005, 16
      %v2139 = vpop.permute.xlu0 %2138
      %2140 = vrot.lane.b32.xlu0 %v2006, 16
      %v2141 = vpop.permute.xlu0 %2140
      %2142 = vrot.lane.b32.xlu0 %v2007, 16
      %v2143 = vpop.permute.xlu0 %2142
      %2144 = vrot.lane.b32.xlu0 %v2008, 16
      %v2145 = vpop.permute.xlu0 %2144
      %2146 = vrot.lane.b32.xlu0 %v2009, 16
      %v2147 = vpop.permute.xlu0 %2146
      %2148 = vrot.lane.b32.xlu0 %v2010, 16
      %v2149 = vpop.permute.xlu0 %2148
      %2150 = vrot.lane.b32.xlu0 %v2011, 16
      %v2151 = vpop.permute.xlu0 %2150
      %2152 = vrot.lane.b32.xlu0 %v2012, 16
      %v2153 = vpop.permute.xlu0 %2152
      %2154 = vrot.lane.b32.xlu0 %v2013, 16
      %v2155 = vpop.permute.xlu0 %2154
      %2156 = vrot.lane.b32.xlu0 %v2014, 16
      %v2157 = vpop.permute.xlu0 %2156
      %2158 = vrot.lane.b32.xlu0 %v2015, 16
      %v2159 = vpop.permute.xlu0 %2158
      %v2160 = vsel %vm712, %v2129, %v2131
      %v2161 = vsel %vm712, %v2133, %v2135
      %v2162 = vsel %vm712, %v2137, %v2139
      %v2163 = vsel %vm712, %v2141, %v2143
      %v2164 = vsel %vm712, %v2145, %v2147
      %v2165 = vsel %vm712, %v2149, %v2151
      %v2166 = vsel %vm712, %v2153, %v2155
      %v2167 = vsel %vm712, %v2157, %v2159
      %v2184 = vsel %vm712, 0.0, %v2129
      %v2185 = vsel %vm712, 0.0, %v2133
      %v2186 = vsel %vm712, 0.0, %v2137
      %v2187 = vsel %vm712, 0.0, %v2141
      %v2188 = vsel %vm712, 0.0, %v2145
      %v2189 = vsel %vm712, 0.0, %v2149
      %v2190 = vsel %vm712, 0.0, %v2153
      %v2191 = vsel %vm712, 0.0, %v2157
      %v2192 = vpack.c.bf16 %v2185, %v2184
      %v2193 = vpack.c.bf16 %v2161, %v2160
      %v2194 = vpack.c.bf16 %v2187, %v2186
      %v2195 = vpack.c.bf16 %v2163, %v2162
      %v2196 = vpack.c.bf16 %v2189, %v2188
      %v2197 = vpack.c.bf16 %v2165, %v2164
      %v2198 = vpack.c.bf16 %v2191, %v2190
      %v2199 = vpack.c.bf16 %v2167, %v2166
      %s2200 = scalar_lea.vmem %s6, 32
      %v2201 = vld [vmem:[%s2200] sm:$0xf]
      %v2202 = vld [vmem:[%s2200 + $0x4] sm:$0xf]
      %v2203 = vld [vmem:[%s2200 + $0x8] sm:$0xf]
      %v2204 = vld [vmem:[%s2200 + $0xc] sm:$0xf]
      %v2205 = vld [vmem:[%s2200 + $0x10] sm:$0xf]
      %v2206 = vld [vmem:[%s2200 + $0x14] sm:$0xf]
      %v2207 = vld [vmem:[%s2200 + $0x18] sm:$0xf]
      %v2208 = vld [vmem:[%s2200 + $0x1c] sm:$0xf]
      %v2217 = vunpack.c.l.b16 %v2201
      %v2218 = vunpack.c.l.b16 %v2202
      %v2219 = vunpack.c.l.b16 %v2203
      %v2220 = vunpack.c.l.b16 %v2204
      %v2221 = vunpack.c.l.b16 %v2205
      %v2222 = vunpack.c.l.b16 %v2206
      %v2223 = vunpack.c.l.b16 %v2207
      %v2224 = vunpack.c.l.b16 %v2208
      %v2225 = vpack.c.b16 %v2218, %v2217
      %v2226 = vpack.c.b16 %v2220, %v2219
      %v2227 = vpack.c.b16 %v2222, %v2221
      %v2228 = vpack.c.b16 %v2224, %v2223
      %v2230 = vsel %vm446, %v2225, 0
      %v2233 = vsel %vm446, %v2226, 0
      %v2236 = vsel %vm446, %v2227, 0
      %v2239 = vsel %vm446, %v2228, 0
      %2241 = vmatpush.bf16.msra.mxu0 0
      %2242 = vmatpush.bf16.msra.mxu0 0
      %2243 = vmatpush.bf16.msra.mxu0 0
      %2244 = vmatpush.bf16.msra.mxu0 0
      %2245 = vmatpush.bf16.msra.mxu0 %v2198
      %2246 = vmatpush.bf16.msra.mxu0 %v2196
      %2247 = vmatpush.bf16.msra.mxu0 %v2194
      %2248 = vmatpush.bf16.msra.mxu0 %v2192
      %2249 = vmatmul.bf16.gmra.mxu0 %v2230
      %v2250 = vpop.f32.mrf.mxu0
      %v2251 = vadd.f32 0.0, %v2250
      %v2252 = vpop.f32.mrf.mxu0
      %v2253 = vadd.f32 0.0, %v2252
      %2254 = vmatmul.bf16.gmra.mxu0 %v2233
      %v2255 = vpop.f32.mrf.mxu0
      %v2256 = vadd.f32 0.0, %v2255
      %v2257 = vpop.f32.mrf.mxu0
      %v2258 = vadd.f32 0.0, %v2257
      %2259 = vmatmul.bf16.gmra.mxu0 %v2236
      %v2260 = vpop.f32.mrf.mxu0
      %v2261 = vadd.f32 0.0, %v2260
      %v2262 = vpop.f32.mrf.mxu0
      %v2263 = vadd.f32 0.0, %v2262
      %2264 = vmatmul.bf16.gmra.mxu0 %v2239
      %v2265 = vpop.f32.mrf.mxu0
      %v2266 = vadd.f32 0.0, %v2265
      %v2267 = vpop.f32.mrf.mxu0
      %v2268 = vadd.f32 0.0, %v2267
      %2269 = vdwg.mxu0
      %2270 = vmatpush.bf16.msra.mxu0 0
      %2271 = vmatpush.bf16.msra.mxu0 0
      %2272 = vmatpush.bf16.msra.mxu0 0
      %2273 = vmatpush.bf16.msra.mxu0 0
      %2274 = vmatpush.bf16.msra.mxu0 %v2199
      %2275 = vmatpush.bf16.msra.mxu0 %v2197
      %2276 = vmatpush.bf16.msra.mxu0 %v2195
      %2277 = vmatpush.bf16.msra.mxu0 %v2193
      %2278 = vmatmul.bf16.gmra.mxu0 %v2230
      %v2279 = vpop.f32.mrf.mxu0
      %v2280 = vadd.f32 0.0, %v2279
      %v2281 = vpop.f32.mrf.mxu0
      %v2282 = vadd.f32 0.0, %v2281
      %2283 = vmatmul.bf16.gmra.mxu0 %v2233
      %v2284 = vpop.f32.mrf.mxu0
      %v2285 = vadd.f32 0.0, %v2284
      %v2286 = vpop.f32.mrf.mxu0
      %v2287 = vadd.f32 0.0, %v2286
      %2288 = vmatmul.bf16.gmra.mxu0 %v2236
      %v2289 = vpop.f32.mrf.mxu0
      %v2290 = vadd.f32 0.0, %v2289
      %v2291 = vpop.f32.mrf.mxu0
      %v2292 = vadd.f32 0.0, %v2291
      %2293 = vmatmul.bf16.gmra.mxu0 %v2239
      %v2294 = vpop.f32.mrf.mxu0
      %v2295 = vadd.f32 0.0, %v2294
      %v2296 = vpop.f32.mrf.mxu0
      %v2297 = vadd.f32 0.0, %v2296
      %2298 = vdwg.mxu0
      %v2307 = vunpack.c.l.b16 %v2120
      %v2308 = vunpack.c.l.b16 %v2121
      %v2309 = vunpack.c.l.b16 %v2122
      %v2310 = vunpack.c.l.b16 %v2123
      %v2311 = vunpack.c.l.b16 %v2124
      %v2312 = vunpack.c.l.b16 %v2125
      %v2313 = vunpack.c.l.b16 %v2126
      %v2314 = vunpack.c.l.b16 %v2127
      %v2315 = vpack.c.b16 %v2308, %v2307
      %v2316 = vpack.c.b16 %v2310, %v2309
      %v2317 = vpack.c.b16 %v2312, %v2311
      %v2318 = vpack.c.b16 %v2314, %v2313
      %v2320 = vsel %vm446, %v2315, 0
      %v2323 = vsel %vm446, %v2316, 0
      %v2326 = vsel %vm446, %v2317, 0
      %v2329 = vsel %vm446, %v2318, 0
      %2331 = vmatpush.bf16.msra.mxu0 0
      %2332 = vmatpush.bf16.msra.mxu0 0
      %2333 = vmatpush.bf16.msra.mxu0 0
      %2334 = vmatpush.bf16.msra.mxu0 0
      %2335 = vmatpush.bf16.msra.mxu0 %v2118
      %2336 = vmatpush.bf16.msra.mxu0 %v2116
      %2337 = vmatpush.bf16.msra.mxu0 %v2114
      %2338 = vmatpush.bf16.msra.mxu0 %v2112
      %2339 = vmatmul.bf16.gmra.mxu0 %v2320
      %v2340 = vpop.f32.mrf.mxu0
      %v2341 = vadd.f32 %v2251, %v2340
      %v2342 = vpop.f32.mrf.mxu0
      %v2343 = vadd.f32 %v2253, %v2342
      %2344 = vmatmul.bf16.gmra.mxu0 %v2323
      %v2345 = vpop.f32.mrf.mxu0
      %v2346 = vadd.f32 %v2256, %v2345
      %v2347 = vpop.f32.mrf.mxu0
      %v2348 = vadd.f32 %v2258, %v2347
      %2349 = vmatmul.bf16.gmra.mxu0 %v2326
      %v2350 = vpop.f32.mrf.mxu0
      %v2351 = vadd.f32 %v2261, %v2350
      %v2352 = vpop.f32.mrf.mxu0
      %v2353 = vadd.f32 %v2263, %v2352
      %2354 = vmatmul.bf16.gmra.mxu0 %v2329
      %v2355 = vpop.f32.mrf.mxu0
      %v2356 = vadd.f32 %v2266, %v2355
      %v2357 = vpop.f32.mrf.mxu0
      %v2358 = vadd.f32 %v2268, %v2357
      %2359 = vdwg.mxu0
      %2360 = vmatpush.bf16.msra.mxu0 0
      %2361 = vmatpush.bf16.msra.mxu0 0
      %2362 = vmatpush.bf16.msra.mxu0 0
      %2363 = vmatpush.bf16.msra.mxu0 0
      %2364 = vmatpush.bf16.msra.mxu0 %v2119
      %2365 = vmatpush.bf16.msra.mxu0 %v2117
      %2366 = vmatpush.bf16.msra.mxu0 %v2115
      %2367 = vmatpush.bf16.msra.mxu0 %v2113
      %2368 = vmatmul.bf16.gmra.mxu0 %v2320
      %v2369 = vpop.f32.mrf.mxu0
      %v2370 = vadd.f32 %v2280, %v2369
      %v2371 = vpop.f32.mrf.mxu0
      %v2372 = vadd.f32 %v2282, %v2371
      %2373 = vmatmul.bf16.gmra.mxu0 %v2323
      %v2374 = vpop.f32.mrf.mxu0
      %v2375 = vadd.f32 %v2285, %v2374
      %v2376 = vpop.f32.mrf.mxu0
      %v2377 = vadd.f32 %v2287, %v2376
      %2378 = vmatmul.bf16.gmra.mxu0 %v2326
      %v2379 = vpop.f32.mrf.mxu0
      %v2380 = vadd.f32 %v2290, %v2379
      %v2381 = vpop.f32.mrf.mxu0
      %v2382 = vadd.f32 %v2292, %v2381
      %2383 = vmatmul.bf16.gmra.mxu0 %v2329
      %v2384 = vpop.f32.mrf.mxu0
      %v2385 = vadd.f32 %v2295, %v2384
      %v2386 = vpop.f32.mrf.mxu0
      %v2387 = vadd.f32 %v2297, %v2386
      %2388 = vdwg.mxu0
      %2389 = vrot.lane.b32.xlu0 %v2000, 15
      %v2390 = vpop.permute.xlu0 %2389
      %2391 = vrot.lane.b32.xlu0 %v2001, 15
      %v2392 = vpop.permute.xlu0 %2391
      %2393 = vrot.lane.b32.xlu0 %v2002, 15
      %v2394 = vpop.permute.xlu0 %2393
      %2395 = vrot.lane.b32.xlu0 %v2003, 15
      %v2396 = vpop.permute.xlu0 %2395
      %2397 = vrot.lane.b32.xlu0 %v2004, 15
      %v2398 = vpop.permute.xlu0 %2397
      %2399 = vrot.lane.b32.xlu0 %v2005, 15
      %v2400 = vpop.permute.xlu0 %2399
      %2401 = vrot.lane.b32.xlu0 %v2006, 15
      %v2402 = vpop.permute.xlu0 %2401
      %2403 = vrot.lane.b32.xlu0 %v2007, 15
      %v2404 = vpop.permute.xlu0 %2403
      %2405 = vrot.lane.b32.xlu0 %v2008, 15
      %v2406 = vpop.permute.xlu0 %2405
      %2407 = vrot.lane.b32.xlu0 %v2009, 15
      %v2408 = vpop.permute.xlu0 %2407
      %2409 = vrot.lane.b32.xlu0 %v2010, 15
      %v2410 = vpop.permute.xlu0 %2409
      %2411 = vrot.lane.b32.xlu0 %v2011, 15
      %v2412 = vpop.permute.xlu0 %2411
      %2413 = vrot.lane.b32.xlu0 %v2012, 15
      %v2414 = vpop.permute.xlu0 %2413
      %2415 = vrot.lane.b32.xlu0 %v2013, 15
      %v2416 = vpop.permute.xlu0 %2415
      %2417 = vrot.lane.b32.xlu0 %v2014, 15
      %v2418 = vpop.permute.xlu0 %2417
      %2419 = vrot.lane.b32.xlu0 %v2015, 15
      %v2420 = vpop.permute.xlu0 %2419
      %v2421 = vsel %vm849, %v2390, %v2392
      %v2422 = vsel %vm849, %v2394, %v2396
      %v2423 = vsel %vm849, %v2398, %v2400
      %v2424 = vsel %vm849, %v2402, %v2404
      %v2425 = vsel %vm849, %v2406, %v2408
      %v2426 = vsel %vm849, %v2410, %v2412
      %v2427 = vsel %vm849, %v2414, %v2416
      %v2428 = vsel %vm849, %v2418, %v2420
      %v2445 = vsel %vm849, 0.0, %v2390
      %v2446 = vsel %vm849, 0.0, %v2394
      %v2447 = vsel %vm849, 0.0, %v2398
      %v2448 = vsel %vm849, 0.0, %v2402
      %v2449 = vsel %vm849, 0.0, %v2406
      %v2450 = vsel %vm849, 0.0, %v2410
      %v2451 = vsel %vm849, 0.0, %v2414
      %v2452 = vsel %vm849, 0.0, %v2418
      %v2453 = vmul.f32 %v2445, %v358
      %v2454 = vmul.f32 %v2421, %v359
      %v2455 = vmul.f32 %v2446, %v358
      %v2456 = vmul.f32 %v2422, %v359
      %v2457 = vmul.f32 %v2447, %v358
      %v2458 = vmul.f32 %v2423, %v359
      %v2459 = vmul.f32 %v2448, %v358
      %v2460 = vmul.f32 %v2424, %v359
      %v2461 = vmul.f32 %v2449, %v358
      %v2462 = vmul.f32 %v2425, %v359
      %v2463 = vmul.f32 %v2450, %v358
      %v2464 = vmul.f32 %v2426, %v359
      %v2465 = vmul.f32 %v2451, %v358
      %v2466 = vmul.f32 %v2427, %v359
      %v2467 = vmul.f32 %v2452, %v358
      %v2468 = vmul.f32 %v2428, %v359
      %v2469 = vpack.c.bf16 %v2455, %v2453
      %v2470 = vpack.c.bf16 %v2456, %v2454
      %v2471 = vpack.c.bf16 %v2459, %v2457
      %v2472 = vpack.c.bf16 %v2460, %v2458
      %v2473 = vpack.c.bf16 %v2463, %v2461
      %v2474 = vpack.c.bf16 %v2464, %v2462
      %v2475 = vpack.c.bf16 %v2467, %v2465
      %v2476 = vpack.c.bf16 %v2468, %v2466
      %s2477 = scalar_lea.vmem %s6, 64
      %v2478 = vld [vmem:[%s2477] sm:$0xf]
      %v2479 = vld [vmem:[%s2477 + $0x4] sm:$0xf]
      %v2480 = vld [vmem:[%s2477 + $0x8] sm:$0xf]
      %v2481 = vld [vmem:[%s2477 + $0xc] sm:$0xf]
      %v2482 = vld [vmem:[%s2477 + $0x10] sm:$0xf]
      %v2483 = vld [vmem:[%s2477 + $0x14] sm:$0xf]
      %v2484 = vld [vmem:[%s2477 + $0x18] sm:$0xf]
      %v2485 = vld [vmem:[%s2477 + $0x1c] sm:$0xf]
      %v2494 = vunpack.c.l.b16 %v2478
      %v2495 = vunpack.c.l.b16 %v2479
      %v2496 = vunpack.c.l.b16 %v2480
      %v2497 = vunpack.c.l.b16 %v2481
      %v2498 = vunpack.c.l.b16 %v2482
      %v2499 = vunpack.c.l.b16 %v2483
      %v2500 = vunpack.c.l.b16 %v2484
      %v2501 = vunpack.c.l.b16 %v2485
      %v2502 = vpack.c.b16 %v2495, %v2494
      %v2503 = vpack.c.b16 %v2497, %v2496
      %v2504 = vpack.c.b16 %v2499, %v2498
      %v2505 = vpack.c.b16 %v2501, %v2500
      %v2507 = vsel %vm446, %v2502, 0
      %v2510 = vsel %vm446, %v2503, 0
      %v2513 = vsel %vm446, %v2504, 0
      %v2516 = vsel %vm446, %v2505, 0
      %2518 = vmatpush.bf16.msra.mxu0 0
      %2519 = vmatpush.bf16.msra.mxu0 0
      %2520 = vmatpush.bf16.msra.mxu0 0
      %2521 = vmatpush.bf16.msra.mxu0 0
      %2522 = vmatpush.bf16.msra.mxu0 %v2475
      %2523 = vmatpush.bf16.msra.mxu0 %v2473
      %2524 = vmatpush.bf16.msra.mxu0 %v2471
      %2525 = vmatpush.bf16.msra.mxu0 %v2469
      %2526 = vmatmul.bf16.gmra.mxu0 %v2507
      %v2527 = vpop.f32.mrf.mxu0
      %v2528 = vadd.f32 0.0, %v2527
      %v2529 = vpop.f32.mrf.mxu0
      %v2530 = vadd.f32 0.0, %v2529
      %2531 = vmatmul.bf16.gmra.mxu0 %v2510
      %v2532 = vpop.f32.mrf.mxu0
      %v2533 = vadd.f32 0.0, %v2532
      %v2534 = vpop.f32.mrf.mxu0
      %v2535 = vadd.f32 0.0, %v2534
      %2536 = vmatmul.bf16.gmra.mxu0 %v2513
      %v2537 = vpop.f32.mrf.mxu0
      %v2538 = vadd.f32 0.0, %v2537
      %v2539 = vpop.f32.mrf.mxu0
      %v2540 = vadd.f32 0.0, %v2539
      %2541 = vmatmul.bf16.gmra.mxu0 %v2516
      %v2542 = vpop.f32.mrf.mxu0
      %v2543 = vadd.f32 0.0, %v2542
      %v2544 = vpop.f32.mrf.mxu0
      %v2545 = vadd.f32 0.0, %v2544
      %2546 = vdwg.mxu0
      %2547 = vmatpush.bf16.msra.mxu0 0
      %2548 = vmatpush.bf16.msra.mxu0 0
      %2549 = vmatpush.bf16.msra.mxu0 0
      %2550 = vmatpush.bf16.msra.mxu0 0
      %2551 = vmatpush.bf16.msra.mxu0 %v2476
      %2552 = vmatpush.bf16.msra.mxu0 %v2474
      %2553 = vmatpush.bf16.msra.mxu0 %v2472
      %2554 = vmatpush.bf16.msra.mxu0 %v2470
      %2555 = vmatmul.bf16.gmra.mxu0 %v2507
      %v2556 = vpop.f32.mrf.mxu0
      %v2557 = vadd.f32 0.0, %v2556
      %v2558 = vpop.f32.mrf.mxu0
      %v2559 = vadd.f32 0.0, %v2558
      %2560 = vmatmul.bf16.gmra.mxu0 %v2510
      %v2561 = vpop.f32.mrf.mxu0
      %v2562 = vadd.f32 0.0, %v2561
      %v2563 = vpop.f32.mrf.mxu0
      %v2564 = vadd.f32 0.0, %v2563
      %2565 = vmatmul.bf16.gmra.mxu0 %v2513
      %v2566 = vpop.f32.mrf.mxu0
      %v2567 = vadd.f32 0.0, %v2566
      %v2568 = vpop.f32.mrf.mxu0
      %v2569 = vadd.f32 0.0, %v2568
      %2570 = vmatmul.bf16.gmra.mxu0 %v2516
      %v2571 = vpop.f32.mrf.mxu0
      %v2572 = vadd.f32 0.0, %v2571
      %v2573 = vpop.f32.mrf.mxu0
      %v2574 = vadd.f32 0.0, %v2573
      %2575 = vdwg.mxu0
      %v2576 = vadd.f32 %v2341, %v2528
      %v2577 = vadd.f32 %v2370, %v2557
      %v2578 = vadd.f32 %v2343, %v2530
      %v2579 = vadd.f32 %v2372, %v2559
      %v2580 = vadd.f32 %v2346, %v2533
      %v2581 = vadd.f32 %v2375, %v2562
      %v2582 = vadd.f32 %v2348, %v2535
      %v2583 = vadd.f32 %v2377, %v2564
      %v2584 = vadd.f32 %v2351, %v2538
      %v2585 = vadd.f32 %v2380, %v2567
      %v2586 = vadd.f32 %v2353, %v2540
      %v2587 = vadd.f32 %v2382, %v2569
      %v2588 = vadd.f32 %v2356, %v2543
      %v2589 = vadd.f32 %v2385, %v2572
      %v2590 = vadd.f32 %v2358, %v2545
      %v2591 = vadd.f32 %v2387, %v2574
      %2592 = vrot.lane.b32.xlu0 %v2000, 1
      %v2593 = vpop.permute.xlu0 %2592
      %2594 = vrot.lane.b32.xlu0 %v2001, 1
      %v2595 = vpop.permute.xlu0 %2594
      %2596 = vrot.lane.b32.xlu0 %v2002, 1
      %v2597 = vpop.permute.xlu0 %2596
      %2598 = vrot.lane.b32.xlu0 %v2003, 1
      %v2599 = vpop.permute.xlu0 %2598
      %2600 = vrot.lane.b32.xlu0 %v2004, 1
      %v2601 = vpop.permute.xlu0 %2600
      %2602 = vrot.lane.b32.xlu0 %v2005, 1
      %v2603 = vpop.permute.xlu0 %2602
      %2604 = vrot.lane.b32.xlu0 %v2006, 1
      %v2605 = vpop.permute.xlu0 %2604
      %2606 = vrot.lane.b32.xlu0 %v2007, 1
      %v2607 = vpop.permute.xlu0 %2606
      %2608 = vrot.lane.b32.xlu0 %v2008, 1
      %v2609 = vpop.permute.xlu0 %2608
      %2610 = vrot.lane.b32.xlu0 %v2009, 1
      %v2611 = vpop.permute.xlu0 %2610
      %2612 = vrot.lane.b32.xlu0 %v2010, 1
      %v2613 = vpop.permute.xlu0 %2612
      %2614 = vrot.lane.b32.xlu0 %v2011, 1
      %v2615 = vpop.permute.xlu0 %2614
      %2616 = vrot.lane.b32.xlu0 %v2012, 1
      %v2617 = vpop.permute.xlu0 %2616
      %2618 = vrot.lane.b32.xlu0 %v2013, 1
      %v2619 = vpop.permute.xlu0 %2618
      %2620 = vrot.lane.b32.xlu0 %v2014, 1
      %v2621 = vpop.permute.xlu0 %2620
      %2622 = vrot.lane.b32.xlu0 %v2015, 1
      %v2623 = vpop.permute.xlu0 %2622
      %v2624 = vsel %vm1002, %v2593, %v2595
      %v2625 = vsel %vm1002, %v2597, %v2599
      %v2626 = vsel %vm1002, %v2601, %v2603
      %v2627 = vsel %vm1002, %v2605, %v2607
      %v2628 = vsel %vm1002, %v2609, %v2611
      %v2629 = vsel %vm1002, %v2613, %v2615
      %v2630 = vsel %vm1002, %v2617, %v2619
      %v2631 = vsel %vm1002, %v2621, %v2623
      %v2648 = vsel %vm1002, 0.0, %v2593
      %v2649 = vsel %vm1002, 0.0, %v2597
      %v2650 = vsel %vm1002, 0.0, %v2601
      %v2651 = vsel %vm1002, 0.0, %v2605
      %v2652 = vsel %vm1002, 0.0, %v2609
      %v2653 = vsel %vm1002, 0.0, %v2613
      %v2654 = vsel %vm1002, 0.0, %v2617
      %v2655 = vsel %vm1002, 0.0, %v2621
      %v2656 = vmul.f32 %v2648, %v364
      %v2657 = vmul.f32 %v2624, %v365
      %v2658 = vmul.f32 %v2649, %v364
      %v2659 = vmul.f32 %v2625, %v365
      %v2660 = vmul.f32 %v2650, %v364
      %v2661 = vmul.f32 %v2626, %v365
      %v2662 = vmul.f32 %v2651, %v364
      %v2663 = vmul.f32 %v2627, %v365
      %v2664 = vmul.f32 %v2652, %v364
      %v2665 = vmul.f32 %v2628, %v365
      %v2666 = vmul.f32 %v2653, %v364
      %v2667 = vmul.f32 %v2629, %v365
      %v2668 = vmul.f32 %v2654, %v364
      %v2669 = vmul.f32 %v2630, %v365
      %v2670 = vmul.f32 %v2655, %v364
      %v2671 = vmul.f32 %v2631, %v365
      %v2672 = vpack.c.bf16 %v2658, %v2656
      %v2673 = vpack.c.bf16 %v2659, %v2657
      %v2674 = vpack.c.bf16 %v2662, %v2660
      %v2675 = vpack.c.bf16 %v2663, %v2661
      %v2676 = vpack.c.bf16 %v2666, %v2664
      %v2677 = vpack.c.bf16 %v2667, %v2665
      %v2678 = vpack.c.bf16 %v2670, %v2668
      %v2679 = vpack.c.bf16 %v2671, %v2669
      %s2680 = scalar_lea.vmem %s6, 96
      %v2681 = vld [vmem:[%s2680] sm:$0xf]
      %v2682 = vld [vmem:[%s2680 + $0x4] sm:$0xf]
      %v2683 = vld [vmem:[%s2680 + $0x8] sm:$0xf]
      %v2684 = vld [vmem:[%s2680 + $0xc] sm:$0xf]
      %v2685 = vld [vmem:[%s2680 + $0x10] sm:$0xf]
      %v2686 = vld [vmem:[%s2680 + $0x14] sm:$0xf]
      %v2687 = vld [vmem:[%s2680 + $0x18] sm:$0xf]
      %v2688 = vld [vmem:[%s2680 + $0x1c] sm:$0xf]
      %v2697 = vunpack.c.l.b16 %v2681
      %v2698 = vunpack.c.l.b16 %v2682
      %v2699 = vunpack.c.l.b16 %v2683
      %v2700 = vunpack.c.l.b16 %v2684
      %v2701 = vunpack.c.l.b16 %v2685
      %v2702 = vunpack.c.l.b16 %v2686
      %v2703 = vunpack.c.l.b16 %v2687
      %v2704 = vunpack.c.l.b16 %v2688
      %v2705 = vpack.c.b16 %v2698, %v2697
      %v2706 = vpack.c.b16 %v2700, %v2699
      %v2707 = vpack.c.b16 %v2702, %v2701
      %v2708 = vpack.c.b16 %v2704, %v2703
      %v2710 = vsel %vm446, %v2705, 0
      %v2713 = vsel %vm446, %v2706, 0
      %v2716 = vsel %vm446, %v2707, 0
      %v2719 = vsel %vm446, %v2708, 0
      %2721 = vmatpush.bf16.msra.mxu0 0
      %2722 = vmatpush.bf16.msra.mxu0 0
      %2723 = vmatpush.bf16.msra.mxu0 0
      %2724 = vmatpush.bf16.msra.mxu0 0
      %2725 = vmatpush.bf16.msra.mxu0 %v2678
      %2726 = vmatpush.bf16.msra.mxu0 %v2676
      %2727 = vmatpush.bf16.msra.mxu0 %v2674
      %2728 = vmatpush.bf16.msra.mxu0 %v2672
      %2729 = vmatmul.bf16.gmra.mxu0 %v2710
      %v2730 = vpop.f32.mrf.mxu0
      %v2731 = vadd.f32 0.0, %v2730
      %v2732 = vpop.f32.mrf.mxu0
      %v2733 = vadd.f32 0.0, %v2732
      %2734 = vmatmul.bf16.gmra.mxu0 %v2713
      %v2735 = vpop.f32.mrf.mxu0
      %v2736 = vadd.f32 0.0, %v2735
      %v2737 = vpop.f32.mrf.mxu0
      %v2738 = vadd.f32 0.0, %v2737
      %2739 = vmatmul.bf16.gmra.mxu0 %v2716
      %v2740 = vpop.f32.mrf.mxu0
      %v2741 = vadd.f32 0.0, %v2740
      %v2742 = vpop.f32.mrf.mxu0
      %v2743 = vadd.f32 0.0, %v2742
      %2744 = vmatmul.bf16.gmra.mxu0 %v2719
      %v2745 = vpop.f32.mrf.mxu0
      %v2746 = vadd.f32 0.0, %v2745
      %v2747 = vpop.f32.mrf.mxu0
      %v2748 = vadd.f32 0.0, %v2747
      %2749 = vdwg.mxu0
      %2750 = vmatpush.bf16.msra.mxu0 0
      %2751 = vmatpush.bf16.msra.mxu0 0
      %2752 = vmatpush.bf16.msra.mxu0 0
      %2753 = vmatpush.bf16.msra.mxu0 0
      %2754 = vmatpush.bf16.msra.mxu0 %v2679
      %2755 = vmatpush.bf16.msra.mxu0 %v2677
      %2756 = vmatpush.bf16.msra.mxu0 %v2675
      %2757 = vmatpush.bf16.msra.mxu0 %v2673
      %2758 = vmatmul.bf16.gmra.mxu0 %v2710
      %v2759 = vpop.f32.mrf.mxu0
      %v2760 = vadd.f32 0.0, %v2759
      %v2761 = vpop.f32.mrf.mxu0
      %v2762 = vadd.f32 0.0, %v2761
      %2763 = vmatmul.bf16.gmra.mxu0 %v2713
      %v2764 = vpop.f32.mrf.mxu0
      %v2765 = vadd.f32 0.0, %v2764
      %v2766 = vpop.f32.mrf.mxu0
      %v2767 = vadd.f32 0.0, %v2766
      %2768 = vmatmul.bf16.gmra.mxu0 %v2716
      %v2769 = vpop.f32.mrf.mxu0
      %v2770 = vadd.f32 0.0, %v2769
      %v2771 = vpop.f32.mrf.mxu0
      %v2772 = vadd.f32 0.0, %v2771
      %2773 = vmatmul.bf16.gmra.mxu0 %v2719
      %v2774 = vpop.f32.mrf.mxu0
      %v2775 = vadd.f32 0.0, %v2774
      %v2776 = vpop.f32.mrf.mxu0
      %v2777 = vadd.f32 0.0, %v2776
      %2778 = vdwg.mxu0
      %v2779 = vadd.f32 %v2576, %v2731
      %v2780 = vadd.f32 %v2577, %v2760
      %v2781 = vadd.f32 %v2578, %v2733
      %v2782 = vadd.f32 %v2579, %v2762
      %v2783 = vadd.f32 %v2580, %v2736
      %v2784 = vadd.f32 %v2581, %v2765
      %v2785 = vadd.f32 %v2582, %v2738
      %v2786 = vadd.f32 %v2583, %v2767
      %v2787 = vadd.f32 %v2584, %v2741
      %v2788 = vadd.f32 %v2585, %v2770
      %v2789 = vadd.f32 %v2586, %v2743
      %v2790 = vadd.f32 %v2587, %v2772
      %v2791 = vadd.f32 %v2588, %v2746
      %v2792 = vadd.f32 %v2589, %v2775
      %v2793 = vadd.f32 %v2590, %v2748
      %v2794 = vadd.f32 %v2591, %v2777
      %v2795 = vpack.c.bf16 %v2002, %v2000
      %v2796 = vpack.c.bf16 %v2003, %v2001
      %v2797 = vpack.c.bf16 %v2006, %v2004
      %v2798 = vpack.c.bf16 %v2007, %v2005
      %v2799 = vpack.c.bf16 %v2010, %v2008
      %v2800 = vpack.c.bf16 %v2011, %v2009
      %v2801 = vpack.c.bf16 %v2014, %v2012
      %v2802 = vpack.c.bf16 %v2015, %v2013
      %s2803 = scalar_lea.vmem %s6, 128
      %v2804 = vld [vmem:[%s2803] sm:$0xf]
      %v2805 = vld [vmem:[%s2803 + $0x4] sm:$0xf]
      %v2806 = vld [vmem:[%s2803 + $0x8] sm:$0xf]
      %v2807 = vld [vmem:[%s2803 + $0xc] sm:$0xf]
      %v2808 = vld [vmem:[%s2803 + $0x10] sm:$0xf]
      %v2809 = vld [vmem:[%s2803 + $0x14] sm:$0xf]
      %v2810 = vld [vmem:[%s2803 + $0x18] sm:$0xf]
      %v2811 = vld [vmem:[%s2803 + $0x1c] sm:$0xf]
      %v2820 = vunpack.c.l.b16 %v2804
      %v2821 = vunpack.c.l.b16 %v2805
      %v2822 = vunpack.c.l.b16 %v2806
      %v2823 = vunpack.c.l.b16 %v2807
      %v2824 = vunpack.c.l.b16 %v2808
      %v2825 = vunpack.c.l.b16 %v2809
      %v2826 = vunpack.c.l.b16 %v2810
      %v2827 = vunpack.c.l.b16 %v2811
      %v2828 = vpack.c.b16 %v2821, %v2820
      %v2829 = vpack.c.b16 %v2823, %v2822
      %v2830 = vpack.c.b16 %v2825, %v2824
      %v2831 = vpack.c.b16 %v2827, %v2826
      %v2833 = vsel %vm446, %v2828, 0
      %v2836 = vsel %vm446, %v2829, 0
      %v2839 = vsel %vm446, %v2830, 0
      %v2842 = vsel %vm446, %v2831, 0
      %2844 = vmatpush.bf16.msra.mxu0 0
      %2845 = vmatpush.bf16.msra.mxu0 0
      %2846 = vmatpush.bf16.msra.mxu0 0
      %2847 = vmatpush.bf16.msra.mxu0 0
      %2848 = vmatpush.bf16.msra.mxu0 %v2801
      %2849 = vmatpush.bf16.msra.mxu0 %v2799
      %2850 = vmatpush.bf16.msra.mxu0 %v2797
      %2851 = vmatpush.bf16.msra.mxu0 %v2795
      %2852 = vmatmul.bf16.gmra.mxu0 %v2833
      %v2853 = vpop.f32.mrf.mxu0
      %v2854 = vadd.f32 0.0, %v2853
      %v2855 = vpop.f32.mrf.mxu0
      %v2856 = vadd.f32 0.0, %v2855
      %2857 = vmatmul.bf16.gmra.mxu0 %v2836
      %v2858 = vpop.f32.mrf.mxu0
      %v2859 = vadd.f32 0.0, %v2858
      %v2860 = vpop.f32.mrf.mxu0
      %v2861 = vadd.f32 0.0, %v2860
      %2862 = vmatmul.bf16.gmra.mxu0 %v2839
      %v2863 = vpop.f32.mrf.mxu0
      %v2864 = vadd.f32 0.0, %v2863
      %v2865 = vpop.f32.mrf.mxu0
      %v2866 = vadd.f32 0.0, %v2865
      %2867 = vmatmul.bf16.gmra.mxu0 %v2842
      %v2868 = vpop.f32.mrf.mxu0
      %v2869 = vadd.f32 0.0, %v2868
      %v2870 = vpop.f32.mrf.mxu0
      %v2871 = vadd.f32 0.0, %v2870
      %2872 = vdwg.mxu0
      %2873 = vmatpush.bf16.msra.mxu0 0
      %2874 = vmatpush.bf16.msra.mxu0 0
      %2875 = vmatpush.bf16.msra.mxu0 0
      %2876 = vmatpush.bf16.msra.mxu0 0
      %2877 = vmatpush.bf16.msra.mxu0 %v2802
      %2878 = vmatpush.bf16.msra.mxu0 %v2800
      %2879 = vmatpush.bf16.msra.mxu0 %v2798
      %2880 = vmatpush.bf16.msra.mxu0 %v2796
      %2881 = vmatmul.bf16.gmra.mxu0 %v2833
      %v2882 = vpop.f32.mrf.mxu0
      %v2883 = vadd.f32 0.0, %v2882
      %v2884 = vpop.f32.mrf.mxu0
      %v2885 = vadd.f32 0.0, %v2884
      %2886 = vmatmul.bf16.gmra.mxu0 %v2836
      %v2887 = vpop.f32.mrf.mxu0
      %v2888 = vadd.f32 0.0, %v2887
      %v2889 = vpop.f32.mrf.mxu0
      %v2890 = vadd.f32 0.0, %v2889
      %2891 = vmatmul.bf16.gmra.mxu0 %v2839
      %v2892 = vpop.f32.mrf.mxu0
      %v2893 = vadd.f32 0.0, %v2892
      %v2894 = vpop.f32.mrf.mxu0
      %v2895 = vadd.f32 0.0, %v2894
      %2896 = vmatmul.bf16.gmra.mxu0 %v2842
      %v2897 = vpop.f32.mrf.mxu0
      %v2898 = vadd.f32 0.0, %v2897
      %v2899 = vpop.f32.mrf.mxu0
      %v2900 = vadd.f32 0.0, %v2899
      %2901 = vdwg.mxu0
      %v2902 = vadd.f32 %v2779, %v2854
      %v2903 = vadd.f32 %v2780, %v2883
      %v2904 = vadd.f32 %v2781, %v2856
      %v2905 = vadd.f32 %v2782, %v2885
      %v2906 = vadd.f32 %v2783, %v2859
      %v2907 = vadd.f32 %v2784, %v2888
      %v2908 = vadd.f32 %v2785, %v2861
      %v2909 = vadd.f32 %v2786, %v2890
      %v2910 = vadd.f32 %v2787, %v2864
      %v2911 = vadd.f32 %v2788, %v2893
      %v2912 = vadd.f32 %v2789, %v2866
      %v2913 = vadd.f32 %v2790, %v2895
      %v2914 = vadd.f32 %v2791, %v2869
      %v2915 = vadd.f32 %v2792, %v2898
      %v2916 = vadd.f32 %v2793, %v2871
      %v2917 = vadd.f32 %v2794, %v2900
      %2918 = vrot.lane.b32.xlu0 %v2000, 127
      %v2919 = vpop.permute.xlu0 %2918
      %2920 = vrot.lane.b32.xlu0 %v2001, 127
      %v2921 = vpop.permute.xlu0 %2920
      %2922 = vrot.lane.b32.xlu0 %v2002, 127
      %v2923 = vpop.permute.xlu0 %2922
      %2924 = vrot.lane.b32.xlu0 %v2003, 127
      %v2925 = vpop.permute.xlu0 %2924
      %2926 = vrot.lane.b32.xlu0 %v2004, 127
      %v2927 = vpop.permute.xlu0 %2926
      %2928 = vrot.lane.b32.xlu0 %v2005, 127
      %v2929 = vpop.permute.xlu0 %2928
      %2930 = vrot.lane.b32.xlu0 %v2006, 127
      %v2931 = vpop.permute.xlu0 %2930
      %2932 = vrot.lane.b32.xlu0 %v2007, 127
      %v2933 = vpop.permute.xlu0 %2932
      %2934 = vrot.lane.b32.xlu0 %v2008, 127
      %v2935 = vpop.permute.xlu0 %2934
      %2936 = vrot.lane.b32.xlu0 %v2009, 127
      %v2937 = vpop.permute.xlu0 %2936
      %2938 = vrot.lane.b32.xlu0 %v2010, 127
      %v2939 = vpop.permute.xlu0 %2938
      %2940 = vrot.lane.b32.xlu0 %v2011, 127
      %v2941 = vpop.permute.xlu0 %2940
      %2942 = vrot.lane.b32.xlu0 %v2012, 127
      %v2943 = vpop.permute.xlu0 %2942
      %2944 = vrot.lane.b32.xlu0 %v2013, 127
      %v2945 = vpop.permute.xlu0 %2944
      %2946 = vrot.lane.b32.xlu0 %v2014, 127
      %v2947 = vpop.permute.xlu0 %2946
      %2948 = vrot.lane.b32.xlu0 %v2015, 127
      %v2949 = vpop.permute.xlu0 %2948
      %v2950 = vsel %vm1227, %v2919, %v2921
      %v2951 = vsel %vm1227, %v2923, %v2925
      %v2952 = vsel %vm1227, %v2927, %v2929
      %v2953 = vsel %vm1227, %v2931, %v2933
      %v2954 = vsel %vm1227, %v2935, %v2937
      %v2955 = vsel %vm1227, %v2939, %v2941
      %v2956 = vsel %vm1227, %v2943, %v2945
      %v2957 = vsel %vm1227, %v2947, %v2949
      %v2974 = vsel %vm1227, %v2921, 0.0
      %v2975 = vsel %vm1227, %v2925, 0.0
      %v2976 = vsel %vm1227, %v2929, 0.0
      %v2977 = vsel %vm1227, %v2933, 0.0
      %v2978 = vsel %vm1227, %v2937, 0.0
      %v2979 = vsel %vm1227, %v2941, 0.0
      %v2980 = vsel %vm1227, %v2945, 0.0
      %v2981 = vsel %vm1227, %v2949, 0.0
      %v2982 = vmul.f32 %v2950, %v358
      %v2983 = vmul.f32 %v2974, %v359
      %v2984 = vmul.f32 %v2951, %v358
      %v2985 = vmul.f32 %v2975, %v359
      %v2986 = vmul.f32 %v2952, %v358
      %v2987 = vmul.f32 %v2976, %v359
      %v2988 = vmul.f32 %v2953, %v358
      %v2989 = vmul.f32 %v2977, %v359
      %v2990 = vmul.f32 %v2954, %v358
      %v2991 = vmul.f32 %v2978, %v359
      %v2992 = vmul.f32 %v2955, %v358
      %v2993 = vmul.f32 %v2979, %v359
      %v2994 = vmul.f32 %v2956, %v358
      %v2995 = vmul.f32 %v2980, %v359
      %v2996 = vmul.f32 %v2957, %v358
      %v2997 = vmul.f32 %v2981, %v359
      %v2998 = vpack.c.bf16 %v2984, %v2982
      %v2999 = vpack.c.bf16 %v2985, %v2983
      %v3000 = vpack.c.bf16 %v2988, %v2986
      %v3001 = vpack.c.bf16 %v2989, %v2987
      %v3002 = vpack.c.bf16 %v2992, %v2990
      %v3003 = vpack.c.bf16 %v2993, %v2991
      %v3004 = vpack.c.bf16 %v2996, %v2994
      %v3005 = vpack.c.bf16 %v2997, %v2995
      %s3006 = scalar_lea.vmem %s6, 160
      %v3007 = vld [vmem:[%s3006] sm:$0xf]
      %v3008 = vld [vmem:[%s3006 + $0x4] sm:$0xf]
      %v3009 = vld [vmem:[%s3006 + $0x8] sm:$0xf]
      %v3010 = vld [vmem:[%s3006 + $0xc] sm:$0xf]
      %v3011 = vld [vmem:[%s3006 + $0x10] sm:$0xf]
      %v3012 = vld [vmem:[%s3006 + $0x14] sm:$0xf]
      %v3013 = vld [vmem:[%s3006 + $0x18] sm:$0xf]
      %v3014 = vld [vmem:[%s3006 + $0x1c] sm:$0xf]
      %v3023 = vunpack.c.l.b16 %v3007
      %v3024 = vunpack.c.l.b16 %v3008
      %v3025 = vunpack.c.l.b16 %v3009
      %v3026 = vunpack.c.l.b16 %v3010
      %v3027 = vunpack.c.l.b16 %v3011
      %v3028 = vunpack.c.l.b16 %v3012
      %v3029 = vunpack.c.l.b16 %v3013
      %v3030 = vunpack.c.l.b16 %v3014
      %v3031 = vpack.c.b16 %v3024, %v3023
      %v3032 = vpack.c.b16 %v3026, %v3025
      %v3033 = vpack.c.b16 %v3028, %v3027
      %v3034 = vpack.c.b16 %v3030, %v3029
      %v3036 = vsel %vm446, %v3031, 0
      %v3039 = vsel %vm446, %v3032, 0
      %v3042 = vsel %vm446, %v3033, 0
      %v3045 = vsel %vm446, %v3034, 0
      %3047 = vmatpush.bf16.msra.mxu0 0
      %3048 = vmatpush.bf16.msra.mxu0 0
      %3049 = vmatpush.bf16.msra.mxu0 0
      %3050 = vmatpush.bf16.msra.mxu0 0
      %3051 = vmatpush.bf16.msra.mxu0 %v3004
      %3052 = vmatpush.bf16.msra.mxu0 %v3002
      %3053 = vmatpush.bf16.msra.mxu0 %v3000
      %3054 = vmatpush.bf16.msra.mxu0 %v2998
      %3055 = vmatmul.bf16.gmra.mxu0 %v3036
      %v3056 = vpop.f32.mrf.mxu0
      %v3057 = vadd.f32 0.0, %v3056
      %v3058 = vpop.f32.mrf.mxu0
      %v3059 = vadd.f32 0.0, %v3058
      %3060 = vmatmul.bf16.gmra.mxu0 %v3039
      %v3061 = vpop.f32.mrf.mxu0
      %v3062 = vadd.f32 0.0, %v3061
      %v3063 = vpop.f32.mrf.mxu0
      %v3064 = vadd.f32 0.0, %v3063
      %3065 = vmatmul.bf16.gmra.mxu0 %v3042
      %v3066 = vpop.f32.mrf.mxu0
      %v3067 = vadd.f32 0.0, %v3066
      %v3068 = vpop.f32.mrf.mxu0
      %v3069 = vadd.f32 0.0, %v3068
      %3070 = vmatmul.bf16.gmra.mxu0 %v3045
      %v3071 = vpop.f32.mrf.mxu0
      %v3072 = vadd.f32 0.0, %v3071
      %v3073 = vpop.f32.mrf.mxu0
      %v3074 = vadd.f32 0.0, %v3073
      %3075 = vdwg.mxu0
      %3076 = vmatpush.bf16.msra.mxu0 0
      %3077 = vmatpush.bf16.msra.mxu0 0
      %3078 = vmatpush.bf16.msra.mxu0 0
      %3079 = vmatpush.bf16.msra.mxu0 0
      %3080 = vmatpush.bf16.msra.mxu0 %v3005
      %3081 = vmatpush.bf16.msra.mxu0 %v3003
      %3082 = vmatpush.bf16.msra.mxu0 %v3001
      %3083 = vmatpush.bf16.msra.mxu0 %v2999
      %3084 = vmatmul.bf16.gmra.mxu0 %v3036
      %v3085 = vpop.f32.mrf.mxu0
      %v3086 = vadd.f32 0.0, %v3085
      %v3087 = vpop.f32.mrf.mxu0
      %v3088 = vadd.f32 0.0, %v3087
      %3089 = vmatmul.bf16.gmra.mxu0 %v3039
      %v3090 = vpop.f32.mrf.mxu0
      %v3091 = vadd.f32 0.0, %v3090
      %v3092 = vpop.f32.mrf.mxu0
      %v3093 = vadd.f32 0.0, %v3092
      %3094 = vmatmul.bf16.gmra.mxu0 %v3042
      %v3095 = vpop.f32.mrf.mxu0
      %v3096 = vadd.f32 0.0, %v3095
      %v3097 = vpop.f32.mrf.mxu0
      %v3098 = vadd.f32 0.0, %v3097
      %3099 = vmatmul.bf16.gmra.mxu0 %v3045
      %v3100 = vpop.f32.mrf.mxu0
      %v3101 = vadd.f32 0.0, %v3100
      %v3102 = vpop.f32.mrf.mxu0
      %v3103 = vadd.f32 0.0, %v3102
      %3104 = vdwg.mxu0
      %v3105 = vadd.f32 %v2902, %v3057
      %v3106 = vadd.f32 %v2903, %v3086
      %v3107 = vadd.f32 %v2904, %v3059
      %v3108 = vadd.f32 %v2905, %v3088
      %v3109 = vadd.f32 %v2906, %v3062
      %v3110 = vadd.f32 %v2907, %v3091
      %v3111 = vadd.f32 %v2908, %v3064
      %v3112 = vadd.f32 %v2909, %v3093
      %v3113 = vadd.f32 %v2910, %v3067
      %v3114 = vadd.f32 %v2911, %v3096
      %v3115 = vadd.f32 %v2912, %v3069
      %v3116 = vadd.f32 %v2913, %v3098
      %v3117 = vadd.f32 %v2914, %v3072
      %v3118 = vadd.f32 %v2915, %v3101
      %v3119 = vadd.f32 %v2916, %v3074
      %v3120 = vadd.f32 %v2917, %v3103
      %3121 = vrot.lane.b32.xlu0 %v2000, 113
      %v3122 = vpop.permute.xlu0 %3121
      %3123 = vrot.lane.b32.xlu0 %v2001, 113
      %v3124 = vpop.permute.xlu0 %3123
      %3125 = vrot.lane.b32.xlu0 %v2002, 113
      %v3126 = vpop.permute.xlu0 %3125
      %3127 = vrot.lane.b32.xlu0 %v2003, 113
      %v3128 = vpop.permute.xlu0 %3127
      %3129 = vrot.lane.b32.xlu0 %v2004, 113
      %v3130 = vpop.permute.xlu0 %3129
      %3131 = vrot.lane.b32.xlu0 %v2005, 113
      %v3132 = vpop.permute.xlu0 %3131
      %3133 = vrot.lane.b32.xlu0 %v2006, 113
      %v3134 = vpop.permute.xlu0 %3133
      %3135 = vrot.lane.b32.xlu0 %v2007, 113
      %v3136 = vpop.permute.xlu0 %3135
      %3137 = vrot.lane.b32.xlu0 %v2008, 113
      %v3138 = vpop.permute.xlu0 %3137
      %3139 = vrot.lane.b32.xlu0 %v2009, 113
      %v3140 = vpop.permute.xlu0 %3139
      %3141 = vrot.lane.b32.xlu0 %v2010, 113
      %v3142 = vpop.permute.xlu0 %3141
      %3143 = vrot.lane.b32.xlu0 %v2011, 113
      %v3144 = vpop.permute.xlu0 %3143
      %3145 = vrot.lane.b32.xlu0 %v2012, 113
      %v3146 = vpop.permute.xlu0 %3145
      %3147 = vrot.lane.b32.xlu0 %v2013, 113
      %v3148 = vpop.permute.xlu0 %3147
      %3149 = vrot.lane.b32.xlu0 %v2014, 113
      %v3150 = vpop.permute.xlu0 %3149
      %3151 = vrot.lane.b32.xlu0 %v2015, 113
      %v3152 = vpop.permute.xlu0 %3151
      %v3153 = vsel %vm1380, %v3122, %v3124
      %v3154 = vsel %vm1380, %v3126, %v3128
      %v3155 = vsel %vm1380, %v3130, %v3132
      %v3156 = vsel %vm1380, %v3134, %v3136
      %v3157 = vsel %vm1380, %v3138, %v3140
      %v3158 = vsel %vm1380, %v3142, %v3144
      %v3159 = vsel %vm1380, %v3146, %v3148
      %v3160 = vsel %vm1380, %v3150, %v3152
      %v3177 = vsel %vm1380, %v3124, 0.0
      %v3178 = vsel %vm1380, %v3128, 0.0
      %v3179 = vsel %vm1380, %v3132, 0.0
      %v3180 = vsel %vm1380, %v3136, 0.0
      %v3181 = vsel %vm1380, %v3140, 0.0
      %v3182 = vsel %vm1380, %v3144, 0.0
      %v3183 = vsel %vm1380, %v3148, 0.0
      %v3184 = vsel %vm1380, %v3152, 0.0
      %v3185 = vmul.f32 %v3153, %v364
      %v3186 = vmul.f32 %v3177, %v365
      %v3187 = vmul.f32 %v3154, %v364
      %v3188 = vmul.f32 %v3178, %v365
      %v3189 = vmul.f32 %v3155, %v364
      %v3190 = vmul.f32 %v3179, %v365
      %v3191 = vmul.f32 %v3156, %v364
      %v3192 = vmul.f32 %v3180, %v365
      %v3193 = vmul.f32 %v3157, %v364
      %v3194 = vmul.f32 %v3181, %v365
      %v3195 = vmul.f32 %v3158, %v364
      %v3196 = vmul.f32 %v3182, %v365
      %v3197 = vmul.f32 %v3159, %v364
      %v3198 = vmul.f32 %v3183, %v365
      %v3199 = vmul.f32 %v3160, %v364
      %v3200 = vmul.f32 %v3184, %v365
      %v3201 = vpack.c.bf16 %v3187, %v3185
      %v3202 = vpack.c.bf16 %v3188, %v3186
      %v3203 = vpack.c.bf16 %v3191, %v3189
      %v3204 = vpack.c.bf16 %v3192, %v3190
      %v3205 = vpack.c.bf16 %v3195, %v3193
      %v3206 = vpack.c.bf16 %v3196, %v3194
      %v3207 = vpack.c.bf16 %v3199, %v3197
      %v3208 = vpack.c.bf16 %v3200, %v3198
      %s3209 = scalar_lea.vmem %s6, 192
      %v3210 = vld [vmem:[%s3209] sm:$0xf]
      %v3211 = vld [vmem:[%s3209 + $0x4] sm:$0xf]
      %v3212 = vld [vmem:[%s3209 + $0x8] sm:$0xf]
      %v3213 = vld [vmem:[%s3209 + $0xc] sm:$0xf]
      %v3214 = vld [vmem:[%s3209 + $0x10] sm:$0xf]
      %v3215 = vld [vmem:[%s3209 + $0x14] sm:$0xf]
      %v3216 = vld [vmem:[%s3209 + $0x18] sm:$0xf]
      %v3217 = vld [vmem:[%s3209 + $0x1c] sm:$0xf]
      %v3226 = vunpack.c.l.b16 %v3210
      %v3227 = vunpack.c.l.b16 %v3211
      %v3228 = vunpack.c.l.b16 %v3212
      %v3229 = vunpack.c.l.b16 %v3213
      %v3230 = vunpack.c.l.b16 %v3214
      %v3231 = vunpack.c.l.b16 %v3215
      %v3232 = vunpack.c.l.b16 %v3216
      %v3233 = vunpack.c.l.b16 %v3217
      %v3234 = vpack.c.b16 %v3227, %v3226
      %v3235 = vpack.c.b16 %v3229, %v3228
      %v3236 = vpack.c.b16 %v3231, %v3230
      %v3237 = vpack.c.b16 %v3233, %v3232
      %v3239 = vsel %vm446, %v3234, 0
      %v3242 = vsel %vm446, %v3235, 0
      %v3245 = vsel %vm446, %v3236, 0
      %v3248 = vsel %vm446, %v3237, 0
      %3250 = vmatpush.bf16.msra.mxu0 0
      %3251 = vmatpush.bf16.msra.mxu0 0
      %3252 = vmatpush.bf16.msra.mxu0 0
      %3253 = vmatpush.bf16.msra.mxu0 0
      %3254 = vmatpush.bf16.msra.mxu0 %v3207
      %3255 = vmatpush.bf16.msra.mxu0 %v3205
      %3256 = vmatpush.bf16.msra.mxu0 %v3203
      %3257 = vmatpush.bf16.msra.mxu0 %v3201
      %3258 = vmatmul.bf16.gmra.mxu0 %v3239
      %v3259 = vpop.f32.mrf.mxu0
      %v3260 = vadd.f32 0.0, %v3259
      %v3261 = vpop.f32.mrf.mxu0
      %v3262 = vadd.f32 0.0, %v3261
      %3263 = vmatmul.bf16.gmra.mxu0 %v3242
      %v3264 = vpop.f32.mrf.mxu0
      %v3265 = vadd.f32 0.0, %v3264
      %v3266 = vpop.f32.mrf.mxu0
      %v3267 = vadd.f32 0.0, %v3266
      %3268 = vmatmul.bf16.gmra.mxu0 %v3245
      %v3269 = vpop.f32.mrf.mxu0
      %v3270 = vadd.f32 0.0, %v3269
      %v3271 = vpop.f32.mrf.mxu0
      %v3272 = vadd.f32 0.0, %v3271
      %3273 = vmatmul.bf16.gmra.mxu0 %v3248
      %v3274 = vpop.f32.mrf.mxu0
      %v3275 = vadd.f32 0.0, %v3274
      %v3276 = vpop.f32.mrf.mxu0
      %v3277 = vadd.f32 0.0, %v3276
      %3278 = vdwg.mxu0
      %3279 = vmatpush.bf16.msra.mxu0 0
      %3280 = vmatpush.bf16.msra.mxu0 0
      %3281 = vmatpush.bf16.msra.mxu0 0
      %3282 = vmatpush.bf16.msra.mxu0 0
      %3283 = vmatpush.bf16.msra.mxu0 %v3208
      %3284 = vmatpush.bf16.msra.mxu0 %v3206
      %3285 = vmatpush.bf16.msra.mxu0 %v3204
      %3286 = vmatpush.bf16.msra.mxu0 %v3202
      %3287 = vmatmul.bf16.gmra.mxu0 %v3239
      %v3288 = vpop.f32.mrf.mxu0
      %v3289 = vadd.f32 0.0, %v3288
      %v3290 = vpop.f32.mrf.mxu0
      %v3291 = vadd.f32 0.0, %v3290
      %3292 = vmatmul.bf16.gmra.mxu0 %v3242
      %v3293 = vpop.f32.mrf.mxu0
      %v3294 = vadd.f32 0.0, %v3293
      %v3295 = vpop.f32.mrf.mxu0
      %v3296 = vadd.f32 0.0, %v3295
      %3297 = vmatmul.bf16.gmra.mxu0 %v3245
      %v3298 = vpop.f32.mrf.mxu0
      %v3299 = vadd.f32 0.0, %v3298
      %v3300 = vpop.f32.mrf.mxu0
      %v3301 = vadd.f32 0.0, %v3300
      %3302 = vmatmul.bf16.gmra.mxu0 %v3248
      %v3303 = vpop.f32.mrf.mxu0
      %v3304 = vadd.f32 0.0, %v3303
      %v3305 = vpop.f32.mrf.mxu0
      %v3306 = vadd.f32 0.0, %v3305
      %3307 = vdwg.mxu0
      %v3308 = vadd.f32 %v3105, %v3260
      %v3309 = vadd.f32 %v3106, %v3289
      %v3310 = vadd.f32 %v3107, %v3262
      %v3311 = vadd.f32 %v3108, %v3291
      %v3312 = vadd.f32 %v3109, %v3265
      %v3313 = vadd.f32 %v3110, %v3294
      %v3314 = vadd.f32 %v3111, %v3267
      %v3315 = vadd.f32 %v3112, %v3296
      %v3316 = vadd.f32 %v3113, %v3270
      %v3317 = vadd.f32 %v3114, %v3299
      %v3318 = vadd.f32 %v3115, %v3272
      %v3319 = vadd.f32 %v3116, %v3301
      %v3320 = vadd.f32 %v3117, %v3275
      %v3321 = vadd.f32 %v3118, %v3304
      %v3322 = vadd.f32 %v3119, %v3277
      %v3323 = vadd.f32 %v3120, %v3306
      %3324 = vrot.lane.b32.xlu0 %v2000, 112
      %v3325 = vpop.permute.xlu0 %3324
      %3326 = vrot.lane.b32.xlu0 %v2001, 112
      %v3327 = vpop.permute.xlu0 %3326
      %3328 = vrot.lane.b32.xlu0 %v2002, 112
      %v3329 = vpop.permute.xlu0 %3328
      %3330 = vrot.lane.b32.xlu0 %v2003, 112
      %v3331 = vpop.permute.xlu0 %3330
      %3332 = vrot.lane.b32.xlu0 %v2004, 112
      %v3333 = vpop.permute.xlu0 %3332
      %3334 = vrot.lane.b32.xlu0 %v2005, 112
      %v3335 = vpop.permute.xlu0 %3334
      %3336 = vrot.lane.b32.xlu0 %v2006, 112
      %v3337 = vpop.permute.xlu0 %3336
      %3338 = vrot.lane.b32.xlu0 %v2007, 112
      %v3339 = vpop.permute.xlu0 %3338
      %3340 = vrot.lane.b32.xlu0 %v2008, 112
      %v3341 = vpop.permute.xlu0 %3340
      %3342 = vrot.lane.b32.xlu0 %v2009, 112
      %v3343 = vpop.permute.xlu0 %3342
      %3344 = vrot.lane.b32.xlu0 %v2010, 112
      %v3345 = vpop.permute.xlu0 %3344
      %3346 = vrot.lane.b32.xlu0 %v2011, 112
      %v3347 = vpop.permute.xlu0 %3346
      %3348 = vrot.lane.b32.xlu0 %v2012, 112
      %v3349 = vpop.permute.xlu0 %3348
      %3350 = vrot.lane.b32.xlu0 %v2013, 112
      %v3351 = vpop.permute.xlu0 %3350
      %3352 = vrot.lane.b32.xlu0 %v2014, 112
      %v3353 = vpop.permute.xlu0 %3352
      %3354 = vrot.lane.b32.xlu0 %v2015, 112
      %v3355 = vpop.permute.xlu0 %3354
      %v3356 = vsel %vm1533, %v3325, %v3327
      %v3357 = vsel %vm1533, %v3329, %v3331
      %v3358 = vsel %vm1533, %v3333, %v3335
      %v3359 = vsel %vm1533, %v3337, %v3339
      %v3360 = vsel %vm1533, %v3341, %v3343
      %v3361 = vsel %vm1533, %v3345, %v3347
      %v3362 = vsel %vm1533, %v3349, %v3351
      %v3363 = vsel %vm1533, %v3353, %v3355
      %v3380 = vsel %vm1533, %v3327, 0.0
      %v3381 = vsel %vm1533, %v3331, 0.0
      %v3382 = vsel %vm1533, %v3335, 0.0
      %v3383 = vsel %vm1533, %v3339, 0.0
      %v3384 = vsel %vm1533, %v3343, 0.0
      %v3385 = vsel %vm1533, %v3347, 0.0
      %v3386 = vsel %vm1533, %v3351, 0.0
      %v3387 = vsel %vm1533, %v3355, 0.0
      %v3388 = vpack.c.bf16 %v3357, %v3356
      %v3389 = vpack.c.bf16 %v3381, %v3380
      %v3390 = vpack.c.bf16 %v3359, %v3358
      %v3391 = vpack.c.bf16 %v3383, %v3382
      %v3392 = vpack.c.bf16 %v3361, %v3360
      %v3393 = vpack.c.bf16 %v3385, %v3384
      %v3394 = vpack.c.bf16 %v3363, %v3362
      %v3395 = vpack.c.bf16 %v3387, %v3386
      %s3396 = scalar_lea.vmem %s6, 224
      %v3397 = vld [vmem:[%s3396] sm:$0xf]
      %v3398 = vld [vmem:[%s3396 + $0x4] sm:$0xf]
      %v3399 = vld [vmem:[%s3396 + $0x8] sm:$0xf]
      %v3400 = vld [vmem:[%s3396 + $0xc] sm:$0xf]
      %v3401 = vld [vmem:[%s3396 + $0x10] sm:$0xf]
      %v3402 = vld [vmem:[%s3396 + $0x14] sm:$0xf]
      %v3403 = vld [vmem:[%s3396 + $0x18] sm:$0xf]
      %v3404 = vld [vmem:[%s3396 + $0x1c] sm:$0xf]
      %v3413 = vunpack.c.l.b16 %v3397
      %v3414 = vunpack.c.l.b16 %v3398
      %v3415 = vunpack.c.l.b16 %v3399
      %v3416 = vunpack.c.l.b16 %v3400
      %v3417 = vunpack.c.l.b16 %v3401
      %v3418 = vunpack.c.l.b16 %v3402
      %v3419 = vunpack.c.l.b16 %v3403
      %v3420 = vunpack.c.l.b16 %v3404
      %v3421 = vpack.c.b16 %v3414, %v3413
      %v3422 = vpack.c.b16 %v3416, %v3415
      %v3423 = vpack.c.b16 %v3418, %v3417
      %v3424 = vpack.c.b16 %v3420, %v3419
      %v3426 = vsel %vm446, %v3421, 0
      %v3429 = vsel %vm446, %v3422, 0
      %v3432 = vsel %vm446, %v3423, 0
      %v3435 = vsel %vm446, %v3424, 0
      %3437 = vmatpush.bf16.msra.mxu0 0
      %3438 = vmatpush.bf16.msra.mxu0 0
      %3439 = vmatpush.bf16.msra.mxu0 0
      %3440 = vmatpush.bf16.msra.mxu0 0
      %3441 = vmatpush.bf16.msra.mxu0 %v3394
      %3442 = vmatpush.bf16.msra.mxu0 %v3392
      %3443 = vmatpush.bf16.msra.mxu0 %v3390
      %3444 = vmatpush.bf16.msra.mxu0 %v3388
      %3445 = vmatmul.bf16.gmra.mxu0 %v3426
      %v3446 = vpop.f32.mrf.mxu0
      %v3447 = vadd.f32 0.0, %v3446
      %v3448 = vpop.f32.mrf.mxu0
      %v3449 = vadd.f32 0.0, %v3448
      %3450 = vmatmul.bf16.gmra.mxu0 %v3429
      %v3451 = vpop.f32.mrf.mxu0
      %v3452 = vadd.f32 0.0, %v3451
      %v3453 = vpop.f32.mrf.mxu0
      %v3454 = vadd.f32 0.0, %v3453
      %3455 = vmatmul.bf16.gmra.mxu0 %v3432
      %v3456 = vpop.f32.mrf.mxu0
      %v3457 = vadd.f32 0.0, %v3456
      %v3458 = vpop.f32.mrf.mxu0
      %v3459 = vadd.f32 0.0, %v3458
      %3460 = vmatmul.bf16.gmra.mxu0 %v3435
      %v3461 = vpop.f32.mrf.mxu0
      %v3462 = vadd.f32 0.0, %v3461
      %v3463 = vpop.f32.mrf.mxu0
      %v3464 = vadd.f32 0.0, %v3463
      %3465 = vdwg.mxu0
      %3466 = vmatpush.bf16.msra.mxu0 0
      %3467 = vmatpush.bf16.msra.mxu0 0
      %3468 = vmatpush.bf16.msra.mxu0 0
      %3469 = vmatpush.bf16.msra.mxu0 0
      %3470 = vmatpush.bf16.msra.mxu0 %v3395
      %3471 = vmatpush.bf16.msra.mxu0 %v3393
      %3472 = vmatpush.bf16.msra.mxu0 %v3391
      %3473 = vmatpush.bf16.msra.mxu0 %v3389
      %3474 = vmatmul.bf16.gmra.mxu0 %v3426
      %v3475 = vpop.f32.mrf.mxu0
      %v3476 = vadd.f32 0.0, %v3475
      %v3477 = vpop.f32.mrf.mxu0
      %v3478 = vadd.f32 0.0, %v3477
      %3479 = vmatmul.bf16.gmra.mxu0 %v3429
      %v3480 = vpop.f32.mrf.mxu0
      %v3481 = vadd.f32 0.0, %v3480
      %v3482 = vpop.f32.mrf.mxu0
      %v3483 = vadd.f32 0.0, %v3482
      %3484 = vmatmul.bf16.gmra.mxu0 %v3432
      %v3485 = vpop.f32.mrf.mxu0
      %v3486 = vadd.f32 0.0, %v3485
      %v3487 = vpop.f32.mrf.mxu0
      %v3488 = vadd.f32 0.0, %v3487
      %3489 = vmatmul.bf16.gmra.mxu0 %v3435
      %v3490 = vpop.f32.mrf.mxu0
      %v3491 = vadd.f32 0.0, %v3490
      %v3492 = vpop.f32.mrf.mxu0
      %v3493 = vadd.f32 0.0, %v3492
      %3494 = vdwg.mxu0
      %v3495 = vadd.f32 %v3308, %v3447
      %v3496 = vadd.f32 %v3309, %v3476
      %v3497 = vadd.f32 %v3310, %v3449
      %v3498 = vadd.f32 %v3311, %v3478
      %v3499 = vadd.f32 %v3312, %v3452
      %v3500 = vadd.f32 %v3313, %v3481
      %v3501 = vadd.f32 %v3314, %v3454
      %v3502 = vadd.f32 %v3315, %v3483
      %v3503 = vadd.f32 %v3316, %v3457
      %v3504 = vadd.f32 %v3317, %v3486
      %v3505 = vadd.f32 %v3318, %v3459
      %v3506 = vadd.f32 %v3319, %v3488
      %v3507 = vadd.f32 %v3320, %v3462
      %v3508 = vadd.f32 %v3321, %v3491
      %v3509 = vadd.f32 %v3322, %v3464
      %v3510 = vadd.f32 %v3323, %v3493
      %3511 = vrot.lane.b32.xlu0 %v2000, 111
      %v3512 = vpop.permute.xlu0 %3511
      %3513 = vrot.lane.b32.xlu0 %v2001, 111
      %v3514 = vpop.permute.xlu0 %3513
      %3515 = vrot.lane.b32.xlu0 %v2002, 111
      %v3516 = vpop.permute.xlu0 %3515
      %3517 = vrot.lane.b32.xlu0 %v2003, 111
      %v3518 = vpop.permute.xlu0 %3517
      %3519 = vrot.lane.b32.xlu0 %v2004, 111
      %v3520 = vpop.permute.xlu0 %3519
      %3521 = vrot.lane.b32.xlu0 %v2005, 111
      %v3522 = vpop.permute.xlu0 %3521
      %3523 = vrot.lane.b32.xlu0 %v2006, 111
      %v3524 = vpop.permute.xlu0 %3523
      %3525 = vrot.lane.b32.xlu0 %v2007, 111
      %v3526 = vpop.permute.xlu0 %3525
      %3527 = vrot.lane.b32.xlu0 %v2008, 111
      %v3528 = vpop.permute.xlu0 %3527
      %3529 = vrot.lane.b32.xlu0 %v2009, 111
      %v3530 = vpop.permute.xlu0 %3529
      %3531 = vrot.lane.b32.xlu0 %v2010, 111
      %v3532 = vpop.permute.xlu0 %3531
      %3533 = vrot.lane.b32.xlu0 %v2011, 111
      %v3534 = vpop.permute.xlu0 %3533
      %3535 = vrot.lane.b32.xlu0 %v2012, 111
      %v3536 = vpop.permute.xlu0 %3535
      %3537 = vrot.lane.b32.xlu0 %v2013, 111
      %v3538 = vpop.permute.xlu0 %3537
      %3539 = vrot.lane.b32.xlu0 %v2014, 111
      %v3540 = vpop.permute.xlu0 %3539
      %3541 = vrot.lane.b32.xlu0 %v2015, 111
      %v3542 = vpop.permute.xlu0 %3541
      %v3543 = vsel %vm1670, %v3512, %v3514
      %v3544 = vsel %vm1670, %v3516, %v3518
      %v3545 = vsel %vm1670, %v3520, %v3522
      %v3546 = vsel %vm1670, %v3524, %v3526
      %v3547 = vsel %vm1670, %v3528, %v3530
      %v3548 = vsel %vm1670, %v3532, %v3534
      %v3549 = vsel %vm1670, %v3536, %v3538
      %v3550 = vsel %vm1670, %v3540, %v3542
      %v3567 = vsel %vm1670, %v3514, 0.0
      %v3568 = vsel %vm1670, %v3518, 0.0
      %v3569 = vsel %vm1670, %v3522, 0.0
      %v3570 = vsel %vm1670, %v3526, 0.0
      %v3571 = vsel %vm1670, %v3530, 0.0
      %v3572 = vsel %vm1670, %v3534, 0.0
      %v3573 = vsel %vm1670, %v3538, 0.0
      %v3574 = vsel %vm1670, %v3542, 0.0
      %v3575 = vmul.f32 %v3543, %v358
      %v3576 = vmul.f32 %v3567, %v359
      %v3577 = vmul.f32 %v3544, %v358
      %v3578 = vmul.f32 %v3568, %v359
      %v3579 = vmul.f32 %v3545, %v358
      %v3580 = vmul.f32 %v3569, %v359
      %v3581 = vmul.f32 %v3546, %v358
      %v3582 = vmul.f32 %v3570, %v359
      %v3583 = vmul.f32 %v3547, %v358
      %v3584 = vmul.f32 %v3571, %v359
      %v3585 = vmul.f32 %v3548, %v358
      %v3586 = vmul.f32 %v3572, %v359
      %v3587 = vmul.f32 %v3549, %v358
      %v3588 = vmul.f32 %v3573, %v359
      %v3589 = vmul.f32 %v3550, %v358
      %v3590 = vmul.f32 %v3574, %v359
      %v3591 = vpack.c.bf16 %v3577, %v3575
      %v3592 = vpack.c.bf16 %v3578, %v3576
      %v3593 = vpack.c.bf16 %v3581, %v3579
      %v3594 = vpack.c.bf16 %v3582, %v3580
      %v3595 = vpack.c.bf16 %v3585, %v3583
      %v3596 = vpack.c.bf16 %v3586, %v3584
      %v3597 = vpack.c.bf16 %v3589, %v3587
      %v3598 = vpack.c.bf16 %v3590, %v3588
      %s3599 = scalar_lea.vmem %s6, 256
      %v3600 = vld [vmem:[%s3599] sm:$0xf]
      %v3601 = vld [vmem:[%s3599 + $0x4] sm:$0xf]
      %v3602 = vld [vmem:[%s3599 + $0x8] sm:$0xf]
      %v3603 = vld [vmem:[%s3599 + $0xc] sm:$0xf]
      %v3604 = vld [vmem:[%s3599 + $0x10] sm:$0xf]
      %v3605 = vld [vmem:[%s3599 + $0x14] sm:$0xf]
      %v3606 = vld [vmem:[%s3599 + $0x18] sm:$0xf]
      %v3607 = vld [vmem:[%s3599 + $0x1c] sm:$0xf]
      %v3616 = vunpack.c.l.b16 %v3600
      %v3617 = vunpack.c.l.b16 %v3601
      %v3618 = vunpack.c.l.b16 %v3602
      %v3619 = vunpack.c.l.b16 %v3603
      %v3620 = vunpack.c.l.b16 %v3604
      %v3621 = vunpack.c.l.b16 %v3605
      %v3622 = vunpack.c.l.b16 %v3606
      %v3623 = vunpack.c.l.b16 %v3607
      %v3624 = vpack.c.b16 %v3617, %v3616
      %v3625 = vpack.c.b16 %v3619, %v3618
      %v3626 = vpack.c.b16 %v3621, %v3620
      %v3627 = vpack.c.b16 %v3623, %v3622
      %v3629 = vsel %vm446, %v3624, 0
      %v3632 = vsel %vm446, %v3625, 0
      %v3635 = vsel %vm446, %v3626, 0
      %v3638 = vsel %vm446, %v3627, 0
      %3640 = vmatpush.bf16.msra.mxu0 0
      %3641 = vmatpush.bf16.msra.mxu0 0
      %3642 = vmatpush.bf16.msra.mxu0 0
      %3643 = vmatpush.bf16.msra.mxu0 0
      %3644 = vmatpush.bf16.msra.mxu0 %v3597
      %3645 = vmatpush.bf16.msra.mxu0 %v3595
      %3646 = vmatpush.bf16.msra.mxu0 %v3593
      %3647 = vmatpush.bf16.msra.mxu0 %v3591
      %3648 = vmatmul.bf16.gmra.mxu0 %v3629
      %v3649 = vpop.f32.mrf.mxu0
      %v3650 = vadd.f32 0.0, %v3649
      %v3651 = vpop.f32.mrf.mxu0
      %v3652 = vadd.f32 0.0, %v3651
      %3653 = vmatmul.bf16.gmra.mxu0 %v3632
      %v3654 = vpop.f32.mrf.mxu0
      %v3655 = vadd.f32 0.0, %v3654
      %v3656 = vpop.f32.mrf.mxu0
      %v3657 = vadd.f32 0.0, %v3656
      %3658 = vmatmul.bf16.gmra.mxu0 %v3635
      %v3659 = vpop.f32.mrf.mxu0
      %v3660 = vadd.f32 0.0, %v3659
      %v3661 = vpop.f32.mrf.mxu0
      %v3662 = vadd.f32 0.0, %v3661
      %3663 = vmatmul.bf16.gmra.mxu0 %v3638
      %v3664 = vpop.f32.mrf.mxu0
      %v3665 = vadd.f32 0.0, %v3664
      %v3666 = vpop.f32.mrf.mxu0
      %v3667 = vadd.f32 0.0, %v3666
      %3668 = vdwg.mxu0
      %3669 = vmatpush.bf16.msra.mxu0 0
      %3670 = vmatpush.bf16.msra.mxu0 0
      %3671 = vmatpush.bf16.msra.mxu0 0
      %3672 = vmatpush.bf16.msra.mxu0 0
      %3673 = vmatpush.bf16.msra.mxu0 %v3598
      %3674 = vmatpush.bf16.msra.mxu0 %v3596
      %3675 = vmatpush.bf16.msra.mxu0 %v3594
      %3676 = vmatpush.bf16.msra.mxu0 %v3592
      %3677 = vmatmul.bf16.gmra.mxu0 %v3629
      %v3678 = vpop.f32.mrf.mxu0
      %v3679 = vadd.f32 0.0, %v3678
      %v3680 = vpop.f32.mrf.mxu0
      %v3681 = vadd.f32 0.0, %v3680
      %3682 = vmatmul.bf16.gmra.mxu0 %v3632
      %v3683 = vpop.f32.mrf.mxu0
      %v3684 = vadd.f32 0.0, %v3683
      %v3685 = vpop.f32.mrf.mxu0
      %v3686 = vadd.f32 0.0, %v3685
      %3687 = vmatmul.bf16.gmra.mxu0 %v3635
      %v3688 = vpop.f32.mrf.mxu0
      %v3689 = vadd.f32 0.0, %v3688
      %v3690 = vpop.f32.mrf.mxu0
      %v3691 = vadd.f32 0.0, %v3690
      %3692 = vmatmul.bf16.gmra.mxu0 %v3638
      %v3693 = vpop.f32.mrf.mxu0
      %v3694 = vadd.f32 0.0, %v3693
      %v3695 = vpop.f32.mrf.mxu0
      %v3696 = vadd.f32 0.0, %v3695
      %3697 = vdwg.mxu0
      %v3698 = vadd.f32 %v3495, %v3650
      %v3699 = vadd.f32 %v3496, %v3679
      %v3700 = vadd.f32 %v3497, %v3652
      %v3701 = vadd.f32 %v3498, %v3681
      %v3702 = vadd.f32 %v3499, %v3655
      %v3703 = vadd.f32 %v3500, %v3684
      %v3704 = vadd.f32 %v3501, %v3657
      %v3705 = vadd.f32 %v3502, %v3686
      %v3706 = vadd.f32 %v3503, %v3660
      %v3707 = vadd.f32 %v3504, %v3689
      %v3708 = vadd.f32 %v3505, %v3662
      %v3709 = vadd.f32 %v3506, %v3691
      %v3710 = vadd.f32 %v3507, %v3665
      %v3711 = vadd.f32 %v3508, %v3694
      %v3712 = vadd.f32 %v3509, %v3667
      %v3713 = vadd.f32 %v3510, %v3696
      %v3714 = vld [vmem:[%s7] sm:$0xff]
      %v3715 = vld [vmem:[%s7 + $0x8] sm:$0xff]
      %v3716 = vld [vmem:[%s7 + $0x10] sm:$0xff]
      %v3717 = vld [vmem:[%s7 + $0x18] sm:$0xff]
      %v3718 = vld [vmem:[%s7 + $0x20] sm:$0xff]
      %v3719 = vld [vmem:[%s7 + $0x28] sm:$0xff]
      %v3720 = vld [vmem:[%s7 + $0x30] sm:$0xff]
      %v3721 = vld [vmem:[%s7 + $0x38] sm:$0xff]
      %3723 = vset.pattern.permute.xlu0 0
      %3724 = vperm.xlu0 %3723, %v3714
      %v3725 = vpop.permute.xlu0 %3724
      %3728 = vset.pattern.permute.xlu0 0
      %3729 = vperm.xlu0 %3728, %v3715
      %v3730 = vpop.permute.xlu0 %3729
      %3733 = vset.pattern.permute.xlu0 0
      %3734 = vperm.xlu0 %3733, %v3716
      %v3735 = vpop.permute.xlu0 %3734
      %3738 = vset.pattern.permute.xlu0 0
      %3739 = vperm.xlu0 %3738, %v3717
      %v3740 = vpop.permute.xlu0 %3739
      %3743 = vset.pattern.permute.xlu0 0
      %3744 = vperm.xlu0 %3743, %v3718
      %v3745 = vpop.permute.xlu0 %3744
      %3748 = vset.pattern.permute.xlu0 0
      %3749 = vperm.xlu0 %3748, %v3719
      %v3750 = vpop.permute.xlu0 %3749
      %3753 = vset.pattern.permute.xlu0 0
      %3754 = vperm.xlu0 %3753, %v3720
      %v3755 = vpop.permute.xlu0 %3754
      %3758 = vset.pattern.permute.xlu0 0
      %3759 = vperm.xlu0 %3758, %v3721
      %v3760 = vpop.permute.xlu0 %3759
      %v3762 = vadd.f32 %v3698, %v3725
      %v3763 = vadd.f32 %v3699, %v3725
      %v3764 = vadd.f32 %v3700, %v3730
      %v3765 = vadd.f32 %v3701, %v3730
      %v3766 = vadd.f32 %v3702, %v3735
      %v3767 = vadd.f32 %v3703, %v3735
      %v3768 = vadd.f32 %v3704, %v3740
      %v3769 = vadd.f32 %v3705, %v3740
      %v3770 = vadd.f32 %v3706, %v3745
      %v3771 = vadd.f32 %v3707, %v3745
      %v3772 = vadd.f32 %v3708, %v3750
      %v3773 = vadd.f32 %v3709, %v3750
      %v3774 = vadd.f32 %v3710, %v3755
      %v3775 = vadd.f32 %v3711, %v3755
      %v3776 = vadd.f32 %v3712, %v3760
      %v3777 = vadd.f32 %v3713, %v3760
      %vm3778 = vcmp.ge.f32.partialorder %v3762, 0.0
      %vm3779 = vcmp.ge.f32.partialorder %v3763, 0.0
      %vm3780 = vcmp.ge.f32.partialorder %v3764, 0.0
      %vm3781 = vcmp.ge.f32.partialorder %v3765, 0.0
      %vm3782 = vcmp.ge.f32.partialorder %v3766, 0.0
      %vm3783 = vcmp.ge.f32.partialorder %v3767, 0.0
      %vm3784 = vcmp.ge.f32.partialorder %v3768, 0.0
      %vm3785 = vcmp.ge.f32.partialorder %v3769, 0.0
      %vm3786 = vcmp.ge.f32.partialorder %v3770, 0.0
      %vm3787 = vcmp.ge.f32.partialorder %v3771, 0.0
      %vm3788 = vcmp.ge.f32.partialorder %v3772, 0.0
      %vm3789 = vcmp.ge.f32.partialorder %v3773, 0.0
      %vm3790 = vcmp.ge.f32.partialorder %v3774, 0.0
      %vm3791 = vcmp.ge.f32.partialorder %v3775, 0.0
      %vm3792 = vcmp.ge.f32.partialorder %v3776, 0.0
      %vm3793 = vcmp.ge.f32.partialorder %v3777, 0.0
      %v3794 = vmul.f32 %v3762, 0.1
      %v3795 = vmul.f32 %v3763, 0.1
      %v3796 = vmul.f32 %v3764, 0.1
      %v3797 = vmul.f32 %v3765, 0.1
      %v3798 = vmul.f32 %v3766, 0.1
      %v3799 = vmul.f32 %v3767, 0.1
      %v3800 = vmul.f32 %v3768, 0.1
      %v3801 = vmul.f32 %v3769, 0.1
      %v3802 = vmul.f32 %v3770, 0.1
      %v3803 = vmul.f32 %v3771, 0.1
      %v3804 = vmul.f32 %v3772, 0.1
      %v3805 = vmul.f32 %v3773, 0.1
      %v3806 = vmul.f32 %v3774, 0.1
      %v3807 = vmul.f32 %v3775, 0.1
      %v3808 = vmul.f32 %v3776, 0.1
      %v3809 = vmul.f32 %v3777, 0.1
      %v3810 = vsel %vm3778, %v3762, %v3794
      %v3811 = vsel %vm3779, %v3763, %v3795
      %v3812 = vsel %vm3780, %v3764, %v3796
      %v3813 = vsel %vm3781, %v3765, %v3797
      %v3814 = vsel %vm3782, %v3766, %v3798
      %v3815 = vsel %vm3783, %v3767, %v3799
      %v3816 = vsel %vm3784, %v3768, %v3800
      %v3817 = vsel %vm3785, %v3769, %v3801
      %v3818 = vsel %vm3786, %v3770, %v3802
      %v3819 = vsel %vm3787, %v3771, %v3803
      %v3820 = vsel %vm3788, %v3772, %v3804
      %v3821 = vsel %vm3789, %v3773, %v3805
      %v3822 = vsel %vm3790, %v3774, %v3806
      %v3823 = vsel %vm3791, %v3775, %v3807
      %v3824 = vsel %vm3792, %v3776, %v3808
      %v3825 = vsel %vm3793, %v3777, %v3809
      %s3826 = scalar_lea.vmem %s2, 64
      %v3827 = vld [vmem:[%s3826] sm:$0xff]
      %v3828 = vld [vmem:[%s3826 + $0x8] sm:$0xff]
      %v3829 = vld [vmem:[%s3826 + $0x10] sm:$0xff]
      %v3830 = vld [vmem:[%s3826 + $0x18] sm:$0xff]
      %v3831 = vld [vmem:[%s3826 + $0x20] sm:$0xff]
      %v3832 = vld [vmem:[%s3826 + $0x28] sm:$0xff]
      %v3833 = vld [vmem:[%s3826 + $0x30] sm:$0xff]
      %v3834 = vld [vmem:[%s3826 + $0x38] sm:$0xff]
      %v3835 = vmul.f32 %v3827, %v401
      %v3836 = vmul.f32 %v3828, %v406
      %v3837 = vmul.f32 %v3829, %v411
      %v3838 = vmul.f32 %v3830, %v416
      %v3839 = vmul.f32 %v3831, %v421
      %v3840 = vmul.f32 %v3832, %v426
      %v3841 = vmul.f32 %v3833, %v431
      %v3842 = vmul.f32 %v3834, %v436
      %v3843 = vsel %vm446, %v3835, 0.0
      %v3844 = vsel %vm446, %v3836, 0.0
      %v3845 = vadd.f32 %v3843, %v3844
      %v3846 = vsel %vm446, %v3837, 0.0
      %v3847 = vadd.f32 %v3845, %v3846
      %v3848 = vsel %vm446, %v3838, 0.0
      %v3849 = vadd.f32 %v3847, %v3848
      %v3850 = vsel %vm446, %v3839, 0.0
      %v3851 = vadd.f32 %v3849, %v3850
      %v3852 = vsel %vm446, %v3840, 0.0
      %v3853 = vadd.f32 %v3851, %v3852
      %v3854 = vsel %vm446, %v3841, 0.0
      %v3855 = vadd.f32 %v3853, %v3854
      %v3856 = vsel %vm446, %v3842, 0.0
      %v3857 = vadd.f32 %v3855, %v3856
      %v3858 = vrot.slane %v3857, 4
      %v3859 = vadd.f32 %v3857, %v3858
      %v3860 = vrot.slane %v3859, 2
      %v3861 = vadd.f32 %v3859, %v3860
      %v3862 = vrot.slane %v3861, 1
      %v3863 = vadd.f32 %v3861, %v3862
      %vm3864 = vcmp.ge.f32.partialorder %v3863, 0.0
      %v3865 = vmul.f32 %v3863, 0.1
      %v3866 = vsel %vm3864, %v3863, %v3865
      %s3867 = scalar_lea.vmem %s3, 576
      %v3868 = vld [vmem:[%s3867] sm:$0xff]
      %v3869 = vld [vmem:[%s3867 + $0x8] sm:$0xff]
      %v3870 = vld [vmem:[%s3867 + $0x10] sm:$0xff]
      %v3871 = vld [vmem:[%s3867 + $0x18] sm:$0xff]
      %v3872 = vld [vmem:[%s3867 + $0x20] sm:$0xff]
      %v3873 = vld [vmem:[%s3867 + $0x28] sm:$0xff]
      %v3874 = vld [vmem:[%s3867 + $0x30] sm:$0xff]
      %v3875 = vld [vmem:[%s3867 + $0x38] sm:$0xff]
      %v3876 = vmul.f32 %v3868, %v3866
      %v3877 = vmul.f32 %v3869, %v3866
      %v3878 = vmul.f32 %v3870, %v3866
      %v3879 = vmul.f32 %v3871, %v3866
      %v3880 = vmul.f32 %v3872, %v3866
      %v3881 = vmul.f32 %v3873, %v3866
      %v3882 = vmul.f32 %v3874, %v3866
      %v3883 = vmul.f32 %v3875, %v3866
      %v3884 = vsel %vm446, %v3876, 0.0
      %3885 = vadd.xlane.f32.xlu0 %v3884
      %v3886 = vpop.xlane.xlu0 %3885
      %v3887 = vsel %vm446, %v3877, 0.0
      %3888 = vadd.xlane.f32.xlu0 %v3887
      %v3889 = vpop.xlane.xlu0 %3888
      %v3890 = vsel %vm446, %v3878, 0.0
      %3891 = vadd.xlane.f32.xlu0 %v3890
      %v3892 = vpop.xlane.xlu0 %3891
      %v3893 = vsel %vm446, %v3879, 0.0
      %3894 = vadd.xlane.f32.xlu0 %v3893
      %v3895 = vpop.xlane.xlu0 %3894
      %v3896 = vsel %vm446, %v3880, 0.0
      %3897 = vadd.xlane.f32.xlu0 %v3896
      %v3898 = vpop.xlane.xlu0 %3897
      %v3899 = vsel %vm446, %v3881, 0.0
      %3900 = vadd.xlane.f32.xlu0 %v3899
      %v3901 = vpop.xlane.xlu0 %3900
      %v3902 = vsel %vm446, %v3882, 0.0
      %3903 = vadd.xlane.f32.xlu0 %v3902
      %v3904 = vpop.xlane.xlu0 %3903
      %v3905 = vsel %vm446, %v3883, 0.0
      %3906 = vadd.xlane.f32.xlu0 %v3905
      %v3907 = vpop.xlane.xlu0 %3906
      %3924 = vrot.lane.b32.xlu0 %v3810, 17
      %v3925 = vpop.permute.xlu0 %3924
      %3926 = vrot.lane.b32.xlu0 %v3811, 17
      %v3927 = vpop.permute.xlu0 %3926
      %3928 = vrot.lane.b32.xlu0 %v3812, 17
      %v3929 = vpop.permute.xlu0 %3928
      %3930 = vrot.lane.b32.xlu0 %v3813, 17
      %v3931 = vpop.permute.xlu0 %3930
      %3932 = vrot.lane.b32.xlu0 %v3814, 17
      %v3933 = vpop.permute.xlu0 %3932
      %3934 = vrot.lane.b32.xlu0 %v3815, 17
      %v3935 = vpop.permute.xlu0 %3934
      %3936 = vrot.lane.b32.xlu0 %v3816, 17
      %v3937 = vpop.permute.xlu0 %3936
      %3938 = vrot.lane.b32.xlu0 %v3817, 17
      %v3939 = vpop.permute.xlu0 %3938
      %3940 = vrot.lane.b32.xlu0 %v3818, 17
      %v3941 = vpop.permute.xlu0 %3940
      %3942 = vrot.lane.b32.xlu0 %v3819, 17
      %v3943 = vpop.permute.xlu0 %3942
      %3944 = vrot.lane.b32.xlu0 %v3820, 17
      %v3945 = vpop.permute.xlu0 %3944
      %3946 = vrot.lane.b32.xlu0 %v3821, 17
      %v3947 = vpop.permute.xlu0 %3946
      %3948 = vrot.lane.b32.xlu0 %v3822, 17
      %v3949 = vpop.permute.xlu0 %3948
      %3950 = vrot.lane.b32.xlu0 %v3823, 17
      %v3951 = vpop.permute.xlu0 %3950
      %3952 = vrot.lane.b32.xlu0 %v3824, 17
      %v3953 = vpop.permute.xlu0 %3952
      %3954 = vrot.lane.b32.xlu0 %v3825, 17
      %v3955 = vpop.permute.xlu0 %3954
      %v3956 = vsel %vm559, %v3925, %v3927
      %v3957 = vsel %vm559, %v3929, %v3931
      %v3958 = vsel %vm559, %v3933, %v3935
      %v3959 = vsel %vm559, %v3937, %v3939
      %v3960 = vsel %vm559, %v3941, %v3943
      %v3961 = vsel %vm559, %v3945, %v3947
      %v3962 = vsel %vm559, %v3949, %v3951
      %v3963 = vsel %vm559, %v3953, %v3955
      %v3980 = vsel %vm559, 0.0, %v3925
      %v3981 = vsel %vm559, 0.0, %v3929
      %v3982 = vsel %vm559, 0.0, %v3933
      %v3983 = vsel %vm559, 0.0, %v3937
      %v3984 = vsel %vm559, 0.0, %v3941
      %v3985 = vsel %vm559, 0.0, %v3945
      %v3986 = vsel %vm559, 0.0, %v3949
      %v3987 = vsel %vm559, 0.0, %v3953
      %v3988 = vmul.f32 %v3980, %v364
      %v3989 = vmul.f32 %v3956, %v365
      %v3990 = vmul.f32 %v3981, %v364
      %v3991 = vmul.f32 %v3957, %v365
      %v3992 = vmul.f32 %v3982, %v364
      %v3993 = vmul.f32 %v3958, %v365
      %v3994 = vmul.f32 %v3983, %v364
      %v3995 = vmul.f32 %v3959, %v365
      %v3996 = vmul.f32 %v3984, %v364
      %v3997 = vmul.f32 %v3960, %v365
      %v3998 = vmul.f32 %v3985, %v364
      %v3999 = vmul.f32 %v3961, %v365
      %v4000 = vmul.f32 %v3986, %v364
      %v4001 = vmul.f32 %v3962, %v365
      %v4002 = vmul.f32 %v3987, %v364
      %v4003 = vmul.f32 %v3963, %v365
      %v4004 = vmul.f32 %v3988, %v3886
      %v4005 = vmul.f32 %v3989, %v3886
      %v4006 = vmul.f32 %v3990, %v3889
      %v4007 = vmul.f32 %v3991, %v3889
      %v4008 = vmul.f32 %v3992, %v3892
      %v4009 = vmul.f32 %v3993, %v3892
      %v4010 = vmul.f32 %v3994, %v3895
      %v4011 = vmul.f32 %v3995, %v3895
      %v4012 = vmul.f32 %v3996, %v3898
      %v4013 = vmul.f32 %v3997, %v3898
      %v4014 = vmul.f32 %v3998, %v3901
      %v4015 = vmul.f32 %v3999, %v3901
      %v4016 = vmul.f32 %v4000, %v3904
      %v4017 = vmul.f32 %v4001, %v3904
      %v4018 = vmul.f32 %v4002, %v3907
      %v4019 = vmul.f32 %v4003, %v3907
      %v4020 = vadd.f32 %v4004, 0.0
      %v4021 = vadd.f32 %v4005, 0.0
      %v4022 = vadd.f32 %v4006, 0.0
      %v4023 = vadd.f32 %v4007, 0.0
      %v4024 = vadd.f32 %v4008, 0.0
      %v4025 = vadd.f32 %v4009, 0.0
      %v4026 = vadd.f32 %v4010, 0.0
      %v4027 = vadd.f32 %v4011, 0.0
      %v4028 = vadd.f32 %v4012, 0.0
      %v4029 = vadd.f32 %v4013, 0.0
      %v4030 = vadd.f32 %v4014, 0.0
      %v4031 = vadd.f32 %v4015, 0.0
      %v4032 = vadd.f32 %v4016, 0.0
      %v4033 = vadd.f32 %v4017, 0.0
      %v4034 = vadd.f32 %v4018, 0.0
      %v4035 = vadd.f32 %v4019, 0.0
      %v4036 = vld [vmem:[%s3867 + $0x40] sm:$0xff]
      %v4037 = vld [vmem:[%s3867 + $0x48] sm:$0xff]
      %v4038 = vld [vmem:[%s3867 + $0x50] sm:$0xff]
      %v4039 = vld [vmem:[%s3867 + $0x58] sm:$0xff]
      %v4040 = vld [vmem:[%s3867 + $0x60] sm:$0xff]
      %v4041 = vld [vmem:[%s3867 + $0x68] sm:$0xff]
      %v4042 = vld [vmem:[%s3867 + $0x70] sm:$0xff]
      %v4043 = vld [vmem:[%s3867 + $0x78] sm:$0xff]
      %v4044 = vmul.f32 %v4036, %v3866
      %v4045 = vmul.f32 %v4037, %v3866
      %v4046 = vmul.f32 %v4038, %v3866
      %v4047 = vmul.f32 %v4039, %v3866
      %v4048 = vmul.f32 %v4040, %v3866
      %v4049 = vmul.f32 %v4041, %v3866
      %v4050 = vmul.f32 %v4042, %v3866
      %v4051 = vmul.f32 %v4043, %v3866
      %v4052 = vsel %vm446, %v4044, 0.0
      %4053 = vadd.xlane.f32.xlu0 %v4052
      %v4054 = vpop.xlane.xlu0 %4053
      %v4055 = vsel %vm446, %v4045, 0.0
      %4056 = vadd.xlane.f32.xlu0 %v4055
      %v4057 = vpop.xlane.xlu0 %4056
      %v4058 = vsel %vm446, %v4046, 0.0
      %4059 = vadd.xlane.f32.xlu0 %v4058
      %v4060 = vpop.xlane.xlu0 %4059
      %v4061 = vsel %vm446, %v4047, 0.0
      %4062 = vadd.xlane.f32.xlu0 %v4061
      %v4063 = vpop.xlane.xlu0 %4062
      %v4064 = vsel %vm446, %v4048, 0.0
      %4065 = vadd.xlane.f32.xlu0 %v4064
      %v4066 = vpop.xlane.xlu0 %4065
      %v4067 = vsel %vm446, %v4049, 0.0
      %4068 = vadd.xlane.f32.xlu0 %v4067
      %v4069 = vpop.xlane.xlu0 %4068
      %v4070 = vsel %vm446, %v4050, 0.0
      %4071 = vadd.xlane.f32.xlu0 %v4070
      %v4072 = vpop.xlane.xlu0 %4071
      %v4073 = vsel %vm446, %v4051, 0.0
      %4074 = vadd.xlane.f32.xlu0 %v4073
      %v4075 = vpop.xlane.xlu0 %4074
      %4076 = vrot.lane.b32.xlu0 %v3810, 16
      %v4077 = vpop.permute.xlu0 %4076
      %4078 = vrot.lane.b32.xlu0 %v3811, 16
      %v4079 = vpop.permute.xlu0 %4078
      %4080 = vrot.lane.b32.xlu0 %v3812, 16
      %v4081 = vpop.permute.xlu0 %4080
      %4082 = vrot.lane.b32.xlu0 %v3813, 16
      %v4083 = vpop.permute.xlu0 %4082
      %4084 = vrot.lane.b32.xlu0 %v3814, 16
      %v4085 = vpop.permute.xlu0 %4084
      %4086 = vrot.lane.b32.xlu0 %v3815, 16
      %v4087 = vpop.permute.xlu0 %4086
      %4088 = vrot.lane.b32.xlu0 %v3816, 16
      %v4089 = vpop.permute.xlu0 %4088
      %4090 = vrot.lane.b32.xlu0 %v3817, 16
      %v4091 = vpop.permute.xlu0 %4090
      %4092 = vrot.lane.b32.xlu0 %v3818, 16
      %v4093 = vpop.permute.xlu0 %4092
      %4094 = vrot.lane.b32.xlu0 %v3819, 16
      %v4095 = vpop.permute.xlu0 %4094
      %4096 = vrot.lane.b32.xlu0 %v3820, 16
      %v4097 = vpop.permute.xlu0 %4096
      %4098 = vrot.lane.b32.xlu0 %v3821, 16
      %v4099 = vpop.permute.xlu0 %4098
      %4100 = vrot.lane.b32.xlu0 %v3822, 16
      %v4101 = vpop.permute.xlu0 %4100
      %4102 = vrot.lane.b32.xlu0 %v3823, 16
      %v4103 = vpop.permute.xlu0 %4102
      %4104 = vrot.lane.b32.xlu0 %v3824, 16
      %v4105 = vpop.permute.xlu0 %4104
      %4106 = vrot.lane.b32.xlu0 %v3825, 16
      %v4107 = vpop.permute.xlu0 %4106
      %v4108 = vsel %vm712, %v4077, %v4079
      %v4109 = vsel %vm712, %v4081, %v4083
      %v4110 = vsel %vm712, %v4085, %v4087
      %v4111 = vsel %vm712, %v4089, %v4091
      %v4112 = vsel %vm712, %v4093, %v4095
      %v4113 = vsel %vm712, %v4097, %v4099
      %v4114 = vsel %vm712, %v4101, %v4103
      %v4115 = vsel %vm712, %v4105, %v4107
      %v4132 = vsel %vm712, 0.0, %v4077
      %v4133 = vsel %vm712, 0.0, %v4081
      %v4134 = vsel %vm712, 0.0, %v4085
      %v4135 = vsel %vm712, 0.0, %v4089
      %v4136 = vsel %vm712, 0.0, %v4093
      %v4137 = vsel %vm712, 0.0, %v4097
      %v4138 = vsel %vm712, 0.0, %v4101
      %v4139 = vsel %vm712, 0.0, %v4105
      %v4140 = vmul.f32 %v4132, %v4054
      %v4141 = vmul.f32 %v4108, %v4054
      %v4142 = vmul.f32 %v4133, %v4057
      %v4143 = vmul.f32 %v4109, %v4057
      %v4144 = vmul.f32 %v4134, %v4060
      %v4145 = vmul.f32 %v4110, %v4060
      %v4146 = vmul.f32 %v4135, %v4063
      %v4147 = vmul.f32 %v4111, %v4063
      %v4148 = vmul.f32 %v4136, %v4066
      %v4149 = vmul.f32 %v4112, %v4066
      %v4150 = vmul.f32 %v4137, %v4069
      %v4151 = vmul.f32 %v4113, %v4069
      %v4152 = vmul.f32 %v4138, %v4072
      %v4153 = vmul.f32 %v4114, %v4072
      %v4154 = vmul.f32 %v4139, %v4075
      %v4155 = vmul.f32 %v4115, %v4075
      %v4156 = vadd.f32 %v4020, %v4140
      %v4157 = vadd.f32 %v4021, %v4141
      %v4158 = vadd.f32 %v4022, %v4142
      %v4159 = vadd.f32 %v4023, %v4143
      %v4160 = vadd.f32 %v4024, %v4144
      %v4161 = vadd.f32 %v4025, %v4145
      %v4162 = vadd.f32 %v4026, %v4146
      %v4163 = vadd.f32 %v4027, %v4147
      %v4164 = vadd.f32 %v4028, %v4148
      %v4165 = vadd.f32 %v4029, %v4149
      %v4166 = vadd.f32 %v4030, %v4150
      %v4167 = vadd.f32 %v4031, %v4151
      %v4168 = vadd.f32 %v4032, %v4152
      %v4169 = vadd.f32 %v4033, %v4153
      %v4170 = vadd.f32 %v4034, %v4154
      %v4171 = vadd.f32 %v4035, %v4155
      %v4172 = vld [vmem:[%s3867 + $0x80] sm:$0xff]
      %v4173 = vld [vmem:[%s3867 + $0x88] sm:$0xff]
      %v4174 = vld [vmem:[%s3867 + $0x90] sm:$0xff]
      %v4175 = vld [vmem:[%s3867 + $0x98] sm:$0xff]
      %v4176 = vld [vmem:[%s3867 + $0xa0] sm:$0xff]
      %v4177 = vld [vmem:[%s3867 + $0xa8] sm:$0xff]
      %v4178 = vld [vmem:[%s3867 + $0xb0] sm:$0xff]
      %v4179 = vld [vmem:[%s3867 + $0xb8] sm:$0xff]
      %v4180 = vmul.f32 %v4172, %v3866
      %v4181 = vmul.f32 %v4173, %v3866
      %v4182 = vmul.f32 %v4174, %v3866
      %v4183 = vmul.f32 %v4175, %v3866
      %v4184 = vmul.f32 %v4176, %v3866
      %v4185 = vmul.f32 %v4177, %v3866
      %v4186 = vmul.f32 %v4178, %v3866
      %v4187 = vmul.f32 %v4179, %v3866
      %v4188 = vsel %vm446, %v4180, 0.0
      %4189 = vadd.xlane.f32.xlu0 %v4188
      %v4190 = vpop.xlane.xlu0 %4189
      %v4191 = vsel %vm446, %v4181, 0.0
      %4192 = vadd.xlane.f32.xlu0 %v4191
      %v4193 = vpop.xlane.xlu0 %4192
      %v4194 = vsel %vm446, %v4182, 0.0
      %4195 = vadd.xlane.f32.xlu0 %v4194
      %v4196 = vpop.xlane.xlu0 %4195
      %v4197 = vsel %vm446, %v4183, 0.0
      %4198 = vadd.xlane.f32.xlu0 %v4197
      %v4199 = vpop.xlane.xlu0 %4198
      %v4200 = vsel %vm446, %v4184, 0.0
      %4201 = vadd.xlane.f32.xlu0 %v4200
      %v4202 = vpop.xlane.xlu0 %4201
      %v4203 = vsel %vm446, %v4185, 0.0
      %4204 = vadd.xlane.f32.xlu0 %v4203
      %v4205 = vpop.xlane.xlu0 %4204
      %v4206 = vsel %vm446, %v4186, 0.0
      %4207 = vadd.xlane.f32.xlu0 %v4206
      %v4208 = vpop.xlane.xlu0 %4207
      %v4209 = vsel %vm446, %v4187, 0.0
      %4210 = vadd.xlane.f32.xlu0 %v4209
      %v4211 = vpop.xlane.xlu0 %4210
      %4212 = vrot.lane.b32.xlu0 %v3810, 15
      %v4213 = vpop.permute.xlu0 %4212
      %4214 = vrot.lane.b32.xlu0 %v3811, 15
      %v4215 = vpop.permute.xlu0 %4214
      %4216 = vrot.lane.b32.xlu0 %v3812, 15
      %v4217 = vpop.permute.xlu0 %4216
      %4218 = vrot.lane.b32.xlu0 %v3813, 15
      %v4219 = vpop.permute.xlu0 %4218
      %4220 = vrot.lane.b32.xlu0 %v3814, 15
      %v4221 = vpop.permute.xlu0 %4220
      %4222 = vrot.lane.b32.xlu0 %v3815, 15
      %v4223 = vpop.permute.xlu0 %4222
      %4224 = vrot.lane.b32.xlu0 %v3816, 15
      %v4225 = vpop.permute.xlu0 %4224
      %4226 = vrot.lane.b32.xlu0 %v3817, 15
      %v4227 = vpop.permute.xlu0 %4226
      %4228 = vrot.lane.b32.xlu0 %v3818, 15
      %v4229 = vpop.permute.xlu0 %4228
      %4230 = vrot.lane.b32.xlu0 %v3819, 15
      %v4231 = vpop.permute.xlu0 %4230
      %4232 = vrot.lane.b32.xlu0 %v3820, 15
      %v4233 = vpop.permute.xlu0 %4232
      %4234 = vrot.lane.b32.xlu0 %v3821, 15
      %v4235 = vpop.permute.xlu0 %4234
      %4236 = vrot.lane.b32.xlu0 %v3822, 15
      %v4237 = vpop.permute.xlu0 %4236
      %4238 = vrot.lane.b32.xlu0 %v3823, 15
      %v4239 = vpop.permute.xlu0 %4238
      %4240 = vrot.lane.b32.xlu0 %v3824, 15
      %v4241 = vpop.permute.xlu0 %4240
      %4242 = vrot.lane.b32.xlu0 %v3825, 15
      %v4243 = vpop.permute.xlu0 %4242
      %v4244 = vsel %vm849, %v4213, %v4215
      %v4245 = vsel %vm849, %v4217, %v4219
      %v4246 = vsel %vm849, %v4221, %v4223
      %v4247 = vsel %vm849, %v4225, %v4227
      %v4248 = vsel %vm849, %v4229, %v4231
      %v4249 = vsel %vm849, %v4233, %v4235
      %v4250 = vsel %vm849, %v4237, %v4239
      %v4251 = vsel %vm849, %v4241, %v4243
      %v4268 = vsel %vm849, 0.0, %v4213
      %v4269 = vsel %vm849, 0.0, %v4217
      %v4270 = vsel %vm849, 0.0, %v4221
      %v4271 = vsel %vm849, 0.0, %v4225
      %v4272 = vsel %vm849, 0.0, %v4229
      %v4273 = vsel %vm849, 0.0, %v4233
      %v4274 = vsel %vm849, 0.0, %v4237
      %v4275 = vsel %vm849, 0.0, %v4241
      %v4276 = vmul.f32 %v4268, %v358
      %v4277 = vmul.f32 %v4244, %v359
      %v4278 = vmul.f32 %v4269, %v358
      %v4279 = vmul.f32 %v4245, %v359
      %v4280 = vmul.f32 %v4270, %v358
      %v4281 = vmul.f32 %v4246, %v359
      %v4282 = vmul.f32 %v4271, %v358
      %v4283 = vmul.f32 %v4247, %v359
      %v4284 = vmul.f32 %v4272, %v358
      %v4285 = vmul.f32 %v4248, %v359
      %v4286 = vmul.f32 %v4273, %v358
      %v4287 = vmul.f32 %v4249, %v359
      %v4288 = vmul.f32 %v4274, %v358
      %v4289 = vmul.f32 %v4250, %v359
      %v4290 = vmul.f32 %v4275, %v358
      %v4291 = vmul.f32 %v4251, %v359
      %v4292 = vmul.f32 %v4276, %v4190
      %v4293 = vmul.f32 %v4277, %v4190
      %v4294 = vmul.f32 %v4278, %v4193
      %v4295 = vmul.f32 %v4279, %v4193
      %v4296 = vmul.f32 %v4280, %v4196
      %v4297 = vmul.f32 %v4281, %v4196
      %v4298 = vmul.f32 %v4282, %v4199
      %v4299 = vmul.f32 %v4283, %v4199
      %v4300 = vmul.f32 %v4284, %v4202
      %v4301 = vmul.f32 %v4285, %v4202
      %v4302 = vmul.f32 %v4286, %v4205
      %v4303 = vmul.f32 %v4287, %v4205
      %v4304 = vmul.f32 %v4288, %v4208
      %v4305 = vmul.f32 %v4289, %v4208
      %v4306 = vmul.f32 %v4290, %v4211
      %v4307 = vmul.f32 %v4291, %v4211
      %v4308 = vadd.f32 %v4156, %v4292
      %v4309 = vadd.f32 %v4157, %v4293
      %v4310 = vadd.f32 %v4158, %v4294
      %v4311 = vadd.f32 %v4159, %v4295
      %v4312 = vadd.f32 %v4160, %v4296
      %v4313 = vadd.f32 %v4161, %v4297
      %v4314 = vadd.f32 %v4162, %v4298
      %v4315 = vadd.f32 %v4163, %v4299
      %v4316 = vadd.f32 %v4164, %v4300
      %v4317 = vadd.f32 %v4165, %v4301
      %v4318 = vadd.f32 %v4166, %v4302
      %v4319 = vadd.f32 %v4167, %v4303
      %v4320 = vadd.f32 %v4168, %v4304
      %v4321 = vadd.f32 %v4169, %v4305
      %v4322 = vadd.f32 %v4170, %v4306
      %v4323 = vadd.f32 %v4171, %v4307
      %v4324 = vld [vmem:[%s3867 + $0xc0] sm:$0xff]
      %v4325 = vld [vmem:[%s3867 + $0xc8] sm:$0xff]
      %v4326 = vld [vmem:[%s3867 + $0xd0] sm:$0xff]
      %v4327 = vld [vmem:[%s3867 + $0xd8] sm:$0xff]
      %v4328 = vld [vmem:[%s3867 + $0xe0] sm:$0xff]
      %v4329 = vld [vmem:[%s3867 + $0xe8] sm:$0xff]
      %v4330 = vld [vmem:[%s3867 + $0xf0] sm:$0xff]
      %v4331 = vld [vmem:[%s3867 + $0xf8] sm:$0xff]
      %v4332 = vmul.f32 %v4324, %v3866
      %v4333 = vmul.f32 %v4325, %v3866
      %v4334 = vmul.f32 %v4326, %v3866
      %v4335 = vmul.f32 %v4327, %v3866
      %v4336 = vmul.f32 %v4328, %v3866
      %v4337 = vmul.f32 %v4329, %v3866
      %v4338 = vmul.f32 %v4330, %v3866
      %v4339 = vmul.f32 %v4331, %v3866
      %v4340 = vsel %vm446, %v4332, 0.0
      %4341 = vadd.xlane.f32.xlu0 %v4340
      %v4342 = vpop.xlane.xlu0 %4341
      %v4343 = vsel %vm446, %v4333, 0.0
      %4344 = vadd.xlane.f32.xlu0 %v4343
      %v4345 = vpop.xlane.xlu0 %4344
      %v4346 = vsel %vm446, %v4334, 0.0
      %4347 = vadd.xlane.f32.xlu0 %v4346
      %v4348 = vpop.xlane.xlu0 %4347
      %v4349 = vsel %vm446, %v4335, 0.0
      %4350 = vadd.xlane.f32.xlu0 %v4349
      %v4351 = vpop.xlane.xlu0 %4350
      %v4352 = vsel %vm446, %v4336, 0.0
      %4353 = vadd.xlane.f32.xlu0 %v4352
      %v4354 = vpop.xlane.xlu0 %4353
      %v4355 = vsel %vm446, %v4337, 0.0
      %4356 = vadd.xlane.f32.xlu0 %v4355
      %v4357 = vpop.xlane.xlu0 %4356
      %v4358 = vsel %vm446, %v4338, 0.0
      %4359 = vadd.xlane.f32.xlu0 %v4358
      %v4360 = vpop.xlane.xlu0 %4359
      %v4361 = vsel %vm446, %v4339, 0.0
      %4362 = vadd.xlane.f32.xlu0 %v4361
      %v4363 = vpop.xlane.xlu0 %4362
      %4364 = vrot.lane.b32.xlu0 %v3810, 1
      %v4365 = vpop.permute.xlu0 %4364
      %4366 = vrot.lane.b32.xlu0 %v3811, 1
      %v4367 = vpop.permute.xlu0 %4366
      %4368 = vrot.lane.b32.xlu0 %v3812, 1
      %v4369 = vpop.permute.xlu0 %4368
      %4370 = vrot.lane.b32.xlu0 %v3813, 1
      %v4371 = vpop.permute.xlu0 %4370
      %4372 = vrot.lane.b32.xlu0 %v3814, 1
      %v4373 = vpop.permute.xlu0 %4372
      %4374 = vrot.lane.b32.xlu0 %v3815, 1
      %v4375 = vpop.permute.xlu0 %4374
      %4376 = vrot.lane.b32.xlu0 %v3816, 1
      %v4377 = vpop.permute.xlu0 %4376
      %4378 = vrot.lane.b32.xlu0 %v3817, 1
      %v4379 = vpop.permute.xlu0 %4378
      %4380 = vrot.lane.b32.xlu0 %v3818, 1
      %v4381 = vpop.permute.xlu0 %4380
      %4382 = vrot.lane.b32.xlu0 %v3819, 1
      %v4383 = vpop.permute.xlu0 %4382
      %4384 = vrot.lane.b32.xlu0 %v3820, 1
      %v4385 = vpop.permute.xlu0 %4384
      %4386 = vrot.lane.b32.xlu0 %v3821, 1
      %v4387 = vpop.permute.xlu0 %4386
      %4388 = vrot.lane.b32.xlu0 %v3822, 1
      %v4389 = vpop.permute.xlu0 %4388
      %4390 = vrot.lane.b32.xlu0 %v3823, 1
      %v4391 = vpop.permute.xlu0 %4390
      %4392 = vrot.lane.b32.xlu0 %v3824, 1
      %v4393 = vpop.permute.xlu0 %4392
      %4394 = vrot.lane.b32.xlu0 %v3825, 1
      %v4395 = vpop.permute.xlu0 %4394
      %v4396 = vsel %vm1002, %v4365, %v4367
      %v4397 = vsel %vm1002, %v4369, %v4371
      %v4398 = vsel %vm1002, %v4373, %v4375
      %v4399 = vsel %vm1002, %v4377, %v4379
      %v4400 = vsel %vm1002, %v4381, %v4383
      %v4401 = vsel %vm1002, %v4385, %v4387
      %v4402 = vsel %vm1002, %v4389, %v4391
      %v4403 = vsel %vm1002, %v4393, %v4395
      %v4420 = vsel %vm1002, 0.0, %v4365
      %v4421 = vsel %vm1002, 0.0, %v4369
      %v4422 = vsel %vm1002, 0.0, %v4373
      %v4423 = vsel %vm1002, 0.0, %v4377
      %v4424 = vsel %vm1002, 0.0, %v4381
      %v4425 = vsel %vm1002, 0.0, %v4385
      %v4426 = vsel %vm1002, 0.0, %v4389
      %v4427 = vsel %vm1002, 0.0, %v4393
      %v4428 = vmul.f32 %v4420, %v364
      %v4429 = vmul.f32 %v4396, %v365
      %v4430 = vmul.f32 %v4421, %v364
      %v4431 = vmul.f32 %v4397, %v365
      %v4432 = vmul.f32 %v4422, %v364
      %v4433 = vmul.f32 %v4398, %v365
      %v4434 = vmul.f32 %v4423, %v364
      %v4435 = vmul.f32 %v4399, %v365
      %v4436 = vmul.f32 %v4424, %v364
      %v4437 = vmul.f32 %v4400, %v365
      %v4438 = vmul.f32 %v4425, %v364
      %v4439 = vmul.f32 %v4401, %v365
      %v4440 = vmul.f32 %v4426, %v364
      %v4441 = vmul.f32 %v4402, %v365
      %v4442 = vmul.f32 %v4427, %v364
      %v4443 = vmul.f32 %v4403, %v365
      %v4444 = vmul.f32 %v4428, %v4342
      %v4445 = vmul.f32 %v4429, %v4342
      %v4446 = vmul.f32 %v4430, %v4345
      %v4447 = vmul.f32 %v4431, %v4345
      %v4448 = vmul.f32 %v4432, %v4348
      %v4449 = vmul.f32 %v4433, %v4348
      %v4450 = vmul.f32 %v4434, %v4351
      %v4451 = vmul.f32 %v4435, %v4351
      %v4452 = vmul.f32 %v4436, %v4354
      %v4453 = vmul.f32 %v4437, %v4354
      %v4454 = vmul.f32 %v4438, %v4357
      %v4455 = vmul.f32 %v4439, %v4357
      %v4456 = vmul.f32 %v4440, %v4360
      %v4457 = vmul.f32 %v4441, %v4360
      %v4458 = vmul.f32 %v4442, %v4363
      %v4459 = vmul.f32 %v4443, %v4363
      %v4460 = vadd.f32 %v4308, %v4444
      %v4461 = vadd.f32 %v4309, %v4445
      %v4462 = vadd.f32 %v4310, %v4446
      %v4463 = vadd.f32 %v4311, %v4447
      %v4464 = vadd.f32 %v4312, %v4448
      %v4465 = vadd.f32 %v4313, %v4449
      %v4466 = vadd.f32 %v4314, %v4450
      %v4467 = vadd.f32 %v4315, %v4451
      %v4468 = vadd.f32 %v4316, %v4452
      %v4469 = vadd.f32 %v4317, %v4453
      %v4470 = vadd.f32 %v4318, %v4454
      %v4471 = vadd.f32 %v4319, %v4455
      %v4472 = vadd.f32 %v4320, %v4456
      %v4473 = vadd.f32 %v4321, %v4457
      %v4474 = vadd.f32 %v4322, %v4458
      %v4475 = vadd.f32 %v4323, %v4459
      %v4476 = vld [vmem:[%s3867 + $0x100] sm:$0xff]
      %v4477 = vld [vmem:[%s3867 + $0x108] sm:$0xff]
      %v4478 = vld [vmem:[%s3867 + $0x110] sm:$0xff]
      %v4479 = vld [vmem:[%s3867 + $0x118] sm:$0xff]
      %v4480 = vld [vmem:[%s3867 + $0x120] sm:$0xff]
      %v4481 = vld [vmem:[%s3867 + $0x128] sm:$0xff]
      %v4482 = vld [vmem:[%s3867 + $0x130] sm:$0xff]
      %v4483 = vld [vmem:[%s3867 + $0x138] sm:$0xff]
      %v4484 = vmul.f32 %v4476, %v3866
      %v4485 = vmul.f32 %v4477, %v3866
      %v4486 = vmul.f32 %v4478, %v3866
      %v4487 = vmul.f32 %v4479, %v3866
      %v4488 = vmul.f32 %v4480, %v3866
      %v4489 = vmul.f32 %v4481, %v3866
      %v4490 = vmul.f32 %v4482, %v3866
      %v4491 = vmul.f32 %v4483, %v3866
      %v4492 = vsel %vm446, %v4484, 0.0
      %4493 = vadd.xlane.f32.xlu0 %v4492
      %v4494 = vpop.xlane.xlu0 %4493
      %v4495 = vsel %vm446, %v4485, 0.0
      %4496 = vadd.xlane.f32.xlu0 %v4495
      %v4497 = vpop.xlane.xlu0 %4496
      %v4498 = vsel %vm446, %v4486, 0.0
      %4499 = vadd.xlane.f32.xlu0 %v4498
      %v4500 = vpop.xlane.xlu0 %4499
      %v4501 = vsel %vm446, %v4487, 0.0
      %4502 = vadd.xlane.f32.xlu0 %v4501
      %v4503 = vpop.xlane.xlu0 %4502
      %v4504 = vsel %vm446, %v4488, 0.0
      %4505 = vadd.xlane.f32.xlu0 %v4504
      %v4506 = vpop.xlane.xlu0 %4505
      %v4507 = vsel %vm446, %v4489, 0.0
      %4508 = vadd.xlane.f32.xlu0 %v4507
      %v4509 = vpop.xlane.xlu0 %4508
      %v4510 = vsel %vm446, %v4490, 0.0
      %4511 = vadd.xlane.f32.xlu0 %v4510
      %v4512 = vpop.xlane.xlu0 %4511
      %v4513 = vsel %vm446, %v4491, 0.0
      %4514 = vadd.xlane.f32.xlu0 %v4513
      %v4515 = vpop.xlane.xlu0 %4514
      %v4516 = vmul.f32 %v3810, %v4494
      %v4517 = vmul.f32 %v3811, %v4494
      %v4518 = vmul.f32 %v3812, %v4497
      %v4519 = vmul.f32 %v3813, %v4497
      %v4520 = vmul.f32 %v3814, %v4500
      %v4521 = vmul.f32 %v3815, %v4500
      %v4522 = vmul.f32 %v3816, %v4503
      %v4523 = vmul.f32 %v3817, %v4503
      %v4524 = vmul.f32 %v3818, %v4506
      %v4525 = vmul.f32 %v3819, %v4506
      %v4526 = vmul.f32 %v3820, %v4509
      %v4527 = vmul.f32 %v3821, %v4509
      %v4528 = vmul.f32 %v3822, %v4512
      %v4529 = vmul.f32 %v3823, %v4512
      %v4530 = vmul.f32 %v3824, %v4515
      %v4531 = vmul.f32 %v3825, %v4515
      %v4532 = vadd.f32 %v4460, %v4516
      %v4533 = vadd.f32 %v4461, %v4517
      %v4534 = vadd.f32 %v4462, %v4518
      %v4535 = vadd.f32 %v4463, %v4519
      %v4536 = vadd.f32 %v4464, %v4520
      %v4537 = vadd.f32 %v4465, %v4521
      %v4538 = vadd.f32 %v4466, %v4522
      %v4539 = vadd.f32 %v4467, %v4523
      %v4540 = vadd.f32 %v4468, %v4524
      %v4541 = vadd.f32 %v4469, %v4525
      %v4542 = vadd.f32 %v4470, %v4526
      %v4543 = vadd.f32 %v4471, %v4527
      %v4544 = vadd.f32 %v4472, %v4528
      %v4545 = vadd.f32 %v4473, %v4529
      %v4546 = vadd.f32 %v4474, %v4530
      %v4547 = vadd.f32 %v4475, %v4531
      %v4548 = vld [vmem:[%s3867 + $0x140] sm:$0xff]
      %v4549 = vld [vmem:[%s3867 + $0x148] sm:$0xff]
      %v4550 = vld [vmem:[%s3867 + $0x150] sm:$0xff]
      %v4551 = vld [vmem:[%s3867 + $0x158] sm:$0xff]
      %v4552 = vld [vmem:[%s3867 + $0x160] sm:$0xff]
      %v4553 = vld [vmem:[%s3867 + $0x168] sm:$0xff]
      %v4554 = vld [vmem:[%s3867 + $0x170] sm:$0xff]
      %v4555 = vld [vmem:[%s3867 + $0x178] sm:$0xff]
      %v4556 = vmul.f32 %v4548, %v3866
      %v4557 = vmul.f32 %v4549, %v3866
      %v4558 = vmul.f32 %v4550, %v3866
      %v4559 = vmul.f32 %v4551, %v3866
      %v4560 = vmul.f32 %v4552, %v3866
      %v4561 = vmul.f32 %v4553, %v3866
      %v4562 = vmul.f32 %v4554, %v3866
      %v4563 = vmul.f32 %v4555, %v3866
      %v4564 = vsel %vm446, %v4556, 0.0
      %4565 = vadd.xlane.f32.xlu0 %v4564
      %v4566 = vpop.xlane.xlu0 %4565
      %v4567 = vsel %vm446, %v4557, 0.0
      %4568 = vadd.xlane.f32.xlu0 %v4567
      %v4569 = vpop.xlane.xlu0 %4568
      %v4570 = vsel %vm446, %v4558, 0.0
      %4571 = vadd.xlane.f32.xlu0 %v4570
      %v4572 = vpop.xlane.xlu0 %4571
      %v4573 = vsel %vm446, %v4559, 0.0
      %4574 = vadd.xlane.f32.xlu0 %v4573
      %v4575 = vpop.xlane.xlu0 %4574
      %v4576 = vsel %vm446, %v4560, 0.0
      %4577 = vadd.xlane.f32.xlu0 %v4576
      %v4578 = vpop.xlane.xlu0 %4577
      %v4579 = vsel %vm446, %v4561, 0.0
      %4580 = vadd.xlane.f32.xlu0 %v4579
      %v4581 = vpop.xlane.xlu0 %4580
      %v4582 = vsel %vm446, %v4562, 0.0
      %4583 = vadd.xlane.f32.xlu0 %v4582
      %v4584 = vpop.xlane.xlu0 %4583
      %v4585 = vsel %vm446, %v4563, 0.0
      %4586 = vadd.xlane.f32.xlu0 %v4585
      %v4587 = vpop.xlane.xlu0 %4586
      %4588 = vrot.lane.b32.xlu0 %v3810, 127
      %v4589 = vpop.permute.xlu0 %4588
      %4590 = vrot.lane.b32.xlu0 %v3811, 127
      %v4591 = vpop.permute.xlu0 %4590
      %4592 = vrot.lane.b32.xlu0 %v3812, 127
      %v4593 = vpop.permute.xlu0 %4592
      %4594 = vrot.lane.b32.xlu0 %v3813, 127
      %v4595 = vpop.permute.xlu0 %4594
      %4596 = vrot.lane.b32.xlu0 %v3814, 127
      %v4597 = vpop.permute.xlu0 %4596
      %4598 = vrot.lane.b32.xlu0 %v3815, 127
      %v4599 = vpop.permute.xlu0 %4598
      %4600 = vrot.lane.b32.xlu0 %v3816, 127
      %v4601 = vpop.permute.xlu0 %4600
      %4602 = vrot.lane.b32.xlu0 %v3817, 127
      %v4603 = vpop.permute.xlu0 %4602
      %4604 = vrot.lane.b32.xlu0 %v3818, 127
      %v4605 = vpop.permute.xlu0 %4604
      %4606 = vrot.lane.b32.xlu0 %v3819, 127
      %v4607 = vpop.permute.xlu0 %4606
      %4608 = vrot.lane.b32.xlu0 %v3820, 127
      %v4609 = vpop.permute.xlu0 %4608
      %4610 = vrot.lane.b32.xlu0 %v3821, 127
      %v4611 = vpop.permute.xlu0 %4610
      %4612 = vrot.lane.b32.xlu0 %v3822, 127
      %v4613 = vpop.permute.xlu0 %4612
      %4614 = vrot.lane.b32.xlu0 %v3823, 127
      %v4615 = vpop.permute.xlu0 %4614
      %4616 = vrot.lane.b32.xlu0 %v3824, 127
      %v4617 = vpop.permute.xlu0 %4616
      %4618 = vrot.lane.b32.xlu0 %v3825, 127
      %v4619 = vpop.permute.xlu0 %4618
      %v4620 = vsel %vm1227, %v4589, %v4591
      %v4621 = vsel %vm1227, %v4593, %v4595
      %v4622 = vsel %vm1227, %v4597, %v4599
      %v4623 = vsel %vm1227, %v4601, %v4603
      %v4624 = vsel %vm1227, %v4605, %v4607
      %v4625 = vsel %vm1227, %v4609, %v4611
      %v4626 = vsel %vm1227, %v4613, %v4615
      %v4627 = vsel %vm1227, %v4617, %v4619
      %v4644 = vsel %vm1227, %v4591, 0.0
      %v4645 = vsel %vm1227, %v4595, 0.0
      %v4646 = vsel %vm1227, %v4599, 0.0
      %v4647 = vsel %vm1227, %v4603, 0.0
      %v4648 = vsel %vm1227, %v4607, 0.0
      %v4649 = vsel %vm1227, %v4611, 0.0
      %v4650 = vsel %vm1227, %v4615, 0.0
      %v4651 = vsel %vm1227, %v4619, 0.0
      %v4652 = vmul.f32 %v4620, %v358
      %v4653 = vmul.f32 %v4644, %v359
      %v4654 = vmul.f32 %v4621, %v358
      %v4655 = vmul.f32 %v4645, %v359
      %v4656 = vmul.f32 %v4622, %v358
      %v4657 = vmul.f32 %v4646, %v359
      %v4658 = vmul.f32 %v4623, %v358
      %v4659 = vmul.f32 %v4647, %v359
      %v4660 = vmul.f32 %v4624, %v358
      %v4661 = vmul.f32 %v4648, %v359
      %v4662 = vmul.f32 %v4625, %v358
      %v4663 = vmul.f32 %v4649, %v359
      %v4664 = vmul.f32 %v4626, %v358
      %v4665 = vmul.f32 %v4650, %v359
      %v4666 = vmul.f32 %v4627, %v358
      %v4667 = vmul.f32 %v4651, %v359
      %v4668 = vmul.f32 %v4652, %v4566
      %v4669 = vmul.f32 %v4653, %v4566
      %v4670 = vmul.f32 %v4654, %v4569
      %v4671 = vmul.f32 %v4655, %v4569
      %v4672 = vmul.f32 %v4656, %v4572
      %v4673 = vmul.f32 %v4657, %v4572
      %v4674 = vmul.f32 %v4658, %v4575
      %v4675 = vmul.f32 %v4659, %v4575
      %v4676 = vmul.f32 %v4660, %v4578
      %v4677 = vmul.f32 %v4661, %v4578
      %v4678 = vmul.f32 %v4662, %v4581
      %v4679 = vmul.f32 %v4663, %v4581
      %v4680 = vmul.f32 %v4664, %v4584
      %v4681 = vmul.f32 %v4665, %v4584
      %v4682 = vmul.f32 %v4666, %v4587
      %v4683 = vmul.f32 %v4667, %v4587
      %v4684 = vadd.f32 %v4532, %v4668
      %v4685 = vadd.f32 %v4533, %v4669
      %v4686 = vadd.f32 %v4534, %v4670
      %v4687 = vadd.f32 %v4535, %v4671
      %v4688 = vadd.f32 %v4536, %v4672
      %v4689 = vadd.f32 %v4537, %v4673
      %v4690 = vadd.f32 %v4538, %v4674
      %v4691 = vadd.f32 %v4539, %v4675
      %v4692 = vadd.f32 %v4540, %v4676
      %v4693 = vadd.f32 %v4541, %v4677
      %v4694 = vadd.f32 %v4542, %v4678
      %v4695 = vadd.f32 %v4543, %v4679
      %v4696 = vadd.f32 %v4544, %v4680
      %v4697 = vadd.f32 %v4545, %v4681
      %v4698 = vadd.f32 %v4546, %v4682
      %v4699 = vadd.f32 %v4547, %v4683
      %v4700 = vld [vmem:[%s3867 + $0x180] sm:$0xff]
      %v4701 = vld [vmem:[%s3867 + $0x188] sm:$0xff]
      %v4702 = vld [vmem:[%s3867 + $0x190] sm:$0xff]
      %v4703 = vld [vmem:[%s3867 + $0x198] sm:$0xff]
      %v4704 = vld [vmem:[%s3867 + $0x1a0] sm:$0xff]
      %v4705 = vld [vmem:[%s3867 + $0x1a8] sm:$0xff]
      %v4706 = vld [vmem:[%s3867 + $0x1b0] sm:$0xff]
      %v4707 = vld [vmem:[%s3867 + $0x1b8] sm:$0xff]
      %v4708 = vmul.f32 %v4700, %v3866
      %v4709 = vmul.f32 %v4701, %v3866
      %v4710 = vmul.f32 %v4702, %v3866
      %v4711 = vmul.f32 %v4703, %v3866
      %v4712 = vmul.f32 %v4704, %v3866
      %v4713 = vmul.f32 %v4705, %v3866
      %v4714 = vmul.f32 %v4706, %v3866
      %v4715 = vmul.f32 %v4707, %v3866
      %v4716 = vsel %vm446, %v4708, 0.0
      %4717 = vadd.xlane.f32.xlu0 %v4716
      %v4718 = vpop.xlane.xlu0 %4717
      %v4719 = vsel %vm446, %v4709, 0.0
      %4720 = vadd.xlane.f32.xlu0 %v4719
      %v4721 = vpop.xlane.xlu0 %4720
      %v4722 = vsel %vm446, %v4710, 0.0
      %4723 = vadd.xlane.f32.xlu0 %v4722
      %v4724 = vpop.xlane.xlu0 %4723
      %v4725 = vsel %vm446, %v4711, 0.0
      %4726 = vadd.xlane.f32.xlu0 %v4725
      %v4727 = vpop.xlane.xlu0 %4726
      %v4728 = vsel %vm446, %v4712, 0.0
      %4729 = vadd.xlane.f32.xlu0 %v4728
      %v4730 = vpop.xlane.xlu0 %4729
      %v4731 = vsel %vm446, %v4713, 0.0
      %4732 = vadd.xlane.f32.xlu0 %v4731
      %v4733 = vpop.xlane.xlu0 %4732
      %v4734 = vsel %vm446, %v4714, 0.0
      %4735 = vadd.xlane.f32.xlu0 %v4734
      %v4736 = vpop.xlane.xlu0 %4735
      %v4737 = vsel %vm446, %v4715, 0.0
      %4738 = vadd.xlane.f32.xlu0 %v4737
      %v4739 = vpop.xlane.xlu0 %4738
      %4740 = vrot.lane.b32.xlu0 %v3810, 113
      %v4741 = vpop.permute.xlu0 %4740
      %4742 = vrot.lane.b32.xlu0 %v3811, 113
      %v4743 = vpop.permute.xlu0 %4742
      %4744 = vrot.lane.b32.xlu0 %v3812, 113
      %v4745 = vpop.permute.xlu0 %4744
      %4746 = vrot.lane.b32.xlu0 %v3813, 113
      %v4747 = vpop.permute.xlu0 %4746
      %4748 = vrot.lane.b32.xlu0 %v3814, 113
      %v4749 = vpop.permute.xlu0 %4748
      %4750 = vrot.lane.b32.xlu0 %v3815, 113
      %v4751 = vpop.permute.xlu0 %4750
      %4752 = vrot.lane.b32.xlu0 %v3816, 113
      %v4753 = vpop.permute.xlu0 %4752
      %4754 = vrot.lane.b32.xlu0 %v3817, 113
      %v4755 = vpop.permute.xlu0 %4754
      %4756 = vrot.lane.b32.xlu0 %v3818, 113
      %v4757 = vpop.permute.xlu0 %4756
      %4758 = vrot.lane.b32.xlu0 %v3819, 113
      %v4759 = vpop.permute.xlu0 %4758
      %4760 = vrot.lane.b32.xlu0 %v3820, 113
      %v4761 = vpop.permute.xlu0 %4760
      %4762 = vrot.lane.b32.xlu0 %v3821, 113
      %v4763 = vpop.permute.xlu0 %4762
      %4764 = vrot.lane.b32.xlu0 %v3822, 113
      %v4765 = vpop.permute.xlu0 %4764
      %4766 = vrot.lane.b32.xlu0 %v3823, 113
      %v4767 = vpop.permute.xlu0 %4766
      %4768 = vrot.lane.b32.xlu0 %v3824, 113
      %v4769 = vpop.permute.xlu0 %4768
      %4770 = vrot.lane.b32.xlu0 %v3825, 113
      %v4771 = vpop.permute.xlu0 %4770
      %v4772 = vsel %vm1380, %v4741, %v4743
      %v4773 = vsel %vm1380, %v4745, %v4747
      %v4774 = vsel %vm1380, %v4749, %v4751
      %v4775 = vsel %vm1380, %v4753, %v4755
      %v4776 = vsel %vm1380, %v4757, %v4759
      %v4777 = vsel %vm1380, %v4761, %v4763
      %v4778 = vsel %vm1380, %v4765, %v4767
      %v4779 = vsel %vm1380, %v4769, %v4771
      %v4796 = vsel %vm1380, %v4743, 0.0
      %v4797 = vsel %vm1380, %v4747, 0.0
      %v4798 = vsel %vm1380, %v4751, 0.0
      %v4799 = vsel %vm1380, %v4755, 0.0
      %v4800 = vsel %vm1380, %v4759, 0.0
      %v4801 = vsel %vm1380, %v4763, 0.0
      %v4802 = vsel %vm1380, %v4767, 0.0
      %v4803 = vsel %vm1380, %v4771, 0.0
      %v4804 = vmul.f32 %v4772, %v364
      %v4805 = vmul.f32 %v4796, %v365
      %v4806 = vmul.f32 %v4773, %v364
      %v4807 = vmul.f32 %v4797, %v365
      %v4808 = vmul.f32 %v4774, %v364
      %v4809 = vmul.f32 %v4798, %v365
      %v4810 = vmul.f32 %v4775, %v364
      %v4811 = vmul.f32 %v4799, %v365
      %v4812 = vmul.f32 %v4776, %v364
      %v4813 = vmul.f32 %v4800, %v365
      %v4814 = vmul.f32 %v4777, %v364
      %v4815 = vmul.f32 %v4801, %v365
      %v4816 = vmul.f32 %v4778, %v364
      %v4817 = vmul.f32 %v4802, %v365
      %v4818 = vmul.f32 %v4779, %v364
      %v4819 = vmul.f32 %v4803, %v365
      %v4820 = vmul.f32 %v4804, %v4718
      %v4821 = vmul.f32 %v4805, %v4718
      %v4822 = vmul.f32 %v4806, %v4721
      %v4823 = vmul.f32 %v4807, %v4721
      %v4824 = vmul.f32 %v4808, %v4724
      %v4825 = vmul.f32 %v4809, %v4724
      %v4826 = vmul.f32 %v4810, %v4727
      %v4827 = vmul.f32 %v4811, %v4727
      %v4828 = vmul.f32 %v4812, %v4730
      %v4829 = vmul.f32 %v4813, %v4730
      %v4830 = vmul.f32 %v4814, %v4733
      %v4831 = vmul.f32 %v4815, %v4733
      %v4832 = vmul.f32 %v4816, %v4736
      %v4833 = vmul.f32 %v4817, %v4736
      %v4834 = vmul.f32 %v4818, %v4739
      %v4835 = vmul.f32 %v4819, %v4739
      %v4836 = vadd.f32 %v4684, %v4820
      %v4837 = vadd.f32 %v4685, %v4821
      %v4838 = vadd.f32 %v4686, %v4822
      %v4839 = vadd.f32 %v4687, %v4823
      %v4840 = vadd.f32 %v4688, %v4824
      %v4841 = vadd.f32 %v4689, %v4825
      %v4842 = vadd.f32 %v4690, %v4826
      %v4843 = vadd.f32 %v4691, %v4827
      %v4844 = vadd.f32 %v4692, %v4828
      %v4845 = vadd.f32 %v4693, %v4829
      %v4846 = vadd.f32 %v4694, %v4830
      %v4847 = vadd.f32 %v4695, %v4831
      %v4848 = vadd.f32 %v4696, %v4832
      %v4849 = vadd.f32 %v4697, %v4833
      %v4850 = vadd.f32 %v4698, %v4834
      %v4851 = vadd.f32 %v4699, %v4835
      %v4852 = vld [vmem:[%s3867 + $0x1c0] sm:$0xff]
      %v4853 = vld [vmem:[%s3867 + $0x1c8] sm:$0xff]
      %v4854 = vld [vmem:[%s3867 + $0x1d0] sm:$0xff]
      %v4855 = vld [vmem:[%s3867 + $0x1d8] sm:$0xff]
      %v4856 = vld [vmem:[%s3867 + $0x1e0] sm:$0xff]
      %v4857 = vld [vmem:[%s3867 + $0x1e8] sm:$0xff]
      %v4858 = vld [vmem:[%s3867 + $0x1f0] sm:$0xff]
      %v4859 = vld [vmem:[%s3867 + $0x1f8] sm:$0xff]
      %v4860 = vmul.f32 %v4852, %v3866
      %v4861 = vmul.f32 %v4853, %v3866
      %v4862 = vmul.f32 %v4854, %v3866
      %v4863 = vmul.f32 %v4855, %v3866
      %v4864 = vmul.f32 %v4856, %v3866
      %v4865 = vmul.f32 %v4857, %v3866
      %v4866 = vmul.f32 %v4858, %v3866
      %v4867 = vmul.f32 %v4859, %v3866
      %v4868 = vsel %vm446, %v4860, 0.0
      %4869 = vadd.xlane.f32.xlu0 %v4868
      %v4870 = vpop.xlane.xlu0 %4869
      %v4871 = vsel %vm446, %v4861, 0.0
      %4872 = vadd.xlane.f32.xlu0 %v4871
      %v4873 = vpop.xlane.xlu0 %4872
      %v4874 = vsel %vm446, %v4862, 0.0
      %4875 = vadd.xlane.f32.xlu0 %v4874
      %v4876 = vpop.xlane.xlu0 %4875
      %v4877 = vsel %vm446, %v4863, 0.0
      %4878 = vadd.xlane.f32.xlu0 %v4877
      %v4879 = vpop.xlane.xlu0 %4878
      %v4880 = vsel %vm446, %v4864, 0.0
      %4881 = vadd.xlane.f32.xlu0 %v4880
      %v4882 = vpop.xlane.xlu0 %4881
      %v4883 = vsel %vm446, %v4865, 0.0
      %4884 = vadd.xlane.f32.xlu0 %v4883
      %v4885 = vpop.xlane.xlu0 %4884
      %v4886 = vsel %vm446, %v4866, 0.0
      %4887 = vadd.xlane.f32.xlu0 %v4886
      %v4888 = vpop.xlane.xlu0 %4887
      %v4889 = vsel %vm446, %v4867, 0.0
      %4890 = vadd.xlane.f32.xlu0 %v4889
      %v4891 = vpop.xlane.xlu0 %4890
      %4892 = vrot.lane.b32.xlu0 %v3810, 112
      %v4893 = vpop.permute.xlu0 %4892
      %4894 = vrot.lane.b32.xlu0 %v3811, 112
      %v4895 = vpop.permute.xlu0 %4894
      %4896 = vrot.lane.b32.xlu0 %v3812, 112
      %v4897 = vpop.permute.xlu0 %4896
      %4898 = vrot.lane.b32.xlu0 %v3813, 112
      %v4899 = vpop.permute.xlu0 %4898
      %4900 = vrot.lane.b32.xlu0 %v3814, 112
      %v4901 = vpop.permute.xlu0 %4900
      %4902 = vrot.lane.b32.xlu0 %v3815, 112
      %v4903 = vpop.permute.xlu0 %4902
      %4904 = vrot.lane.b32.xlu0 %v3816, 112
      %v4905 = vpop.permute.xlu0 %4904
      %4906 = vrot.lane.b32.xlu0 %v3817, 112
      %v4907 = vpop.permute.xlu0 %4906
      %4908 = vrot.lane.b32.xlu0 %v3818, 112
      %v4909 = vpop.permute.xlu0 %4908
      %4910 = vrot.lane.b32.xlu0 %v3819, 112
      %v4911 = vpop.permute.xlu0 %4910
      %4912 = vrot.lane.b32.xlu0 %v3820, 112
      %v4913 = vpop.permute.xlu0 %4912
      %4914 = vrot.lane.b32.xlu0 %v3821, 112
      %v4915 = vpop.permute.xlu0 %4914
      %4916 = vrot.lane.b32.xlu0 %v3822, 112
      %v4917 = vpop.permute.xlu0 %4916
      %4918 = vrot.lane.b32.xlu0 %v3823, 112
      %v4919 = vpop.permute.xlu0 %4918
      %4920 = vrot.lane.b32.xlu0 %v3824, 112
      %v4921 = vpop.permute.xlu0 %4920
      %4922 = vrot.lane.b32.xlu0 %v3825, 112
      %v4923 = vpop.permute.xlu0 %4922
      %v4924 = vsel %vm1533, %v4893, %v4895
      %v4925 = vsel %vm1533, %v4897, %v4899
      %v4926 = vsel %vm1533, %v4901, %v4903
      %v4927 = vsel %vm1533, %v4905, %v4907
      %v4928 = vsel %vm1533, %v4909, %v4911
      %v4929 = vsel %vm1533, %v4913, %v4915
      %v4930 = vsel %vm1533, %v4917, %v4919
      %v4931 = vsel %vm1533, %v4921, %v4923
      %v4948 = vsel %vm1533, %v4895, 0.0
      %v4949 = vsel %vm1533, %v4899, 0.0
      %v4950 = vsel %vm1533, %v4903, 0.0
      %v4951 = vsel %vm1533, %v4907, 0.0
      %v4952 = vsel %vm1533, %v4911, 0.0
      %v4953 = vsel %vm1533, %v4915, 0.0
      %v4954 = vsel %vm1533, %v4919, 0.0
      %v4955 = vsel %vm1533, %v4923, 0.0
      %v4956 = vmul.f32 %v4924, %v4870
      %v4957 = vmul.f32 %v4948, %v4870
      %v4958 = vmul.f32 %v4925, %v4873
      %v4959 = vmul.f32 %v4949, %v4873
      %v4960 = vmul.f32 %v4926, %v4876
      %v4961 = vmul.f32 %v4950, %v4876
      %v4962 = vmul.f32 %v4927, %v4879
      %v4963 = vmul.f32 %v4951, %v4879
      %v4964 = vmul.f32 %v4928, %v4882
      %v4965 = vmul.f32 %v4952, %v4882
      %v4966 = vmul.f32 %v4929, %v4885
      %v4967 = vmul.f32 %v4953, %v4885
      %v4968 = vmul.f32 %v4930, %v4888
      %v4969 = vmul.f32 %v4954, %v4888
      %v4970 = vmul.f32 %v4931, %v4891
      %v4971 = vmul.f32 %v4955, %v4891
      %v4972 = vadd.f32 %v4836, %v4956
      %v4973 = vadd.f32 %v4837, %v4957
      %v4974 = vadd.f32 %v4838, %v4958
      %v4975 = vadd.f32 %v4839, %v4959
      %v4976 = vadd.f32 %v4840, %v4960
      %v4977 = vadd.f32 %v4841, %v4961
      %v4978 = vadd.f32 %v4842, %v4962
      %v4979 = vadd.f32 %v4843, %v4963
      %v4980 = vadd.f32 %v4844, %v4964
      %v4981 = vadd.f32 %v4845, %v4965
      %v4982 = vadd.f32 %v4846, %v4966
      %v4983 = vadd.f32 %v4847, %v4967
      %v4984 = vadd.f32 %v4848, %v4968
      %v4985 = vadd.f32 %v4849, %v4969
      %v4986 = vadd.f32 %v4850, %v4970
      %v4987 = vadd.f32 %v4851, %v4971
      %v4988 = vld [vmem:[%s3867 + $0x200] sm:$0xff]
      %v4989 = vld [vmem:[%s3867 + $0x208] sm:$0xff]
      %v4990 = vld [vmem:[%s3867 + $0x210] sm:$0xff]
      %v4991 = vld [vmem:[%s3867 + $0x218] sm:$0xff]
      %v4992 = vld [vmem:[%s3867 + $0x220] sm:$0xff]
      %v4993 = vld [vmem:[%s3867 + $0x228] sm:$0xff]
      %v4994 = vld [vmem:[%s3867 + $0x230] sm:$0xff]
      %v4995 = vld [vmem:[%s3867 + $0x238] sm:$0xff]
      %v4996 = vmul.f32 %v4988, %v3866
      %v4997 = vmul.f32 %v4989, %v3866
      %v4998 = vmul.f32 %v4990, %v3866
      %v4999 = vmul.f32 %v4991, %v3866
      %v5000 = vmul.f32 %v4992, %v3866
      %v5001 = vmul.f32 %v4993, %v3866
      %v5002 = vmul.f32 %v4994, %v3866
      %v5003 = vmul.f32 %v4995, %v3866
      %v5004 = vsel %vm446, %v4996, 0.0
      %5005 = vadd.xlane.f32.xlu0 %v5004
      %v5006 = vpop.xlane.xlu0 %5005
      %v5007 = vsel %vm446, %v4997, 0.0
      %5008 = vadd.xlane.f32.xlu0 %v5007
      %v5009 = vpop.xlane.xlu0 %5008
      %v5010 = vsel %vm446, %v4998, 0.0
      %5011 = vadd.xlane.f32.xlu0 %v5010
      %v5012 = vpop.xlane.xlu0 %5011
      %v5013 = vsel %vm446, %v4999, 0.0
      %5014 = vadd.xlane.f32.xlu0 %v5013
      %v5015 = vpop.xlane.xlu0 %5014
      %v5016 = vsel %vm446, %v5000, 0.0
      %5017 = vadd.xlane.f32.xlu0 %v5016
      %v5018 = vpop.xlane.xlu0 %5017
      %v5019 = vsel %vm446, %v5001, 0.0
      %5020 = vadd.xlane.f32.xlu0 %v5019
      %v5021 = vpop.xlane.xlu0 %5020
      %v5022 = vsel %vm446, %v5002, 0.0
      %5023 = vadd.xlane.f32.xlu0 %v5022
      %v5024 = vpop.xlane.xlu0 %5023
      %v5025 = vsel %vm446, %v5003, 0.0
      %5026 = vadd.xlane.f32.xlu0 %v5025
      %v5027 = vpop.xlane.xlu0 %5026
      %5028 = vrot.lane.b32.xlu0 %v3810, 111
      %v5029 = vpop.permute.xlu0 %5028
      %5030 = vrot.lane.b32.xlu0 %v3811, 111
      %v5031 = vpop.permute.xlu0 %5030
      %5032 = vrot.lane.b32.xlu0 %v3812, 111
      %v5033 = vpop.permute.xlu0 %5032
      %5034 = vrot.lane.b32.xlu0 %v3813, 111
      %v5035 = vpop.permute.xlu0 %5034
      %5036 = vrot.lane.b32.xlu0 %v3814, 111
      %v5037 = vpop.permute.xlu0 %5036
      %5038 = vrot.lane.b32.xlu0 %v3815, 111
      %v5039 = vpop.permute.xlu0 %5038
      %5040 = vrot.lane.b32.xlu0 %v3816, 111
      %v5041 = vpop.permute.xlu0 %5040
      %5042 = vrot.lane.b32.xlu0 %v3817, 111
      %v5043 = vpop.permute.xlu0 %5042
      %5044 = vrot.lane.b32.xlu0 %v3818, 111
      %v5045 = vpop.permute.xlu0 %5044
      %5046 = vrot.lane.b32.xlu0 %v3819, 111
      %v5047 = vpop.permute.xlu0 %5046
      %5048 = vrot.lane.b32.xlu0 %v3820, 111
      %v5049 = vpop.permute.xlu0 %5048
      %5050 = vrot.lane.b32.xlu0 %v3821, 111
      %v5051 = vpop.permute.xlu0 %5050
      %5052 = vrot.lane.b32.xlu0 %v3822, 111
      %v5053 = vpop.permute.xlu0 %5052
      %5054 = vrot.lane.b32.xlu0 %v3823, 111
      %v5055 = vpop.permute.xlu0 %5054
      %5056 = vrot.lane.b32.xlu0 %v3824, 111
      %v5057 = vpop.permute.xlu0 %5056
      %5058 = vrot.lane.b32.xlu0 %v3825, 111
      %v5059 = vpop.permute.xlu0 %5058
      %v5060 = vsel %vm1670, %v5029, %v5031
      %v5061 = vsel %vm1670, %v5033, %v5035
      %v5062 = vsel %vm1670, %v5037, %v5039
      %v5063 = vsel %vm1670, %v5041, %v5043
      %v5064 = vsel %vm1670, %v5045, %v5047
      %v5065 = vsel %vm1670, %v5049, %v5051
      %v5066 = vsel %vm1670, %v5053, %v5055
      %v5067 = vsel %vm1670, %v5057, %v5059
      %v5084 = vsel %vm1670, %v5031, 0.0
      %v5085 = vsel %vm1670, %v5035, 0.0
      %v5086 = vsel %vm1670, %v5039, 0.0
      %v5087 = vsel %vm1670, %v5043, 0.0
      %v5088 = vsel %vm1670, %v5047, 0.0
      %v5089 = vsel %vm1670, %v5051, 0.0
      %v5090 = vsel %vm1670, %v5055, 0.0
      %v5091 = vsel %vm1670, %v5059, 0.0
      %v5092 = vmul.f32 %v5060, %v358
      %v5093 = vmul.f32 %v5084, %v359
      %v5094 = vmul.f32 %v5061, %v358
      %v5095 = vmul.f32 %v5085, %v359
      %v5096 = vmul.f32 %v5062, %v358
      %v5097 = vmul.f32 %v5086, %v359
      %v5098 = vmul.f32 %v5063, %v358
      %v5099 = vmul.f32 %v5087, %v359
      %v5100 = vmul.f32 %v5064, %v358
      %v5101 = vmul.f32 %v5088, %v359
      %v5102 = vmul.f32 %v5065, %v358
      %v5103 = vmul.f32 %v5089, %v359
      %v5104 = vmul.f32 %v5066, %v358
      %v5105 = vmul.f32 %v5090, %v359
      %v5106 = vmul.f32 %v5067, %v358
      %v5107 = vmul.f32 %v5091, %v359
      %v5108 = vmul.f32 %v5092, %v5006
      %v5109 = vmul.f32 %v5093, %v5006
      %v5110 = vmul.f32 %v5094, %v5009
      %v5111 = vmul.f32 %v5095, %v5009
      %v5112 = vmul.f32 %v5096, %v5012
      %v5113 = vmul.f32 %v5097, %v5012
      %v5114 = vmul.f32 %v5098, %v5015
      %v5115 = vmul.f32 %v5099, %v5015
      %v5116 = vmul.f32 %v5100, %v5018
      %v5117 = vmul.f32 %v5101, %v5018
      %v5118 = vmul.f32 %v5102, %v5021
      %v5119 = vmul.f32 %v5103, %v5021
      %v5120 = vmul.f32 %v5104, %v5024
      %v5121 = vmul.f32 %v5105, %v5024
      %v5122 = vmul.f32 %v5106, %v5027
      %v5123 = vmul.f32 %v5107, %v5027
      %v5124 = vadd.f32 %v4972, %v5108
      %v5125 = vadd.f32 %v4973, %v5109
      %v5126 = vadd.f32 %v4974, %v5110
      %v5127 = vadd.f32 %v4975, %v5111
      %v5128 = vadd.f32 %v4976, %v5112
      %v5129 = vadd.f32 %v4977, %v5113
      %v5130 = vadd.f32 %v4978, %v5114
      %v5131 = vadd.f32 %v4979, %v5115
      %v5132 = vadd.f32 %v4980, %v5116
      %v5133 = vadd.f32 %v4981, %v5117
      %v5134 = vadd.f32 %v4982, %v5118
      %v5135 = vadd.f32 %v4983, %v5119
      %v5136 = vadd.f32 %v4984, %v5120
      %v5137 = vadd.f32 %v4985, %v5121
      %v5138 = vadd.f32 %v4986, %v5122
      %v5139 = vadd.f32 %v4987, %v5123
      %vm5140 = vcmp.ge.f32.partialorder %v5124, 0.0
      %vm5141 = vcmp.ge.f32.partialorder %v5125, 0.0
      %vm5142 = vcmp.ge.f32.partialorder %v5126, 0.0
      %vm5143 = vcmp.ge.f32.partialorder %v5127, 0.0
      %vm5144 = vcmp.ge.f32.partialorder %v5128, 0.0
      %vm5145 = vcmp.ge.f32.partialorder %v5129, 0.0
      %vm5146 = vcmp.ge.f32.partialorder %v5130, 0.0
      %vm5147 = vcmp.ge.f32.partialorder %v5131, 0.0
      %vm5148 = vcmp.ge.f32.partialorder %v5132, 0.0
      %vm5149 = vcmp.ge.f32.partialorder %v5133, 0.0
      %vm5150 = vcmp.ge.f32.partialorder %v5134, 0.0
      %vm5151 = vcmp.ge.f32.partialorder %v5135, 0.0
      %vm5152 = vcmp.ge.f32.partialorder %v5136, 0.0
      %vm5153 = vcmp.ge.f32.partialorder %v5137, 0.0
      %vm5154 = vcmp.ge.f32.partialorder %v5138, 0.0
      %vm5155 = vcmp.ge.f32.partialorder %v5139, 0.0
      %v5156 = vmul.f32 %v5124, 0.1
      %v5157 = vmul.f32 %v5125, 0.1
      %v5158 = vmul.f32 %v5126, 0.1
      %v5159 = vmul.f32 %v5127, 0.1
      %v5160 = vmul.f32 %v5128, 0.1
      %v5161 = vmul.f32 %v5129, 0.1
      %v5162 = vmul.f32 %v5130, 0.1
      %v5163 = vmul.f32 %v5131, 0.1
      %v5164 = vmul.f32 %v5132, 0.1
      %v5165 = vmul.f32 %v5133, 0.1
      %v5166 = vmul.f32 %v5134, 0.1
      %v5167 = vmul.f32 %v5135, 0.1
      %v5168 = vmul.f32 %v5136, 0.1
      %v5169 = vmul.f32 %v5137, 0.1
      %v5170 = vmul.f32 %v5138, 0.1
      %v5171 = vmul.f32 %v5139, 0.1
      %v5172 = vsel %vm5140, %v5124, %v5156
      %v5173 = vsel %vm5141, %v5125, %v5157
      %v5174 = vsel %vm5142, %v5126, %v5158
      %v5175 = vsel %vm5143, %v5127, %v5159
      %v5176 = vsel %vm5144, %v5128, %v5160
      %v5177 = vsel %vm5145, %v5129, %v5161
      %v5178 = vsel %vm5146, %v5130, %v5162
      %v5179 = vsel %vm5147, %v5131, %v5163
      %v5180 = vsel %vm5148, %v5132, %v5164
      %v5181 = vsel %vm5149, %v5133, %v5165
      %v5182 = vsel %vm5150, %v5134, %v5166
      %v5183 = vsel %vm5151, %v5135, %v5167
      %v5184 = vsel %vm5152, %v5136, %v5168
      %v5185 = vsel %vm5153, %v5137, %v5169
      %v5186 = vsel %vm5154, %v5138, %v5170
      %v5187 = vsel %vm5155, %v5139, %v5171
      %s5188 = scalar_lea.vmem %s4, 64
      %v5189 = vld [vmem:[%s5188] sm:$0xff]
      %v5190 = vld [vmem:[%s5188 + $0x8] sm:$0xff]
      %v5191 = vld [vmem:[%s5188 + $0x10] sm:$0xff]
      %v5192 = vld [vmem:[%s5188 + $0x18] sm:$0xff]
      %v5193 = vld [vmem:[%s5188 + $0x20] sm:$0xff]
      %v5194 = vld [vmem:[%s5188 + $0x28] sm:$0xff]
      %v5195 = vld [vmem:[%s5188 + $0x30] sm:$0xff]
      %v5196 = vld [vmem:[%s5188 + $0x38] sm:$0xff]
      %5198 = vset.pattern.permute.xlu0 0
      %5199 = vperm.xlu0 %5198, %v5189
      %v5200 = vpop.permute.xlu0 %5199
      %5203 = vset.pattern.permute.xlu0 0
      %5204 = vperm.xlu0 %5203, %v5190
      %v5205 = vpop.permute.xlu0 %5204
      %5208 = vset.pattern.permute.xlu0 0
      %5209 = vperm.xlu0 %5208, %v5191
      %v5210 = vpop.permute.xlu0 %5209
      %5213 = vset.pattern.permute.xlu0 0
      %5214 = vperm.xlu0 %5213, %v5192
      %v5215 = vpop.permute.xlu0 %5214
      %5218 = vset.pattern.permute.xlu0 0
      %5219 = vperm.xlu0 %5218, %v5193
      %v5220 = vpop.permute.xlu0 %5219
      %5223 = vset.pattern.permute.xlu0 0
      %5224 = vperm.xlu0 %5223, %v5194
      %v5225 = vpop.permute.xlu0 %5224
      %5228 = vset.pattern.permute.xlu0 0
      %5229 = vperm.xlu0 %5228, %v5195
      %v5230 = vpop.permute.xlu0 %5229
      %5233 = vset.pattern.permute.xlu0 0
      %5234 = vperm.xlu0 %5233, %v5196
      %v5235 = vpop.permute.xlu0 %5234
      %v5237 = vmul.f32 %v3810, %v5200
      %v5238 = vmul.f32 %v3811, %v5200
      %v5239 = vmul.f32 %v3812, %v5205
      %v5240 = vmul.f32 %v3813, %v5205
      %v5241 = vmul.f32 %v3814, %v5210
      %v5242 = vmul.f32 %v3815, %v5210
      %v5243 = vmul.f32 %v3816, %v5215
      %v5244 = vmul.f32 %v3817, %v5215
      %v5245 = vmul.f32 %v3818, %v5220
      %v5246 = vmul.f32 %v3819, %v5220
      %v5247 = vmul.f32 %v3820, %v5225
      %v5248 = vmul.f32 %v3821, %v5225
      %v5249 = vmul.f32 %v3822, %v5230
      %v5250 = vmul.f32 %v3823, %v5230
      %v5251 = vmul.f32 %v3824, %v5235
      %v5252 = vmul.f32 %v3825, %v5235
      %v5253 = vadd.f32 %v5237, %v5239
      %v5254 = vadd.f32 %v5253, %v5241
      %v5255 = vadd.f32 %v5254, %v5243
      %v5256 = vadd.f32 %v5255, %v5245
      %v5257 = vadd.f32 %v5256, %v5247
      %v5258 = vadd.f32 %v5257, %v5249
      %v5259 = vadd.f32 %v5258, %v5251
      %v5260 = vrot.slane %v5259, 4
      %v5261 = vadd.f32 %v5259, %v5260
      %v5262 = vrot.slane %v5261, 2
      %v5263 = vadd.f32 %v5261, %v5262
      %v5264 = vrot.slane %v5263, 1
      %v5265 = vadd.f32 %v5263, %v5264
      %v5266 = vadd.f32 %v5238, %v5240
      %v5267 = vadd.f32 %v5266, %v5242
      %v5268 = vadd.f32 %v5267, %v5244
      %v5269 = vadd.f32 %v5268, %v5246
      %v5270 = vadd.f32 %v5269, %v5248
      %v5271 = vadd.f32 %v5270, %v5250
      %v5272 = vadd.f32 %v5271, %v5252
      %v5273 = vrot.slane %v5272, 4
      %v5274 = vadd.f32 %v5272, %v5273
      %v5275 = vrot.slane %v5274, 2
      %v5276 = vadd.f32 %v5274, %v5275
      %v5277 = vrot.slane %v5276, 1
      %v5278 = vadd.f32 %v5276, %v5277
      %s5279 = scalar_lea.vmem %s5, 1
      %v5280 = vld [vmem:[%s5279] sm:$0x1]
      %5282 = vset.pattern.permute.xlu0 0
      %5283 = vperm.xlu0 %5282, %v5280
      %v5284 = vpop.permute.xlu0 %5283
      %v5286 = vperm.slane %v5284, 0
      %v5287 = vadd.f32 %v5265, %v5286
      %v5288 = vadd.f32 %v5278, %v5286
      %v5289 = vxor.u32 %v5287, 2147483648
      %v5290 = vxor.u32 %v5288, 2147483648
      %v5291 = vmul.f32 %v5289, 1.442695
      %v5292 = vpow.pop %v5291
      %v5293 = vmul.f32 %v5290, 1.442695
      %v5294 = vpow.pop %v5293
      %v5295 = vadd.f32 %v5292, 1.0
      %v5296 = vadd.f32 %v5294, 1.0
      %v5297 = vrcp.pop %v5295
      %v5298 = vmul.f32 %v5295, %v5297
      %v5299 = vsub.f32 1.0, %v5298
      %v5300 = vmul.f32 %v5297, %v5299
      %v5301 = vadd.f32 %v5297, %v5300
      %vm5302 = vweird.f32 %v5295
      %vm5303 = vweird.f32 %v5297
      %vm5304 = vmor %vm5302, %vm5303
      %v5305 = vsel %vm5304, %v5297, %v5301
      %v5306 = vand.u32 2147483647, %v5295
      %vm5307 = vcmp.eq.f32.partialorder %v5306, 8.507059e+37
      %v5308 = vand.u32 %v5295, 2147483648
      %v5309 = vor.u32 1.1754944e-38, %v5308
      %v5310 = vsel %vm5307, %v5309, %v5305
      %v5311 = vmul.f32 1.0, %v5310
      %v5312 = vrcp.pop %v5296
      %v5313 = vmul.f32 %v5296, %v5312
      %v5314 = vsub.f32 1.0, %v5313
      %v5315 = vmul.f32 %v5312, %v5314
      %v5316 = vadd.f32 %v5312, %v5315
      %vm5317 = vweird.f32 %v5296
      %vm5318 = vweird.f32 %v5312
      %vm5319 = vmor %vm5317, %vm5318
      %v5320 = vsel %vm5319, %v5312, %v5316
      %v5321 = vand.u32 2147483647, %v5296
      %vm5322 = vcmp.eq.f32.partialorder %v5321, 8.507059e+37
      %v5323 = vand.u32 %v5296, 2147483648
      %v5324 = vor.u32 1.1754944e-38, %v5323
      %v5325 = vsel %vm5322, %v5324, %v5320
      %v5326 = vmul.f32 1.0, %v5325
      %v5327 = vmul.f32 %v5172, %v5311
      %v5328 = vmul.f32 %v5173, %v5326
      %v5329 = vmul.f32 %v5174, %v5311
      %v5330 = vmul.f32 %v5175, %v5326
      %v5331 = vmul.f32 %v5176, %v5311
      %v5332 = vmul.f32 %v5177, %v5326
      %v5333 = vmul.f32 %v5178, %v5311
      %v5334 = vmul.f32 %v5179, %v5326
      %v5335 = vmul.f32 %v5180, %v5311
      %v5336 = vmul.f32 %v5181, %v5326
      %v5337 = vmul.f32 %v5182, %v5311
      %v5338 = vmul.f32 %v5183, %v5326
      %v5339 = vmul.f32 %v5184, %v5311
      %v5340 = vmul.f32 %v5185, %v5326
      %v5341 = vmul.f32 %v5186, %v5311
      %v5342 = vmul.f32 %v5187, %v5326
      %v5343 = vadd.f32 %v5327, %v3810
      %v5344 = vadd.f32 %v5328, %v3811
      %v5345 = vadd.f32 %v5329, %v3812
      %v5346 = vadd.f32 %v5330, %v3813
      %v5347 = vadd.f32 %v5331, %v3814
      %v5348 = vadd.f32 %v5332, %v3815
      %v5349 = vadd.f32 %v5333, %v3816
      %v5350 = vadd.f32 %v5334, %v3817
      %v5351 = vadd.f32 %v5335, %v3818
      %v5352 = vadd.f32 %v5336, %v3819
      %v5353 = vadd.f32 %v5337, %v3820
      %v5354 = vadd.f32 %v5338, %v3821
      %v5355 = vadd.f32 %v5339, %v3822
      %v5356 = vadd.f32 %v5340, %v3823
      %v5357 = vadd.f32 %v5341, %v3824
      %v5358 = vadd.f32 %v5342, %v3825
      %vm5359 = vcmp.ge.f32.partialorder %v5343, 0.0
      %vm5360 = vcmp.ge.f32.partialorder %v5344, 0.0
      %vm5361 = vcmp.ge.f32.partialorder %v5345, 0.0
      %vm5362 = vcmp.ge.f32.partialorder %v5346, 0.0
      %vm5363 = vcmp.ge.f32.partialorder %v5347, 0.0
      %vm5364 = vcmp.ge.f32.partialorder %v5348, 0.0
      %vm5365 = vcmp.ge.f32.partialorder %v5349, 0.0
      %vm5366 = vcmp.ge.f32.partialorder %v5350, 0.0
      %vm5367 = vcmp.ge.f32.partialorder %v5351, 0.0
      %vm5368 = vcmp.ge.f32.partialorder %v5352, 0.0
      %vm5369 = vcmp.ge.f32.partialorder %v5353, 0.0
      %vm5370 = vcmp.ge.f32.partialorder %v5354, 0.0
      %vm5371 = vcmp.ge.f32.partialorder %v5355, 0.0
      %vm5372 = vcmp.ge.f32.partialorder %v5356, 0.0
      %vm5373 = vcmp.ge.f32.partialorder %v5357, 0.0
      %vm5374 = vcmp.ge.f32.partialorder %v5358, 0.0
      %v5375 = vmul.f32 %v5343, 0.1
      %v5376 = vmul.f32 %v5344, 0.1
      %v5377 = vmul.f32 %v5345, 0.1
      %v5378 = vmul.f32 %v5346, 0.1
      %v5379 = vmul.f32 %v5347, 0.1
      %v5380 = vmul.f32 %v5348, 0.1
      %v5381 = vmul.f32 %v5349, 0.1
      %v5382 = vmul.f32 %v5350, 0.1
      %v5383 = vmul.f32 %v5351, 0.1
      %v5384 = vmul.f32 %v5352, 0.1
      %v5385 = vmul.f32 %v5353, 0.1
      %v5386 = vmul.f32 %v5354, 0.1
      %v5387 = vmul.f32 %v5355, 0.1
      %v5388 = vmul.f32 %v5356, 0.1
      %v5389 = vmul.f32 %v5357, 0.1
      %v5390 = vmul.f32 %v5358, 0.1
      %v5391 = vsel %vm5359, %v5343, %v5375
      %v5392 = vsel %vm5360, %v5344, %v5376
      %v5393 = vsel %vm5361, %v5345, %v5377
      %v5394 = vsel %vm5362, %v5346, %v5378
      %v5395 = vsel %vm5363, %v5347, %v5379
      %v5396 = vsel %vm5364, %v5348, %v5380
      %v5397 = vsel %vm5365, %v5349, %v5381
      %v5398 = vsel %vm5366, %v5350, %v5382
      %v5399 = vsel %vm5367, %v5351, %v5383
      %v5400 = vsel %vm5368, %v5352, %v5384
      %v5401 = vsel %vm5369, %v5353, %v5385
      %v5402 = vsel %vm5370, %v5354, %v5386
      %v5403 = vsel %vm5371, %v5355, %v5387
      %v5404 = vsel %vm5372, %v5356, %v5388
      %v5405 = vsel %vm5373, %v5357, %v5389
      %v5406 = vsel %vm5374, %v5358, %v5390
      %5423 = vrot.lane.b32.xlu0 %v5391, 17
      %v5424 = vpop.permute.xlu0 %5423
      %5425 = vrot.lane.b32.xlu0 %v5392, 17
      %v5426 = vpop.permute.xlu0 %5425
      %5427 = vrot.lane.b32.xlu0 %v5393, 17
      %v5428 = vpop.permute.xlu0 %5427
      %5429 = vrot.lane.b32.xlu0 %v5394, 17
      %v5430 = vpop.permute.xlu0 %5429
      %5431 = vrot.lane.b32.xlu0 %v5395, 17
      %v5432 = vpop.permute.xlu0 %5431
      %5433 = vrot.lane.b32.xlu0 %v5396, 17
      %v5434 = vpop.permute.xlu0 %5433
      %5435 = vrot.lane.b32.xlu0 %v5397, 17
      %v5436 = vpop.permute.xlu0 %5435
      %5437 = vrot.lane.b32.xlu0 %v5398, 17
      %v5438 = vpop.permute.xlu0 %5437
      %5439 = vrot.lane.b32.xlu0 %v5399, 17
      %v5440 = vpop.permute.xlu0 %5439
      %5441 = vrot.lane.b32.xlu0 %v5400, 17
      %v5442 = vpop.permute.xlu0 %5441
      %5443 = vrot.lane.b32.xlu0 %v5401, 17
      %v5444 = vpop.permute.xlu0 %5443
      %5445 = vrot.lane.b32.xlu0 %v5402, 17
      %v5446 = vpop.permute.xlu0 %5445
      %5447 = vrot.lane.b32.xlu0 %v5403, 17
      %v5448 = vpop.permute.xlu0 %5447
      %5449 = vrot.lane.b32.xlu0 %v5404, 17
      %v5450 = vpop.permute.xlu0 %5449
      %5451 = vrot.lane.b32.xlu0 %v5405, 17
      %v5452 = vpop.permute.xlu0 %5451
      %5453 = vrot.lane.b32.xlu0 %v5406, 17
      %v5454 = vpop.permute.xlu0 %5453
      %v5455 = vsel %vm559, %v5424, %v5426
      %v5456 = vsel %vm559, %v5428, %v5430
      %v5457 = vsel %vm559, %v5432, %v5434
      %v5458 = vsel %vm559, %v5436, %v5438
      %v5459 = vsel %vm559, %v5440, %v5442
      %v5460 = vsel %vm559, %v5444, %v5446
      %v5461 = vsel %vm559, %v5448, %v5450
      %v5462 = vsel %vm559, %v5452, %v5454
      %v5479 = vsel %vm559, 0.0, %v5424
      %v5480 = vsel %vm559, 0.0, %v5428
      %v5481 = vsel %vm559, 0.0, %v5432
      %v5482 = vsel %vm559, 0.0, %v5436
      %v5483 = vsel %vm559, 0.0, %v5440
      %v5484 = vsel %vm559, 0.0, %v5444
      %v5485 = vsel %vm559, 0.0, %v5448
      %v5486 = vsel %vm559, 0.0, %v5452
      %v5487 = vmul.f32 %v5479, %v364
      %v5488 = vmul.f32 %v5455, %v365
      %v5489 = vmul.f32 %v5480, %v364
      %v5490 = vmul.f32 %v5456, %v365
      %v5491 = vmul.f32 %v5481, %v364
      %v5492 = vmul.f32 %v5457, %v365
      %v5493 = vmul.f32 %v5482, %v364
      %v5494 = vmul.f32 %v5458, %v365
      %v5495 = vmul.f32 %v5483, %v364
      %v5496 = vmul.f32 %v5459, %v365
      %v5497 = vmul.f32 %v5484, %v364
      %v5498 = vmul.f32 %v5460, %v365
      %v5499 = vmul.f32 %v5485, %v364
      %v5500 = vmul.f32 %v5461, %v365
      %v5501 = vmul.f32 %v5486, %v364
      %v5502 = vmul.f32 %v5462, %v365
      %v5503 = vpack.c.bf16 %v5489, %v5487
      %v5504 = vpack.c.bf16 %v5490, %v5488
      %v5505 = vpack.c.bf16 %v5493, %v5491
      %v5506 = vpack.c.bf16 %v5494, %v5492
      %v5507 = vpack.c.bf16 %v5497, %v5495
      %v5508 = vpack.c.bf16 %v5498, %v5496
      %v5509 = vpack.c.bf16 %v5501, %v5499
      %v5510 = vpack.c.bf16 %v5502, %v5500
      %s5511 = scalar_lea.vmem %s6, 288
      %v5512 = vld [vmem:[%s5511] sm:$0xf]
      %v5513 = vld [vmem:[%s5511 + $0x4] sm:$0xf]
      %v5514 = vld [vmem:[%s5511 + $0x8] sm:$0xf]
      %v5515 = vld [vmem:[%s5511 + $0xc] sm:$0xf]
      %v5516 = vld [vmem:[%s5511 + $0x10] sm:$0xf]
      %v5517 = vld [vmem:[%s5511 + $0x14] sm:$0xf]
      %v5518 = vld [vmem:[%s5511 + $0x18] sm:$0xf]
      %v5519 = vld [vmem:[%s5511 + $0x1c] sm:$0xf]
      %5520 = vrot.lane.b32.xlu0 %v5391, 16
      %v5521 = vpop.permute.xlu0 %5520
      %5522 = vrot.lane.b32.xlu0 %v5392, 16
      %v5523 = vpop.permute.xlu0 %5522
      %5524 = vrot.lane.b32.xlu0 %v5393, 16
      %v5525 = vpop.permute.xlu0 %5524
      %5526 = vrot.lane.b32.xlu0 %v5394, 16
      %v5527 = vpop.permute.xlu0 %5526
      %5528 = vrot.lane.b32.xlu0 %v5395, 16
      %v5529 = vpop.permute.xlu0 %5528
      %5530 = vrot.lane.b32.xlu0 %v5396, 16
      %v5531 = vpop.permute.xlu0 %5530
      %5532 = vrot.lane.b32.xlu0 %v5397, 16
      %v5533 = vpop.permute.xlu0 %5532
      %5534 = vrot.lane.b32.xlu0 %v5398, 16
      %v5535 = vpop.permute.xlu0 %5534
      %5536 = vrot.lane.b32.xlu0 %v5399, 16
      %v5537 = vpop.permute.xlu0 %5536
      %5538 = vrot.lane.b32.xlu0 %v5400, 16
      %v5539 = vpop.permute.xlu0 %5538
      %5540 = vrot.lane.b32.xlu0 %v5401, 16
      %v5541 = vpop.permute.xlu0 %5540
      %5542 = vrot.lane.b32.xlu0 %v5402, 16
      %v5543 = vpop.permute.xlu0 %5542
      %5544 = vrot.lane.b32.xlu0 %v5403, 16
      %v5545 = vpop.permute.xlu0 %5544
      %5546 = vrot.lane.b32.xlu0 %v5404, 16
      %v5547 = vpop.permute.xlu0 %5546
      %5548 = vrot.lane.b32.xlu0 %v5405, 16
      %v5549 = vpop.permute.xlu0 %5548
      %5550 = vrot.lane.b32.xlu0 %v5406, 16
      %v5551 = vpop.permute.xlu0 %5550
      %v5552 = vsel %vm712, %v5521, %v5523
      %v5553 = vsel %vm712, %v5525, %v5527
      %v5554 = vsel %vm712, %v5529, %v5531
      %v5555 = vsel %vm712, %v5533, %v5535
      %v5556 = vsel %vm712, %v5537, %v5539
      %v5557 = vsel %vm712, %v5541, %v5543
      %v5558 = vsel %vm712, %v5545, %v5547
      %v5559 = vsel %vm712, %v5549, %v5551
      %v5576 = vsel %vm712, 0.0, %v5521
      %v5577 = vsel %vm712, 0.0, %v5525
      %v5578 = vsel %vm712, 0.0, %v5529
      %v5579 = vsel %vm712, 0.0, %v5533
      %v5580 = vsel %vm712, 0.0, %v5537
      %v5581 = vsel %vm712, 0.0, %v5541
      %v5582 = vsel %vm712, 0.0, %v5545
      %v5583 = vsel %vm712, 0.0, %v5549
      %v5584 = vpack.c.bf16 %v5577, %v5576
      %v5585 = vpack.c.bf16 %v5553, %v5552
      %v5586 = vpack.c.bf16 %v5579, %v5578
      %v5587 = vpack.c.bf16 %v5555, %v5554
      %v5588 = vpack.c.bf16 %v5581, %v5580
      %v5589 = vpack.c.bf16 %v5557, %v5556
      %v5590 = vpack.c.bf16 %v5583, %v5582
      %v5591 = vpack.c.bf16 %v5559, %v5558
      %s5592 = scalar_lea.vmem %s6, 320
      %v5593 = vld [vmem:[%s5592] sm:$0xf]
      %v5594 = vld [vmem:[%s5592 + $0x4] sm:$0xf]
      %v5595 = vld [vmem:[%s5592 + $0x8] sm:$0xf]
      %v5596 = vld [vmem:[%s5592 + $0xc] sm:$0xf]
      %v5597 = vld [vmem:[%s5592 + $0x10] sm:$0xf]
      %v5598 = vld [vmem:[%s5592 + $0x14] sm:$0xf]
      %v5599 = vld [vmem:[%s5592 + $0x18] sm:$0xf]
      %v5600 = vld [vmem:[%s5592 + $0x1c] sm:$0xf]
      %v5609 = vunpack.c.l.b16 %v5593
      %v5610 = vunpack.c.l.b16 %v5594
      %v5611 = vunpack.c.l.b16 %v5595
      %v5612 = vunpack.c.l.b16 %v5596
      %v5613 = vunpack.c.l.b16 %v5597
      %v5614 = vunpack.c.l.b16 %v5598
      %v5615 = vunpack.c.l.b16 %v5599
      %v5616 = vunpack.c.l.b16 %v5600
      %v5617 = vpack.c.b16 %v5610, %v5609
      %v5618 = vpack.c.b16 %v5612, %v5611
      %v5619 = vpack.c.b16 %v5614, %v5613
      %v5620 = vpack.c.b16 %v5616, %v5615
      %v5622 = vsel %vm446, %v5617, 0
      %v5625 = vsel %vm446, %v5618, 0
      %v5628 = vsel %vm446, %v5619, 0
      %v5631 = vsel %vm446, %v5620, 0
      %5633 = vmatpush.bf16.msra.mxu0 0
      %5634 = vmatpush.bf16.msra.mxu0 0
      %5635 = vmatpush.bf16.msra.mxu0 0
      %5636 = vmatpush.bf16.msra.mxu0 0
      %5637 = vmatpush.bf16.msra.mxu0 %v5590
      %5638 = vmatpush.bf16.msra.mxu0 %v5588
      %5639 = vmatpush.bf16.msra.mxu0 %v5586
      %5640 = vmatpush.bf16.msra.mxu0 %v5584
      %5641 = vmatmul.bf16.gmra.mxu0 %v5622
      %v5642 = vpop.f32.mrf.mxu0
      %v5643 = vadd.f32 0.0, %v5642
      %v5644 = vpop.f32.mrf.mxu0
      %v5645 = vadd.f32 0.0, %v5644
      %5646 = vmatmul.bf16.gmra.mxu0 %v5625
      %v5647 = vpop.f32.mrf.mxu0
      %v5648 = vadd.f32 0.0, %v5647
      %v5649 = vpop.f32.mrf.mxu0
      %v5650 = vadd.f32 0.0, %v5649
      %5651 = vmatmul.bf16.gmra.mxu0 %v5628
      %v5652 = vpop.f32.mrf.mxu0
      %v5653 = vadd.f32 0.0, %v5652
      %v5654 = vpop.f32.mrf.mxu0
      %v5655 = vadd.f32 0.0, %v5654
      %5656 = vmatmul.bf16.gmra.mxu0 %v5631
      %v5657 = vpop.f32.mrf.mxu0
      %v5658 = vadd.f32 0.0, %v5657
      %v5659 = vpop.f32.mrf.mxu0
      %v5660 = vadd.f32 0.0, %v5659
      %5661 = vdwg.mxu0
      %5662 = vmatpush.bf16.msra.mxu0 0
      %5663 = vmatpush.bf16.msra.mxu0 0
      %5664 = vmatpush.bf16.msra.mxu0 0
      %5665 = vmatpush.bf16.msra.mxu0 0
      %5666 = vmatpush.bf16.msra.mxu0 %v5591
      %5667 = vmatpush.bf16.msra.mxu0 %v5589
      %5668 = vmatpush.bf16.msra.mxu0 %v5587
      %5669 = vmatpush.bf16.msra.mxu0 %v5585
      %5670 = vmatmul.bf16.gmra.mxu0 %v5622
      %v5671 = vpop.f32.mrf.mxu0
      %v5672 = vadd.f32 0.0, %v5671
      %v5673 = vpop.f32.mrf.mxu0
      %v5674 = vadd.f32 0.0, %v5673
      %5675 = vmatmul.bf16.gmra.mxu0 %v5625
      %v5676 = vpop.f32.mrf.mxu0
      %v5677 = vadd.f32 0.0, %v5676
      %v5678 = vpop.f32.mrf.mxu0
      %v5679 = vadd.f32 0.0, %v5678
      %5680 = vmatmul.bf16.gmra.mxu0 %v5628
      %v5681 = vpop.f32.mrf.mxu0
      %v5682 = vadd.f32 0.0, %v5681
      %v5683 = vpop.f32.mrf.mxu0
      %v5684 = vadd.f32 0.0, %v5683
      %5685 = vmatmul.bf16.gmra.mxu0 %v5631
      %v5686 = vpop.f32.mrf.mxu0
      %v5687 = vadd.f32 0.0, %v5686
      %v5688 = vpop.f32.mrf.mxu0
      %v5689 = vadd.f32 0.0, %v5688
      %5690 = vdwg.mxu0
      %v5699 = vunpack.c.l.b16 %v5512
      %v5700 = vunpack.c.l.b16 %v5513
      %v5701 = vunpack.c.l.b16 %v5514
      %v5702 = vunpack.c.l.b16 %v5515
      %v5703 = vunpack.c.l.b16 %v5516
      %v5704 = vunpack.c.l.b16 %v5517
      %v5705 = vunpack.c.l.b16 %v5518
      %v5706 = vunpack.c.l.b16 %v5519
      %v5707 = vpack.c.b16 %v5700, %v5699
      %v5708 = vpack.c.b16 %v5702, %v5701
      %v5709 = vpack.c.b16 %v5704, %v5703
      %v5710 = vpack.c.b16 %v5706, %v5705
      %v5712 = vsel %vm446, %v5707, 0
      %v5715 = vsel %vm446, %v5708, 0
      %v5718 = vsel %vm446, %v5709, 0
      %v5721 = vsel %vm446, %v5710, 0
      %5723 = vmatpush.bf16.msra.mxu0 0
      %5724 = vmatpush.bf16.msra.mxu0 0
      %5725 = vmatpush.bf16.msra.mxu0 0
      %5726 = vmatpush.bf16.msra.mxu0 0
      %5727 = vmatpush.bf16.msra.mxu0 %v5509
      %5728 = vmatpush.bf16.msra.mxu0 %v5507
      %5729 = vmatpush.bf16.msra.mxu0 %v5505
      %5730 = vmatpush.bf16.msra.mxu0 %v5503
      %5731 = vmatmul.bf16.gmra.mxu0 %v5712
      %v5732 = vpop.f32.mrf.mxu0
      %v5733 = vadd.f32 %v5643, %v5732
      %v5734 = vpop.f32.mrf.mxu0
      %v5735 = vadd.f32 %v5645, %v5734
      %5736 = vmatmul.bf16.gmra.mxu0 %v5715
      %v5737 = vpop.f32.mrf.mxu0
      %v5738 = vadd.f32 %v5648, %v5737
      %v5739 = vpop.f32.mrf.mxu0
      %v5740 = vadd.f32 %v5650, %v5739
      %5741 = vmatmul.bf16.gmra.mxu0 %v5718
      %v5742 = vpop.f32.mrf.mxu0
      %v5743 = vadd.f32 %v5653, %v5742
      %v5744 = vpop.f32.mrf.mxu0
      %v5745 = vadd.f32 %v5655, %v5744
      %5746 = vmatmul.bf16.gmra.mxu0 %v5721
      %v5747 = vpop.f32.mrf.mxu0
      %v5748 = vadd.f32 %v5658, %v5747
      %v5749 = vpop.f32.mrf.mxu0
      %v5750 = vadd.f32 %v5660, %v5749
      %5751 = vdwg.mxu0
      %5752 = vmatpush.bf16.msra.mxu0 0
      %5753 = vmatpush.bf16.msra.mxu0 0
      %5754 = vmatpush.bf16.msra.mxu0 0
      %5755 = vmatpush.bf16.msra.mxu0 0
      %5756 = vmatpush.bf16.msra.mxu0 %v5510
      %5757 = vmatpush.bf16.msra.mxu0 %v5508
      %5758 = vmatpush.bf16.msra.mxu0 %v5506
      %5759 = vmatpush.bf16.msra.mxu0 %v5504
      %5760 = vmatmul.bf16.gmra.mxu0 %v5712
      %v5761 = vpop.f32.mrf.mxu0
      %v5762 = vadd.f32 %v5672, %v5761
      %v5763 = vpop.f32.mrf.mxu0
      %v5764 = vadd.f32 %v5674, %v5763
      %5765 = vmatmul.bf16.gmra.mxu0 %v5715
      %v5766 = vpop.f32.mrf.mxu0
      %v5767 = vadd.f32 %v5677, %v5766
      %v5768 = vpop.f32.mrf.mxu0
      %v5769 = vadd.f32 %v5679, %v5768
      %5770 = vmatmul.bf16.gmra.mxu0 %v5718
      %v5771 = vpop.f32.mrf.mxu0
      %v5772 = vadd.f32 %v5682, %v5771
      %v5773 = vpop.f32.mrf.mxu0
      %v5774 = vadd.f32 %v5684, %v5773
      %5775 = vmatmul.bf16.gmra.mxu0 %v5721
      %v5776 = vpop.f32.mrf.mxu0
      %v5777 = vadd.f32 %v5687, %v5776
      %v5778 = vpop.f32.mrf.mxu0
      %v5779 = vadd.f32 %v5689, %v5778
      %5780 = vdwg.mxu0
      %5781 = vrot.lane.b32.xlu0 %v5391, 15
      %v5782 = vpop.permute.xlu0 %5781
      %5783 = vrot.lane.b32.xlu0 %v5392, 15
      %v5784 = vpop.permute.xlu0 %5783
      %5785 = vrot.lane.b32.xlu0 %v5393, 15
      %v5786 = vpop.permute.xlu0 %5785
      %5787 = vrot.lane.b32.xlu0 %v5394, 15
      %v5788 = vpop.permute.xlu0 %5787
      %5789 = vrot.lane.b32.xlu0 %v5395, 15
      %v5790 = vpop.permute.xlu0 %5789
      %5791 = vrot.lane.b32.xlu0 %v5396, 15
      %v5792 = vpop.permute.xlu0 %5791
      %5793 = vrot.lane.b32.xlu0 %v5397, 15
      %v5794 = vpop.permute.xlu0 %5793
      %5795 = vrot.lane.b32.xlu0 %v5398, 15
      %v5796 = vpop.permute.xlu0 %5795
      %5797 = vrot.lane.b32.xlu0 %v5399, 15
      %v5798 = vpop.permute.xlu0 %5797
      %5799 = vrot.lane.b32.xlu0 %v5400, 15
      %v5800 = vpop.permute.xlu0 %5799
      %5801 = vrot.lane.b32.xlu0 %v5401, 15
      %v5802 = vpop.permute.xlu0 %5801
      %5803 = vrot.lane.b32.xlu0 %v5402, 15
      %v5804 = vpop.permute.xlu0 %5803
      %5805 = vrot.lane.b32.xlu0 %v5403, 15
      %v5806 = vpop.permute.xlu0 %5805
      %5807 = vrot.lane.b32.xlu0 %v5404, 15
      %v5808 = vpop.permute.xlu0 %5807
      %5809 = vrot.lane.b32.xlu0 %v5405, 15
      %v5810 = vpop.permute.xlu0 %5809
      %5811 = vrot.lane.b32.xlu0 %v5406, 15
      %v5812 = vpop.permute.xlu0 %5811
      %v5813 = vsel %vm849, %v5782, %v5784
      %v5814 = vsel %vm849, %v5786, %v5788
      %v5815 = vsel %vm849, %v5790, %v5792
      %v5816 = vsel %vm849, %v5794, %v5796
      %v5817 = vsel %vm849, %v5798, %v5800
      %v5818 = vsel %vm849, %v5802, %v5804
      %v5819 = vsel %vm849, %v5806, %v5808
      %v5820 = vsel %vm849, %v5810, %v5812
      %v5837 = vsel %vm849, 0.0, %v5782
      %v5838 = vsel %vm849, 0.0, %v5786
      %v5839 = vsel %vm849, 0.0, %v5790
      %v5840 = vsel %vm849, 0.0, %v5794
      %v5841 = vsel %vm849, 0.0, %v5798
      %v5842 = vsel %vm849, 0.0, %v5802
      %v5843 = vsel %vm849, 0.0, %v5806
      %v5844 = vsel %vm849, 0.0, %v5810
      %v5845 = vmul.f32 %v5837, %v358
      %v5846 = vmul.f32 %v5813, %v359
      %v5847 = vmul.f32 %v5838, %v358
      %v5848 = vmul.f32 %v5814, %v359
      %v5849 = vmul.f32 %v5839, %v358
      %v5850 = vmul.f32 %v5815, %v359
      %v5851 = vmul.f32 %v5840, %v358
      %v5852 = vmul.f32 %v5816, %v359
      %v5853 = vmul.f32 %v5841, %v358
      %v5854 = vmul.f32 %v5817, %v359
      %v5855 = vmul.f32 %v5842, %v358
      %v5856 = vmul.f32 %v5818, %v359
      %v5857 = vmul.f32 %v5843, %v358
      %v5858 = vmul.f32 %v5819, %v359
      %v5859 = vmul.f32 %v5844, %v358
      %v5860 = vmul.f32 %v5820, %v359
      %v5861 = vpack.c.bf16 %v5847, %v5845
      %v5862 = vpack.c.bf16 %v5848, %v5846
      %v5863 = vpack.c.bf16 %v5851, %v5849
      %v5864 = vpack.c.bf16 %v5852, %v5850
      %v5865 = vpack.c.bf16 %v5855, %v5853
      %v5866 = vpack.c.bf16 %v5856, %v5854
      %v5867 = vpack.c.bf16 %v5859, %v5857
      %v5868 = vpack.c.bf16 %v5860, %v5858
      %s5869 = scalar_lea.vmem %s6, 352
      %v5870 = vld [vmem:[%s5869] sm:$0xf]
      %v5871 = vld [vmem:[%s5869 + $0x4] sm:$0xf]
      %v5872 = vld [vmem:[%s5869 + $0x8] sm:$0xf]
      %v5873 = vld [vmem:[%s5869 + $0xc] sm:$0xf]
      %v5874 = vld [vmem:[%s5869 + $0x10] sm:$0xf]
      %v5875 = vld [vmem:[%s5869 + $0x14] sm:$0xf]
      %v5876 = vld [vmem:[%s5869 + $0x18] sm:$0xf]
      %v5877 = vld [vmem:[%s5869 + $0x1c] sm:$0xf]
      %v5886 = vunpack.c.l.b16 %v5870
      %v5887 = vunpack.c.l.b16 %v5871
      %v5888 = vunpack.c.l.b16 %v5872
      %v5889 = vunpack.c.l.b16 %v5873
      %v5890 = vunpack.c.l.b16 %v5874
      %v5891 = vunpack.c.l.b16 %v5875
      %v5892 = vunpack.c.l.b16 %v5876
      %v5893 = vunpack.c.l.b16 %v5877
      %v5894 = vpack.c.b16 %v5887, %v5886
      %v5895 = vpack.c.b16 %v5889, %v5888
      %v5896 = vpack.c.b16 %v5891, %v5890
      %v5897 = vpack.c.b16 %v5893, %v5892
      %v5899 = vsel %vm446, %v5894, 0
      %v5902 = vsel %vm446, %v5895, 0
      %v5905 = vsel %vm446, %v5896, 0
      %v5908 = vsel %vm446, %v5897, 0
      %5910 = vmatpush.bf16.msra.mxu0 0
      %5911 = vmatpush.bf16.msra.mxu0 0
      %5912 = vmatpush.bf16.msra.mxu0 0
      %5913 = vmatpush.bf16.msra.mxu0 0
      %5914 = vmatpush.bf16.msra.mxu0 %v5867
      %5915 = vmatpush.bf16.msra.mxu0 %v5865
      %5916 = vmatpush.bf16.msra.mxu0 %v5863
      %5917 = vmatpush.bf16.msra.mxu0 %v5861
      %5918 = vmatmul.bf16.gmra.mxu0 %v5899
      %v5919 = vpop.f32.mrf.mxu0
      %v5920 = vadd.f32 0.0, %v5919
      %v5921 = vpop.f32.mrf.mxu0
      %v5922 = vadd.f32 0.0, %v5921
      %5923 = vmatmul.bf16.gmra.mxu0 %v5902
      %v5924 = vpop.f32.mrf.mxu0
      %v5925 = vadd.f32 0.0, %v5924
      %v5926 = vpop.f32.mrf.mxu0
      %v5927 = vadd.f32 0.0, %v5926
      %5928 = vmatmul.bf16.gmra.mxu0 %v5905
      %v5929 = vpop.f32.mrf.mxu0
      %v5930 = vadd.f32 0.0, %v5929
      %v5931 = vpop.f32.mrf.mxu0
      %v5932 = vadd.f32 0.0, %v5931
      %5933 = vmatmul.bf16.gmra.mxu0 %v5908
      %v5934 = vpop.f32.mrf.mxu0
      %v5935 = vadd.f32 0.0, %v5934
      %v5936 = vpop.f32.mrf.mxu0
      %v5937 = vadd.f32 0.0, %v5936
      %5938 = vdwg.mxu0
      %5939 = vmatpush.bf16.msra.mxu0 0
      %5940 = vmatpush.bf16.msra.mxu0 0
      %5941 = vmatpush.bf16.msra.mxu0 0
      %5942 = vmatpush.bf16.msra.mxu0 0
      %5943 = vmatpush.bf16.msra.mxu0 %v5868
      %5944 = vmatpush.bf16.msra.mxu0 %v5866
      %5945 = vmatpush.bf16.msra.mxu0 %v5864
      %5946 = vmatpush.bf16.msra.mxu0 %v5862
      %5947 = vmatmul.bf16.gmra.mxu0 %v5899
      %v5948 = vpop.f32.mrf.mxu0
      %v5949 = vadd.f32 0.0, %v5948
      %v5950 = vpop.f32.mrf.mxu0
      %v5951 = vadd.f32 0.0, %v5950
      %5952 = vmatmul.bf16.gmra.mxu0 %v5902
      %v5953 = vpop.f32.mrf.mxu0
      %v5954 = vadd.f32 0.0, %v5953
      %v5955 = vpop.f32.mrf.mxu0
      %v5956 = vadd.f32 0.0, %v5955
      %5957 = vmatmul.bf16.gmra.mxu0 %v5905
      %v5958 = vpop.f32.mrf.mxu0
      %v5959 = vadd.f32 0.0, %v5958
      %v5960 = vpop.f32.mrf.mxu0
      %v5961 = vadd.f32 0.0, %v5960
      %5962 = vmatmul.bf16.gmra.mxu0 %v5908
      %v5963 = vpop.f32.mrf.mxu0
      %v5964 = vadd.f32 0.0, %v5963
      %v5965 = vpop.f32.mrf.mxu0
      %v5966 = vadd.f32 0.0, %v5965
      %5967 = vdwg.mxu0
      %v5968 = vadd.f32 %v5733, %v5920
      %v5969 = vadd.f32 %v5762, %v5949
      %v5970 = vadd.f32 %v5735, %v5922
      %v5971 = vadd.f32 %v5764, %v5951
      %v5972 = vadd.f32 %v5738, %v5925
      %v5973 = vadd.f32 %v5767, %v5954
      %v5974 = vadd.f32 %v5740, %v5927
      %v5975 = vadd.f32 %v5769, %v5956
      %v5976 = vadd.f32 %v5743, %v5930
      %v5977 = vadd.f32 %v5772, %v5959
      %v5978 = vadd.f32 %v5745, %v5932
      %v5979 = vadd.f32 %v5774, %v5961
      %v5980 = vadd.f32 %v5748, %v5935
      %v5981 = vadd.f32 %v5777, %v5964
      %v5982 = vadd.f32 %v5750, %v5937
      %v5983 = vadd.f32 %v5779, %v5966
      %5984 = vrot.lane.b32.xlu0 %v5391, 1
      %v5985 = vpop.permute.xlu0 %5984
      %5986 = vrot.lane.b32.xlu0 %v5392, 1
      %v5987 = vpop.permute.xlu0 %5986
      %5988 = vrot.lane.b32.xlu0 %v5393, 1
      %v5989 = vpop.permute.xlu0 %5988
      %5990 = vrot.lane.b32.xlu0 %v5394, 1
      %v5991 = vpop.permute.xlu0 %5990
      %5992 = vrot.lane.b32.xlu0 %v5395, 1
      %v5993 = vpop.permute.xlu0 %5992
      %5994 = vrot.lane.b32.xlu0 %v5396, 1
      %v5995 = vpop.permute.xlu0 %5994
      %5996 = vrot.lane.b32.xlu0 %v5397, 1
      %v5997 = vpop.permute.xlu0 %5996
      %5998 = vrot.lane.b32.xlu0 %v5398, 1
      %v5999 = vpop.permute.xlu0 %5998
      %6000 = vrot.lane.b32.xlu0 %v5399, 1
      %v6001 = vpop.permute.xlu0 %6000
      %6002 = vrot.lane.b32.xlu0 %v5400, 1
      %v6003 = vpop.permute.xlu0 %6002
      %6004 = vrot.lane.b32.xlu0 %v5401, 1
      %v6005 = vpop.permute.xlu0 %6004
      %6006 = vrot.lane.b32.xlu0 %v5402, 1
      %v6007 = vpop.permute.xlu0 %6006
      %6008 = vrot.lane.b32.xlu0 %v5403, 1
      %v6009 = vpop.permute.xlu0 %6008
      %6010 = vrot.lane.b32.xlu0 %v5404, 1
      %v6011 = vpop.permute.xlu0 %6010
      %6012 = vrot.lane.b32.xlu0 %v5405, 1
      %v6013 = vpop.permute.xlu0 %6012
      %6014 = vrot.lane.b32.xlu0 %v5406, 1
      %v6015 = vpop.permute.xlu0 %6014
      %v6016 = vsel %vm1002, %v5985, %v5987
      %v6017 = vsel %vm1002, %v5989, %v5991
      %v6018 = vsel %vm1002, %v5993, %v5995
      %v6019 = vsel %vm1002, %v5997, %v5999
      %v6020 = vsel %vm1002, %v6001, %v6003
      %v6021 = vsel %vm1002, %v6005, %v6007
      %v6022 = vsel %vm1002, %v6009, %v6011
      %v6023 = vsel %vm1002, %v6013, %v6015
      %v6040 = vsel %vm1002, 0.0, %v5985
      %v6041 = vsel %vm1002, 0.0, %v5989
      %v6042 = vsel %vm1002, 0.0, %v5993
      %v6043 = vsel %vm1002, 0.0, %v5997
      %v6044 = vsel %vm1002, 0.0, %v6001
      %v6045 = vsel %vm1002, 0.0, %v6005
      %v6046 = vsel %vm1002, 0.0, %v6009
      %v6047 = vsel %vm1002, 0.0, %v6013
      %v6048 = vmul.f32 %v6040, %v364
      %v6049 = vmul.f32 %v6016, %v365
      %v6050 = vmul.f32 %v6041, %v364
      %v6051 = vmul.f32 %v6017, %v365
      %v6052 = vmul.f32 %v6042, %v364
      %v6053 = vmul.f32 %v6018, %v365
      %v6054 = vmul.f32 %v6043, %v364
      %v6055 = vmul.f32 %v6019, %v365
      %v6056 = vmul.f32 %v6044, %v364
      %v6057 = vmul.f32 %v6020, %v365
      %v6058 = vmul.f32 %v6045, %v364
      %v6059 = vmul.f32 %v6021, %v365
      %v6060 = vmul.f32 %v6046, %v364
      %v6061 = vmul.f32 %v6022, %v365
      %v6062 = vmul.f32 %v6047, %v364
      %v6063 = vmul.f32 %v6023, %v365
      %v6064 = vpack.c.bf16 %v6050, %v6048
      %v6065 = vpack.c.bf16 %v6051, %v6049
      %v6066 = vpack.c.bf16 %v6054, %v6052
      %v6067 = vpack.c.bf16 %v6055, %v6053
      %v6068 = vpack.c.bf16 %v6058, %v6056
      %v6069 = vpack.c.bf16 %v6059, %v6057
      %v6070 = vpack.c.bf16 %v6062, %v6060
      %v6071 = vpack.c.bf16 %v6063, %v6061
      %s6072 = scalar_lea.vmem %s6, 384
      %v6073 = vld [vmem:[%s6072] sm:$0xf]
      %v6074 = vld [vmem:[%s6072 + $0x4] sm:$0xf]
      %v6075 = vld [vmem:[%s6072 + $0x8] sm:$0xf]
      %v6076 = vld [vmem:[%s6072 + $0xc] sm:$0xf]
      %v6077 = vld [vmem:[%s6072 + $0x10] sm:$0xf]
      %v6078 = vld [vmem:[%s6072 + $0x14] sm:$0xf]
      %v6079 = vld [vmem:[%s6072 + $0x18] sm:$0xf]
      %v6080 = vld [vmem:[%s6072 + $0x1c] sm:$0xf]
      %v6089 = vunpack.c.l.b16 %v6073
      %v6090 = vunpack.c.l.b16 %v6074
      %v6091 = vunpack.c.l.b16 %v6075
      %v6092 = vunpack.c.l.b16 %v6076
      %v6093 = vunpack.c.l.b16 %v6077
      %v6094 = vunpack.c.l.b16 %v6078
      %v6095 = vunpack.c.l.b16 %v6079
      %v6096 = vunpack.c.l.b16 %v6080
      %v6097 = vpack.c.b16 %v6090, %v6089
      %v6098 = vpack.c.b16 %v6092, %v6091
      %v6099 = vpack.c.b16 %v6094, %v6093
      %v6100 = vpack.c.b16 %v6096, %v6095
      %v6102 = vsel %vm446, %v6097, 0
      %v6105 = vsel %vm446, %v6098, 0
      %v6108 = vsel %vm446, %v6099, 0
      %v6111 = vsel %vm446, %v6100, 0
      %6113 = vmatpush.bf16.msra.mxu0 0
      %6114 = vmatpush.bf16.msra.mxu0 0
      %6115 = vmatpush.bf16.msra.mxu0 0
      %6116 = vmatpush.bf16.msra.mxu0 0
      %6117 = vmatpush.bf16.msra.mxu0 %v6070
      %6118 = vmatpush.bf16.msra.mxu0 %v6068
      %6119 = vmatpush.bf16.msra.mxu0 %v6066
      %6120 = vmatpush.bf16.msra.mxu0 %v6064
      %6121 = vmatmul.bf16.gmra.mxu0 %v6102
      %v6122 = vpop.f32.mrf.mxu0
      %v6123 = vadd.f32 0.0, %v6122
      %v6124 = vpop.f32.mrf.mxu0
      %v6125 = vadd.f32 0.0, %v6124
      %6126 = vmatmul.bf16.gmra.mxu0 %v6105
      %v6127 = vpop.f32.mrf.mxu0
      %v6128 = vadd.f32 0.0, %v6127
      %v6129 = vpop.f32.mrf.mxu0
      %v6130 = vadd.f32 0.0, %v6129
      %6131 = vmatmul.bf16.gmra.mxu0 %v6108
      %v6132 = vpop.f32.mrf.mxu0
      %v6133 = vadd.f32 0.0, %v6132
      %v6134 = vpop.f32.mrf.mxu0
      %v6135 = vadd.f32 0.0, %v6134
      %6136 = vmatmul.bf16.gmra.mxu0 %v6111
      %v6137 = vpop.f32.mrf.mxu0
      %v6138 = vadd.f32 0.0, %v6137
      %v6139 = vpop.f32.mrf.mxu0
      %v6140 = vadd.f32 0.0, %v6139
      %6141 = vdwg.mxu0
      %6142 = vmatpush.bf16.msra.mxu0 0
      %6143 = vmatpush.bf16.msra.mxu0 0
      %6144 = vmatpush.bf16.msra.mxu0 0
      %6145 = vmatpush.bf16.msra.mxu0 0
      %6146 = vmatpush.bf16.msra.mxu0 %v6071
      %6147 = vmatpush.bf16.msra.mxu0 %v6069
      %6148 = vmatpush.bf16.msra.mxu0 %v6067
      %6149 = vmatpush.bf16.msra.mxu0 %v6065
      %6150 = vmatmul.bf16.gmra.mxu0 %v6102
      %v6151 = vpop.f32.mrf.mxu0
      %v6152 = vadd.f32 0.0, %v6151
      %v6153 = vpop.f32.mrf.mxu0
      %v6154 = vadd.f32 0.0, %v6153
      %6155 = vmatmul.bf16.gmra.mxu0 %v6105
      %v6156 = vpop.f32.mrf.mxu0
      %v6157 = vadd.f32 0.0, %v6156
      %v6158 = vpop.f32.mrf.mxu0
      %v6159 = vadd.f32 0.0, %v6158
      %6160 = vmatmul.bf16.gmra.mxu0 %v6108
      %v6161 = vpop.f32.mrf.mxu0
      %v6162 = vadd.f32 0.0, %v6161
      %v6163 = vpop.f32.mrf.mxu0
      %v6164 = vadd.f32 0.0, %v6163
      %6165 = vmatmul.bf16.gmra.mxu0 %v6111
      %v6166 = vpop.f32.mrf.mxu0
      %v6167 = vadd.f32 0.0, %v6166
      %v6168 = vpop.f32.mrf.mxu0
      %v6169 = vadd.f32 0.0, %v6168
      %6170 = vdwg.mxu0
      %v6171 = vadd.f32 %v5968, %v6123
      %v6172 = vadd.f32 %v5969, %v6152
      %v6173 = vadd.f32 %v5970, %v6125
      %v6174 = vadd.f32 %v5971, %v6154
      %v6175 = vadd.f32 %v5972, %v6128
      %v6176 = vadd.f32 %v5973, %v6157
      %v6177 = vadd.f32 %v5974, %v6130
      %v6178 = vadd.f32 %v5975, %v6159
      %v6179 = vadd.f32 %v5976, %v6133
      %v6180 = vadd.f32 %v5977, %v6162
      %v6181 = vadd.f32 %v5978, %v6135
      %v6182 = vadd.f32 %v5979, %v6164
      %v6183 = vadd.f32 %v5980, %v6138
      %v6184 = vadd.f32 %v5981, %v6167
      %v6185 = vadd.f32 %v5982, %v6140
      %v6186 = vadd.f32 %v5983, %v6169
      %v6187 = vpack.c.bf16 %v5393, %v5391
      %v6188 = vpack.c.bf16 %v5394, %v5392
      %v6189 = vpack.c.bf16 %v5397, %v5395
      %v6190 = vpack.c.bf16 %v5398, %v5396
      %v6191 = vpack.c.bf16 %v5401, %v5399
      %v6192 = vpack.c.bf16 %v5402, %v5400
      %v6193 = vpack.c.bf16 %v5405, %v5403
      %v6194 = vpack.c.bf16 %v5406, %v5404
      %s6195 = scalar_lea.vmem %s6, 416
      %v6196 = vld [vmem:[%s6195] sm:$0xf]
      %v6197 = vld [vmem:[%s6195 + $0x4] sm:$0xf]
      %v6198 = vld [vmem:[%s6195 + $0x8] sm:$0xf]
      %v6199 = vld [vmem:[%s6195 + $0xc] sm:$0xf]
      %v6200 = vld [vmem:[%s6195 + $0x10] sm:$0xf]
      %v6201 = vld [vmem:[%s6195 + $0x14] sm:$0xf]
      %v6202 = vld [vmem:[%s6195 + $0x18] sm:$0xf]
      %v6203 = vld [vmem:[%s6195 + $0x1c] sm:$0xf]
      %v6212 = vunpack.c.l.b16 %v6196
      %v6213 = vunpack.c.l.b16 %v6197
      %v6214 = vunpack.c.l.b16 %v6198
      %v6215 = vunpack.c.l.b16 %v6199
      %v6216 = vunpack.c.l.b16 %v6200
      %v6217 = vunpack.c.l.b16 %v6201
      %v6218 = vunpack.c.l.b16 %v6202
      %v6219 = vunpack.c.l.b16 %v6203
      %v6220 = vpack.c.b16 %v6213, %v6212
      %v6221 = vpack.c.b16 %v6215, %v6214
      %v6222 = vpack.c.b16 %v6217, %v6216
      %v6223 = vpack.c.b16 %v6219, %v6218
      %v6225 = vsel %vm446, %v6220, 0
      %v6228 = vsel %vm446, %v6221, 0
      %v6231 = vsel %vm446, %v6222, 0
      %v6234 = vsel %vm446, %v6223, 0
      %6236 = vmatpush.bf16.msra.mxu0 0
      %6237 = vmatpush.bf16.msra.mxu0 0
      %6238 = vmatpush.bf16.msra.mxu0 0
      %6239 = vmatpush.bf16.msra.mxu0 0
      %6240 = vmatpush.bf16.msra.mxu0 %v6193
      %6241 = vmatpush.bf16.msra.mxu0 %v6191
      %6242 = vmatpush.bf16.msra.mxu0 %v6189
      %6243 = vmatpush.bf16.msra.mxu0 %v6187
      %6244 = vmatmul.bf16.gmra.mxu0 %v6225
      %v6245 = vpop.f32.mrf.mxu0
      %v6246 = vadd.f32 0.0, %v6245
      %v6247 = vpop.f32.mrf.mxu0
      %v6248 = vadd.f32 0.0, %v6247
      %6249 = vmatmul.bf16.gmra.mxu0 %v6228
      %v6250 = vpop.f32.mrf.mxu0
      %v6251 = vadd.f32 0.0, %v6250
      %v6252 = vpop.f32.mrf.mxu0
      %v6253 = vadd.f32 0.0, %v6252
      %6254 = vmatmul.bf16.gmra.mxu0 %v6231
      %v6255 = vpop.f32.mrf.mxu0
      %v6256 = vadd.f32 0.0, %v6255
      %v6257 = vpop.f32.mrf.mxu0
      %v6258 = vadd.f32 0.0, %v6257
      %6259 = vmatmul.bf16.gmra.mxu0 %v6234
      %v6260 = vpop.f32.mrf.mxu0
      %v6261 = vadd.f32 0.0, %v6260
      %v6262 = vpop.f32.mrf.mxu0
      %v6263 = vadd.f32 0.0, %v6262
      %6264 = vdwg.mxu0
      %6265 = vmatpush.bf16.msra.mxu0 0
      %6266 = vmatpush.bf16.msra.mxu0 0
      %6267 = vmatpush.bf16.msra.mxu0 0
      %6268 = vmatpush.bf16.msra.mxu0 0
      %6269 = vmatpush.bf16.msra.mxu0 %v6194
      %6270 = vmatpush.bf16.msra.mxu0 %v6192
      %6271 = vmatpush.bf16.msra.mxu0 %v6190
      %6272 = vmatpush.bf16.msra.mxu0 %v6188
      %6273 = vmatmul.bf16.gmra.mxu0 %v6225
      %v6274 = vpop.f32.mrf.mxu0
      %v6275 = vadd.f32 0.0, %v6274
      %v6276 = vpop.f32.mrf.mxu0
      %v6277 = vadd.f32 0.0, %v6276
      %6278 = vmatmul.bf16.gmra.mxu0 %v6228
      %v6279 = vpop.f32.mrf.mxu0
      %v6280 = vadd.f32 0.0, %v6279
      %v6281 = vpop.f32.mrf.mxu0
      %v6282 = vadd.f32 0.0, %v6281
      %6283 = vmatmul.bf16.gmra.mxu0 %v6231
      %v6284 = vpop.f32.mrf.mxu0
      %v6285 = vadd.f32 0.0, %v6284
      %v6286 = vpop.f32.mrf.mxu0
      %v6287 = vadd.f32 0.0, %v6286
      %6288 = vmatmul.bf16.gmra.mxu0 %v6234
      %v6289 = vpop.f32.mrf.mxu0
      %v6290 = vadd.f32 0.0, %v6289
      %v6291 = vpop.f32.mrf.mxu0
      %v6292 = vadd.f32 0.0, %v6291
      %6293 = vdwg.mxu0
      %v6294 = vadd.f32 %v6171, %v6246
      %v6295 = vadd.f32 %v6172, %v6275
      %v6296 = vadd.f32 %v6173, %v6248
      %v6297 = vadd.f32 %v6174, %v6277
      %v6298 = vadd.f32 %v6175, %v6251
      %v6299 = vadd.f32 %v6176, %v6280
      %v6300 = vadd.f32 %v6177, %v6253
      %v6301 = vadd.f32 %v6178, %v6282
      %v6302 = vadd.f32 %v6179, %v6256
      %v6303 = vadd.f32 %v6180, %v6285
      %v6304 = vadd.f32 %v6181, %v6258
      %v6305 = vadd.f32 %v6182, %v6287
      %v6306 = vadd.f32 %v6183, %v6261
      %v6307 = vadd.f32 %v6184, %v6290
      %v6308 = vadd.f32 %v6185, %v6263
      %v6309 = vadd.f32 %v6186, %v6292
      %6310 = vrot.lane.b32.xlu0 %v5391, 127
      %v6311 = vpop.permute.xlu0 %6310
      %6312 = vrot.lane.b32.xlu0 %v5392, 127
      %v6313 = vpop.permute.xlu0 %6312
      %6314 = vrot.lane.b32.xlu0 %v5393, 127
      %v6315 = vpop.permute.xlu0 %6314
      %6316 = vrot.lane.b32.xlu0 %v5394, 127
      %v6317 = vpop.permute.xlu0 %6316
      %6318 = vrot.lane.b32.xlu0 %v5395, 127
      %v6319 = vpop.permute.xlu0 %6318
      %6320 = vrot.lane.b32.xlu0 %v5396, 127
      %v6321 = vpop.permute.xlu0 %6320
      %6322 = vrot.lane.b32.xlu0 %v5397, 127
      %v6323 = vpop.permute.xlu0 %6322
      %6324 = vrot.lane.b32.xlu0 %v5398, 127
      %v6325 = vpop.permute.xlu0 %6324
      %6326 = vrot.lane.b32.xlu0 %v5399, 127
      %v6327 = vpop.permute.xlu0 %6326
      %6328 = vrot.lane.b32.xlu0 %v5400, 127
      %v6329 = vpop.permute.xlu0 %6328
      %6330 = vrot.lane.b32.xlu0 %v5401, 127
      %v6331 = vpop.permute.xlu0 %6330
      %6332 = vrot.lane.b32.xlu0 %v5402, 127
      %v6333 = vpop.permute.xlu0 %6332
      %6334 = vrot.lane.b32.xlu0 %v5403, 127
      %v6335 = vpop.permute.xlu0 %6334
      %6336 = vrot.lane.b32.xlu0 %v5404, 127
      %v6337 = vpop.permute.xlu0 %6336
      %6338 = vrot.lane.b32.xlu0 %v5405, 127
      %v6339 = vpop.permute.xlu0 %6338
      %6340 = vrot.lane.b32.xlu0 %v5406, 127
      %v6341 = vpop.permute.xlu0 %6340
      %v6342 = vsel %vm1227, %v6311, %v6313
      %v6343 = vsel %vm1227, %v6315, %v6317
      %v6344 = vsel %vm1227, %v6319, %v6321
      %v6345 = vsel %vm1227, %v6323, %v6325
      %v6346 = vsel %vm1227, %v6327, %v6329
      %v6347 = vsel %vm1227, %v6331, %v6333
      %v6348 = vsel %vm1227, %v6335, %v6337
      %v6349 = vsel %vm1227, %v6339, %v6341
      %v6366 = vsel %vm1227, %v6313, 0.0
      %v6367 = vsel %vm1227, %v6317, 0.0
      %v6368 = vsel %vm1227, %v6321, 0.0
      %v6369 = vsel %vm1227, %v6325, 0.0
      %v6370 = vsel %vm1227, %v6329, 0.0
      %v6371 = vsel %vm1227, %v6333, 0.0
      %v6372 = vsel %vm1227, %v6337, 0.0
      %v6373 = vsel %vm1227, %v6341, 0.0
      %v6374 = vmul.f32 %v6342, %v358
      %v6375 = vmul.f32 %v6366, %v359
      %v6376 = vmul.f32 %v6343, %v358
      %v6377 = vmul.f32 %v6367, %v359
      %v6378 = vmul.f32 %v6344, %v358
      %v6379 = vmul.f32 %v6368, %v359
      %v6380 = vmul.f32 %v6345, %v358
      %v6381 = vmul.f32 %v6369, %v359
      %v6382 = vmul.f32 %v6346, %v358
      %v6383 = vmul.f32 %v6370, %v359
      %v6384 = vmul.f32 %v6347, %v358
      %v6385 = vmul.f32 %v6371, %v359
      %v6386 = vmul.f32 %v6348, %v358
      %v6387 = vmul.f32 %v6372, %v359
      %v6388 = vmul.f32 %v6349, %v358
      %v6389 = vmul.f32 %v6373, %v359
      %v6390 = vpack.c.bf16 %v6376, %v6374
      %v6391 = vpack.c.bf16 %v6377, %v6375
      %v6392 = vpack.c.bf16 %v6380, %v6378
      %v6393 = vpack.c.bf16 %v6381, %v6379
      %v6394 = vpack.c.bf16 %v6384, %v6382
      %v6395 = vpack.c.bf16 %v6385, %v6383
      %v6396 = vpack.c.bf16 %v6388, %v6386
      %v6397 = vpack.c.bf16 %v6389, %v6387
      %s6398 = scalar_lea.vmem %s6, 448
      %v6399 = vld [vmem:[%s6398] sm:$0xf]
      %v6400 = vld [vmem:[%s6398 + $0x4] sm:$0xf]
      %v6401 = vld [vmem:[%s6398 + $0x8] sm:$0xf]
      %v6402 = vld [vmem:[%s6398 + $0xc] sm:$0xf]
      %v6403 = vld [vmem:[%s6398 + $0x10] sm:$0xf]
      %v6404 = vld [vmem:[%s6398 + $0x14] sm:$0xf]
      %v6405 = vld [vmem:[%s6398 + $0x18] sm:$0xf]
      %v6406 = vld [vmem:[%s6398 + $0x1c] sm:$0xf]
      %v6415 = vunpack.c.l.b16 %v6399
      %v6416 = vunpack.c.l.b16 %v6400
      %v6417 = vunpack.c.l.b16 %v6401
      %v6418 = vunpack.c.l.b16 %v6402
      %v6419 = vunpack.c.l.b16 %v6403
      %v6420 = vunpack.c.l.b16 %v6404
      %v6421 = vunpack.c.l.b16 %v6405
      %v6422 = vunpack.c.l.b16 %v6406
      %v6423 = vpack.c.b16 %v6416, %v6415
      %v6424 = vpack.c.b16 %v6418, %v6417
      %v6425 = vpack.c.b16 %v6420, %v6419
      %v6426 = vpack.c.b16 %v6422, %v6421
      %v6428 = vsel %vm446, %v6423, 0
      %v6431 = vsel %vm446, %v6424, 0
      %v6434 = vsel %vm446, %v6425, 0
      %v6437 = vsel %vm446, %v6426, 0
      %6439 = vmatpush.bf16.msra.mxu0 0
      %6440 = vmatpush.bf16.msra.mxu0 0
      %6441 = vmatpush.bf16.msra.mxu0 0
      %6442 = vmatpush.bf16.msra.mxu0 0
      %6443 = vmatpush.bf16.msra.mxu0 %v6396
      %6444 = vmatpush.bf16.msra.mxu0 %v6394
      %6445 = vmatpush.bf16.msra.mxu0 %v6392
      %6446 = vmatpush.bf16.msra.mxu0 %v6390
      %6447 = vmatmul.bf16.gmra.mxu0 %v6428
      %v6448 = vpop.f32.mrf.mxu0
      %v6449 = vadd.f32 0.0, %v6448
      %v6450 = vpop.f32.mrf.mxu0
      %v6451 = vadd.f32 0.0, %v6450
      %6452 = vmatmul.bf16.gmra.mxu0 %v6431
      %v6453 = vpop.f32.mrf.mxu0
      %v6454 = vadd.f32 0.0, %v6453
      %v6455 = vpop.f32.mrf.mxu0
      %v6456 = vadd.f32 0.0, %v6455
      %6457 = vmatmul.bf16.gmra.mxu0 %v6434
      %v6458 = vpop.f32.mrf.mxu0
      %v6459 = vadd.f32 0.0, %v6458
      %v6460 = vpop.f32.mrf.mxu0
      %v6461 = vadd.f32 0.0, %v6460
      %6462 = vmatmul.bf16.gmra.mxu0 %v6437
      %v6463 = vpop.f32.mrf.mxu0
      %v6464 = vadd.f32 0.0, %v6463
      %v6465 = vpop.f32.mrf.mxu0
      %v6466 = vadd.f32 0.0, %v6465
      %6467 = vdwg.mxu0
      %6468 = vmatpush.bf16.msra.mxu0 0
      %6469 = vmatpush.bf16.msra.mxu0 0
      %6470 = vmatpush.bf16.msra.mxu0 0
      %6471 = vmatpush.bf16.msra.mxu0 0
      %6472 = vmatpush.bf16.msra.mxu0 %v6397
      %6473 = vmatpush.bf16.msra.mxu0 %v6395
      %6474 = vmatpush.bf16.msra.mxu0 %v6393
      %6475 = vmatpush.bf16.msra.mxu0 %v6391
      %6476 = vmatmul.bf16.gmra.mxu0 %v6428
      %v6477 = vpop.f32.mrf.mxu0
      %v6478 = vadd.f32 0.0, %v6477
      %v6479 = vpop.f32.mrf.mxu0
      %v6480 = vadd.f32 0.0, %v6479
      %6481 = vmatmul.bf16.gmra.mxu0 %v6431
      %v6482 = vpop.f32.mrf.mxu0
      %v6483 = vadd.f32 0.0, %v6482
      %v6484 = vpop.f32.mrf.mxu0
      %v6485 = vadd.f32 0.0, %v6484
      %6486 = vmatmul.bf16.gmra.mxu0 %v6434
      %v6487 = vpop.f32.mrf.mxu0
      %v6488 = vadd.f32 0.0, %v6487
      %v6489 = vpop.f32.mrf.mxu0
      %v6490 = vadd.f32 0.0, %v6489
      %6491 = vmatmul.bf16.gmra.mxu0 %v6437
      %v6492 = vpop.f32.mrf.mxu0
      %v6493 = vadd.f32 0.0, %v6492
      %v6494 = vpop.f32.mrf.mxu0
      %v6495 = vadd.f32 0.0, %v6494
      %6496 = vdwg.mxu0
      %v6497 = vadd.f32 %v6294, %v6449
      %v6498 = vadd.f32 %v6295, %v6478
      %v6499 = vadd.f32 %v6296, %v6451
      %v6500 = vadd.f32 %v6297, %v6480
      %v6501 = vadd.f32 %v6298, %v6454
      %v6502 = vadd.f32 %v6299, %v6483
      %v6503 = vadd.f32 %v6300, %v6456
      %v6504 = vadd.f32 %v6301, %v6485
      %v6505 = vadd.f32 %v6302, %v6459
      %v6506 = vadd.f32 %v6303, %v6488
      %v6507 = vadd.f32 %v6304, %v6461
      %v6508 = vadd.f32 %v6305, %v6490
      %v6509 = vadd.f32 %v6306, %v6464
      %v6510 = vadd.f32 %v6307, %v6493
      %v6511 = vadd.f32 %v6308, %v6466
      %v6512 = vadd.f32 %v6309, %v6495
      %6513 = vrot.lane.b32.xlu0 %v5391, 113
      %v6514 = vpop.permute.xlu0 %6513
      %6515 = vrot.lane.b32.xlu0 %v5392, 113
      %v6516 = vpop.permute.xlu0 %6515
      %6517 = vrot.lane.b32.xlu0 %v5393, 113
      %v6518 = vpop.permute.xlu0 %6517
      %6519 = vrot.lane.b32.xlu0 %v5394, 113
      %v6520 = vpop.permute.xlu0 %6519
      %6521 = vrot.lane.b32.xlu0 %v5395, 113
      %v6522 = vpop.permute.xlu0 %6521
      %6523 = vrot.lane.b32.xlu0 %v5396, 113
      %v6524 = vpop.permute.xlu0 %6523
      %6525 = vrot.lane.b32.xlu0 %v5397, 113
      %v6526 = vpop.permute.xlu0 %6525
      %6527 = vrot.lane.b32.xlu0 %v5398, 113
      %v6528 = vpop.permute.xlu0 %6527
      %6529 = vrot.lane.b32.xlu0 %v5399, 113
      %v6530 = vpop.permute.xlu0 %6529
      %6531 = vrot.lane.b32.xlu0 %v5400, 113
      %v6532 = vpop.permute.xlu0 %6531
      %6533 = vrot.lane.b32.xlu0 %v5401, 113
      %v6534 = vpop.permute.xlu0 %6533
      %6535 = vrot.lane.b32.xlu0 %v5402, 113
      %v6536 = vpop.permute.xlu0 %6535
      %6537 = vrot.lane.b32.xlu0 %v5403, 113
      %v6538 = vpop.permute.xlu0 %6537
      %6539 = vrot.lane.b32.xlu0 %v5404, 113
      %v6540 = vpop.permute.xlu0 %6539
      %6541 = vrot.lane.b32.xlu0 %v5405, 113
      %v6542 = vpop.permute.xlu0 %6541
      %6543 = vrot.lane.b32.xlu0 %v5406, 113
      %v6544 = vpop.permute.xlu0 %6543
      %v6545 = vsel %vm1380, %v6514, %v6516
      %v6546 = vsel %vm1380, %v6518, %v6520
      %v6547 = vsel %vm1380, %v6522, %v6524
      %v6548 = vsel %vm1380, %v6526, %v6528
      %v6549 = vsel %vm1380, %v6530, %v6532
      %v6550 = vsel %vm1380, %v6534, %v6536
      %v6551 = vsel %vm1380, %v6538, %v6540
      %v6552 = vsel %vm1380, %v6542, %v6544
      %v6569 = vsel %vm1380, %v6516, 0.0
      %v6570 = vsel %vm1380, %v6520, 0.0
      %v6571 = vsel %vm1380, %v6524, 0.0
      %v6572 = vsel %vm1380, %v6528, 0.0
      %v6573 = vsel %vm1380, %v6532, 0.0
      %v6574 = vsel %vm1380, %v6536, 0.0
      %v6575 = vsel %vm1380, %v6540, 0.0
      %v6576 = vsel %vm1380, %v6544, 0.0
      %v6577 = vmul.f32 %v6545, %v364
      %v6578 = vmul.f32 %v6569, %v365
      %v6579 = vmul.f32 %v6546, %v364
      %v6580 = vmul.f32 %v6570, %v365
      %v6581 = vmul.f32 %v6547, %v364
      %v6582 = vmul.f32 %v6571, %v365
      %v6583 = vmul.f32 %v6548, %v364
      %v6584 = vmul.f32 %v6572, %v365
      %v6585 = vmul.f32 %v6549, %v364
      %v6586 = vmul.f32 %v6573, %v365
      %v6587 = vmul.f32 %v6550, %v364
      %v6588 = vmul.f32 %v6574, %v365
      %v6589 = vmul.f32 %v6551, %v364
      %v6590 = vmul.f32 %v6575, %v365
      %v6591 = vmul.f32 %v6552, %v364
      %v6592 = vmul.f32 %v6576, %v365
      %v6593 = vpack.c.bf16 %v6579, %v6577
      %v6594 = vpack.c.bf16 %v6580, %v6578
      %v6595 = vpack.c.bf16 %v6583, %v6581
      %v6596 = vpack.c.bf16 %v6584, %v6582
      %v6597 = vpack.c.bf16 %v6587, %v6585
      %v6598 = vpack.c.bf16 %v6588, %v6586
      %v6599 = vpack.c.bf16 %v6591, %v6589
      %v6600 = vpack.c.bf16 %v6592, %v6590
      %s6601 = scalar_lea.vmem %s6, 480
      %v6602 = vld [vmem:[%s6601] sm:$0xf]
      %v6603 = vld [vmem:[%s6601 + $0x4] sm:$0xf]
      %v6604 = vld [vmem:[%s6601 + $0x8] sm:$0xf]
      %v6605 = vld [vmem:[%s6601 + $0xc] sm:$0xf]
      %v6606 = vld [vmem:[%s6601 + $0x10] sm:$0xf]
      %v6607 = vld [vmem:[%s6601 + $0x14] sm:$0xf]
      %v6608 = vld [vmem:[%s6601 + $0x18] sm:$0xf]
      %v6609 = vld [vmem:[%s6601 + $0x1c] sm:$0xf]
      %v6618 = vunpack.c.l.b16 %v6602
      %v6619 = vunpack.c.l.b16 %v6603
      %v6620 = vunpack.c.l.b16 %v6604
      %v6621 = vunpack.c.l.b16 %v6605
      %v6622 = vunpack.c.l.b16 %v6606
      %v6623 = vunpack.c.l.b16 %v6607
      %v6624 = vunpack.c.l.b16 %v6608
      %v6625 = vunpack.c.l.b16 %v6609
      %v6626 = vpack.c.b16 %v6619, %v6618
      %v6627 = vpack.c.b16 %v6621, %v6620
      %v6628 = vpack.c.b16 %v6623, %v6622
      %v6629 = vpack.c.b16 %v6625, %v6624
      %v6631 = vsel %vm446, %v6626, 0
      %v6634 = vsel %vm446, %v6627, 0
      %v6637 = vsel %vm446, %v6628, 0
      %v6640 = vsel %vm446, %v6629, 0
      %6642 = vmatpush.bf16.msra.mxu0 0
      %6643 = vmatpush.bf16.msra.mxu0 0
      %6644 = vmatpush.bf16.msra.mxu0 0
      %6645 = vmatpush.bf16.msra.mxu0 0
      %6646 = vmatpush.bf16.msra.mxu0 %v6599
      %6647 = vmatpush.bf16.msra.mxu0 %v6597
      %6648 = vmatpush.bf16.msra.mxu0 %v6595
      %6649 = vmatpush.bf16.msra.mxu0 %v6593
      %6650 = vmatmul.bf16.gmra.mxu0 %v6631
      %v6651 = vpop.f32.mrf.mxu0
      %v6652 = vadd.f32 0.0, %v6651
      %v6653 = vpop.f32.mrf.mxu0
      %v6654 = vadd.f32 0.0, %v6653
      %6655 = vmatmul.bf16.gmra.mxu0 %v6634
      %v6656 = vpop.f32.mrf.mxu0
      %v6657 = vadd.f32 0.0, %v6656
      %v6658 = vpop.f32.mrf.mxu0
      %v6659 = vadd.f32 0.0, %v6658
      %6660 = vmatmul.bf16.gmra.mxu0 %v6637
      %v6661 = vpop.f32.mrf.mxu0
      %v6662 = vadd.f32 0.0, %v6661
      %v6663 = vpop.f32.mrf.mxu0
      %v6664 = vadd.f32 0.0, %v6663
      %6665 = vmatmul.bf16.gmra.mxu0 %v6640
      %v6666 = vpop.f32.mrf.mxu0
      %v6667 = vadd.f32 0.0, %v6666
      %v6668 = vpop.f32.mrf.mxu0
      %v6669 = vadd.f32 0.0, %v6668
      %6670 = vdwg.mxu0
      %6671 = vmatpush.bf16.msra.mxu0 0
      %6672 = vmatpush.bf16.msra.mxu0 0
      %6673 = vmatpush.bf16.msra.mxu0 0
      %6674 = vmatpush.bf16.msra.mxu0 0
      %6675 = vmatpush.bf16.msra.mxu0 %v6600
      %6676 = vmatpush.bf16.msra.mxu0 %v6598
      %6677 = vmatpush.bf16.msra.mxu0 %v6596
      %6678 = vmatpush.bf16.msra.mxu0 %v6594
      %6679 = vmatmul.bf16.gmra.mxu0 %v6631
      %v6680 = vpop.f32.mrf.mxu0
      %v6681 = vadd.f32 0.0, %v6680
      %v6682 = vpop.f32.mrf.mxu0
      %v6683 = vadd.f32 0.0, %v6682
      %6684 = vmatmul.bf16.gmra.mxu0 %v6634
      %v6685 = vpop.f32.mrf.mxu0
      %v6686 = vadd.f32 0.0, %v6685
      %v6687 = vpop.f32.mrf.mxu0
      %v6688 = vadd.f32 0.0, %v6687
      %6689 = vmatmul.bf16.gmra.mxu0 %v6637
      %v6690 = vpop.f32.mrf.mxu0
      %v6691 = vadd.f32 0.0, %v6690
      %v6692 = vpop.f32.mrf.mxu0
      %v6693 = vadd.f32 0.0, %v6692
      %6694 = vmatmul.bf16.gmra.mxu0 %v6640
      %v6695 = vpop.f32.mrf.mxu0
      %v6696 = vadd.f32 0.0, %v6695
      %v6697 = vpop.f32.mrf.mxu0
      %v6698 = vadd.f32 0.0, %v6697
      %6699 = vdwg.mxu0
      %v6700 = vadd.f32 %v6497, %v6652
      %v6701 = vadd.f32 %v6498, %v6681
      %v6702 = vadd.f32 %v6499, %v6654
      %v6703 = vadd.f32 %v6500, %v6683
      %v6704 = vadd.f32 %v6501, %v6657
      %v6705 = vadd.f32 %v6502, %v6686
      %v6706 = vadd.f32 %v6503, %v6659
      %v6707 = vadd.f32 %v6504, %v6688
      %v6708 = vadd.f32 %v6505, %v6662
      %v6709 = vadd.f32 %v6506, %v6691
      %v6710 = vadd.f32 %v6507, %v6664
      %v6711 = vadd.f32 %v6508, %v6693
      %v6712 = vadd.f32 %v6509, %v6667
      %v6713 = vadd.f32 %v6510, %v6696
      %v6714 = vadd.f32 %v6511, %v6669
      %v6715 = vadd.f32 %v6512, %v6698
      %6716 = vrot.lane.b32.xlu0 %v5391, 112
      %v6717 = vpop.permute.xlu0 %6716
      %6718 = vrot.lane.b32.xlu0 %v5392, 112
      %v6719 = vpop.permute.xlu0 %6718
      %6720 = vrot.lane.b32.xlu0 %v5393, 112
      %v6721 = vpop.permute.xlu0 %6720
      %6722 = vrot.lane.b32.xlu0 %v5394, 112
      %v6723 = vpop.permute.xlu0 %6722
      %6724 = vrot.lane.b32.xlu0 %v5395, 112
      %v6725 = vpop.permute.xlu0 %6724
      %6726 = vrot.lane.b32.xlu0 %v5396, 112
      %v6727 = vpop.permute.xlu0 %6726
      %6728 = vrot.lane.b32.xlu0 %v5397, 112
      %v6729 = vpop.permute.xlu0 %6728
      %6730 = vrot.lane.b32.xlu0 %v5398, 112
      %v6731 = vpop.permute.xlu0 %6730
      %6732 = vrot.lane.b32.xlu0 %v5399, 112
      %v6733 = vpop.permute.xlu0 %6732
      %6734 = vrot.lane.b32.xlu0 %v5400, 112
      %v6735 = vpop.permute.xlu0 %6734
      %6736 = vrot.lane.b32.xlu0 %v5401, 112
      %v6737 = vpop.permute.xlu0 %6736
      %6738 = vrot.lane.b32.xlu0 %v5402, 112
      %v6739 = vpop.permute.xlu0 %6738
      %6740 = vrot.lane.b32.xlu0 %v5403, 112
      %v6741 = vpop.permute.xlu0 %6740
      %6742 = vrot.lane.b32.xlu0 %v5404, 112
      %v6743 = vpop.permute.xlu0 %6742
      %6744 = vrot.lane.b32.xlu0 %v5405, 112
      %v6745 = vpop.permute.xlu0 %6744
      %6746 = vrot.lane.b32.xlu0 %v5406, 112
      %v6747 = vpop.permute.xlu0 %6746
      %v6748 = vsel %vm1533, %v6717, %v6719
      %v6749 = vsel %vm1533, %v6721, %v6723
      %v6750 = vsel %vm1533, %v6725, %v6727
      %v6751 = vsel %vm1533, %v6729, %v6731
      %v6752 = vsel %vm1533, %v6733, %v6735
      %v6753 = vsel %vm1533, %v6737, %v6739
      %v6754 = vsel %vm1533, %v6741, %v6743
      %v6755 = vsel %vm1533, %v6745, %v6747
      %v6772 = vsel %vm1533, %v6719, 0.0
      %v6773 = vsel %vm1533, %v6723, 0.0
      %v6774 = vsel %vm1533, %v6727, 0.0
      %v6775 = vsel %vm1533, %v6731, 0.0
      %v6776 = vsel %vm1533, %v6735, 0.0
      %v6777 = vsel %vm1533, %v6739, 0.0
      %v6778 = vsel %vm1533, %v6743, 0.0
      %v6779 = vsel %vm1533, %v6747, 0.0
      %v6780 = vpack.c.bf16 %v6749, %v6748
      %v6781 = vpack.c.bf16 %v6773, %v6772
      %v6782 = vpack.c.bf16 %v6751, %v6750
      %v6783 = vpack.c.bf16 %v6775, %v6774
      %v6784 = vpack.c.bf16 %v6753, %v6752
      %v6785 = vpack.c.bf16 %v6777, %v6776
      %v6786 = vpack.c.bf16 %v6755, %v6754
      %v6787 = vpack.c.bf16 %v6779, %v6778
      %s6788 = scalar_lea.vmem %s6, 512
      %v6789 = vld [vmem:[%s6788] sm:$0xf]
      %v6790 = vld [vmem:[%s6788 + $0x4] sm:$0xf]
      %v6791 = vld [vmem:[%s6788 + $0x8] sm:$0xf]
      %v6792 = vld [vmem:[%s6788 + $0xc] sm:$0xf]
      %v6793 = vld [vmem:[%s6788 + $0x10] sm:$0xf]
      %v6794 = vld [vmem:[%s6788 + $0x14] sm:$0xf]
      %v6795 = vld [vmem:[%s6788 + $0x18] sm:$0xf]
      %v6796 = vld [vmem:[%s6788 + $0x1c] sm:$0xf]
      %v6805 = vunpack.c.l.b16 %v6789
      %v6806 = vunpack.c.l.b16 %v6790
      %v6807 = vunpack.c.l.b16 %v6791
      %v6808 = vunpack.c.l.b16 %v6792
      %v6809 = vunpack.c.l.b16 %v6793
      %v6810 = vunpack.c.l.b16 %v6794
      %v6811 = vunpack.c.l.b16 %v6795
      %v6812 = vunpack.c.l.b16 %v6796
      %v6813 = vpack.c.b16 %v6806, %v6805
      %v6814 = vpack.c.b16 %v6808, %v6807
      %v6815 = vpack.c.b16 %v6810, %v6809
      %v6816 = vpack.c.b16 %v6812, %v6811
      %v6818 = vsel %vm446, %v6813, 0
      %v6821 = vsel %vm446, %v6814, 0
      %v6824 = vsel %vm446, %v6815, 0
      %v6827 = vsel %vm446, %v6816, 0
      %6829 = vmatpush.bf16.msra.mxu0 0
      %6830 = vmatpush.bf16.msra.mxu0 0
      %6831 = vmatpush.bf16.msra.mxu0 0
      %6832 = vmatpush.bf16.msra.mxu0 0
      %6833 = vmatpush.bf16.msra.mxu0 %v6786
      %6834 = vmatpush.bf16.msra.mxu0 %v6784
      %6835 = vmatpush.bf16.msra.mxu0 %v6782
      %6836 = vmatpush.bf16.msra.mxu0 %v6780
      %6837 = vmatmul.bf16.gmra.mxu0 %v6818
      %v6838 = vpop.f32.mrf.mxu0
      %v6839 = vadd.f32 0.0, %v6838
      %v6840 = vpop.f32.mrf.mxu0
      %v6841 = vadd.f32 0.0, %v6840
      %6842 = vmatmul.bf16.gmra.mxu0 %v6821
      %v6843 = vpop.f32.mrf.mxu0
      %v6844 = vadd.f32 0.0, %v6843
      %v6845 = vpop.f32.mrf.mxu0
      %v6846 = vadd.f32 0.0, %v6845
      %6847 = vmatmul.bf16.gmra.mxu0 %v6824
      %v6848 = vpop.f32.mrf.mxu0
      %v6849 = vadd.f32 0.0, %v6848
      %v6850 = vpop.f32.mrf.mxu0
      %v6851 = vadd.f32 0.0, %v6850
      %6852 = vmatmul.bf16.gmra.mxu0 %v6827
      %v6853 = vpop.f32.mrf.mxu0
      %v6854 = vadd.f32 0.0, %v6853
      %v6855 = vpop.f32.mrf.mxu0
      %v6856 = vadd.f32 0.0, %v6855
      %6857 = vdwg.mxu0
      %6858 = vmatpush.bf16.msra.mxu0 0
      %6859 = vmatpush.bf16.msra.mxu0 0
      %6860 = vmatpush.bf16.msra.mxu0 0
      %6861 = vmatpush.bf16.msra.mxu0 0
      %6862 = vmatpush.bf16.msra.mxu0 %v6787
      %6863 = vmatpush.bf16.msra.mxu0 %v6785
      %6864 = vmatpush.bf16.msra.mxu0 %v6783
      %6865 = vmatpush.bf16.msra.mxu0 %v6781
      %6866 = vmatmul.bf16.gmra.mxu0 %v6818
      %v6867 = vpop.f32.mrf.mxu0
      %v6868 = vadd.f32 0.0, %v6867
      %v6869 = vpop.f32.mrf.mxu0
      %v6870 = vadd.f32 0.0, %v6869
      %6871 = vmatmul.bf16.gmra.mxu0 %v6821
      %v6872 = vpop.f32.mrf.mxu0
      %v6873 = vadd.f32 0.0, %v6872
      %v6874 = vpop.f32.mrf.mxu0
      %v6875 = vadd.f32 0.0, %v6874
      %6876 = vmatmul.bf16.gmra.mxu0 %v6824
      %v6877 = vpop.f32.mrf.mxu0
      %v6878 = vadd.f32 0.0, %v6877
      %v6879 = vpop.f32.mrf.mxu0
      %v6880 = vadd.f32 0.0, %v6879
      %6881 = vmatmul.bf16.gmra.mxu0 %v6827
      %v6882 = vpop.f32.mrf.mxu0
      %v6883 = vadd.f32 0.0, %v6882
      %v6884 = vpop.f32.mrf.mxu0
      %v6885 = vadd.f32 0.0, %v6884
      %6886 = vdwg.mxu0
      %v6887 = vadd.f32 %v6700, %v6839
      %v6888 = vadd.f32 %v6701, %v6868
      %v6889 = vadd.f32 %v6702, %v6841
      %v6890 = vadd.f32 %v6703, %v6870
      %v6891 = vadd.f32 %v6704, %v6844
      %v6892 = vadd.f32 %v6705, %v6873
      %v6893 = vadd.f32 %v6706, %v6846
      %v6894 = vadd.f32 %v6707, %v6875
      %v6895 = vadd.f32 %v6708, %v6849
      %v6896 = vadd.f32 %v6709, %v6878
      %v6897 = vadd.f32 %v6710, %v6851
      %v6898 = vadd.f32 %v6711, %v6880
      %v6899 = vadd.f32 %v6712, %v6854
      %v6900 = vadd.f32 %v6713, %v6883
      %v6901 = vadd.f32 %v6714, %v6856
      %v6902 = vadd.f32 %v6715, %v6885
      %6903 = vrot.lane.b32.xlu0 %v5391, 111
      %v6904 = vpop.permute.xlu0 %6903
      %6905 = vrot.lane.b32.xlu0 %v5392, 111
      %v6906 = vpop.permute.xlu0 %6905
      %6907 = vrot.lane.b32.xlu0 %v5393, 111
      %v6908 = vpop.permute.xlu0 %6907
      %6909 = vrot.lane.b32.xlu0 %v5394, 111
      %v6910 = vpop.permute.xlu0 %6909
      %6911 = vrot.lane.b32.xlu0 %v5395, 111
      %v6912 = vpop.permute.xlu0 %6911
      %6913 = vrot.lane.b32.xlu0 %v5396, 111
      %v6914 = vpop.permute.xlu0 %6913
      %6915 = vrot.lane.b32.xlu0 %v5397, 111
      %v6916 = vpop.permute.xlu0 %6915
      %6917 = vrot.lane.b32.xlu0 %v5398, 111
      %v6918 = vpop.permute.xlu0 %6917
      %6919 = vrot.lane.b32.xlu0 %v5399, 111
      %v6920 = vpop.permute.xlu0 %6919
      %6921 = vrot.lane.b32.xlu0 %v5400, 111
      %v6922 = vpop.permute.xlu0 %6921
      %6923 = vrot.lane.b32.xlu0 %v5401, 111
      %v6924 = vpop.permute.xlu0 %6923
      %6925 = vrot.lane.b32.xlu0 %v5402, 111
      %v6926 = vpop.permute.xlu0 %6925
      %6927 = vrot.lane.b32.xlu0 %v5403, 111
      %v6928 = vpop.permute.xlu0 %6927
      %6929 = vrot.lane.b32.xlu0 %v5404, 111
      %v6930 = vpop.permute.xlu0 %6929
      %6931 = vrot.lane.b32.xlu0 %v5405, 111
      %v6932 = vpop.permute.xlu0 %6931
      %6933 = vrot.lane.b32.xlu0 %v5406, 111
      %v6934 = vpop.permute.xlu0 %6933
      %v6935 = vsel %vm1670, %v6904, %v6906
      %v6936 = vsel %vm1670, %v6908, %v6910
      %v6937 = vsel %vm1670, %v6912, %v6914
      %v6938 = vsel %vm1670, %v6916, %v6918
      %v6939 = vsel %vm1670, %v6920, %v6922
      %v6940 = vsel %vm1670, %v6924, %v6926
      %v6941 = vsel %vm1670, %v6928, %v6930
      %v6942 = vsel %vm1670, %v6932, %v6934
      %v6959 = vsel %vm1670, %v6906, 0.0
      %v6960 = vsel %vm1670, %v6910, 0.0
      %v6961 = vsel %vm1670, %v6914, 0.0
      %v6962 = vsel %vm1670, %v6918, 0.0
      %v6963 = vsel %vm1670, %v6922, 0.0
      %v6964 = vsel %vm1670, %v6926, 0.0
      %v6965 = vsel %vm1670, %v6930, 0.0
      %v6966 = vsel %vm1670, %v6934, 0.0
      %v6967 = vmul.f32 %v6935, %v358
      %v6968 = vmul.f32 %v6959, %v359
      %v6969 = vmul.f32 %v6936, %v358
      %v6970 = vmul.f32 %v6960, %v359
      %v6971 = vmul.f32 %v6937, %v358
      %v6972 = vmul.f32 %v6961, %v359
      %v6973 = vmul.f32 %v6938, %v358
      %v6974 = vmul.f32 %v6962, %v359
      %v6975 = vmul.f32 %v6939, %v358
      %v6976 = vmul.f32 %v6963, %v359
      %v6977 = vmul.f32 %v6940, %v358
      %v6978 = vmul.f32 %v6964, %v359
      %v6979 = vmul.f32 %v6941, %v358
      %v6980 = vmul.f32 %v6965, %v359
      %v6981 = vmul.f32 %v6942, %v358
      %v6982 = vmul.f32 %v6966, %v359
      %v6983 = vpack.c.bf16 %v6969, %v6967
      %v6984 = vpack.c.bf16 %v6970, %v6968
      %v6985 = vpack.c.bf16 %v6973, %v6971
      %v6986 = vpack.c.bf16 %v6974, %v6972
      %v6987 = vpack.c.bf16 %v6977, %v6975
      %v6988 = vpack.c.bf16 %v6978, %v6976
      %v6989 = vpack.c.bf16 %v6981, %v6979
      %v6990 = vpack.c.bf16 %v6982, %v6980
      %s6991 = scalar_lea.vmem %s6, 544
      %v6992 = vld [vmem:[%s6991] sm:$0xf]
      %v6993 = vld [vmem:[%s6991 + $0x4] sm:$0xf]
      %v6994 = vld [vmem:[%s6991 + $0x8] sm:$0xf]
      %v6995 = vld [vmem:[%s6991 + $0xc] sm:$0xf]
      %v6996 = vld [vmem:[%s6991 + $0x10] sm:$0xf]
      %v6997 = vld [vmem:[%s6991 + $0x14] sm:$0xf]
      %v6998 = vld [vmem:[%s6991 + $0x18] sm:$0xf]
      %v6999 = vld [vmem:[%s6991 + $0x1c] sm:$0xf]
      %v7008 = vunpack.c.l.b16 %v6992
      %v7009 = vunpack.c.l.b16 %v6993
      %v7010 = vunpack.c.l.b16 %v6994
      %v7011 = vunpack.c.l.b16 %v6995
      %v7012 = vunpack.c.l.b16 %v6996
      %v7013 = vunpack.c.l.b16 %v6997
      %v7014 = vunpack.c.l.b16 %v6998
      %v7015 = vunpack.c.l.b16 %v6999
      %v7016 = vpack.c.b16 %v7009, %v7008
      %v7017 = vpack.c.b16 %v7011, %v7010
      %v7018 = vpack.c.b16 %v7013, %v7012
      %v7019 = vpack.c.b16 %v7015, %v7014
      %v7021 = vsel %vm446, %v7016, 0
      %v7024 = vsel %vm446, %v7017, 0
      %v7027 = vsel %vm446, %v7018, 0
      %v7030 = vsel %vm446, %v7019, 0
      %7032 = vmatpush.bf16.msra.mxu0 0
      %7033 = vmatpush.bf16.msra.mxu0 0
      %7034 = vmatpush.bf16.msra.mxu0 0
      %7035 = vmatpush.bf16.msra.mxu0 0
      %7036 = vmatpush.bf16.msra.mxu0 %v6989
      %7037 = vmatpush.bf16.msra.mxu0 %v6987
      %7038 = vmatpush.bf16.msra.mxu0 %v6985
      %7039 = vmatpush.bf16.msra.mxu0 %v6983
      %7040 = vmatmul.bf16.gmra.mxu0 %v7021
      %v7041 = vpop.f32.mrf.mxu0
      %v7042 = vadd.f32 0.0, %v7041
      %v7043 = vpop.f32.mrf.mxu0
      %v7044 = vadd.f32 0.0, %v7043
      %7045 = vmatmul.bf16.gmra.mxu0 %v7024
      %v7046 = vpop.f32.mrf.mxu0
      %v7047 = vadd.f32 0.0, %v7046
      %v7048 = vpop.f32.mrf.mxu0
      %v7049 = vadd.f32 0.0, %v7048
      %7050 = vmatmul.bf16.gmra.mxu0 %v7027
      %v7051 = vpop.f32.mrf.mxu0
      %v7052 = vadd.f32 0.0, %v7051
      %v7053 = vpop.f32.mrf.mxu0
      %v7054 = vadd.f32 0.0, %v7053
      %7055 = vmatmul.bf16.gmra.mxu0 %v7030
      %v7056 = vpop.f32.mrf.mxu0
      %v7057 = vadd.f32 0.0, %v7056
      %v7058 = vpop.f32.mrf.mxu0
      %v7059 = vadd.f32 0.0, %v7058
      %7060 = vdwg.mxu0
      %7061 = vmatpush.bf16.msra.mxu0 0
      %7062 = vmatpush.bf16.msra.mxu0 0
      %7063 = vmatpush.bf16.msra.mxu0 0
      %7064 = vmatpush.bf16.msra.mxu0 0
      %7065 = vmatpush.bf16.msra.mxu0 %v6990
      %7066 = vmatpush.bf16.msra.mxu0 %v6988
      %7067 = vmatpush.bf16.msra.mxu0 %v6986
      %7068 = vmatpush.bf16.msra.mxu0 %v6984
      %7069 = vmatmul.bf16.gmra.mxu0 %v7021
      %v7070 = vpop.f32.mrf.mxu0
      %v7071 = vadd.f32 0.0, %v7070
      %v7072 = vpop.f32.mrf.mxu0
      %v7073 = vadd.f32 0.0, %v7072
      %7074 = vmatmul.bf16.gmra.mxu0 %v7024
      %v7075 = vpop.f32.mrf.mxu0
      %v7076 = vadd.f32 0.0, %v7075
      %v7077 = vpop.f32.mrf.mxu0
      %v7078 = vadd.f32 0.0, %v7077
      %7079 = vmatmul.bf16.gmra.mxu0 %v7027
      %v7080 = vpop.f32.mrf.mxu0
      %v7081 = vadd.f32 0.0, %v7080
      %v7082 = vpop.f32.mrf.mxu0
      %v7083 = vadd.f32 0.0, %v7082
      %7084 = vmatmul.bf16.gmra.mxu0 %v7030
      %v7085 = vpop.f32.mrf.mxu0
      %v7086 = vadd.f32 0.0, %v7085
      %v7087 = vpop.f32.mrf.mxu0
      %v7088 = vadd.f32 0.0, %v7087
      %7089 = vdwg.mxu0
      %v7090 = vadd.f32 %v6887, %v7042
      %v7091 = vadd.f32 %v6888, %v7071
      %v7092 = vadd.f32 %v6889, %v7044
      %v7093 = vadd.f32 %v6890, %v7073
      %v7094 = vadd.f32 %v6891, %v7047
      %v7095 = vadd.f32 %v6892, %v7076
      %v7096 = vadd.f32 %v6893, %v7049
      %v7097 = vadd.f32 %v6894, %v7078
      %v7098 = vadd.f32 %v6895, %v7052
      %v7099 = vadd.f32 %v6896, %v7081
      %v7100 = vadd.f32 %v6897, %v7054
      %v7101 = vadd.f32 %v6898, %v7083
      %v7102 = vadd.f32 %v6899, %v7057
      %v7103 = vadd.f32 %v6900, %v7086
      %v7104 = vadd.f32 %v6901, %v7059
      %v7105 = vadd.f32 %v6902, %v7088
      %s7106 = scalar_lea.vmem %s7, 64
      %v7107 = vld [vmem:[%s7106] sm:$0xff]
      %v7108 = vld [vmem:[%s7106 + $0x8] sm:$0xff]
      %v7109 = vld [vmem:[%s7106 + $0x10] sm:$0xff]
      %v7110 = vld [vmem:[%s7106 + $0x18] sm:$0xff]
      %v7111 = vld [vmem:[%s7106 + $0x20] sm:$0xff]
      %v7112 = vld [vmem:[%s7106 + $0x28] sm:$0xff]
      %v7113 = vld [vmem:[%s7106 + $0x30] sm:$0xff]
      %v7114 = vld [vmem:[%s7106 + $0x38] sm:$0xff]
      %7116 = vset.pattern.permute.xlu0 0
      %7117 = vperm.xlu0 %7116, %v7107
      %v7118 = vpop.permute.xlu0 %7117
      %7121 = vset.pattern.permute.xlu0 0
      %7122 = vperm.xlu0 %7121, %v7108
      %v7123 = vpop.permute.xlu0 %7122
      %7126 = vset.pattern.permute.xlu0 0
      %7127 = vperm.xlu0 %7126, %v7109
      %v7128 = vpop.permute.xlu0 %7127
      %7131 = vset.pattern.permute.xlu0 0
      %7132 = vperm.xlu0 %7131, %v7110
      %v7133 = vpop.permute.xlu0 %7132
      %7136 = vset.pattern.permute.xlu0 0
      %7137 = vperm.xlu0 %7136, %v7111
      %v7138 = vpop.permute.xlu0 %7137
      %7141 = vset.pattern.permute.xlu0 0
      %7142 = vperm.xlu0 %7141, %v7112
      %v7143 = vpop.permute.xlu0 %7142
      %7146 = vset.pattern.permute.xlu0 0
      %7147 = vperm.xlu0 %7146, %v7113
      %v7148 = vpop.permute.xlu0 %7147
      %7151 = vset.pattern.permute.xlu0 0
      %7152 = vperm.xlu0 %7151, %v7114
      %v7153 = vpop.permute.xlu0 %7152
      %v7155 = vadd.f32 %v7090, %v7118
      %v7156 = vadd.f32 %v7091, %v7118
      %v7157 = vadd.f32 %v7092, %v7123
      %v7158 = vadd.f32 %v7093, %v7123
      %v7159 = vadd.f32 %v7094, %v7128
      %v7160 = vadd.f32 %v7095, %v7128
      %v7161 = vadd.f32 %v7096, %v7133
      %v7162 = vadd.f32 %v7097, %v7133
      %v7163 = vadd.f32 %v7098, %v7138
      %v7164 = vadd.f32 %v7099, %v7138
      %v7165 = vadd.f32 %v7100, %v7143
      %v7166 = vadd.f32 %v7101, %v7143
      %v7167 = vadd.f32 %v7102, %v7148
      %v7168 = vadd.f32 %v7103, %v7148
      %v7169 = vadd.f32 %v7104, %v7153
      %v7170 = vadd.f32 %v7105, %v7153
      %v7171 = vadd.f32 %v7155, %v366
      %v7172 = vadd.f32 %v7156, %v367
      %v7173 = vadd.f32 %v7157, %v368
      %v7174 = vadd.f32 %v7158, %v369
      %v7175 = vadd.f32 %v7159, %v370
      %v7176 = vadd.f32 %v7160, %v371
      %v7177 = vadd.f32 %v7161, %v372
      %v7178 = vadd.f32 %v7162, %v373
      %v7179 = vadd.f32 %v7163, %v374
      %v7180 = vadd.f32 %v7164, %v375
      %v7181 = vadd.f32 %v7165, %v376
      %v7182 = vadd.f32 %v7166, %v377
      %v7183 = vadd.f32 %v7167, %v378
      %v7184 = vadd.f32 %v7168, %v379
      %v7185 = vadd.f32 %v7169, %v380
      %v7186 = vadd.f32 %v7170, %v381
      %7187 = vst [vmem:[%s325] sm:$0xff] %v7171
      %7188 = vst [vmem:[%s325 + $0x8] sm:$0xff] %v7172
      %7189 = vst [vmem:[%s325 + $0x10] sm:$0xff] %v7173
      %7190 = vst [vmem:[%s325 + $0x18] sm:$0xff] %v7174
      %7191 = vst [vmem:[%s325 + $0x20] sm:$0xff] %v7175
      %7192 = vst [vmem:[%s325 + $0x28] sm:$0xff] %v7176
      %7193 = vst [vmem:[%s325 + $0x30] sm:$0xff] %v7177
      %7194 = vst [vmem:[%s325 + $0x38] sm:$0xff] %v7178
      %7195 = vst [vmem:[%s325 + $0x40] sm:$0xff] %v7179
      %7196 = vst [vmem:[%s325 + $0x48] sm:$0xff] %v7180
      %7197 = vst [vmem:[%s325 + $0x50] sm:$0xff] %v7181
      %7198 = vst [vmem:[%s325 + $0x58] sm:$0xff] %v7182
      %7199 = vst [vmem:[%s325 + $0x60] sm:$0xff] %v7183
      %7200 = vst [vmem:[%s325 + $0x68] sm:$0xff] %v7184
      %7201 = vst [vmem:[%s325 + $0x70] sm:$0xff] %v7185
      %7202 = vst [vmem:[%s325 + $0x78] sm:$0xff] %v7186
      %p7203 = scmp.lt.s32.totalorder %s19, 1
      %s7204 = scalar_select %p7203, %s19, 1
      %s7205 = smul.addr %s7204, 16
      %s7206 = smul.addr %s7205, 8
      %s7207 = scalar_lea.vmem %s8, %s7206
      // Predicated region
      $region53: #{rdab_forward.1} parent=51 // pred_check
        %p7208 = pneg %p215
      $region54: #{rdab_forward.1} parent=51 // pred_check_branch
        %7210 = sbr.rel (%p7208) target = $region56
      $region55: #{rdab_forward.1} parent=51 // pred_region
        _
      $region56: #{rdab_forward.1} parent=51 // pred_fallthru
        _
    $region52: #{rdab_forward.1} parent=5 // pred_fallthru
      _
    %p7211 = scmp.le.s32.totalorder 2, %s14
    // Predicated region
    $region57: #{rdab_forward.1} parent=5 // pred_check
      %p7212 = pneg %p7211
    $region58: #{rdab_forward.1} parent=5 // pred_check_branch
      %7214 = sbr.rel (%p7212) target = $region60
    $region59: #{rdab_forward.1} parent=5 // pred_region
      %s7215 = ssub.s32 %s14, 2
      // Predicated region
      $region61: #{rdab_forward.1} parent=59 // pred_check
        %p7216 = pneg %p221
      $region62: #{rdab_forward.1} parent=59 // pred_check_branch
        %7218 = sbr.rel (%p7216) target = $region64
      $region63: #{rdab_forward.1} parent=59 // pred_region
        %p7219 = scmp.lt.s32.totalorder %s20, 1
        %s7220 = scalar_select %p7219, %s20, 1
        %s7221 = smul.addr %s7220, 16
        %s7222 = smul.addr %s7221, 8
        %s7223 = scalar_lea.vmem %s8, %s7222
      $region64: #{rdab_forward.1} parent=59 // pred_fallthru
        _
    $region60: #{rdab_forward.1} parent=5 // pred_fallthru
      _
  $region6: #{rdab_forward.1} parent=0 // loop_footer
    %s18 = sadd.s32 1, %s14
  $region7: #{rdab_forward.1} parent=0 // loop_footer_branch
    %13 = sbr.rel target = $region3
  $region8: #{rdab_forward.1} parent=0 // loop_exit
    _

</llo_original>
